<compile_context>
chip_gen: v6e
topology: v6e:2x2x1
jax: 0.10.0
libtpu: 0.0.40
codegen_flags: <defaults>
</compile_context>

<pallas_src>
import numpy as np

import jax
import jax.numpy as jnp
from jax.experimental import pallas as pl
from jax.experimental.pallas import tpu as pltpu


# ----------------------------------------------------------------------------
# Channel-slot layout (group-major): group g owns tap-buffer rows
# [9*slot_off[g], 9*slot_off[g] + 9*pad_g), tap-major within the group.
# ----------------------------------------------------------------------------
def _round_up8(n):
    return (n + 7) // 8 * 8


def _slot_layout(num_feat, num_grow_ch):
    sizes = [num_feat, num_grow_ch, num_grow_ch, num_grow_ch, num_grow_ch]
    pads = [_round_up8(s) for s in sizes]
    slot_off = [0]
    for p in pads[:-1]:
        slot_off.append(slot_off[-1] + p)
    c_slots = sum(pads)                               # padded total channels
    cout_pad = _round_up8(max(num_feat, num_grow_ch))
    return sizes, pads, tuple(slot_off), c_slots, cout_pad


# ----------------------------------------------------------------------------
# Fused RRDB kernel
# ----------------------------------------------------------------------------
def _make_rrdb_kernel(C0, H, W, sizes, pads, slot_off, C_slots, Cout_pad):
    HW = H * W
    # Static per-conv contraction length: conv i reads the contiguous prefix of
    # the tap buffer covering channel groups 0..i (72/144/216/288/360 at demo).
    K_pref = [9 * (slot_off[i] + pads[i]) for i in range(5)]

    def kernel(x_ref, w1, w2, w3, w4, w5, b_ref, m_ref, o_ref, taps_ref):
        w_refs = (w1, w2, w3, w4, w5)

        def append_taps(vals, g):
            """Write the 9 shifted/masked copies of `vals` (pads[g], HW) into the
            tap-buffer rows owned by channel group g (the fused dense concat).
            Rows of `vals` beyond sizes[g] are exact zeros; every row of the
            group is (re)written each image, so no scratch zero-fill is needed."""
            n = pads[g]
            base = 9 * slot_off[g]
            for t in range(9):
                kh, kw = divmod(t, 3)
                d = (kh - 1) * W + (kw - 1)            # flat spatial shift
                if d == 0:
                    tap = vals                         # center tap: no shift, no mask
                else:
                    # XLU roll + pre-broadcast f32 border mask (== zero padding);
                    # masks arrive already broadcast to (Cout_pad, HW), so no
                    # broadcast_in_dim is emitted here.
                    tap = pltpu.roll(vals, shift=(-d) % HW, axis=1) * m_ref[t, :n, :]
                taps_ref[base + t * n:base + (t + 1) * n, :] = tap.astype(taps_ref.dtype)

        def conv(i, r, lrelu):
            """One 3x3 conv = one MXU matmul (bf16 x bf16 -> f32) over the
            group-0..i tap prefix."""
            K = K_pref[i]
            acc = jnp.dot(w_refs[i][r], taps_ref[:K, :],
                          preferred_element_type=jnp.float32)   # (Cout_pad, HW) f32
            acc = acc + b_ref[5 * r + i]                        # (Cout_pad, 1) f32
            if lrelu:
                acc = jnp.where(acc >= 0.0, acc, 0.2 * acc)     # LeakyReLU(0.2)
            return acc

        x0 = x_ref[0]                                  # (pads[0], HW) f32, rows >= C0 are 0
        feat = x0
        for r in range(3):                             # rdb1..rdb3
            append_taps(feat, 0)
            x1 = conv(0, r, True); append_taps(x1[:pads[1]], 1)
            x2 = conv(1, r, True); append_taps(x2[:pads[2]], 2)
            x3 = conv(2, r, True); append_taps(x3[:pads[3]], 3)
            x4 = conv(3, r, True); append_taps(x4[:pads[4]], 4)
            x5 = conv(4, r, False)
            feat = x5[:pads[0]] * 0.2 + feat           # RDB residual (pad rows stay 0)
        o_ref[0] = feat[:C0] * 0.2 + x0[:C0]           # fused RRDB residual

    return kernel


def build_rrdb_forward(num_feat, num_grow_ch, H, W):
    """Returns a jitted forward(x_nchw, W_list, b_all, masks) -> NCHW output."""
    sizes, pads, slot_off, C_slots, Cout_pad = _slot_layout(num_feat, num_grow_ch)
    C0 = num_feat
    HW = H * W
    kernel = _make_rrdb_kernel(C0, H, W, sizes, pads, slot_off, C_slots, Cout_pad)

    def forward(x_nchw, W_list, b_all, masks):
        B = x_nchw.shape[0]
        x_flat = x_nchw.reshape(B, C0, HW)             # NCHW -> (B, C, H*W), free
        if pads[0] > C0:                               # zero-pad group 0 to its slot width
            x_flat = jnp.concatenate(
                [x_flat, jnp.zeros((B, pads[0] - C0, HW), x_flat.dtype)], axis=1)

        def const_spec(arr):
            # Grid-invariant operand: constant index map -> fetched once.
            return pl.BlockSpec(arr.shape, lambda b: (0, 0, 0))

        out = pl.pallas_call(
            kernel,
            out_shape=jax.ShapeDtypeStruct((B, C0, HW), jnp.float32),
            grid=(B,),
            in_specs=[pl.BlockSpec((1, pads[0], HW), lambda b: (b, 0, 0))]
                     + [const_spec(w) for w in W_list]
                     + [const_spec(b_all), const_spec(masks)],
            out_specs=pl.BlockSpec((1, C0, HW), lambda b: (b, 0, 0)),
            # Persistent bf16 tap scratch (group-major, 9 taps x padded channels).
            scratch_shapes=[pltpu.VMEM((9 * C_slots, HW), jnp.bfloat16)],
            compiler_params=pltpu.CompilerParams(
                dimension_semantics=("parallel",)),
        )(x_flat, *W_list, b_all, masks)
        return out.reshape(B, C0, H, W)

    return jax.jit(forward)


# ----------------------------------------------------------------------------
# Parameter construction & packing
# ----------------------------------------------------------------------------
def _init_conv(key, cin, cout):
    """kaiming_normal(fan_in) scaled by 0.1 (default_init_weights), small bias."""
    k_w, k_b = jax.random.split(key)
    fan_in = cin * 9
    std = 0.1 * (2.0 / fan_in) ** 0.5
    w = std * jax.random.normal(k_w, (cout, cin, 3, 3), dtype=jnp.float32)  # OIHW
    b = 0.01 * jax.random.normal(k_b, (cout,), dtype=jnp.float32)
    return w, b


def init_rrdb_params(key, num_feat, num_grow_ch):
    params = []
    for _ in range(3):                     # rdb1, rdb2, rdb3
        rdb = []
        for i in range(1, 6):              # conv1..conv5
            key, sub = jax.random.split(key)
            cin = num_feat + (i - 1) * num_grow_ch
            cout = num_grow_ch if i < 5 else num_feat
            rdb.append(_init_conv(sub, cin, cout))
        params.append(rdb)
    return params


def pack_rrdb_params(params, num_feat, num_grow_ch):
    """Pack the 15 convs for the group-major tap layout.

    Returns:
      W_list: 5 bf16 arrays, W_list[i] of shape (3, Cout_pad, K_i) with
              K_i = 9*(slot_off[i] + pads[i]); column index = 9*slot_off[g]
              + tap*pads[g] + c, matching tap-buffer rows exactly.
      b_all:  (15, Cout_pad, 1) f32 biases (index 5*rdb + conv).
    """
    sizes, pads, slot_off, C_slots, Cout_pad = _slot_layout(num_feat, num_grow_ch)
    W_list = []
    b_all = np.zeros((15, Cout_pad, 1), np.float32)
    for i in range(5):
        K = 9 * (slot_off[i] + pads[i])
        Wi = np.zeros((3, Cout_pad, K), np.float32)
        for r in range(3):
            w, b = params[r][i]
            w = np.asarray(w)                          # (cout, cin, 3, 3)
            cout = w.shape[0]
            b_all[5 * r + i, :cout, 0] = np.asarray(b)
            true_off = 0
            for g in range(i + 1):                     # conv(i+1) sees groups 0..i
                s = sizes[g]
                blk = w[:, true_off:true_off + s]      # (cout, s, 3, 3)
                for t in range(9):
                    kh, kw = divmod(t, 3)
                    col0 = 9 * slot_off[g] + t * pads[g]
                    Wi[r, :cout, col0:col0 + s] = blk[:, :, kh, kw]
                true_off += s
        W_list.append(jnp.asarray(Wi, dtype=jnp.bfloat16))
    return W_list, jnp.asarray(b_all)


def make_tap_masks(H, W, num_feat, num_grow_ch):
    """Border-validity masks for the 9 taps, pre-broadcast to (Cout_pad, HW)."""
    _, _, _, _, Cout_pad = _slot_layout(num_feat, num_grow_ch)
    HW = H * W
    p = np.arange(HW)
    h, w = p // W, p % W
    masks = np.zeros((9, Cout_pad, HW), np.float32)
    for t in range(9):
        kh, kw = divmod(t, 3)
        dh, dw = kh - 1, kw - 1
        valid = (h + dh >= 0) & (h + dh < H) & (w + dw >= 0) & (w + dw < W)
        masks[t] = valid.astype(np.float32)[None, :]
    return jnp.asarray(masks)                          # (9, Cout_pad, HW)


# ----------------------------------------------------------------------------
# Pure-JAX reference (numerical sanity check)
# ----------------------------------------------------------------------------
def rrdb_reference(x, params):
    def conv(t, w, b):
        y = jax.lax.conv_general_dilated(
            t, w, (1, 1), ((1, 1), (1, 1)),
            dimension_numbers=("NCHW", "OIHW", "NCHW"),
            precision=jax.lax.Precision.HIGHEST)
        return y + b[None, :, None, None]

    lrelu = lambda t: jnp.where(t >= 0, t, 0.2 * t)

    def rdb(t, ps):
        x1 = lrelu(conv(t, *ps[0]))
        x2 = lrelu(conv(jnp.concatenate([t, x1], 1), *ps[1]))
        x3 = lrelu(conv(jnp.concatenate([t, x1, x2], 1), *ps[2]))
        x4 = lrelu(conv(jnp.concatenate([t, x1, x2, x3], 1), *ps[3]))
        x5 = conv(jnp.concatenate([t, x1, x2, x3, x4], 1), *ps[4])
        return x5 * 0.2 + t

    out = rdb(rdb(rdb(x, params[0]), params[1]), params[2])
    return out * 0.2 + x


# ----------------------------------------------------------------------------
# Main
# ----------------------------------------------------------------------------
if __name__ == "__main__":
    key = jax.random.PRNGKey(0)
    k_x, k_p = jax.random.split(key)

    B, NUM_FEAT, H, W = 2, 4, 16, 16
    NUM_GROW_CH = 8

    x = jax.random.normal(k_x, (B, NUM_FEAT, H, W), dtype=jnp.float32)
    params = init_rrdb_params(k_p, NUM_FEAT, NUM_GROW_CH)

    W_list, b_all = pack_rrdb_params(params, NUM_FEAT, NUM_GROW_CH)
    masks = make_tap_masks(H, W, NUM_FEAT, NUM_GROW_CH)

    forward = build_rrdb_forward(NUM_FEAT, NUM_GROW_CH, H, W)
    out = forward(x, W_list, b_all, masks)
    jax.block_until_ready(out)

    assert out.shape == (B, NUM_FEAT, H, W), out.shape
    assert out.dtype == jnp.float32

    ref = rrdb_reference(x, params)
    # bf16 taps/weights with f32 accumulation vs Precision.HIGHEST f32 reference:
    # observed error is O(1e-3); 1e-2 gives headroom while still catching bugs.
    np.testing.assert_allclose(np.asarray(out), np.asarray(ref),
                               rtol=1e-2, atol=1e-2)

    print("KERNEL_OK")
</pallas_src>

<mosaic_0001>
module attributes {stable_mosaic.version = 11 : i64} {
  func.func @kernel(%arg0: i32, %arg1: memref<1x8x256xf32, #tpu.memory_space<vmem>>, %arg2: memref<3x8x72xbf16, #tpu.memory_space<vmem>>, %arg3: memref<3x8x144xbf16, #tpu.memory_space<vmem>>, %arg4: memref<3x8x216xbf16, #tpu.memory_space<vmem>>, %arg5: memref<3x8x288xbf16, #tpu.memory_space<vmem>>, %arg6: memref<3x8x360xbf16, #tpu.memory_space<vmem>>, %arg7: memref<15x8x1xf32, #tpu.memory_space<vmem>>, %arg8: memref<9x8x256xf32, #tpu.memory_space<vmem>>, %arg9: memref<1x4x256xf32, #tpu.memory_space<vmem>>, %arg10: memref<360x256xbf16, #tpu.memory_space<vmem>>) attributes {dimension_semantics = [#tpu.dimension_semantics<parallel>], iteration_bounds = array<i64: 2>, scalar_prefetch = 0 : i64, scratch_operands = 1 : i64, tpu.core_type = #tpu.core_type<tc>, window_params = [{transform_indices = @transform_0, window_bounds = array<i64: 1, 8, 256>}, {pipeline_mode = #tpu.pipeline_mode<synchronous>, transform_indices = @transform_1, window_bounds = array<i64: 3, 8, 72>}, {pipeline_mode = #tpu.pipeline_mode<synchronous>, transform_indices = @transform_2, window_bounds = array<i64: 3, 8, 144>}, {pipeline_mode = #tpu.pipeline_mode<synchronous>, transform_indices = @transform_3, window_bounds = array<i64: 3, 8, 216>}, {pipeline_mode = #tpu.pipeline_mode<synchronous>, transform_indices = @transform_4, window_bounds = array<i64: 3, 8, 288>}, {pipeline_mode = #tpu.pipeline_mode<synchronous>, transform_indices = @transform_5, window_bounds = array<i64: 3, 8, 360>}, {pipeline_mode = #tpu.pipeline_mode<synchronous>, transform_indices = @transform_6, window_bounds = array<i64: 15, 8, 1>}, {pipeline_mode = #tpu.pipeline_mode<synchronous>, transform_indices = @transform_7, window_bounds = array<i64: 9, 8, 256>}, {transform_indices = @transform_8, window_bounds = array<i64: 1, 4, 256>}]} {
    %c0 = arith.constant 0 : index
    %c0_0 = arith.constant 0 : index
    %c0_1 = arith.constant 0 : index
    %0 = vector.load %arg1[%c0, %c0_0, %c0_1] : memref<1x8x256xf32, #tpu.memory_space<vmem>>, vector<1x8x256xf32>
    %1 = vector.shape_cast %0 : vector<1x8x256xf32> to vector<8x256xf32>
    %c17_i32 = arith.constant 17 : i32
    %2 = tpu.dynamic_rotate %1 by %c17_i32 dim 1 : vector<8x256xf32>, i32 -> vector<8x256xf32>
    %c0_2 = arith.constant 0 : index
    %c0_3 = arith.constant 0 : index
    %c0_4 = arith.constant 0 : index
    %3 = vector.load %arg8[%c0_2, %c0_3, %c0_4] : memref<9x8x256xf32, #tpu.memory_space<vmem>>, vector<1x8x256xf32>
    %4 = vector.shape_cast %3 : vector<1x8x256xf32> to vector<8x256xf32>
    %5 = arith.mulf %2, %4 : vector<8x256xf32>
    %6 = arith.truncf %5 : vector<8x256xf32> to vector<8x256xbf16>
    %c0_5 = arith.constant 0 : index
    %c0_6 = arith.constant 0 : index
    %7 = vector.load %arg10[%c0_5, %c0_6] : memref<360x256xbf16, #tpu.memory_space<vmem>>, vector<8x256xbf16>
    tpu.vector_store %arg10[%c0_5, %c0_6], %6 {strides = array<i32>} : memref<360x256xbf16, #tpu.memory_space<vmem>>, vector<8x256xbf16>,
    %c16_i32 = arith.constant 16 : i32
    %8 = tpu.dynamic_rotate %1 by %c16_i32 dim 1 : vector<8x256xf32>, i32 -> vector<8x256xf32>
    %c1 = arith.constant 1 : index
    %c0_7 = arith.constant 0 : index
    %c0_8 = arith.constant 0 : index
    %9 = vector.load %arg8[%c1, %c0_7, %c0_8] : memref<9x8x256xf32, #tpu.memory_space<vmem>>, vector<1x8x256xf32>
    %10 = vector.shape_cast %9 : vector<1x8x256xf32> to vector<8x256xf32>
    %11 = arith.mulf %8, %10 : vector<8x256xf32>
    %12 = arith.truncf %11 : vector<8x256xf32> to vector<8x256xbf16>
    %c8 = arith.constant 8 : index
    %c0_9 = arith.constant 0 : index
    %13 = vector.load %arg10[%c8, %c0_9] : memref<360x256xbf16, #tpu.memory_space<vmem>>, vector<8x256xbf16>
    tpu.vector_store %arg10[%c8, %c0_9], %12 {strides = array<i32>} : memref<360x256xbf16, #tpu.memory_space<vmem>>, vector<8x256xbf16>,
    %c15_i32 = arith.constant 15 : i32
    %14 = tpu.dynamic_rotate %1 by %c15_i32 dim 1 : vector<8x256xf32>, i32 -> vector<8x256xf32>
    %c2 = arith.constant 2 : index
    %c0_10 = arith.constant 0 : index
    %c0_11 = arith.constant 0 : index
    %15 = vector.load %arg8[%c2, %c0_10, %c0_11] : memref<9x8x256xf32, #tpu.memory_space<vmem>>, vector<1x8x256xf32>
    %16 = vector.shape_cast %15 : vector<1x8x256xf32> to vector<8x256xf32>
    %17 = arith.mulf %14, %16 : vector<8x256xf32>
    %18 = arith.truncf %17 : vector<8x256xf32> to vector<8x256xbf16>
    %c16 = arith.constant 16 : index
    %c0_12 = arith.constant 0 : index
    %19 = vector.load %arg10[%c16, %c0_12] : memref<360x256xbf16, #tpu.memory_space<vmem>>, vector<8x256xbf16>
    tpu.vector_store %arg10[%c16, %c0_12], %18 {strides = array<i32>} : memref<360x256xbf16, #tpu.memory_space<vmem>>, vector<8x256xbf16>,
    %c1_i32 = arith.constant 1 : i32
    %20 = tpu.dynamic_rotate %1 by %c1_i32 dim 1 : vector<8x256xf32>, i32 -> vector<8x256xf32>
    %c3 = arith.constant 3 : index
    %c0_13 = arith.constant 0 : index
    %c0_14 = arith.constant 0 : index
    %21 = vector.load %arg8[%c3, %c0_13, %c0_14] : memref<9x8x256xf32, #tpu.memory_space<vmem>>, vector<1x8x256xf32>
    %22 = vector.shape_cast %21 : vector<1x8x256xf32> to vector<8x256xf32>
    %23 = arith.mulf %20, %22 : vector<8x256xf32>
    %24 = arith.truncf %23 : vector<8x256xf32> to vector<8x256xbf16>
    %c24 = arith.constant 24 : index
    %c0_15 = arith.constant 0 : index
    %25 = vector.load %arg10[%c24, %c0_15] : memref<360x256xbf16, #tpu.memory_space<vmem>>, vector<8x256xbf16>
    tpu.vector_store %arg10[%c24, %c0_15], %24 {strides = array<i32>} : memref<360x256xbf16, #tpu.memory_space<vmem>>, vector<8x256xbf16>,
    %26 = arith.truncf %1 : vector<8x256xf32> to vector<8x256xbf16>
    %c32 = arith.constant 32 : index
    %c0_16 = arith.constant 0 : index
    %27 = vector.load %arg10[%c32, %c0_16] : memref<360x256xbf16, #tpu.memory_space<vmem>>, vector<8x256xbf16>
    tpu.vector_store %arg10[%c32, %c0_16], %26 {strides = array<i32>} : memref<360x256xbf16, #tpu.memory_space<vmem>>, vector<8x256xbf16>,
    %c255_i32 = arith.constant 255 : i32
    %28 = tpu.dynamic_rotate %1 by %c255_i32 dim 1 : vector<8x256xf32>, i32 -> vector<8x256xf32>
    %c5 = arith.constant 5 : index
    %c0_17 = arith.constant 0 : index
    %c0_18 = arith.constant 0 : index
    %29 = vector.load %arg8[%c5, %c0_17, %c0_18] : memref<9x8x256xf32, #tpu.memory_space<vmem>>, vector<1x8x256xf32>
    %30 = vector.shape_cast %29 : vector<1x8x256xf32> to vector<8x256xf32>
    %31 = arith.mulf %28, %30 : vector<8x256xf32>
    %32 = arith.truncf %31 : vector<8x256xf32> to vector<8x256xbf16>
    %c40 = arith.constant 40 : index
    %c0_19 = arith.constant 0 : index
    %33 = vector.load %arg10[%c40, %c0_19] : memref<360x256xbf16, #tpu.memory_space<vmem>>, vector<8x256xbf16>
    tpu.vector_store %arg10[%c40, %c0_19], %32 {strides = array<i32>} : memref<360x256xbf16, #tpu.memory_space<vmem>>, vector<8x256xbf16>,
    %c241_i32 = arith.constant 241 : i32
    %34 = tpu.dynamic_rotate %1 by %c241_i32 dim 1 : vector<8x256xf32>, i32 -> vector<8x256xf32>
    %c6 = arith.constant 6 : index
    %c0_20 = arith.constant 0 : index
    %c0_21 = arith.constant 0 : index
    %35 = vector.load %arg8[%c6, %c0_20, %c0_21] : memref<9x8x256xf32, #tpu.memory_space<vmem>>, vector<1x8x256xf32>
    %36 = vector.shape_cast %35 : vector<1x8x256xf32> to vector<8x256xf32>
    %37 = arith.mulf %34, %36 : vector<8x256xf32>
    %38 = arith.truncf %37 : vector<8x256xf32> to vector<8x256xbf16>
    %c48 = arith.constant 48 : index
    %c0_22 = arith.constant 0 : index
    %39 = vector.load %arg10[%c48, %c0_22] : memref<360x256xbf16, #tpu.memory_space<vmem>>, vector<8x256xbf16>
    tpu.vector_store %arg10[%c48, %c0_22], %38 {strides = array<i32>} : memref<360x256xbf16, #tpu.memory_space<vmem>>, vector<8x256xbf16>,
    %c240_i32 = arith.constant 240 : i32
    %40 = tpu.dynamic_rotate %1 by %c240_i32 dim 1 : vector<8x256xf32>, i32 -> vector<8x256xf32>
    %c7 = arith.constant 7 : index
    %c0_23 = arith.constant 0 : index
    %c0_24 = arith.constant 0 : index
    %41 = vector.load %arg8[%c7, %c0_23, %c0_24] : memref<9x8x256xf32, #tpu.memory_space<vmem>>, vector<1x8x256xf32>
    %42 = vector.shape_cast %41 : vector<1x8x256xf32> to vector<8x256xf32>
    %43 = arith.mulf %40, %42 : vector<8x256xf32>
    %44 = arith.truncf %43 : vector<8x256xf32> to vector<8x256xbf16>
    %c56 = arith.constant 56 : index
    %c0_25 = arith.constant 0 : index
    %45 = vector.load %arg10[%c56, %c0_25] : memref<360x256xbf16, #tpu.memory_space<vmem>>, vector<8x256xbf16>
    tpu.vector_store %arg10[%c56, %c0_25], %44 {strides = array<i32>} : memref<360x256xbf16, #tpu.memory_space<vmem>>, vector<8x256xbf16>,
    %c239_i32 = arith.constant 239 : i32
    %46 = tpu.dynamic_rotate %1 by %c239_i32 dim 1 : vector<8x256xf32>, i32 -> vector<8x256xf32>
    %c8_26 = arith.constant 8 : index
    %c0_27 = arith.constant 0 : index
    %c0_28 = arith.constant 0 : index
    %47 = vector.load %arg8[%c8_26, %c0_27, %c0_28] : memref<9x8x256xf32, #tpu.memory_space<vmem>>, vector<1x8x256xf32>
    %48 = vector.shape_cast %47 : vector<1x8x256xf32> to vector<8x256xf32>
    %49 = arith.mulf %46, %48 : vector<8x256xf32>
    %50 = arith.truncf %49 : vector<8x256xf32> to vector<8x256xbf16>
    %c64 = arith.constant 64 : index
    %c0_29 = arith.constant 0 : index
    %51 = vector.load %arg10[%c64, %c0_29] : memref<360x256xbf16, #tpu.memory_space<vmem>>, vector<8x256xbf16>
    tpu.vector_store %arg10[%c64, %c0_29], %50 {strides = array<i32>} : memref<360x256xbf16, #tpu.memory_space<vmem>>, vector<8x256xbf16>,
    %c0_30 = arith.constant 0 : index
    %c0_31 = arith.constant 0 : index
    %c0_32 = arith.constant 0 : index
    %52 = vector.load %arg2[%c0_30, %c0_31, %c0_32] : memref<3x8x72xbf16, #tpu.memory_space<vmem>>, vector<1x8x72xbf16>
    %53 = vector.shape_cast %52 : vector<1x8x72xbf16> to vector<8x72xbf16>
    %c0_33 = arith.constant 0 : index
    %c0_34 = arith.constant 0 : index
    %54 = vector.load %arg10[%c0_33, %c0_34] : memref<360x256xbf16, #tpu.memory_space<vmem>>, vector<72x256xbf16>
    %cst = arith.constant dense<0.000000e+00> : vector<8x256xf32>
    %55 = tpu.matmul %53, %54, %cst {dimension_numbers = #tpu.dot_dimension_numbers<[1], [0], [0], [1], [0, 0, 1, 1], [], []>} : vector<8x72xbf16>, vector<72x256xbf16>, vector<8x256xf32> -> vector<8x256xf32>
    %c0_35 = arith.constant 0 : index
    %c0_36 = arith.constant 0 : index
    %c0_37 = arith.constant 0 : index
    %56 = vector.load %arg7[%c0_35, %c0_36, %c0_37] : memref<15x8x1xf32, #tpu.memory_space<vmem>>, vector<1x8x1xf32>
    %57 = vector.shape_cast %56 : vector<1x8x1xf32> to vector<8x1xf32>
    %58 = vector.broadcast %57 : vector<8x1xf32> to vector<8x256xf32>
    %59 = arith.addf %55, %58 : vector<8x256xf32>
    %cst_38 = arith.constant 0.000000e+00 : f32
    %60 = vector.broadcast %cst_38 : f32 to vector<8x256xf32>
    %61 = arith.cmpf oge, %59, %60 : vector<8x256xf32>
    %cst_39 = arith.constant 2.000000e-01 : f32
    %62 = vector.broadcast %cst_39 : f32 to vector<8x256xf32>
    %63 = arith.mulf %62, %59 : vector<8x256xf32>
    %64 = arith.select %61, %59, %63 : vector<8x256xi1>, vector<8x256xf32>
    %c17_i32_40 = arith.constant 17 : i32
    %65 = tpu.dynamic_rotate %64 by %c17_i32_40 dim 1 : vector<8x256xf32>, i32 -> vector<8x256xf32>
    %c0_41 = arith.constant 0 : index
    %c0_42 = arith.constant 0 : index
    %c0_43 = arith.constant 0 : index
    %66 = vector.load %arg8[%c0_41, %c0_42, %c0_43] : memref<9x8x256xf32, #tpu.memory_space<vmem>>, vector<1x8x256xf32>
    %67 = vector.shape_cast %66 : vector<1x8x256xf32> to vector<8x256xf32>
    %68 = arith.mulf %65, %67 : vector<8x256xf32>
    %69 = arith.truncf %68 : vector<8x256xf32> to vector<8x256xbf16>
    %c72 = arith.constant 72 : index
    %c0_44 = arith.constant 0 : index
    %70 = vector.load %arg10[%c72, %c0_44] : memref<360x256xbf16, #tpu.memory_space<vmem>>, vector<8x256xbf16>
    tpu.vector_store %arg10[%c72, %c0_44], %69 {strides = array<i32>} : memref<360x256xbf16, #tpu.memory_space<vmem>>, vector<8x256xbf16>,
    %c16_i32_45 = arith.constant 16 : i32
    %71 = tpu.dynamic_rotate %64 by %c16_i32_45 dim 1 : vector<8x256xf32>, i32 -> vector<8x256xf32>
    %c1_46 = arith.constant 1 : index
    %c0_47 = arith.constant 0 : index
    %c0_48 = arith.constant 0 : index
    %72 = vector.load %arg8[%c1_46, %c0_47, %c0_48] : memref<9x8x256xf32, #tpu.memory_space<vmem>>, vector<1x8x256xf32>
    %73 = vector.shape_cast %72 : vector<1x8x256xf32> to vector<8x256xf32>
    %74 = arith.mulf %71, %73 : vector<8x256xf32>
    %75 = arith.truncf %74 : vector<8x256xf32> to vector<8x256xbf16>
    %c80 = arith.constant 80 : index
    %c0_49 = arith.constant 0 : index
    %76 = vector.load %arg10[%c80, %c0_49] : memref<360x256xbf16, #tpu.memory_space<vmem>>, vector<8x256xbf16>
    tpu.vector_store %arg10[%c80, %c0_49], %75 {strides = array<i32>} : memref<360x256xbf16, #tpu.memory_space<vmem>>, vector<8x256xbf16>,
    %c15_i32_50 = arith.constant 15 : i32
    %77 = tpu.dynamic_rotate %64 by %c15_i32_50 dim 1 : vector<8x256xf32>, i32 -> vector<8x256xf32>
    %c2_51 = arith.constant 2 : index
    %c0_52 = arith.constant 0 : index
    %c0_53 = arith.constant 0 : index
    %78 = vector.load %arg8[%c2_51, %c0_52, %c0_53] : memref<9x8x256xf32, #tpu.memory_space<vmem>>, vector<1x8x256xf32>
    %79 = vector.shape_cast %78 : vector<1x8x256xf32> to vector<8x256xf32>
    %80 = arith.mulf %77, %79 : vector<8x256xf32>
    %81 = arith.truncf %80 : vector<8x256xf32> to vector<8x256xbf16>
    %c88 = arith.constant 88 : index
    %c0_54 = arith.constant 0 : index
    %82 = vector.load %arg10[%c88, %c0_54] : memref<360x256xbf16, #tpu.memory_space<vmem>>, vector<8x256xbf16>
    tpu.vector_store %arg10[%c88, %c0_54], %81 {strides = array<i32>} : memref<360x256xbf16, #tpu.memory_space<vmem>>, vector<8x256xbf16>,
    %c1_i32_55 = arith.constant 1 : i32
    %83 = tpu.dynamic_rotate %64 by %c1_i32_55 dim 1 : vector<8x256xf32>, i32 -> vector<8x256xf32>
    %c3_56 = arith.constant 3 : index
    %c0_57 = arith.constant 0 : index
    %c0_58 = arith.constant 0 : index
    %84 = vector.load %arg8[%c3_56, %c0_57, %c0_58] : memref<9x8x256xf32, #tpu.memory_space<vmem>>, vector<1x8x256xf32>
    %85 = vector.shape_cast %84 : vector<1x8x256xf32> to vector<8x256xf32>
    %86 = arith.mulf %83, %85 : vector<8x256xf32>
    %87 = arith.truncf %86 : vector<8x256xf32> to vector<8x256xbf16>
    %c96 = arith.constant 96 : index
    %c0_59 = arith.constant 0 : index
    %88 = vector.load %arg10[%c96, %c0_59] : memref<360x256xbf16, #tpu.memory_space<vmem>>, vector<8x256xbf16>
    tpu.vector_store %arg10[%c96, %c0_59], %87 {strides = array<i32>} : memref<360x256xbf16, #tpu.memory_space<vmem>>, vector<8x256xbf16>,
    %89 = arith.truncf %64 : vector<8x256xf32> to vector<8x256xbf16>
    %c104 = arith.constant 104 : index
    %c0_60 = arith.constant 0 : index
    %90 = vector.load %arg10[%c104, %c0_60] : memref<360x256xbf16, #tpu.memory_space<vmem>>, vector<8x256xbf16>
    tpu.vector_store %arg10[%c104, %c0_60], %89 {strides = array<i32>} : memref<360x256xbf16, #tpu.memory_space<vmem>>, vector<8x256xbf16>,
    %c255_i32_61 = arith.constant 255 : i32
    %91 = tpu.dynamic_rotate %64 by %c255_i32_61 dim 1 : vector<8x256xf32>, i32 -> vector<8x256xf32>
    %c5_62 = arith.constant 5 : index
    %c0_63 = arith.constant 0 : index
    %c0_64 = arith.constant 0 : index
    %92 = vector.load %arg8[%c5_62, %c0_63, %c0_64] : memref<9x8x256xf32, #tpu.memory_space<vmem>>, vector<1x8x256xf32>
    %93 = vector.shape_cast %92 : vector<1x8x256xf32> to vector<8x256xf32>
    %94 = arith.mulf %91, %93 : vector<8x256xf32>
    %95 = arith.truncf %94 : vector<8x256xf32> to vector<8x256xbf16>
    %c112 = arith.constant 112 : index
    %c0_65 = arith.constant 0 : index
    %96 = vector.load %arg10[%c112, %c0_65] : memref<360x256xbf16, #tpu.memory_space<vmem>>, vector<8x256xbf16>
    tpu.vector_store %arg10[%c112, %c0_65], %95 {strides = array<i32>} : memref<360x256xbf16, #tpu.memory_space<vmem>>, vector<8x256xbf16>,
    %c241_i32_66 = arith.constant 241 : i32
    %97 = tpu.dynamic_rotate %64 by %c241_i32_66 dim 1 : vector<8x256xf32>, i32 -> vector<8x256xf32>
    %c6_67 = arith.constant 6 : index
    %c0_68 = arith.constant 0 : index
    %c0_69 = arith.constant 0 : index
    %98 = vector.load %arg8[%c6_67, %c0_68, %c0_69] : memref<9x8x256xf32, #tpu.memory_space<vmem>>, vector<1x8x256xf32>
    %99 = vector.shape_cast %98 : vector<1x8x256xf32> to vector<8x256xf32>
    %100 = arith.mulf %97, %99 : vector<8x256xf32>
    %101 = arith.truncf %100 : vector<8x256xf32> to vector<8x256xbf16>
    %c120 = arith.constant 120 : index
    %c0_70 = arith.constant 0 : index
    %102 = vector.load %arg10[%c120, %c0_70] : memref<360x256xbf16, #tpu.memory_space<vmem>>, vector<8x256xbf16>
    tpu.vector_store %arg10[%c120, %c0_70], %101 {strides = array<i32>} : memref<360x256xbf16, #tpu.memory_space<vmem>>, vector<8x256xbf16>,
    %c240_i32_71 = arith.constant 240 : i32
    %103 = tpu.dynamic_rotate %64 by %c240_i32_71 dim 1 : vector<8x256xf32>, i32 -> vector<8x256xf32>
    %c7_72 = arith.constant 7 : index
    %c0_73 = arith.constant 0 : index
    %c0_74 = arith.constant 0 : index
    %104 = vector.load %arg8[%c7_72, %c0_73, %c0_74] : memref<9x8x256xf32, #tpu.memory_space<vmem>>, vector<1x8x256xf32>
    %105 = vector.shape_cast %104 : vector<1x8x256xf32> to vector<8x256xf32>
    %106 = arith.mulf %103, %105 : vector<8x256xf32>
    %107 = arith.truncf %106 : vector<8x256xf32> to vector<8x256xbf16>
    %c128 = arith.constant 128 : index
    %c0_75 = arith.constant 0 : index
    %108 = vector.load %arg10[%c128, %c0_75] : memref<360x256xbf16, #tpu.memory_space<vmem>>, vector<8x256xbf16>
    tpu.vector_store %arg10[%c128, %c0_75], %107 {strides = array<i32>} : memref<360x256xbf16, #tpu.memory_space<vmem>>, vector<8x256xbf16>,
    %c239_i32_76 = arith.constant 239 : i32
    %109 = tpu.dynamic_rotate %64 by %c239_i32_76 dim 1 : vector<8x256xf32>, i32 -> vector<8x256xf32>
    %c8_77 = arith.constant 8 : index
    %c0_78 = arith.constant 0 : index
    %c0_79 = arith.constant 0 : index
    %110 = vector.load %arg8[%c8_77, %c0_78, %c0_79] : memref<9x8x256xf32, #tpu.memory_space<vmem>>, vector<1x8x256xf32>
    %111 = vector.shape_cast %110 : vector<1x8x256xf32> to vector<8x256xf32>
    %112 = arith.mulf %109, %111 : vector<8x256xf32>
    %113 = arith.truncf %112 : vector<8x256xf32> to vector<8x256xbf16>
    %c136 = arith.constant 136 : index
    %c0_80 = arith.constant 0 : index
    %114 = vector.load %arg10[%c136, %c0_80] : memref<360x256xbf16, #tpu.memory_space<vmem>>, vector<8x256xbf16>
    tpu.vector_store %arg10[%c136, %c0_80], %113 {strides = array<i32>} : memref<360x256xbf16, #tpu.memory_space<vmem>>, vector<8x256xbf16>,
    %c0_81 = arith.constant 0 : index
    %c0_82 = arith.constant 0 : index
    %c0_83 = arith.constant 0 : index
    %115 = vector.load %arg3[%c0_81, %c0_82, %c0_83] : memref<3x8x144xbf16, #tpu.memory_space<vmem>>, vector<1x8x144xbf16>
    %116 = vector.shape_cast %115 : vector<1x8x144xbf16> to vector<8x144xbf16>
    %c0_84 = arith.constant 0 : index
    %c0_85 = arith.constant 0 : index
    %117 = vector.load %arg10[%c0_84, %c0_85] : memref<360x256xbf16, #tpu.memory_space<vmem>>, vector<144x256xbf16>
    %cst_86 = arith.constant dense<0.000000e+00> : vector<8x256xf32>
    %118 = tpu.matmul %116, %117, %cst_86 {dimension_numbers = #tpu.dot_dimension_numbers<[1], [0], [0], [1], [0, 0, 1, 1], [], []>} : vector<8x144xbf16>, vector<144x256xbf16>, vector<8x256xf32> -> vector<8x256xf32>
    %c1_87 = arith.constant 1 : index
    %c0_88 = arith.constant 0 : index
    %c0_89 = arith.constant 0 : index
    %119 = vector.load %arg7[%c1_87, %c0_88, %c0_89] : memref<15x8x1xf32, #tpu.memory_space<vmem>>, vector<1x8x1xf32>
    %120 = vector.shape_cast %119 : vector<1x8x1xf32> to vector<8x1xf32>
    %121 = vector.broadcast %120 : vector<8x1xf32> to vector<8x256xf32>
    %122 = arith.addf %118, %121 : vector<8x256xf32>
    %cst_90 = arith.constant 0.000000e+00 : f32
    %123 = vector.broadcast %cst_90 : f32 to vector<8x256xf32>
    %124 = arith.cmpf oge, %122, %123 : vector<8x256xf32>
    %cst_91 = arith.constant 2.000000e-01 : f32
    %125 = vector.broadcast %cst_91 : f32 to vector<8x256xf32>
    %126 = arith.mulf %125, %122 : vector<8x256xf32>
    %127 = arith.select %124, %122, %126 : vector<8x256xi1>, vector<8x256xf32>
    %c17_i32_92 = arith.constant 17 : i32
    %128 = tpu.dynamic_rotate %127 by %c17_i32_92 dim 1 : vector<8x256xf32>, i32 -> vector<8x256xf32>
    %c0_93 = arith.constant 0 : index
    %c0_94 = arith.constant 0 : index
    %c0_95 = arith.constant 0 : index
    %129 = vector.load %arg8[%c0_93, %c0_94, %c0_95] : memref<9x8x256xf32, #tpu.memory_space<vmem>>, vector<1x8x256xf32>
    %130 = vector.shape_cast %129 : vector<1x8x256xf32> to vector<8x256xf32>
    %131 = arith.mulf %128, %130 : vector<8x256xf32>
    %132 = arith.truncf %131 : vector<8x256xf32> to vector<8x256xbf16>
    %c144 = arith.constant 144 : index
    %c0_96 = arith.constant 0 : index
    %133 = vector.load %arg10[%c144, %c0_96] : memref<360x256xbf16, #tpu.memory_space<vmem>>, vector<8x256xbf16>
    tpu.vector_store %arg10[%c144, %c0_96], %132 {strides = array<i32>} : memref<360x256xbf16, #tpu.memory_space<vmem>>, vector<8x256xbf16>,
    %c16_i32_97 = arith.constant 16 : i32
    %134 = tpu.dynamic_rotate %127 by %c16_i32_97 dim 1 : vector<8x256xf32>, i32 -> vector<8x256xf32>
    %c1_98 = arith.constant 1 : index
    %c0_99 = arith.constant 0 : index
    %c0_100 = arith.constant 0 : index
    %135 = vector.load %arg8[%c1_98, %c0_99, %c0_100] : memref<9x8x256xf32, #tpu.memory_space<vmem>>, vector<1x8x256xf32>
    %136 = vector.shape_cast %135 : vector<1x8x256xf32> to vector<8x256xf32>
    %137 = arith.mulf %134, %136 : vector<8x256xf32>
    %138 = arith.truncf %137 : vector<8x256xf32> to vector<8x256xbf16>
    %c152 = arith.constant 152 : index
    %c0_101 = arith.constant 0 : index
    %139 = vector.load %arg10[%c152, %c0_101] : memref<360x256xbf16, #tpu.memory_space<vmem>>, vector<8x256xbf16>
    tpu.vector_store %arg10[%c152, %c0_101], %138 {strides = array<i32>} : memref<360x256xbf16, #tpu.memory_space<vmem>>, vector<8x256xbf16>,
    %c15_i32_102 = arith.constant 15 : i32
    %140 = tpu.dynamic_rotate %127 by %c15_i32_102 dim 1 : vector<8x256xf32>, i32 -> vector<8x256xf32>
    %c2_103 = arith.constant 2 : index
    %c0_104 = arith.constant 0 : index
    %c0_105 = arith.constant 0 : index
    %141 = vector.load %arg8[%c2_103, %c0_104, %c0_105] : memref<9x8x256xf32, #tpu.memory_space<vmem>>, vector<1x8x256xf32>
    %142 = vector.shape_cast %141 : vector<1x8x256xf32> to vector<8x256xf32>
    %143 = arith.mulf %140, %142 : vector<8x256xf32>
    %144 = arith.truncf %143 : vector<8x256xf32> to vector<8x256xbf16>
    %c160 = arith.constant 160 : index
    %c0_106 = arith.constant 0 : index
    %145 = vector.load %arg10[%c160, %c0_106] : memref<360x256xbf16, #tpu.memory_space<vmem>>, vector<8x256xbf16>
    tpu.vector_store %arg10[%c160, %c0_106], %144 {strides = array<i32>} : memref<360x256xbf16, #tpu.memory_space<vmem>>, vector<8x256xbf16>,
    %c1_i32_107 = arith.constant 1 : i32
    %146 = tpu.dynamic_rotate %127 by %c1_i32_107 dim 1 : vector<8x256xf32>, i32 -> vector<8x256xf32>
    %c3_108 = arith.constant 3 : index
    %c0_109 = arith.constant 0 : index
    %c0_110 = arith.constant 0 : index
    %147 = vector.load %arg8[%c3_108, %c0_109, %c0_110] : memref<9x8x256xf32, #tpu.memory_space<vmem>>, vector<1x8x256xf32>
    %148 = vector.shape_cast %147 : vector<1x8x256xf32> to vector<8x256xf32>
    %149 = arith.mulf %146, %148 : vector<8x256xf32>
    %150 = arith.truncf %149 : vector<8x256xf32> to vector<8x256xbf16>
    %c168 = arith.constant 168 : index
    %c0_111 = arith.constant 0 : index
    %151 = vector.load %arg10[%c168, %c0_111] : memref<360x256xbf16, #tpu.memory_space<vmem>>, vector<8x256xbf16>
    tpu.vector_store %arg10[%c168, %c0_111], %150 {strides = array<i32>} : memref<360x256xbf16, #tpu.memory_space<vmem>>, vector<8x256xbf16>,
    %152 = arith.truncf %127 : vector<8x256xf32> to vector<8x256xbf16>
    %c176 = arith.constant 176 : index
    %c0_112 = arith.constant 0 : index
    %153 = vector.load %arg10[%c176, %c0_112] : memref<360x256xbf16, #tpu.memory_space<vmem>>, vector<8x256xbf16>
    tpu.vector_store %arg10[%c176, %c0_112], %152 {strides = array<i32>} : memref<360x256xbf16, #tpu.memory_space<vmem>>, vector<8x256xbf16>,
    %c255_i32_113 = arith.constant 255 : i32
    %154 = tpu.dynamic_rotate %127 by %c255_i32_113 dim 1 : vector<8x256xf32>, i32 -> vector<8x256xf32>
    %c5_114 = arith.constant 5 : index
    %c0_115 = arith.constant 0 : index
    %c0_116 = arith.constant 0 : index
    %155 = vector.load %arg8[%c5_114, %c0_115, %c0_116] : memref<9x8x256xf32, #tpu.memory_space<vmem>>, vector<1x8x256xf32>
    %156 = vector.shape_cast %155 : vector<1x8x256xf32> to vector<8x256xf32>
    %157 = arith.mulf %154, %156 : vector<8x256xf32>
    %158 = arith.truncf %157 : vector<8x256xf32> to vector<8x256xbf16>
    %c184 = arith.constant 184 : index
    %c0_117 = arith.constant 0 : index
    %159 = vector.load %arg10[%c184, %c0_117] : memref<360x256xbf16, #tpu.memory_space<vmem>>, vector<8x256xbf16>
    tpu.vector_store %arg10[%c184, %c0_117], %158 {strides = array<i32>} : memref<360x256xbf16, #tpu.memory_space<vmem>>, vector<8x256xbf16>,
    %c241_i32_118 = arith.constant 241 : i32
    %160 = tpu.dynamic_rotate %127 by %c241_i32_118 dim 1 : vector<8x256xf32>, i32 -> vector<8x256xf32>
    %c6_119 = arith.constant 6 : index
    %c0_120 = arith.constant 0 : index
    %c0_121 = arith.constant 0 : index
    %161 = vector.load %arg8[%c6_119, %c0_120, %c0_121] : memref<9x8x256xf32, #tpu.memory_space<vmem>>, vector<1x8x256xf32>
    %162 = vector.shape_cast %161 : vector<1x8x256xf32> to vector<8x256xf32>
    %163 = arith.mulf %160, %162 : vector<8x256xf32>
    %164 = arith.truncf %163 : vector<8x256xf32> to vector<8x256xbf16>
    %c192 = arith.constant 192 : index
    %c0_122 = arith.constant 0 : index
    %165 = vector.load %arg10[%c192, %c0_122] : memref<360x256xbf16, #tpu.memory_space<vmem>>, vector<8x256xbf16>
    tpu.vector_store %arg10[%c192, %c0_122], %164 {strides = array<i32>} : memref<360x256xbf16, #tpu.memory_space<vmem>>, vector<8x256xbf16>,
    %c240_i32_123 = arith.constant 240 : i32
    %166 = tpu.dynamic_rotate %127 by %c240_i32_123 dim 1 : vector<8x256xf32>, i32 -> vector<8x256xf32>
    %c7_124 = arith.constant 7 : index
    %c0_125 = arith.constant 0 : index
    %c0_126 = arith.constant 0 : index
    %167 = vector.load %arg8[%c7_124, %c0_125, %c0_126] : memref<9x8x256xf32, #tpu.memory_space<vmem>>, vector<1x8x256xf32>
    %168 = vector.shape_cast %167 : vector<1x8x256xf32> to vector<8x256xf32>
    %169 = arith.mulf %166, %168 : vector<8x256xf32>
    %170 = arith.truncf %169 : vector<8x256xf32> to vector<8x256xbf16>
    %c200 = arith.constant 200 : index
    %c0_127 = arith.constant 0 : index
    %171 = vector.load %arg10[%c200, %c0_127] : memref<360x256xbf16, #tpu.memory_space<vmem>>, vector<8x256xbf16>
    tpu.vector_store %arg10[%c200, %c0_127], %170 {strides = array<i32>} : memref<360x256xbf16, #tpu.memory_space<vmem>>, vector<8x256xbf16>,
    %c239_i32_128 = arith.constant 239 : i32
    %172 = tpu.dynamic_rotate %127 by %c239_i32_128 dim 1 : vector<8x256xf32>, i32 -> vector<8x256xf32>
    %c8_129 = arith.constant 8 : index
    %c0_130 = arith.constant 0 : index
    %c0_131 = arith.constant 0 : index
    %173 = vector.load %arg8[%c8_129, %c0_130, %c0_131] : memref<9x8x256xf32, #tpu.memory_space<vmem>>, vector<1x8x256xf32>
    %174 = vector.shape_cast %173 : vector<1x8x256xf32> to vector<8x256xf32>
    %175 = arith.mulf %172, %174 : vector<8x256xf32>
    %176 = arith.truncf %175 : vector<8x256xf32> to vector<8x256xbf16>
    %c208 = arith.constant 208 : index
    %c0_132 = arith.constant 0 : index
    %177 = vector.load %arg10[%c208, %c0_132] : memref<360x256xbf16, #tpu.memory_space<vmem>>, vector<8x256xbf16>
    tpu.vector_store %arg10[%c208, %c0_132], %176 {strides = array<i32>} : memref<360x256xbf16, #tpu.memory_space<vmem>>, vector<8x256xbf16>,
    %c0_133 = arith.constant 0 : index
    %c0_134 = arith.constant 0 : index
    %c0_135 = arith.constant 0 : index
    %178 = vector.load %arg4[%c0_133, %c0_134, %c0_135] : memref<3x8x216xbf16, #tpu.memory_space<vmem>>, vector<1x8x216xbf16>
    %179 = vector.shape_cast %178 : vector<1x8x216xbf16> to vector<8x216xbf16>
    %c0_136 = arith.constant 0 : index
    %c0_137 = arith.constant 0 : index
    %180 = vector.load %arg10[%c0_136, %c0_137] : memref<360x256xbf16, #tpu.memory_space<vmem>>, vector<216x256xbf16>
    %cst_138 = arith.constant dense<0.000000e+00> : vector<8x256xf32>
    %181 = tpu.matmul %179, %180, %cst_138 {dimension_numbers = #tpu.dot_dimension_numbers<[1], [0], [0], [1], [0, 0, 1, 1], [], []>} : vector<8x216xbf16>, vector<216x256xbf16>, vector<8x256xf32> -> vector<8x256xf32>
    %c2_139 = arith.constant 2 : index
    %c0_140 = arith.constant 0 : index
    %c0_141 = arith.constant 0 : index
    %182 = vector.load %arg7[%c2_139, %c0_140, %c0_141] : memref<15x8x1xf32, #tpu.memory_space<vmem>>, vector<1x8x1xf32>
    %183 = vector.shape_cast %182 : vector<1x8x1xf32> to vector<8x1xf32>
    %184 = vector.broadcast %183 : vector<8x1xf32> to vector<8x256xf32>
    %185 = arith.addf %181, %184 : vector<8x256xf32>
    %cst_142 = arith.constant 0.000000e+00 : f32
    %186 = vector.broadcast %cst_142 : f32 to vector<8x256xf32>
    %187 = arith.cmpf oge, %185, %186 : vector<8x256xf32>
    %cst_143 = arith.constant 2.000000e-01 : f32
    %188 = vector.broadcast %cst_143 : f32 to vector<8x256xf32>
    %189 = arith.mulf %188, %185 : vector<8x256xf32>
    %190 = arith.select %187, %185, %189 : vector<8x256xi1>, vector<8x256xf32>
    %c17_i32_144 = arith.constant 17 : i32
    %191 = tpu.dynamic_rotate %190 by %c17_i32_144 dim 1 : vector<8x256xf32>, i32 -> vector<8x256xf32>
    %c0_145 = arith.constant 0 : index
    %c0_146 = arith.constant 0 : index
    %c0_147 = arith.constant 0 : index
    %192 = vector.load %arg8[%c0_145, %c0_146, %c0_147] : memref<9x8x256xf32, #tpu.memory_space<vmem>>, vector<1x8x256xf32>
    %193 = vector.shape_cast %192 : vector<1x8x256xf32> to vector<8x256xf32>
    %194 = arith.mulf %191, %193 : vector<8x256xf32>
    %195 = arith.truncf %194 : vector<8x256xf32> to vector<8x256xbf16>
    %c216 = arith.constant 216 : index
    %c0_148 = arith.constant 0 : index
    %196 = vector.load %arg10[%c216, %c0_148] : memref<360x256xbf16, #tpu.memory_space<vmem>>, vector<8x256xbf16>
    tpu.vector_store %arg10[%c216, %c0_148], %195 {strides = array<i32>} : memref<360x256xbf16, #tpu.memory_space<vmem>>, vector<8x256xbf16>,
    %c16_i32_149 = arith.constant 16 : i32
    %197 = tpu.dynamic_rotate %190 by %c16_i32_149 dim 1 : vector<8x256xf32>, i32 -> vector<8x256xf32>
    %c1_150 = arith.constant 1 : index
    %c0_151 = arith.constant 0 : index
    %c0_152 = arith.constant 0 : index
    %198 = vector.load %arg8[%c1_150, %c0_151, %c0_152] : memref<9x8x256xf32, #tpu.memory_space<vmem>>, vector<1x8x256xf32>
    %199 = vector.shape_cast %198 : vector<1x8x256xf32> to vector<8x256xf32>
    %200 = arith.mulf %197, %199 : vector<8x256xf32>
    %201 = arith.truncf %200 : vector<8x256xf32> to vector<8x256xbf16>
    %c224 = arith.constant 224 : index
    %c0_153 = arith.constant 0 : index
    %202 = vector.load %arg10[%c224, %c0_153] : memref<360x256xbf16, #tpu.memory_space<vmem>>, vector<8x256xbf16>
    tpu.vector_store %arg10[%c224, %c0_153], %201 {strides = array<i32>} : memref<360x256xbf16, #tpu.memory_space<vmem>>, vector<8x256xbf16>,
    %c15_i32_154 = arith.constant 15 : i32
    %203 = tpu.dynamic_rotate %190 by %c15_i32_154 dim 1 : vector<8x256xf32>, i32 -> vector<8x256xf32>
    %c2_155 = arith.constant 2 : index
    %c0_156 = arith.constant 0 : index
    %c0_157 = arith.constant 0 : index
    %204 = vector.load %arg8[%c2_155, %c0_156, %c0_157] : memref<9x8x256xf32, #tpu.memory_space<vmem>>, vector<1x8x256xf32>
    %205 = vector.shape_cast %204 : vector<1x8x256xf32> to vector<8x256xf32>
    %206 = arith.mulf %203, %205 : vector<8x256xf32>
    %207 = arith.truncf %206 : vector<8x256xf32> to vector<8x256xbf16>
    %c232 = arith.constant 232 : index
    %c0_158 = arith.constant 0 : index
    %208 = vector.load %arg10[%c232, %c0_158] : memref<360x256xbf16, #tpu.memory_space<vmem>>, vector<8x256xbf16>
    tpu.vector_store %arg10[%c232, %c0_158], %207 {strides = array<i32>} : memref<360x256xbf16, #tpu.memory_space<vmem>>, vector<8x256xbf16>,
    %c1_i32_159 = arith.constant 1 : i32
    %209 = tpu.dynamic_rotate %190 by %c1_i32_159 dim 1 : vector<8x256xf32>, i32 -> vector<8x256xf32>
    %c3_160 = arith.constant 3 : index
    %c0_161 = arith.constant 0 : index
    %c0_162 = arith.constant 0 : index
    %210 = vector.load %arg8[%c3_160, %c0_161, %c0_162] : memref<9x8x256xf32, #tpu.memory_space<vmem>>, vector<1x8x256xf32>
    %211 = vector.shape_cast %210 : vector<1x8x256xf32> to vector<8x256xf32>
    %212 = arith.mulf %209, %211 : vector<8x256xf32>
    %213 = arith.truncf %212 : vector<8x256xf32> to vector<8x256xbf16>
    %c240 = arith.constant 240 : index
    %c0_163 = arith.constant 0 : index
    %214 = vector.load %arg10[%c240, %c0_163] : memref<360x256xbf16, #tpu.memory_space<vmem>>, vector<8x256xbf16>
    tpu.vector_store %arg10[%c240, %c0_163], %213 {strides = array<i32>} : memref<360x256xbf16, #tpu.memory_space<vmem>>, vector<8x256xbf16>,
    %215 = arith.truncf %190 : vector<8x256xf32> to vector<8x256xbf16>
    %c248 = arith.constant 248 : index
    %c0_164 = arith.constant 0 : index
    %216 = vector.load %arg10[%c248, %c0_164] : memref<360x256xbf16, #tpu.memory_space<vmem>>, vector<8x256xbf16>
    tpu.vector_store %arg10[%c248, %c0_164], %215 {strides = array<i32>} : memref<360x256xbf16, #tpu.memory_space<vmem>>, vector<8x256xbf16>,
    %c255_i32_165 = arith.constant 255 : i32
    %217 = tpu.dynamic_rotate %190 by %c255_i32_165 dim 1 : vector<8x256xf32>, i32 -> vector<8x256xf32>
    %c5_166 = arith.constant 5 : index
    %c0_167 = arith.constant 0 : index
    %c0_168 = arith.constant 0 : index
    %218 = vector.load %arg8[%c5_166, %c0_167, %c0_168] : memref<9x8x256xf32, #tpu.memory_space<vmem>>, vector<1x8x256xf32>
    %219 = vector.shape_cast %218 : vector<1x8x256xf32> to vector<8x256xf32>
    %220 = arith.mulf %217, %219 : vector<8x256xf32>
    %221 = arith.truncf %220 : vector<8x256xf32> to vector<8x256xbf16>
    %c256 = arith.constant 256 : index
    %c0_169 = arith.constant 0 : index
    %222 = vector.load %arg10[%c256, %c0_169] : memref<360x256xbf16, #tpu.memory_space<vmem>>, vector<8x256xbf16>
    tpu.vector_store %arg10[%c256, %c0_169], %221 {strides = array<i32>} : memref<360x256xbf16, #tpu.memory_space<vmem>>, vector<8x256xbf16>,
    %c241_i32_170 = arith.constant 241 : i32
    %223 = tpu.dynamic_rotate %190 by %c241_i32_170 dim 1 : vector<8x256xf32>, i32 -> vector<8x256xf32>
    %c6_171 = arith.constant 6 : index
    %c0_172 = arith.constant 0 : index
    %c0_173 = arith.constant 0 : index
    %224 = vector.load %arg8[%c6_171, %c0_172, %c0_173] : memref<9x8x256xf32, #tpu.memory_space<vmem>>, vector<1x8x256xf32>
    %225 = vector.shape_cast %224 : vector<1x8x256xf32> to vector<8x256xf32>
    %226 = arith.mulf %223, %225 : vector<8x256xf32>
    %227 = arith.truncf %226 : vector<8x256xf32> to vector<8x256xbf16>
    %c264 = arith.constant 264 : index
    %c0_174 = arith.constant 0 : index
    %228 = vector.load %arg10[%c264, %c0_174] : memref<360x256xbf16, #tpu.memory_space<vmem>>, vector<8x256xbf16>
    tpu.vector_store %arg10[%c264, %c0_174], %227 {strides = array<i32>} : memref<360x256xbf16, #tpu.memory_space<vmem>>, vector<8x256xbf16>,
    %c240_i32_175 = arith.constant 240 : i32
    %229 = tpu.dynamic_rotate %190 by %c240_i32_175 dim 1 : vector<8x256xf32>, i32 -> vector<8x256xf32>
    %c7_176 = arith.constant 7 : index
    %c0_177 = arith.constant 0 : index
    %c0_178 = arith.constant 0 : index
    %230 = vector.load %arg8[%c7_176, %c0_177, %c0_178] : memref<9x8x256xf32, #tpu.memory_space<vmem>>, vector<1x8x256xf32>
    %231 = vector.shape_cast %230 : vector<1x8x256xf32> to vector<8x256xf32>
    %232 = arith.mulf %229, %231 : vector<8x256xf32>
    %233 = arith.truncf %232 : vector<8x256xf32> to vector<8x256xbf16>
    %c272 = arith.constant 272 : index
    %c0_179 = arith.constant 0 : index
    %234 = vector.load %arg10[%c272, %c0_179] : memref<360x256xbf16, #tpu.memory_space<vmem>>, vector<8x256xbf16>
    tpu.vector_store %arg10[%c272, %c0_179], %233 {strides = array<i32>} : memref<360x256xbf16, #tpu.memory_space<vmem>>, vector<8x256xbf16>,
    %c239_i32_180 = arith.constant 239 : i32
    %235 = tpu.dynamic_rotate %190 by %c239_i32_180 dim 1 : vector<8x256xf32>, i32 -> vector<8x256xf32>
    %c8_181 = arith.constant 8 : index
    %c0_182 = arith.constant 0 : index
    %c0_183 = arith.constant 0 : index
    %236 = vector.load %arg8[%c8_181, %c0_182, %c0_183] : memref<9x8x256xf32, #tpu.memory_space<vmem>>, vector<1x8x256xf32>
    %237 = vector.shape_cast %236 : vector<1x8x256xf32> to vector<8x256xf32>
    %238 = arith.mulf %235, %237 : vector<8x256xf32>
    %239 = arith.truncf %238 : vector<8x256xf32> to vector<8x256xbf16>
    %c280 = arith.constant 280 : index
    %c0_184 = arith.constant 0 : index
    %240 = vector.load %arg10[%c280, %c0_184] : memref<360x256xbf16, #tpu.memory_space<vmem>>, vector<8x256xbf16>
    tpu.vector_store %arg10[%c280, %c0_184], %239 {strides = array<i32>} : memref<360x256xbf16, #tpu.memory_space<vmem>>, vector<8x256xbf16>,
    %c0_185 = arith.constant 0 : index
    %c0_186 = arith.constant 0 : index
    %c0_187 = arith.constant 0 : index
    %241 = vector.load %arg5[%c0_185, %c0_186, %c0_187] : memref<3x8x288xbf16, #tpu.memory_space<vmem>>, vector<1x8x288xbf16>
    %242 = vector.shape_cast %241 : vector<1x8x288xbf16> to vector<8x288xbf16>
    %c0_188 = arith.constant 0 : index
    %c0_189 = arith.constant 0 : index
    %243 = vector.load %arg10[%c0_188, %c0_189] : memref<360x256xbf16, #tpu.memory_space<vmem>>, vector<288x256xbf16>
    %cst_190 = arith.constant dense<0.000000e+00> : vector<8x256xf32>
    %244 = tpu.matmul %242, %243, %cst_190 {dimension_numbers = #tpu.dot_dimension_numbers<[1], [0], [0], [1], [0, 0, 1, 1], [], []>} : vector<8x288xbf16>, vector<288x256xbf16>, vector<8x256xf32> -> vector<8x256xf32>
    %c3_191 = arith.constant 3 : index
    %c0_192 = arith.constant 0 : index
    %c0_193 = arith.constant 0 : index
    %245 = vector.load %arg7[%c3_191, %c0_192, %c0_193] : memref<15x8x1xf32, #tpu.memory_space<vmem>>, vector<1x8x1xf32>
    %246 = vector.shape_cast %245 : vector<1x8x1xf32> to vector<8x1xf32>
    %247 = vector.broadcast %246 : vector<8x1xf32> to vector<8x256xf32>
    %248 = arith.addf %244, %247 : vector<8x256xf32>
    %cst_194 = arith.constant 0.000000e+00 : f32
    %249 = vector.broadcast %cst_194 : f32 to vector<8x256xf32>
    %250 = arith.cmpf oge, %248, %249 : vector<8x256xf32>
    %cst_195 = arith.constant 2.000000e-01 : f32
    %251 = vector.broadcast %cst_195 : f32 to vector<8x256xf32>
    %252 = arith.mulf %251, %248 : vector<8x256xf32>
    %253 = arith.select %250, %248, %252 : vector<8x256xi1>, vector<8x256xf32>
    %c17_i32_196 = arith.constant 17 : i32
    %254 = tpu.dynamic_rotate %253 by %c17_i32_196 dim 1 : vector<8x256xf32>, i32 -> vector<8x256xf32>
    %c0_197 = arith.constant 0 : index
    %c0_198 = arith.constant 0 : index
    %c0_199 = arith.constant 0 : index
    %255 = vector.load %arg8[%c0_197, %c0_198, %c0_199] : memref<9x8x256xf32, #tpu.memory_space<vmem>>, vector<1x8x256xf32>
    %256 = vector.shape_cast %255 : vector<1x8x256xf32> to vector<8x256xf32>
    %257 = arith.mulf %254, %256 : vector<8x256xf32>
    %258 = arith.truncf %257 : vector<8x256xf32> to vector<8x256xbf16>
    %c288 = arith.constant 288 : index
    %c0_200 = arith.constant 0 : index
    %259 = vector.load %arg10[%c288, %c0_200] : memref<360x256xbf16, #tpu.memory_space<vmem>>, vector<8x256xbf16>
    tpu.vector_store %arg10[%c288, %c0_200], %258 {strides = array<i32>} : memref<360x256xbf16, #tpu.memory_space<vmem>>, vector<8x256xbf16>,
    %c16_i32_201 = arith.constant 16 : i32
    %260 = tpu.dynamic_rotate %253 by %c16_i32_201 dim 1 : vector<8x256xf32>, i32 -> vector<8x256xf32>
    %c1_202 = arith.constant 1 : index
    %c0_203 = arith.constant 0 : index
    %c0_204 = arith.constant 0 : index
    %261 = vector.load %arg8[%c1_202, %c0_203, %c0_204] : memref<9x8x256xf32, #tpu.memory_space<vmem>>, vector<1x8x256xf32>
    %262 = vector.shape_cast %261 : vector<1x8x256xf32> to vector<8x256xf32>
    %263 = arith.mulf %260, %262 : vector<8x256xf32>
    %264 = arith.truncf %263 : vector<8x256xf32> to vector<8x256xbf16>
    %c296 = arith.constant 296 : index
    %c0_205 = arith.constant 0 : index
    %265 = vector.load %arg10[%c296, %c0_205] : memref<360x256xbf16, #tpu.memory_space<vmem>>, vector<8x256xbf16>
    tpu.vector_store %arg10[%c296, %c0_205], %264 {strides = array<i32>} : memref<360x256xbf16, #tpu.memory_space<vmem>>, vector<8x256xbf16>,
    %c15_i32_206 = arith.constant 15 : i32
    %266 = tpu.dynamic_rotate %253 by %c15_i32_206 dim 1 : vector<8x256xf32>, i32 -> vector<8x256xf32>
    %c2_207 = arith.constant 2 : index
    %c0_208 = arith.constant 0 : index
    %c0_209 = arith.constant 0 : index
    %267 = vector.load %arg8[%c2_207, %c0_208, %c0_209] : memref<9x8x256xf32, #tpu.memory_space<vmem>>, vector<1x8x256xf32>
    %268 = vector.shape_cast %267 : vector<1x8x256xf32> to vector<8x256xf32>
    %269 = arith.mulf %266, %268 : vector<8x256xf32>
    %270 = arith.truncf %269 : vector<8x256xf32> to vector<8x256xbf16>
    %c304 = arith.constant 304 : index
    %c0_210 = arith.constant 0 : index
    %271 = vector.load %arg10[%c304, %c0_210] : memref<360x256xbf16, #tpu.memory_space<vmem>>, vector<8x256xbf16>
    tpu.vector_store %arg10[%c304, %c0_210], %270 {strides = array<i32>} : memref<360x256xbf16, #tpu.memory_space<vmem>>, vector<8x256xbf16>,
    %c1_i32_211 = arith.constant 1 : i32
    %272 = tpu.dynamic_rotate %253 by %c1_i32_211 dim 1 : vector<8x256xf32>, i32 -> vector<8x256xf32>
    %c3_212 = arith.constant 3 : index
    %c0_213 = arith.constant 0 : index
    %c0_214 = arith.constant 0 : index
    %273 = vector.load %arg8[%c3_212, %c0_213, %c0_214] : memref<9x8x256xf32, #tpu.memory_space<vmem>>, vector<1x8x256xf32>
    %274 = vector.shape_cast %273 : vector<1x8x256xf32> to vector<8x256xf32>
    %275 = arith.mulf %272, %274 : vector<8x256xf32>
    %276 = arith.truncf %275 : vector<8x256xf32> to vector<8x256xbf16>
    %c312 = arith.constant 312 : index
    %c0_215 = arith.constant 0 : index
    %277 = vector.load %arg10[%c312, %c0_215] : memref<360x256xbf16, #tpu.memory_space<vmem>>, vector<8x256xbf16>
    tpu.vector_store %arg10[%c312, %c0_215], %276 {strides = array<i32>} : memref<360x256xbf16, #tpu.memory_space<vmem>>, vector<8x256xbf16>,
    %278 = arith.truncf %253 : vector<8x256xf32> to vector<8x256xbf16>
    %c320 = arith.constant 320 : index
    %c0_216 = arith.constant 0 : index
    %279 = vector.load %arg10[%c320, %c0_216] : memref<360x256xbf16, #tpu.memory_space<vmem>>, vector<8x256xbf16>
    tpu.vector_store %arg10[%c320, %c0_216], %278 {strides = array<i32>} : memref<360x256xbf16, #tpu.memory_space<vmem>>, vector<8x256xbf16>,
    %c255_i32_217 = arith.constant 255 : i32
    %280 = tpu.dynamic_rotate %253 by %c255_i32_217 dim 1 : vector<8x256xf32>, i32 -> vector<8x256xf32>
    %c5_218 = arith.constant 5 : index
    %c0_219 = arith.constant 0 : index
    %c0_220 = arith.constant 0 : index
    %281 = vector.load %arg8[%c5_218, %c0_219, %c0_220] : memref<9x8x256xf32, #tpu.memory_space<vmem>>, vector<1x8x256xf32>
    %282 = vector.shape_cast %281 : vector<1x8x256xf32> to vector<8x256xf32>
    %283 = arith.mulf %280, %282 : vector<8x256xf32>
    %284 = arith.truncf %283 : vector<8x256xf32> to vector<8x256xbf16>
    %c328 = arith.constant 328 : index
    %c0_221 = arith.constant 0 : index
    %285 = vector.load %arg10[%c328, %c0_221] : memref<360x256xbf16, #tpu.memory_space<vmem>>, vector<8x256xbf16>
    tpu.vector_store %arg10[%c328, %c0_221], %284 {strides = array<i32>} : memref<360x256xbf16, #tpu.memory_space<vmem>>, vector<8x256xbf16>,
    %c241_i32_222 = arith.constant 241 : i32
    %286 = tpu.dynamic_rotate %253 by %c241_i32_222 dim 1 : vector<8x256xf32>, i32 -> vector<8x256xf32>
    %c6_223 = arith.constant 6 : index
    %c0_224 = arith.constant 0 : index
    %c0_225 = arith.constant 0 : index
    %287 = vector.load %arg8[%c6_223, %c0_224, %c0_225] : memref<9x8x256xf32, #tpu.memory_space<vmem>>, vector<1x8x256xf32>
    %288 = vector.shape_cast %287 : vector<1x8x256xf32> to vector<8x256xf32>
    %289 = arith.mulf %286, %288 : vector<8x256xf32>
    %290 = arith.truncf %289 : vector<8x256xf32> to vector<8x256xbf16>
    %c336 = arith.constant 336 : index
    %c0_226 = arith.constant 0 : index
    %291 = vector.load %arg10[%c336, %c0_226] : memref<360x256xbf16, #tpu.memory_space<vmem>>, vector<8x256xbf16>
    tpu.vector_store %arg10[%c336, %c0_226], %290 {strides = array<i32>} : memref<360x256xbf16, #tpu.memory_space<vmem>>, vector<8x256xbf16>,
    %c240_i32_227 = arith.constant 240 : i32
    %292 = tpu.dynamic_rotate %253 by %c240_i32_227 dim 1 : vector<8x256xf32>, i32 -> vector<8x256xf32>
    %c7_228 = arith.constant 7 : index
    %c0_229 = arith.constant 0 : index
    %c0_230 = arith.constant 0 : index
    %293 = vector.load %arg8[%c7_228, %c0_229, %c0_230] : memref<9x8x256xf32, #tpu.memory_space<vmem>>, vector<1x8x256xf32>
    %294 = vector.shape_cast %293 : vector<1x8x256xf32> to vector<8x256xf32>
    %295 = arith.mulf %292, %294 : vector<8x256xf32>
    %296 = arith.truncf %295 : vector<8x256xf32> to vector<8x256xbf16>
    %c344 = arith.constant 344 : index
    %c0_231 = arith.constant 0 : index
    %297 = vector.load %arg10[%c344, %c0_231] : memref<360x256xbf16, #tpu.memory_space<vmem>>, vector<8x256xbf16>
    tpu.vector_store %arg10[%c344, %c0_231], %296 {strides = array<i32>} : memref<360x256xbf16, #tpu.memory_space<vmem>>, vector<8x256xbf16>,
    %c239_i32_232 = arith.constant 239 : i32
    %298 = tpu.dynamic_rotate %253 by %c239_i32_232 dim 1 : vector<8x256xf32>, i32 -> vector<8x256xf32>
    %c8_233 = arith.constant 8 : index
    %c0_234 = arith.constant 0 : index
    %c0_235 = arith.constant 0 : index
    %299 = vector.load %arg8[%c8_233, %c0_234, %c0_235] : memref<9x8x256xf32, #tpu.memory_space<vmem>>, vector<1x8x256xf32>
    %300 = vector.shape_cast %299 : vector<1x8x256xf32> to vector<8x256xf32>
    %301 = arith.mulf %298, %300 : vector<8x256xf32>
    %302 = arith.truncf %301 : vector<8x256xf32> to vector<8x256xbf16>
    %c352 = arith.constant 352 : index
    %c0_236 = arith.constant 0 : index
    %303 = vector.load %arg10[%c352, %c0_236] : memref<360x256xbf16, #tpu.memory_space<vmem>>, vector<8x256xbf16>
    tpu.vector_store %arg10[%c352, %c0_236], %302 {strides = array<i32>} : memref<360x256xbf16, #tpu.memory_space<vmem>>, vector<8x256xbf16>,
    %c0_237 = arith.constant 0 : index
    %c0_238 = arith.constant 0 : index
    %c0_239 = arith.constant 0 : index
    %304 = vector.load %arg6[%c0_237, %c0_238, %c0_239] : memref<3x8x360xbf16, #tpu.memory_space<vmem>>, vector<1x8x360xbf16>
    %305 = vector.shape_cast %304 : vector<1x8x360xbf16> to vector<8x360xbf16>
    %c0_240 = arith.constant 0 : index
    %c0_241 = arith.constant 0 : index
    %306 = vector.load %arg10[%c0_240, %c0_241] : memref<360x256xbf16, #tpu.memory_space<vmem>>, vector<360x256xbf16>
    %cst_242 = arith.constant dense<0.000000e+00> : vector<8x256xf32>
    %307 = tpu.matmul %305, %306, %cst_242 {dimension_numbers = #tpu.dot_dimension_numbers<[1], [0], [0], [1], [0, 0, 1, 1], [], []>} : vector<8x360xbf16>, vector<360x256xbf16>, vector<8x256xf32> -> vector<8x256xf32>
    %c4 = arith.constant 4 : index
    %c0_243 = arith.constant 0 : index
    %c0_244 = arith.constant 0 : index
    %308 = vector.load %arg7[%c4, %c0_243, %c0_244] : memref<15x8x1xf32, #tpu.memory_space<vmem>>, vector<1x8x1xf32>
    %309 = vector.shape_cast %308 : vector<1x8x1xf32> to vector<8x1xf32>
    %310 = vector.broadcast %309 : vector<8x1xf32> to vector<8x256xf32>
    %311 = arith.addf %307, %310 : vector<8x256xf32>
    %cst_245 = arith.constant 2.000000e-01 : f32
    %312 = vector.broadcast %cst_245 : f32 to vector<8x256xf32>
    %313 = arith.mulf %311, %312 : vector<8x256xf32>
    %314 = arith.addf %313, %1 : vector<8x256xf32>
    %c17_i32_246 = arith.constant 17 : i32
    %315 = tpu.dynamic_rotate %314 by %c17_i32_246 dim 1 : vector<8x256xf32>, i32 -> vector<8x256xf32>
    %c0_247 = arith.constant 0 : index
    %c0_248 = arith.constant 0 : index
    %c0_249 = arith.constant 0 : index
    %316 = vector.load %arg8[%c0_247, %c0_248, %c0_249] : memref<9x8x256xf32, #tpu.memory_space<vmem>>, vector<1x8x256xf32>
    %317 = vector.shape_cast %316 : vector<1x8x256xf32> to vector<8x256xf32>
    %318 = arith.mulf %315, %317 : vector<8x256xf32>
    %319 = arith.truncf %318 : vector<8x256xf32> to vector<8x256xbf16>
    %c0_250 = arith.constant 0 : index
    %c0_251 = arith.constant 0 : index
    %320 = vector.load %arg10[%c0_250, %c0_251] : memref<360x256xbf16, #tpu.memory_space<vmem>>, vector<8x256xbf16>
    tpu.vector_store %arg10[%c0_250, %c0_251], %319 {strides = array<i32>} : memref<360x256xbf16, #tpu.memory_space<vmem>>, vector<8x256xbf16>,
    %c16_i32_252 = arith.constant 16 : i32
    %321 = tpu.dynamic_rotate %314 by %c16_i32_252 dim 1 : vector<8x256xf32>, i32 -> vector<8x256xf32>
    %c1_253 = arith.constant 1 : index
    %c0_254 = arith.constant 0 : index
    %c0_255 = arith.constant 0 : index
    %322 = vector.load %arg8[%c1_253, %c0_254, %c0_255] : memref<9x8x256xf32, #tpu.memory_space<vmem>>, vector<1x8x256xf32>
    %323 = vector.shape_cast %322 : vector<1x8x256xf32> to vector<8x256xf32>
    %324 = arith.mulf %321, %323 : vector<8x256xf32>
    %325 = arith.truncf %324 : vector<8x256xf32> to vector<8x256xbf16>
    %c8_256 = arith.constant 8 : index
    %c0_257 = arith.constant 0 : index
    %326 = vector.load %arg10[%c8_256, %c0_257] : memref<360x256xbf16, #tpu.memory_space<vmem>>, vector<8x256xbf16>
    tpu.vector_store %arg10[%c8_256, %c0_257], %325 {strides = array<i32>} : memref<360x256xbf16, #tpu.memory_space<vmem>>, vector<8x256xbf16>,
    %c15_i32_258 = arith.constant 15 : i32
    %327 = tpu.dynamic_rotate %314 by %c15_i32_258 dim 1 : vector<8x256xf32>, i32 -> vector<8x256xf32>
    %c2_259 = arith.constant 2 : index
    %c0_260 = arith.constant 0 : index
    %c0_261 = arith.constant 0 : index
    %328 = vector.load %arg8[%c2_259, %c0_260, %c0_261] : memref<9x8x256xf32, #tpu.memory_space<vmem>>, vector<1x8x256xf32>
    %329 = vector.shape_cast %328 : vector<1x8x256xf32> to vector<8x256xf32>
    %330 = arith.mulf %327, %329 : vector<8x256xf32>
    %331 = arith.truncf %330 : vector<8x256xf32> to vector<8x256xbf16>
    %c16_262 = arith.constant 16 : index
    %c0_263 = arith.constant 0 : index
    %332 = vector.load %arg10[%c16_262, %c0_263] : memref<360x256xbf16, #tpu.memory_space<vmem>>, vector<8x256xbf16>
    tpu.vector_store %arg10[%c16_262, %c0_263], %331 {strides = array<i32>} : memref<360x256xbf16, #tpu.memory_space<vmem>>, vector<8x256xbf16>,
    %c1_i32_264 = arith.constant 1 : i32
    %333 = tpu.dynamic_rotate %314 by %c1_i32_264 dim 1 : vector<8x256xf32>, i32 -> vector<8x256xf32>
    %c3_265 = arith.constant 3 : index
    %c0_266 = arith.constant 0 : index
    %c0_267 = arith.constant 0 : index
    %334 = vector.load %arg8[%c3_265, %c0_266, %c0_267] : memref<9x8x256xf32, #tpu.memory_space<vmem>>, vector<1x8x256xf32>
    %335 = vector.shape_cast %334 : vector<1x8x256xf32> to vector<8x256xf32>
    %336 = arith.mulf %333, %335 : vector<8x256xf32>
    %337 = arith.truncf %336 : vector<8x256xf32> to vector<8x256xbf16>
    %c24_268 = arith.constant 24 : index
    %c0_269 = arith.constant 0 : index
    %338 = vector.load %arg10[%c24_268, %c0_269] : memref<360x256xbf16, #tpu.memory_space<vmem>>, vector<8x256xbf16>
    tpu.vector_store %arg10[%c24_268, %c0_269], %337 {strides = array<i32>} : memref<360x256xbf16, #tpu.memory_space<vmem>>, vector<8x256xbf16>,
    %339 = arith.truncf %314 : vector<8x256xf32> to vector<8x256xbf16>
    %c32_270 = arith.constant 32 : index
    %c0_271 = arith.constant 0 : index
    %340 = vector.load %arg10[%c32_270, %c0_271] : memref<360x256xbf16, #tpu.memory_space<vmem>>, vector<8x256xbf16>
    tpu.vector_store %arg10[%c32_270, %c0_271], %339 {strides = array<i32>} : memref<360x256xbf16, #tpu.memory_space<vmem>>, vector<8x256xbf16>,
    %c255_i32_272 = arith.constant 255 : i32
    %341 = tpu.dynamic_rotate %314 by %c255_i32_272 dim 1 : vector<8x256xf32>, i32 -> vector<8x256xf32>
    %c5_273 = arith.constant 5 : index
    %c0_274 = arith.constant 0 : index
    %c0_275 = arith.constant 0 : index
    %342 = vector.load %arg8[%c5_273, %c0_274, %c0_275] : memref<9x8x256xf32, #tpu.memory_space<vmem>>, vector<1x8x256xf32>
    %343 = vector.shape_cast %342 : vector<1x8x256xf32> to vector<8x256xf32>
    %344 = arith.mulf %341, %343 : vector<8x256xf32>
    %345 = arith.truncf %344 : vector<8x256xf32> to vector<8x256xbf16>
    %c40_276 = arith.constant 40 : index
    %c0_277 = arith.constant 0 : index
    %346 = vector.load %arg10[%c40_276, %c0_277] : memref<360x256xbf16, #tpu.memory_space<vmem>>, vector<8x256xbf16>
    tpu.vector_store %arg10[%c40_276, %c0_277], %345 {strides = array<i32>} : memref<360x256xbf16, #tpu.memory_space<vmem>>, vector<8x256xbf16>,
    %c241_i32_278 = arith.constant 241 : i32
    %347 = tpu.dynamic_rotate %314 by %c241_i32_278 dim 1 : vector<8x256xf32>, i32 -> vector<8x256xf32>
    %c6_279 = arith.constant 6 : index
    %c0_280 = arith.constant 0 : index
    %c0_281 = arith.constant 0 : index
    %348 = vector.load %arg8[%c6_279, %c0_280, %c0_281] : memref<9x8x256xf32, #tpu.memory_space<vmem>>, vector<1x8x256xf32>
    %349 = vector.shape_cast %348 : vector<1x8x256xf32> to vector<8x256xf32>
    %350 = arith.mulf %347, %349 : vector<8x256xf32>
    %351 = arith.truncf %350 : vector<8x256xf32> to vector<8x256xbf16>
    %c48_282 = arith.constant 48 : index
    %c0_283 = arith.constant 0 : index
    %352 = vector.load %arg10[%c48_282, %c0_283] : memref<360x256xbf16, #tpu.memory_space<vmem>>, vector<8x256xbf16>
    tpu.vector_store %arg10[%c48_282, %c0_283], %351 {strides = array<i32>} : memref<360x256xbf16, #tpu.memory_space<vmem>>, vector<8x256xbf16>,
    %c240_i32_284 = arith.constant 240 : i32
    %353 = tpu.dynamic_rotate %314 by %c240_i32_284 dim 1 : vector<8x256xf32>, i32 -> vector<8x256xf32>
    %c7_285 = arith.constant 7 : index
    %c0_286 = arith.constant 0 : index
    %c0_287 = arith.constant 0 : index
    %354 = vector.load %arg8[%c7_285, %c0_286, %c0_287] : memref<9x8x256xf32, #tpu.memory_space<vmem>>, vector<1x8x256xf32>
    %355 = vector.shape_cast %354 : vector<1x8x256xf32> to vector<8x256xf32>
    %356 = arith.mulf %353, %355 : vector<8x256xf32>
    %357 = arith.truncf %356 : vector<8x256xf32> to vector<8x256xbf16>
    %c56_288 = arith.constant 56 : index
    %c0_289 = arith.constant 0 : index
    %358 = vector.load %arg10[%c56_288, %c0_289] : memref<360x256xbf16, #tpu.memory_space<vmem>>, vector<8x256xbf16>
    tpu.vector_store %arg10[%c56_288, %c0_289], %357 {strides = array<i32>} : memref<360x256xbf16, #tpu.memory_space<vmem>>, vector<8x256xbf16>,
    %c239_i32_290 = arith.constant 239 : i32
    %359 = tpu.dynamic_rotate %314 by %c239_i32_290 dim 1 : vector<8x256xf32>, i32 -> vector<8x256xf32>
    %c8_291 = arith.constant 8 : index
    %c0_292 = arith.constant 0 : index
    %c0_293 = arith.constant 0 : index
    %360 = vector.load %arg8[%c8_291, %c0_292, %c0_293] : memref<9x8x256xf32, #tpu.memory_space<vmem>>, vector<1x8x256xf32>
    %361 = vector.shape_cast %360 : vector<1x8x256xf32> to vector<8x256xf32>
    %362 = arith.mulf %359, %361 : vector<8x256xf32>
    %363 = arith.truncf %362 : vector<8x256xf32> to vector<8x256xbf16>
    %c64_294 = arith.constant 64 : index
    %c0_295 = arith.constant 0 : index
    %364 = vector.load %arg10[%c64_294, %c0_295] : memref<360x256xbf16, #tpu.memory_space<vmem>>, vector<8x256xbf16>
    tpu.vector_store %arg10[%c64_294, %c0_295], %363 {strides = array<i32>} : memref<360x256xbf16, #tpu.memory_space<vmem>>, vector<8x256xbf16>,
    %c1_296 = arith.constant 1 : index
    %c0_297 = arith.constant 0 : index
    %c0_298 = arith.constant 0 : index
    %365 = vector.load %arg2[%c1_296, %c0_297, %c0_298] : memref<3x8x72xbf16, #tpu.memory_space<vmem>>, vector<1x8x72xbf16>
    %366 = vector.shape_cast %365 : vector<1x8x72xbf16> to vector<8x72xbf16>
    %c0_299 = arith.constant 0 : index
    %c0_300 = arith.constant 0 : index
    %367 = vector.load %arg10[%c0_299, %c0_300] : memref<360x256xbf16, #tpu.memory_space<vmem>>, vector<72x256xbf16>
    %cst_301 = arith.constant dense<0.000000e+00> : vector<8x256xf32>
    %368 = tpu.matmul %366, %367, %cst_301 {dimension_numbers = #tpu.dot_dimension_numbers<[1], [0], [0], [1], [0, 0, 1, 1], [], []>} : vector<8x72xbf16>, vector<72x256xbf16>, vector<8x256xf32> -> vector<8x256xf32>
    %c5_302 = arith.constant 5 : index
    %c0_303 = arith.constant 0 : index
    %c0_304 = arith.constant 0 : index
    %369 = vector.load %arg7[%c5_302, %c0_303, %c0_304] : memref<15x8x1xf32, #tpu.memory_space<vmem>>, vector<1x8x1xf32>
    %370 = vector.shape_cast %369 : vector<1x8x1xf32> to vector<8x1xf32>
    %371 = vector.broadcast %370 : vector<8x1xf32> to vector<8x256xf32>
    %372 = arith.addf %368, %371 : vector<8x256xf32>
    %cst_305 = arith.constant 0.000000e+00 : f32
    %373 = vector.broadcast %cst_305 : f32 to vector<8x256xf32>
    %374 = arith.cmpf oge, %372, %373 : vector<8x256xf32>
    %cst_306 = arith.constant 2.000000e-01 : f32
    %375 = vector.broadcast %cst_306 : f32 to vector<8x256xf32>
    %376 = arith.mulf %375, %372 : vector<8x256xf32>
    %377 = arith.select %374, %372, %376 : vector<8x256xi1>, vector<8x256xf32>
    %c17_i32_307 = arith.constant 17 : i32
    %378 = tpu.dynamic_rotate %377 by %c17_i32_307 dim 1 : vector<8x256xf32>, i32 -> vector<8x256xf32>
    %c0_308 = arith.constant 0 : index
    %c0_309 = arith.constant 0 : index
    %c0_310 = arith.constant 0 : index
    %379 = vector.load %arg8[%c0_308, %c0_309, %c0_310] : memref<9x8x256xf32, #tpu.memory_space<vmem>>, vector<1x8x256xf32>
    %380 = vector.shape_cast %379 : vector<1x8x256xf32> to vector<8x256xf32>
    %381 = arith.mulf %378, %380 : vector<8x256xf32>
    %382 = arith.truncf %381 : vector<8x256xf32> to vector<8x256xbf16>
    %c72_311 = arith.constant 72 : index
    %c0_312 = arith.constant 0 : index
    %383 = vector.load %arg10[%c72_311, %c0_312] : memref<360x256xbf16, #tpu.memory_space<vmem>>, vector<8x256xbf16>
    tpu.vector_store %arg10[%c72_311, %c0_312], %382 {strides = array<i32>} : memref<360x256xbf16, #tpu.memory_space<vmem>>, vector<8x256xbf16>,
    %c16_i32_313 = arith.constant 16 : i32
    %384 = tpu.dynamic_rotate %377 by %c16_i32_313 dim 1 : vector<8x256xf32>, i32 -> vector<8x256xf32>
    %c1_314 = arith.constant 1 : index
    %c0_315 = arith.constant 0 : index
    %c0_316 = arith.constant 0 : index
    %385 = vector.load %arg8[%c1_314, %c0_315, %c0_316] : memref<9x8x256xf32, #tpu.memory_space<vmem>>, vector<1x8x256xf32>
    %386 = vector.shape_cast %385 : vector<1x8x256xf32> to vector<8x256xf32>
    %387 = arith.mulf %384, %386 : vector<8x256xf32>
    %388 = arith.truncf %387 : vector<8x256xf32> to vector<8x256xbf16>
    %c80_317 = arith.constant 80 : index
    %c0_318 = arith.constant 0 : index
    %389 = vector.load %arg10[%c80_317, %c0_318] : memref<360x256xbf16, #tpu.memory_space<vmem>>, vector<8x256xbf16>
    tpu.vector_store %arg10[%c80_317, %c0_318], %388 {strides = array<i32>} : memref<360x256xbf16, #tpu.memory_space<vmem>>, vector<8x256xbf16>,
    %c15_i32_319 = arith.constant 15 : i32
    %390 = tpu.dynamic_rotate %377 by %c15_i32_319 dim 1 : vector<8x256xf32>, i32 -> vector<8x256xf32>
    %c2_320 = arith.constant 2 : index
    %c0_321 = arith.constant 0 : index
    %c0_322 = arith.constant 0 : index
    %391 = vector.load %arg8[%c2_320, %c0_321, %c0_322] : memref<9x8x256xf32, #tpu.memory_space<vmem>>, vector<1x8x256xf32>
    %392 = vector.shape_cast %391 : vector<1x8x256xf32> to vector<8x256xf32>
    %393 = arith.mulf %390, %392 : vector<8x256xf32>
    %394 = arith.truncf %393 : vector<8x256xf32> to vector<8x256xbf16>
    %c88_323 = arith.constant 88 : index
    %c0_324 = arith.constant 0 : index
    %395 = vector.load %arg10[%c88_323, %c0_324] : memref<360x256xbf16, #tpu.memory_space<vmem>>, vector<8x256xbf16>
    tpu.vector_store %arg10[%c88_323, %c0_324], %394 {strides = array<i32>} : memref<360x256xbf16, #tpu.memory_space<vmem>>, vector<8x256xbf16>,
    %c1_i32_325 = arith.constant 1 : i32
    %396 = tpu.dynamic_rotate %377 by %c1_i32_325 dim 1 : vector<8x256xf32>, i32 -> vector<8x256xf32>
    %c3_326 = arith.constant 3 : index
    %c0_327 = arith.constant 0 : index
    %c0_328 = arith.constant 0 : index
    %397 = vector.load %arg8[%c3_326, %c0_327, %c0_328] : memref<9x8x256xf32, #tpu.memory_space<vmem>>, vector<1x8x256xf32>
    %398 = vector.shape_cast %397 : vector<1x8x256xf32> to vector<8x256xf32>
    %399 = arith.mulf %396, %398 : vector<8x256xf32>
    %400 = arith.truncf %399 : vector<8x256xf32> to vector<8x256xbf16>
    %c96_329 = arith.constant 96 : index
    %c0_330 = arith.constant 0 : index
    %401 = vector.load %arg10[%c96_329, %c0_330] : memref<360x256xbf16, #tpu.memory_space<vmem>>, vector<8x256xbf16>
    tpu.vector_store %arg10[%c96_329, %c0_330], %400 {strides = array<i32>} : memref<360x256xbf16, #tpu.memory_space<vmem>>, vector<8x256xbf16>,
    %402 = arith.truncf %377 : vector<8x256xf32> to vector<8x256xbf16>
    %c104_331 = arith.constant 104 : index
    %c0_332 = arith.constant 0 : index
    %403 = vector.load %arg10[%c104_331, %c0_332] : memref<360x256xbf16, #tpu.memory_space<vmem>>, vector<8x256xbf16>
    tpu.vector_store %arg10[%c104_331, %c0_332], %402 {strides = array<i32>} : memref<360x256xbf16, #tpu.memory_space<vmem>>, vector<8x256xbf16>,
    %c255_i32_333 = arith.constant 255 : i32
    %404 = tpu.dynamic_rotate %377 by %c255_i32_333 dim 1 : vector<8x256xf32>, i32 -> vector<8x256xf32>
    %c5_334 = arith.constant 5 : index
    %c0_335 = arith.constant 0 : index
    %c0_336 = arith.constant 0 : index
    %405 = vector.load %arg8[%c5_334, %c0_335, %c0_336] : memref<9x8x256xf32, #tpu.memory_space<vmem>>, vector<1x8x256xf32>
    %406 = vector.shape_cast %405 : vector<1x8x256xf32> to vector<8x256xf32>
    %407 = arith.mulf %404, %406 : vector<8x256xf32>
    %408 = arith.truncf %407 : vector<8x256xf32> to vector<8x256xbf16>
    %c112_337 = arith.constant 112 : index
    %c0_338 = arith.constant 0 : index
    %409 = vector.load %arg10[%c112_337, %c0_338] : memref<360x256xbf16, #tpu.memory_space<vmem>>, vector<8x256xbf16>
    tpu.vector_store %arg10[%c112_337, %c0_338], %408 {strides = array<i32>} : memref<360x256xbf16, #tpu.memory_space<vmem>>, vector<8x256xbf16>,
    %c241_i32_339 = arith.constant 241 : i32
    %410 = tpu.dynamic_rotate %377 by %c241_i32_339 dim 1 : vector<8x256xf32>, i32 -> vector<8x256xf32>
    %c6_340 = arith.constant 6 : index
    %c0_341 = arith.constant 0 : index
    %c0_342 = arith.constant 0 : index
    %411 = vector.load %arg8[%c6_340, %c0_341, %c0_342] : memref<9x8x256xf32, #tpu.memory_space<vmem>>, vector<1x8x256xf32>
    %412 = vector.shape_cast %411 : vector<1x8x256xf32> to vector<8x256xf32>
    %413 = arith.mulf %410, %412 : vector<8x256xf32>
    %414 = arith.truncf %413 : vector<8x256xf32> to vector<8x256xbf16>
    %c120_343 = arith.constant 120 : index
    %c0_344 = arith.constant 0 : index
    %415 = vector.load %arg10[%c120_343, %c0_344] : memref<360x256xbf16, #tpu.memory_space<vmem>>, vector<8x256xbf16>
    tpu.vector_store %arg10[%c120_343, %c0_344], %414 {strides = array<i32>} : memref<360x256xbf16, #tpu.memory_space<vmem>>, vector<8x256xbf16>,
    %c240_i32_345 = arith.constant 240 : i32
    %416 = tpu.dynamic_rotate %377 by %c240_i32_345 dim 1 : vector<8x256xf32>, i32 -> vector<8x256xf32>
    %c7_346 = arith.constant 7 : index
    %c0_347 = arith.constant 0 : index
    %c0_348 = arith.constant 0 : index
    %417 = vector.load %arg8[%c7_346, %c0_347, %c0_348] : memref<9x8x256xf32, #tpu.memory_space<vmem>>, vector<1x8x256xf32>
    %418 = vector.shape_cast %417 : vector<1x8x256xf32> to vector<8x256xf32>
    %419 = arith.mulf %416, %418 : vector<8x256xf32>
    %420 = arith.truncf %419 : vector<8x256xf32> to vector<8x256xbf16>
    %c128_349 = arith.constant 128 : index
    %c0_350 = arith.constant 0 : index
    %421 = vector.load %arg10[%c128_349, %c0_350] : memref<360x256xbf16, #tpu.memory_space<vmem>>, vector<8x256xbf16>
    tpu.vector_store %arg10[%c128_349, %c0_350], %420 {strides = array<i32>} : memref<360x256xbf16, #tpu.memory_space<vmem>>, vector<8x256xbf16>,
    %c239_i32_351 = arith.constant 239 : i32
    %422 = tpu.dynamic_rotate %377 by %c239_i32_351 dim 1 : vector<8x256xf32>, i32 -> vector<8x256xf32>
    %c8_352 = arith.constant 8 : index
    %c0_353 = arith.constant 0 : index
    %c0_354 = arith.constant 0 : index
    %423 = vector.load %arg8[%c8_352, %c0_353, %c0_354] : memref<9x8x256xf32, #tpu.memory_space<vmem>>, vector<1x8x256xf32>
    %424 = vector.shape_cast %423 : vector<1x8x256xf32> to vector<8x256xf32>
    %425 = arith.mulf %422, %424 : vector<8x256xf32>
    %426 = arith.truncf %425 : vector<8x256xf32> to vector<8x256xbf16>
    %c136_355 = arith.constant 136 : index
    %c0_356 = arith.constant 0 : index
    %427 = vector.load %arg10[%c136_355, %c0_356] : memref<360x256xbf16, #tpu.memory_space<vmem>>, vector<8x256xbf16>
    tpu.vector_store %arg10[%c136_355, %c0_356], %426 {strides = array<i32>} : memref<360x256xbf16, #tpu.memory_space<vmem>>, vector<8x256xbf16>,
    %c1_357 = arith.constant 1 : index
    %c0_358 = arith.constant 0 : index
    %c0_359 = arith.constant 0 : index
    %428 = vector.load %arg3[%c1_357, %c0_358, %c0_359] : memref<3x8x144xbf16, #tpu.memory_space<vmem>>, vector<1x8x144xbf16>
    %429 = vector.shape_cast %428 : vector<1x8x144xbf16> to vector<8x144xbf16>
    %c0_360 = arith.constant 0 : index
    %c0_361 = arith.constant 0 : index
    %430 = vector.load %arg10[%c0_360, %c0_361] : memref<360x256xbf16, #tpu.memory_space<vmem>>, vector<144x256xbf16>
    %cst_362 = arith.constant dense<0.000000e+00> : vector<8x256xf32>
    %431 = tpu.matmul %429, %430, %cst_362 {dimension_numbers = #tpu.dot_dimension_numbers<[1], [0], [0], [1], [0, 0, 1, 1], [], []>} : vector<8x144xbf16>, vector<144x256xbf16>, vector<8x256xf32> -> vector<8x256xf32>
    %c6_363 = arith.constant 6 : index
    %c0_364 = arith.constant 0 : index
    %c0_365 = arith.constant 0 : index
    %432 = vector.load %arg7[%c6_363, %c0_364, %c0_365] : memref<15x8x1xf32, #tpu.memory_space<vmem>>, vector<1x8x1xf32>
    %433 = vector.shape_cast %432 : vector<1x8x1xf32> to vector<8x1xf32>
    %434 = vector.broadcast %433 : vector<8x1xf32> to vector<8x256xf32>
    %435 = arith.addf %431, %434 : vector<8x256xf32>
    %cst_366 = arith.constant 0.000000e+00 : f32
    %436 = vector.broadcast %cst_366 : f32 to vector<8x256xf32>
    %437 = arith.cmpf oge, %435, %436 : vector<8x256xf32>
    %cst_367 = arith.constant 2.000000e-01 : f32
    %438 = vector.broadcast %cst_367 : f32 to vector<8x256xf32>
    %439 = arith.mulf %438, %435 : vector<8x256xf32>
    %440 = arith.select %437, %435, %439 : vector<8x256xi1>, vector<8x256xf32>
    %c17_i32_368 = arith.constant 17 : i32
    %441 = tpu.dynamic_rotate %440 by %c17_i32_368 dim 1 : vector<8x256xf32>, i32 -> vector<8x256xf32>
    %c0_369 = arith.constant 0 : index
    %c0_370 = arith.constant 0 : index
    %c0_371 = arith.constant 0 : index
    %442 = vector.load %arg8[%c0_369, %c0_370, %c0_371] : memref<9x8x256xf32, #tpu.memory_space<vmem>>, vector<1x8x256xf32>
    %443 = vector.shape_cast %442 : vector<1x8x256xf32> to vector<8x256xf32>
    %444 = arith.mulf %441, %443 : vector<8x256xf32>
    %445 = arith.truncf %444 : vector<8x256xf32> to vector<8x256xbf16>
    %c144_372 = arith.constant 144 : index
    %c0_373 = arith.constant 0 : index
    %446 = vector.load %arg10[%c144_372, %c0_373] : memref<360x256xbf16, #tpu.memory_space<vmem>>, vector<8x256xbf16>
    tpu.vector_store %arg10[%c144_372, %c0_373], %445 {strides = array<i32>} : memref<360x256xbf16, #tpu.memory_space<vmem>>, vector<8x256xbf16>,
    %c16_i32_374 = arith.constant 16 : i32
    %447 = tpu.dynamic_rotate %440 by %c16_i32_374 dim 1 : vector<8x256xf32>, i32 -> vector<8x256xf32>
    %c1_375 = arith.constant 1 : index
    %c0_376 = arith.constant 0 : index
    %c0_377 = arith.constant 0 : index
    %448 = vector.load %arg8[%c1_375, %c0_376, %c0_377] : memref<9x8x256xf32, #tpu.memory_space<vmem>>, vector<1x8x256xf32>
    %449 = vector.shape_cast %448 : vector<1x8x256xf32> to vector<8x256xf32>
    %450 = arith.mulf %447, %449 : vector<8x256xf32>
    %451 = arith.truncf %450 : vector<8x256xf32> to vector<8x256xbf16>
    %c152_378 = arith.constant 152 : index
    %c0_379 = arith.constant 0 : index
    %452 = vector.load %arg10[%c152_378, %c0_379] : memref<360x256xbf16, #tpu.memory_space<vmem>>, vector<8x256xbf16>
    tpu.vector_store %arg10[%c152_378, %c0_379], %451 {strides = array<i32>} : memref<360x256xbf16, #tpu.memory_space<vmem>>, vector<8x256xbf16>,
    %c15_i32_380 = arith.constant 15 : i32
    %453 = tpu.dynamic_rotate %440 by %c15_i32_380 dim 1 : vector<8x256xf32>, i32 -> vector<8x256xf32>
    %c2_381 = arith.constant 2 : index
    %c0_382 = arith.constant 0 : index
    %c0_383 = arith.constant 0 : index
    %454 = vector.load %arg8[%c2_381, %c0_382, %c0_383] : memref<9x8x256xf32, #tpu.memory_space<vmem>>, vector<1x8x256xf32>
    %455 = vector.shape_cast %454 : vector<1x8x256xf32> to vector<8x256xf32>
    %456 = arith.mulf %453, %455 : vector<8x256xf32>
    %457 = arith.truncf %456 : vector<8x256xf32> to vector<8x256xbf16>
    %c160_384 = arith.constant 160 : index
    %c0_385 = arith.constant 0 : index
    %458 = vector.load %arg10[%c160_384, %c0_385] : memref<360x256xbf16, #tpu.memory_space<vmem>>, vector<8x256xbf16>
    tpu.vector_store %arg10[%c160_384, %c0_385], %457 {strides = array<i32>} : memref<360x256xbf16, #tpu.memory_space<vmem>>, vector<8x256xbf16>,
    %c1_i32_386 = arith.constant 1 : i32
    %459 = tpu.dynamic_rotate %440 by %c1_i32_386 dim 1 : vector<8x256xf32>, i32 -> vector<8x256xf32>
    %c3_387 = arith.constant 3 : index
    %c0_388 = arith.constant 0 : index
    %c0_389 = arith.constant 0 : index
    %460 = vector.load %arg8[%c3_387, %c0_388, %c0_389] : memref<9x8x256xf32, #tpu.memory_space<vmem>>, vector<1x8x256xf32>
    %461 = vector.shape_cast %460 : vector<1x8x256xf32> to vector<8x256xf32>
    %462 = arith.mulf %459, %461 : vector<8x256xf32>
    %463 = arith.truncf %462 : vector<8x256xf32> to vector<8x256xbf16>
    %c168_390 = arith.constant 168 : index
    %c0_391 = arith.constant 0 : index
    %464 = vector.load %arg10[%c168_390, %c0_391] : memref<360x256xbf16, #tpu.memory_space<vmem>>, vector<8x256xbf16>
    tpu.vector_store %arg10[%c168_390, %c0_391], %463 {strides = array<i32>} : memref<360x256xbf16, #tpu.memory_space<vmem>>, vector<8x256xbf16>,
    %465 = arith.truncf %440 : vector<8x256xf32> to vector<8x256xbf16>
    %c176_392 = arith.constant 176 : index
    %c0_393 = arith.constant 0 : index
    %466 = vector.load %arg10[%c176_392, %c0_393] : memref<360x256xbf16, #tpu.memory_space<vmem>>, vector<8x256xbf16>
    tpu.vector_store %arg10[%c176_392, %c0_393], %465 {strides = array<i32>} : memref<360x256xbf16, #tpu.memory_space<vmem>>, vector<8x256xbf16>,
    %c255_i32_394 = arith.constant 255 : i32
    %467 = tpu.dynamic_rotate %440 by %c255_i32_394 dim 1 : vector<8x256xf32>, i32 -> vector<8x256xf32>
    %c5_395 = arith.constant 5 : index
    %c0_396 = arith.constant 0 : index
    %c0_397 = arith.constant 0 : index
    %468 = vector.load %arg8[%c5_395, %c0_396, %c0_397] : memref<9x8x256xf32, #tpu.memory_space<vmem>>, vector<1x8x256xf32>
    %469 = vector.shape_cast %468 : vector<1x8x256xf32> to vector<8x256xf32>
    %470 = arith.mulf %467, %469 : vector<8x256xf32>
    %471 = arith.truncf %470 : vector<8x256xf32> to vector<8x256xbf16>
    %c184_398 = arith.constant 184 : index
    %c0_399 = arith.constant 0 : index
    %472 = vector.load %arg10[%c184_398, %c0_399] : memref<360x256xbf16, #tpu.memory_space<vmem>>, vector<8x256xbf16>
    tpu.vector_store %arg10[%c184_398, %c0_399], %471 {strides = array<i32>} : memref<360x256xbf16, #tpu.memory_space<vmem>>, vector<8x256xbf16>,
    %c241_i32_400 = arith.constant 241 : i32
    %473 = tpu.dynamic_rotate %440 by %c241_i32_400 dim 1 : vector<8x256xf32>, i32 -> vector<8x256xf32>
    %c6_401 = arith.constant 6 : index
    %c0_402 = arith.constant 0 : index
    %c0_403 = arith.constant 0 : index
    %474 = vector.load %arg8[%c6_401, %c0_402, %c0_403] : memref<9x8x256xf32, #tpu.memory_space<vmem>>, vector<1x8x256xf32>
    %475 = vector.shape_cast %474 : vector<1x8x256xf32> to vector<8x256xf32>
    %476 = arith.mulf %473, %475 : vector<8x256xf32>
    %477 = arith.truncf %476 : vector<8x256xf32> to vector<8x256xbf16>
    %c192_404 = arith.constant 192 : index
    %c0_405 = arith.constant 0 : index
    %478 = vector.load %arg10[%c192_404, %c0_405] : memref<360x256xbf16, #tpu.memory_space<vmem>>, vector<8x256xbf16>
    tpu.vector_store %arg10[%c192_404, %c0_405], %477 {strides = array<i32>} : memref<360x256xbf16, #tpu.memory_space<vmem>>, vector<8x256xbf16>,
    %c240_i32_406 = arith.constant 240 : i32
    %479 = tpu.dynamic_rotate %440 by %c240_i32_406 dim 1 : vector<8x256xf32>, i32 -> vector<8x256xf32>
    %c7_407 = arith.constant 7 : index
    %c0_408 = arith.constant 0 : index
    %c0_409 = arith.constant 0 : index
    %480 = vector.load %arg8[%c7_407, %c0_408, %c0_409] : memref<9x8x256xf32, #tpu.memory_space<vmem>>, vector<1x8x256xf32>
    %481 = vector.shape_cast %480 : vector<1x8x256xf32> to vector<8x256xf32>
    %482 = arith.mulf %479, %481 : vector<8x256xf32>
    %483 = arith.truncf %482 : vector<8x256xf32> to vector<8x256xbf16>
    %c200_410 = arith.constant 200 : index
    %c0_411 = arith.constant 0 : index
    %484 = vector.load %arg10[%c200_410, %c0_411] : memref<360x256xbf16, #tpu.memory_space<vmem>>, vector<8x256xbf16>
    tpu.vector_store %arg10[%c200_410, %c0_411], %483 {strides = array<i32>} : memref<360x256xbf16, #tpu.memory_space<vmem>>, vector<8x256xbf16>,
    %c239_i32_412 = arith.constant 239 : i32
    %485 = tpu.dynamic_rotate %440 by %c239_i32_412 dim 1 : vector<8x256xf32>, i32 -> vector<8x256xf32>
    %c8_413 = arith.constant 8 : index
    %c0_414 = arith.constant 0 : index
    %c0_415 = arith.constant 0 : index
    %486 = vector.load %arg8[%c8_413, %c0_414, %c0_415] : memref<9x8x256xf32, #tpu.memory_space<vmem>>, vector<1x8x256xf32>
    %487 = vector.shape_cast %486 : vector<1x8x256xf32> to vector<8x256xf32>
    %488 = arith.mulf %485, %487 : vector<8x256xf32>
    %489 = arith.truncf %488 : vector<8x256xf32> to vector<8x256xbf16>
    %c208_416 = arith.constant 208 : index
    %c0_417 = arith.constant 0 : index
    %490 = vector.load %arg10[%c208_416, %c0_417] : memref<360x256xbf16, #tpu.memory_space<vmem>>, vector<8x256xbf16>
    tpu.vector_store %arg10[%c208_416, %c0_417], %489 {strides = array<i32>} : memref<360x256xbf16, #tpu.memory_space<vmem>>, vector<8x256xbf16>,
    %c1_418 = arith.constant 1 : index
    %c0_419 = arith.constant 0 : index
    %c0_420 = arith.constant 0 : index
    %491 = vector.load %arg4[%c1_418, %c0_419, %c0_420] : memref<3x8x216xbf16, #tpu.memory_space<vmem>>, vector<1x8x216xbf16>
    %492 = vector.shape_cast %491 : vector<1x8x216xbf16> to vector<8x216xbf16>
    %c0_421 = arith.constant 0 : index
    %c0_422 = arith.constant 0 : index
    %493 = vector.load %arg10[%c0_421, %c0_422] : memref<360x256xbf16, #tpu.memory_space<vmem>>, vector<216x256xbf16>
    %cst_423 = arith.constant dense<0.000000e+00> : vector<8x256xf32>
    %494 = tpu.matmul %492, %493, %cst_423 {dimension_numbers = #tpu.dot_dimension_numbers<[1], [0], [0], [1], [0, 0, 1, 1], [], []>} : vector<8x216xbf16>, vector<216x256xbf16>, vector<8x256xf32> -> vector<8x256xf32>
    %c7_424 = arith.constant 7 : index
    %c0_425 = arith.constant 0 : index
    %c0_426 = arith.constant 0 : index
    %495 = vector.load %arg7[%c7_424, %c0_425, %c0_426] : memref<15x8x1xf32, #tpu.memory_space<vmem>>, vector<1x8x1xf32>
    %496 = vector.shape_cast %495 : vector<1x8x1xf32> to vector<8x1xf32>
    %497 = vector.broadcast %496 : vector<8x1xf32> to vector<8x256xf32>
    %498 = arith.addf %494, %497 : vector<8x256xf32>
    %cst_427 = arith.constant 0.000000e+00 : f32
    %499 = vector.broadcast %cst_427 : f32 to vector<8x256xf32>
    %500 = arith.cmpf oge, %498, %499 : vector<8x256xf32>
    %cst_428 = arith.constant 2.000000e-01 : f32
    %501 = vector.broadcast %cst_428 : f32 to vector<8x256xf32>
    %502 = arith.mulf %501, %498 : vector<8x256xf32>
    %503 = arith.select %500, %498, %502 : vector<8x256xi1>, vector<8x256xf32>
    %c17_i32_429 = arith.constant 17 : i32
    %504 = tpu.dynamic_rotate %503 by %c17_i32_429 dim 1 : vector<8x256xf32>, i32 -> vector<8x256xf32>
    %c0_430 = arith.constant 0 : index
    %c0_431 = arith.constant 0 : index
    %c0_432 = arith.constant 0 : index
    %505 = vector.load %arg8[%c0_430, %c0_431, %c0_432] : memref<9x8x256xf32, #tpu.memory_space<vmem>>, vector<1x8x256xf32>
    %506 = vector.shape_cast %505 : vector<1x8x256xf32> to vector<8x256xf32>
    %507 = arith.mulf %504, %506 : vector<8x256xf32>
    %508 = arith.truncf %507 : vector<8x256xf32> to vector<8x256xbf16>
    %c216_433 = arith.constant 216 : index
    %c0_434 = arith.constant 0 : index
    %509 = vector.load %arg10[%c216_433, %c0_434] : memref<360x256xbf16, #tpu.memory_space<vmem>>, vector<8x256xbf16>
    tpu.vector_store %arg10[%c216_433, %c0_434], %508 {strides = array<i32>} : memref<360x256xbf16, #tpu.memory_space<vmem>>, vector<8x256xbf16>,
    %c16_i32_435 = arith.constant 16 : i32
    %510 = tpu.dynamic_rotate %503 by %c16_i32_435 dim 1 : vector<8x256xf32>, i32 -> vector<8x256xf32>
    %c1_436 = arith.constant 1 : index
    %c0_437 = arith.constant 0 : index
    %c0_438 = arith.constant 0 : index
    %511 = vector.load %arg8[%c1_436, %c0_437, %c0_438] : memref<9x8x256xf32, #tpu.memory_space<vmem>>, vector<1x8x256xf32>
    %512 = vector.shape_cast %511 : vector<1x8x256xf32> to vector<8x256xf32>
    %513 = arith.mulf %510, %512 : vector<8x256xf32>
    %514 = arith.truncf %513 : vector<8x256xf32> to vector<8x256xbf16>
    %c224_439 = arith.constant 224 : index
    %c0_440 = arith.constant 0 : index
    %515 = vector.load %arg10[%c224_439, %c0_440] : memref<360x256xbf16, #tpu.memory_space<vmem>>, vector<8x256xbf16>
    tpu.vector_store %arg10[%c224_439, %c0_440], %514 {strides = array<i32>} : memref<360x256xbf16, #tpu.memory_space<vmem>>, vector<8x256xbf16>,
    %c15_i32_441 = arith.constant 15 : i32
    %516 = tpu.dynamic_rotate %503 by %c15_i32_441 dim 1 : vector<8x256xf32>, i32 -> vector<8x256xf32>
    %c2_442 = arith.constant 2 : index
    %c0_443 = arith.constant 0 : index
    %c0_444 = arith.constant 0 : index
    %517 = vector.load %arg8[%c2_442, %c0_443, %c0_444] : memref<9x8x256xf32, #tpu.memory_space<vmem>>, vector<1x8x256xf32>
    %518 = vector.shape_cast %517 : vector<1x8x256xf32> to vector<8x256xf32>
    %519 = arith.mulf %516, %518 : vector<8x256xf32>
    %520 = arith.truncf %519 : vector<8x256xf32> to vector<8x256xbf16>
    %c232_445 = arith.constant 232 : index
    %c0_446 = arith.constant 0 : index
    %521 = vector.load %arg10[%c232_445, %c0_446] : memref<360x256xbf16, #tpu.memory_space<vmem>>, vector<8x256xbf16>
    tpu.vector_store %arg10[%c232_445, %c0_446], %520 {strides = array<i32>} : memref<360x256xbf16, #tpu.memory_space<vmem>>, vector<8x256xbf16>,
    %c1_i32_447 = arith.constant 1 : i32
    %522 = tpu.dynamic_rotate %503 by %c1_i32_447 dim 1 : vector<8x256xf32>, i32 -> vector<8x256xf32>
    %c3_448 = arith.constant 3 : index
    %c0_449 = arith.constant 0 : index
    %c0_450 = arith.constant 0 : index
    %523 = vector.load %arg8[%c3_448, %c0_449, %c0_450] : memref<9x8x256xf32, #tpu.memory_space<vmem>>, vector<1x8x256xf32>
    %524 = vector.shape_cast %523 : vector<1x8x256xf32> to vector<8x256xf32>
    %525 = arith.mulf %522, %524 : vector<8x256xf32>
    %526 = arith.truncf %525 : vector<8x256xf32> to vector<8x256xbf16>
    %c240_451 = arith.constant 240 : index
    %c0_452 = arith.constant 0 : index
    %527 = vector.load %arg10[%c240_451, %c0_452] : memref<360x256xbf16, #tpu.memory_space<vmem>>, vector<8x256xbf16>
    tpu.vector_store %arg10[%c240_451, %c0_452], %526 {strides = array<i32>} : memref<360x256xbf16, #tpu.memory_space<vmem>>, vector<8x256xbf16>,
    %528 = arith.truncf %503 : vector<8x256xf32> to vector<8x256xbf16>
    %c248_453 = arith.constant 248 : index
    %c0_454 = arith.constant 0 : index
    %529 = vector.load %arg10[%c248_453, %c0_454] : memref<360x256xbf16, #tpu.memory_space<vmem>>, vector<8x256xbf16>
    tpu.vector_store %arg10[%c248_453, %c0_454], %528 {strides = array<i32>} : memref<360x256xbf16, #tpu.memory_space<vmem>>, vector<8x256xbf16>,
    %c255_i32_455 = arith.constant 255 : i32
    %530 = tpu.dynamic_rotate %503 by %c255_i32_455 dim 1 : vector<8x256xf32>, i32 -> vector<8x256xf32>
    %c5_456 = arith.constant 5 : index
    %c0_457 = arith.constant 0 : index
    %c0_458 = arith.constant 0 : index
    %531 = vector.load %arg8[%c5_456, %c0_457, %c0_458] : memref<9x8x256xf32, #tpu.memory_space<vmem>>, vector<1x8x256xf32>
    %532 = vector.shape_cast %531 : vector<1x8x256xf32> to vector<8x256xf32>
    %533 = arith.mulf %530, %532 : vector<8x256xf32>
    %534 = arith.truncf %533 : vector<8x256xf32> to vector<8x256xbf16>
    %c256_459 = arith.constant 256 : index
    %c0_460 = arith.constant 0 : index
    %535 = vector.load %arg10[%c256_459, %c0_460] : memref<360x256xbf16, #tpu.memory_space<vmem>>, vector<8x256xbf16>
    tpu.vector_store %arg10[%c256_459, %c0_460], %534 {strides = array<i32>} : memref<360x256xbf16, #tpu.memory_space<vmem>>, vector<8x256xbf16>,
    %c241_i32_461 = arith.constant 241 : i32
    %536 = tpu.dynamic_rotate %503 by %c241_i32_461 dim 1 : vector<8x256xf32>, i32 -> vector<8x256xf32>
    %c6_462 = arith.constant 6 : index
    %c0_463 = arith.constant 0 : index
    %c0_464 = arith.constant 0 : index
    %537 = vector.load %arg8[%c6_462, %c0_463, %c0_464] : memref<9x8x256xf32, #tpu.memory_space<vmem>>, vector<1x8x256xf32>
    %538 = vector.shape_cast %537 : vector<1x8x256xf32> to vector<8x256xf32>
    %539 = arith.mulf %536, %538 : vector<8x256xf32>
    %540 = arith.truncf %539 : vector<8x256xf32> to vector<8x256xbf16>
    %c264_465 = arith.constant 264 : index
    %c0_466 = arith.constant 0 : index
    %541 = vector.load %arg10[%c264_465, %c0_466] : memref<360x256xbf16, #tpu.memory_space<vmem>>, vector<8x256xbf16>
    tpu.vector_store %arg10[%c264_465, %c0_466], %540 {strides = array<i32>} : memref<360x256xbf16, #tpu.memory_space<vmem>>, vector<8x256xbf16>,
    %c240_i32_467 = arith.constant 240 : i32
    %542 = tpu.dynamic_rotate %503 by %c240_i32_467 dim 1 : vector<8x256xf32>, i32 -> vector<8x256xf32>
    %c7_468 = arith.constant 7 : index
    %c0_469 = arith.constant 0 : index
    %c0_470 = arith.constant 0 : index
    %543 = vector.load %arg8[%c7_468, %c0_469, %c0_470] : memref<9x8x256xf32, #tpu.memory_space<vmem>>, vector<1x8x256xf32>
    %544 = vector.shape_cast %543 : vector<1x8x256xf32> to vector<8x256xf32>
    %545 = arith.mulf %542, %544 : vector<8x256xf32>
    %546 = arith.truncf %545 : vector<8x256xf32> to vector<8x256xbf16>
    %c272_471 = arith.constant 272 : index
    %c0_472 = arith.constant 0 : index
    %547 = vector.load %arg10[%c272_471, %c0_472] : memref<360x256xbf16, #tpu.memory_space<vmem>>, vector<8x256xbf16>
    tpu.vector_store %arg10[%c272_471, %c0_472], %546 {strides = array<i32>} : memref<360x256xbf16, #tpu.memory_space<vmem>>, vector<8x256xbf16>,
    %c239_i32_473 = arith.constant 239 : i32
    %548 = tpu.dynamic_rotate %503 by %c239_i32_473 dim 1 : vector<8x256xf32>, i32 -> vector<8x256xf32>
    %c8_474 = arith.constant 8 : index
    %c0_475 = arith.constant 0 : index
    %c0_476 = arith.constant 0 : index
    %549 = vector.load %arg8[%c8_474, %c0_475, %c0_476] : memref<9x8x256xf32, #tpu.memory_space<vmem>>, vector<1x8x256xf32>
    %550 = vector.shape_cast %549 : vector<1x8x256xf32> to vector<8x256xf32>
    %551 = arith.mulf %548, %550 : vector<8x256xf32>
    %552 = arith.truncf %551 : vector<8x256xf32> to vector<8x256xbf16>
    %c280_477 = arith.constant 280 : index
    %c0_478 = arith.constant 0 : index
    %553 = vector.load %arg10[%c280_477, %c0_478] : memref<360x256xbf16, #tpu.memory_space<vmem>>, vector<8x256xbf16>
    tpu.vector_store %arg10[%c280_477, %c0_478], %552 {strides = array<i32>} : memref<360x256xbf16, #tpu.memory_space<vmem>>, vector<8x256xbf16>,
    %c1_479 = arith.constant 1 : index
    %c0_480 = arith.constant 0 : index
    %c0_481 = arith.constant 0 : index
    %554 = vector.load %arg5[%c1_479, %c0_480, %c0_481] : memref<3x8x288xbf16, #tpu.memory_space<vmem>>, vector<1x8x288xbf16>
    %555 = vector.shape_cast %554 : vector<1x8x288xbf16> to vector<8x288xbf16>
    %c0_482 = arith.constant 0 : index
    %c0_483 = arith.constant 0 : index
    %556 = vector.load %arg10[%c0_482, %c0_483] : memref<360x256xbf16, #tpu.memory_space<vmem>>, vector<288x256xbf16>
    %cst_484 = arith.constant dense<0.000000e+00> : vector<8x256xf32>
    %557 = tpu.matmul %555, %556, %cst_484 {dimension_numbers = #tpu.dot_dimension_numbers<[1], [0], [0], [1], [0, 0, 1, 1], [], []>} : vector<8x288xbf16>, vector<288x256xbf16>, vector<8x256xf32> -> vector<8x256xf32>
    %c8_485 = arith.constant 8 : index
    %c0_486 = arith.constant 0 : index
    %c0_487 = arith.constant 0 : index
    %558 = vector.load %arg7[%c8_485, %c0_486, %c0_487] : memref<15x8x1xf32, #tpu.memory_space<vmem>>, vector<1x8x1xf32>
    %559 = vector.shape_cast %558 : vector<1x8x1xf32> to vector<8x1xf32>
    %560 = vector.broadcast %559 : vector<8x1xf32> to vector<8x256xf32>
    %561 = arith.addf %557, %560 : vector<8x256xf32>
    %cst_488 = arith.constant 0.000000e+00 : f32
    %562 = vector.broadcast %cst_488 : f32 to vector<8x256xf32>
    %563 = arith.cmpf oge, %561, %562 : vector<8x256xf32>
    %cst_489 = arith.constant 2.000000e-01 : f32
    %564 = vector.broadcast %cst_489 : f32 to vector<8x256xf32>
    %565 = arith.mulf %564, %561 : vector<8x256xf32>
    %566 = arith.select %563, %561, %565 : vector<8x256xi1>, vector<8x256xf32>
    %c17_i32_490 = arith.constant 17 : i32
    %567 = tpu.dynamic_rotate %566 by %c17_i32_490 dim 1 : vector<8x256xf32>, i32 -> vector<8x256xf32>
    %c0_491 = arith.constant 0 : index
    %c0_492 = arith.constant 0 : index
    %c0_493 = arith.constant 0 : index
    %568 = vector.load %arg8[%c0_491, %c0_492, %c0_493] : memref<9x8x256xf32, #tpu.memory_space<vmem>>, vector<1x8x256xf32>
    %569 = vector.shape_cast %568 : vector<1x8x256xf32> to vector<8x256xf32>
    %570 = arith.mulf %567, %569 : vector<8x256xf32>
    %571 = arith.truncf %570 : vector<8x256xf32> to vector<8x256xbf16>
    %c288_494 = arith.constant 288 : index
    %c0_495 = arith.constant 0 : index
    %572 = vector.load %arg10[%c288_494, %c0_495] : memref<360x256xbf16, #tpu.memory_space<vmem>>, vector<8x256xbf16>
    tpu.vector_store %arg10[%c288_494, %c0_495], %571 {strides = array<i32>} : memref<360x256xbf16, #tpu.memory_space<vmem>>, vector<8x256xbf16>,
    %c16_i32_496 = arith.constant 16 : i32
    %573 = tpu.dynamic_rotate %566 by %c16_i32_496 dim 1 : vector<8x256xf32>, i32 -> vector<8x256xf32>
    %c1_497 = arith.constant 1 : index
    %c0_498 = arith.constant 0 : index
    %c0_499 = arith.constant 0 : index
    %574 = vector.load %arg8[%c1_497, %c0_498, %c0_499] : memref<9x8x256xf32, #tpu.memory_space<vmem>>, vector<1x8x256xf32>
    %575 = vector.shape_cast %574 : vector<1x8x256xf32> to vector<8x256xf32>
    %576 = arith.mulf %573, %575 : vector<8x256xf32>
    %577 = arith.truncf %576 : vector<8x256xf32> to vector<8x256xbf16>
    %c296_500 = arith.constant 296 : index
    %c0_501 = arith.constant 0 : index
    %578 = vector.load %arg10[%c296_500, %c0_501] : memref<360x256xbf16, #tpu.memory_space<vmem>>, vector<8x256xbf16>
    tpu.vector_store %arg10[%c296_500, %c0_501], %577 {strides = array<i32>} : memref<360x256xbf16, #tpu.memory_space<vmem>>, vector<8x256xbf16>,
    %c15_i32_502 = arith.constant 15 : i32
    %579 = tpu.dynamic_rotate %566 by %c15_i32_502 dim 1 : vector<8x256xf32>, i32 -> vector<8x256xf32>
    %c2_503 = arith.constant 2 : index
    %c0_504 = arith.constant 0 : index
    %c0_505 = arith.constant 0 : index
    %580 = vector.load %arg8[%c2_503, %c0_504, %c0_505] : memref<9x8x256xf32, #tpu.memory_space<vmem>>, vector<1x8x256xf32>
    %581 = vector.shape_cast %580 : vector<1x8x256xf32> to vector<8x256xf32>
    %582 = arith.mulf %579, %581 : vector<8x256xf32>
    %583 = arith.truncf %582 : vector<8x256xf32> to vector<8x256xbf16>
    %c304_506 = arith.constant 304 : index
    %c0_507 = arith.constant 0 : index
    %584 = vector.load %arg10[%c304_506, %c0_507] : memref<360x256xbf16, #tpu.memory_space<vmem>>, vector<8x256xbf16>
    tpu.vector_store %arg10[%c304_506, %c0_507], %583 {strides = array<i32>} : memref<360x256xbf16, #tpu.memory_space<vmem>>, vector<8x256xbf16>,
    %c1_i32_508 = arith.constant 1 : i32
    %585 = tpu.dynamic_rotate %566 by %c1_i32_508 dim 1 : vector<8x256xf32>, i32 -> vector<8x256xf32>
    %c3_509 = arith.constant 3 : index
    %c0_510 = arith.constant 0 : index
    %c0_511 = arith.constant 0 : index
    %586 = vector.load %arg8[%c3_509, %c0_510, %c0_511] : memref<9x8x256xf32, #tpu.memory_space<vmem>>, vector<1x8x256xf32>
    %587 = vector.shape_cast %586 : vector<1x8x256xf32> to vector<8x256xf32>
    %588 = arith.mulf %585, %587 : vector<8x256xf32>
    %589 = arith.truncf %588 : vector<8x256xf32> to vector<8x256xbf16>
    %c312_512 = arith.constant 312 : index
    %c0_513 = arith.constant 0 : index
    %590 = vector.load %arg10[%c312_512, %c0_513] : memref<360x256xbf16, #tpu.memory_space<vmem>>, vector<8x256xbf16>
    tpu.vector_store %arg10[%c312_512, %c0_513], %589 {strides = array<i32>} : memref<360x256xbf16, #tpu.memory_space<vmem>>, vector<8x256xbf16>,
    %591 = arith.truncf %566 : vector<8x256xf32> to vector<8x256xbf16>
    %c320_514 = arith.constant 320 : index
    %c0_515 = arith.constant 0 : index
    %592 = vector.load %arg10[%c320_514, %c0_515] : memref<360x256xbf16, #tpu.memory_space<vmem>>, vector<8x256xbf16>
    tpu.vector_store %arg10[%c320_514, %c0_515], %591 {strides = array<i32>} : memref<360x256xbf16, #tpu.memory_space<vmem>>, vector<8x256xbf16>,
    %c255_i32_516 = arith.constant 255 : i32
    %593 = tpu.dynamic_rotate %566 by %c255_i32_516 dim 1 : vector<8x256xf32>, i32 -> vector<8x256xf32>
    %c5_517 = arith.constant 5 : index
    %c0_518 = arith.constant 0 : index
    %c0_519 = arith.constant 0 : index
    %594 = vector.load %arg8[%c5_517, %c0_518, %c0_519] : memref<9x8x256xf32, #tpu.memory_space<vmem>>, vector<1x8x256xf32>
    %595 = vector.shape_cast %594 : vector<1x8x256xf32> to vector<8x256xf32>
    %596 = arith.mulf %593, %595 : vector<8x256xf32>
    %597 = arith.truncf %596 : vector<8x256xf32> to vector<8x256xbf16>
    %c328_520 = arith.constant 328 : index
    %c0_521 = arith.constant 0 : index
    %598 = vector.load %arg10[%c328_520, %c0_521] : memref<360x256xbf16, #tpu.memory_space<vmem>>, vector<8x256xbf16>
    tpu.vector_store %arg10[%c328_520, %c0_521], %597 {strides = array<i32>} : memref<360x256xbf16, #tpu.memory_space<vmem>>, vector<8x256xbf16>,
    %c241_i32_522 = arith.constant 241 : i32
    %599 = tpu.dynamic_rotate %566 by %c241_i32_522 dim 1 : vector<8x256xf32>, i32 -> vector<8x256xf32>
    %c6_523 = arith.constant 6 : index
    %c0_524 = arith.constant 0 : index
    %c0_525 = arith.constant 0 : index
    %600 = vector.load %arg8[%c6_523, %c0_524, %c0_525] : memref<9x8x256xf32, #tpu.memory_space<vmem>>, vector<1x8x256xf32>
    %601 = vector.shape_cast %600 : vector<1x8x256xf32> to vector<8x256xf32>
    %602 = arith.mulf %599, %601 : vector<8x256xf32>
    %603 = arith.truncf %602 : vector<8x256xf32> to vector<8x256xbf16>
    %c336_526 = arith.constant 336 : index
    %c0_527 = arith.constant 0 : index
    %604 = vector.load %arg10[%c336_526, %c0_527] : memref<360x256xbf16, #tpu.memory_space<vmem>>, vector<8x256xbf16>
    tpu.vector_store %arg10[%c336_526, %c0_527], %603 {strides = array<i32>} : memref<360x256xbf16, #tpu.memory_space<vmem>>, vector<8x256xbf16>,
    %c240_i32_528 = arith.constant 240 : i32
    %605 = tpu.dynamic_rotate %566 by %c240_i32_528 dim 1 : vector<8x256xf32>, i32 -> vector<8x256xf32>
    %c7_529 = arith.constant 7 : index
    %c0_530 = arith.constant 0 : index
    %c0_531 = arith.constant 0 : index
    %606 = vector.load %arg8[%c7_529, %c0_530, %c0_531] : memref<9x8x256xf32, #tpu.memory_space<vmem>>, vector<1x8x256xf32>
    %607 = vector.shape_cast %606 : vector<1x8x256xf32> to vector<8x256xf32>
    %608 = arith.mulf %605, %607 : vector<8x256xf32>
    %609 = arith.truncf %608 : vector<8x256xf32> to vector<8x256xbf16>
    %c344_532 = arith.constant 344 : index
    %c0_533 = arith.constant 0 : index
    %610 = vector.load %arg10[%c344_532, %c0_533] : memref<360x256xbf16, #tpu.memory_space<vmem>>, vector<8x256xbf16>
    tpu.vector_store %arg10[%c344_532, %c0_533], %609 {strides = array<i32>} : memref<360x256xbf16, #tpu.memory_space<vmem>>, vector<8x256xbf16>,
    %c239_i32_534 = arith.constant 239 : i32
    %611 = tpu.dynamic_rotate %566 by %c239_i32_534 dim 1 : vector<8x256xf32>, i32 -> vector<8x256xf32>
    %c8_535 = arith.constant 8 : index
    %c0_536 = arith.constant 0 : index
    %c0_537 = arith.constant 0 : index
    %612 = vector.load %arg8[%c8_535, %c0_536, %c0_537] : memref<9x8x256xf32, #tpu.memory_space<vmem>>, vector<1x8x256xf32>
    %613 = vector.shape_cast %612 : vector<1x8x256xf32> to vector<8x256xf32>
    %614 = arith.mulf %611, %613 : vector<8x256xf32>
    %615 = arith.truncf %614 : vector<8x256xf32> to vector<8x256xbf16>
    %c352_538 = arith.constant 352 : index
    %c0_539 = arith.constant 0 : index
    %616 = vector.load %arg10[%c352_538, %c0_539] : memref<360x256xbf16, #tpu.memory_space<vmem>>, vector<8x256xbf16>
    tpu.vector_store %arg10[%c352_538, %c0_539], %615 {strides = array<i32>} : memref<360x256xbf16, #tpu.memory_space<vmem>>, vector<8x256xbf16>,
    %c1_540 = arith.constant 1 : index
    %c0_541 = arith.constant 0 : index
    %c0_542 = arith.constant 0 : index
    %617 = vector.load %arg6[%c1_540, %c0_541, %c0_542] : memref<3x8x360xbf16, #tpu.memory_space<vmem>>, vector<1x8x360xbf16>
    %618 = vector.shape_cast %617 : vector<1x8x360xbf16> to vector<8x360xbf16>
    %c0_543 = arith.constant 0 : index
    %c0_544 = arith.constant 0 : index
    %619 = vector.load %arg10[%c0_543, %c0_544] : memref<360x256xbf16, #tpu.memory_space<vmem>>, vector<360x256xbf16>
    %cst_545 = arith.constant dense<0.000000e+00> : vector<8x256xf32>
    %620 = tpu.matmul %618, %619, %cst_545 {dimension_numbers = #tpu.dot_dimension_numbers<[1], [0], [0], [1], [0, 0, 1, 1], [], []>} : vector<8x360xbf16>, vector<360x256xbf16>, vector<8x256xf32> -> vector<8x256xf32>
    %c9 = arith.constant 9 : index
    %c0_546 = arith.constant 0 : index
    %c0_547 = arith.constant 0 : index
    %621 = vector.load %arg7[%c9, %c0_546, %c0_547] : memref<15x8x1xf32, #tpu.memory_space<vmem>>, vector<1x8x1xf32>
    %622 = vector.shape_cast %621 : vector<1x8x1xf32> to vector<8x1xf32>
    %623 = vector.broadcast %622 : vector<8x1xf32> to vector<8x256xf32>
    %624 = arith.addf %620, %623 : vector<8x256xf32>
    %cst_548 = arith.constant 2.000000e-01 : f32
    %625 = vector.broadcast %cst_548 : f32 to vector<8x256xf32>
    %626 = arith.mulf %624, %625 : vector<8x256xf32>
    %627 = arith.addf %626, %314 : vector<8x256xf32>
    %c17_i32_549 = arith.constant 17 : i32
    %628 = tpu.dynamic_rotate %627 by %c17_i32_549 dim 1 : vector<8x256xf32>, i32 -> vector<8x256xf32>
    %c0_550 = arith.constant 0 : index
    %c0_551 = arith.constant 0 : index
    %c0_552 = arith.constant 0 : index
    %629 = vector.load %arg8[%c0_550, %c0_551, %c0_552] : memref<9x8x256xf32, #tpu.memory_space<vmem>>, vector<1x8x256xf32>
    %630 = vector.shape_cast %629 : vector<1x8x256xf32> to vector<8x256xf32>
    %631 = arith.mulf %628, %630 : vector<8x256xf32>
    %632 = arith.truncf %631 : vector<8x256xf32> to vector<8x256xbf16>
    %c0_553 = arith.constant 0 : index
    %c0_554 = arith.constant 0 : index
    %633 = vector.load %arg10[%c0_553, %c0_554] : memref<360x256xbf16, #tpu.memory_space<vmem>>, vector<8x256xbf16>
    tpu.vector_store %arg10[%c0_553, %c0_554], %632 {strides = array<i32>} : memref<360x256xbf16, #tpu.memory_space<vmem>>, vector<8x256xbf16>,
    %c16_i32_555 = arith.constant 16 : i32
    %634 = tpu.dynamic_rotate %627 by %c16_i32_555 dim 1 : vector<8x256xf32>, i32 -> vector<8x256xf32>
    %c1_556 = arith.constant 1 : index
    %c0_557 = arith.constant 0 : index
    %c0_558 = arith.constant 0 : index
    %635 = vector.load %arg8[%c1_556, %c0_557, %c0_558] : memref<9x8x256xf32, #tpu.memory_space<vmem>>, vector<1x8x256xf32>
    %636 = vector.shape_cast %635 : vector<1x8x256xf32> to vector<8x256xf32>
    %637 = arith.mulf %634, %636 : vector<8x256xf32>
    %638 = arith.truncf %637 : vector<8x256xf32> to vector<8x256xbf16>
    %c8_559 = arith.constant 8 : index
    %c0_560 = arith.constant 0 : index
    %639 = vector.load %arg10[%c8_559, %c0_560] : memref<360x256xbf16, #tpu.memory_space<vmem>>, vector<8x256xbf16>
    tpu.vector_store %arg10[%c8_559, %c0_560], %638 {strides = array<i32>} : memref<360x256xbf16, #tpu.memory_space<vmem>>, vector<8x256xbf16>,
    %c15_i32_561 = arith.constant 15 : i32
    %640 = tpu.dynamic_rotate %627 by %c15_i32_561 dim 1 : vector<8x256xf32>, i32 -> vector<8x256xf32>
    %c2_562 = arith.constant 2 : index
    %c0_563 = arith.constant 0 : index
    %c0_564 = arith.constant 0 : index
    %641 = vector.load %arg8[%c2_562, %c0_563, %c0_564] : memref<9x8x256xf32, #tpu.memory_space<vmem>>, vector<1x8x256xf32>
    %642 = vector.shape_cast %641 : vector<1x8x256xf32> to vector<8x256xf32>
    %643 = arith.mulf %640, %642 : vector<8x256xf32>
    %644 = arith.truncf %643 : vector<8x256xf32> to vector<8x256xbf16>
    %c16_565 = arith.constant 16 : index
    %c0_566 = arith.constant 0 : index
    %645 = vector.load %arg10[%c16_565, %c0_566] : memref<360x256xbf16, #tpu.memory_space<vmem>>, vector<8x256xbf16>
    tpu.vector_store %arg10[%c16_565, %c0_566], %644 {strides = array<i32>} : memref<360x256xbf16, #tpu.memory_space<vmem>>, vector<8x256xbf16>,
    %c1_i32_567 = arith.constant 1 : i32
    %646 = tpu.dynamic_rotate %627 by %c1_i32_567 dim 1 : vector<8x256xf32>, i32 -> vector<8x256xf32>
    %c3_568 = arith.constant 3 : index
    %c0_569 = arith.constant 0 : index
    %c0_570 = arith.constant 0 : index
    %647 = vector.load %arg8[%c3_568, %c0_569, %c0_570] : memref<9x8x256xf32, #tpu.memory_space<vmem>>, vector<1x8x256xf32>
    %648 = vector.shape_cast %647 : vector<1x8x256xf32> to vector<8x256xf32>
    %649 = arith.mulf %646, %648 : vector<8x256xf32>
    %650 = arith.truncf %649 : vector<8x256xf32> to vector<8x256xbf16>
    %c24_571 = arith.constant 24 : index
    %c0_572 = arith.constant 0 : index
    %651 = vector.load %arg10[%c24_571, %c0_572] : memref<360x256xbf16, #tpu.memory_space<vmem>>, vector<8x256xbf16>
    tpu.vector_store %arg10[%c24_571, %c0_572], %650 {strides = array<i32>} : memref<360x256xbf16, #tpu.memory_space<vmem>>, vector<8x256xbf16>,
    %652 = arith.truncf %627 : vector<8x256xf32> to vector<8x256xbf16>
    %c32_573 = arith.constant 32 : index
    %c0_574 = arith.constant 0 : index
    %653 = vector.load %arg10[%c32_573, %c0_574] : memref<360x256xbf16, #tpu.memory_space<vmem>>, vector<8x256xbf16>
    tpu.vector_store %arg10[%c32_573, %c0_574], %652 {strides = array<i32>} : memref<360x256xbf16, #tpu.memory_space<vmem>>, vector<8x256xbf16>,
    %c255_i32_575 = arith.constant 255 : i32
    %654 = tpu.dynamic_rotate %627 by %c255_i32_575 dim 1 : vector<8x256xf32>, i32 -> vector<8x256xf32>
    %c5_576 = arith.constant 5 : index
    %c0_577 = arith.constant 0 : index
    %c0_578 = arith.constant 0 : index
    %655 = vector.load %arg8[%c5_576, %c0_577, %c0_578] : memref<9x8x256xf32, #tpu.memory_space<vmem>>, vector<1x8x256xf32>
    %656 = vector.shape_cast %655 : vector<1x8x256xf32> to vector<8x256xf32>
    %657 = arith.mulf %654, %656 : vector<8x256xf32>
    %658 = arith.truncf %657 : vector<8x256xf32> to vector<8x256xbf16>
    %c40_579 = arith.constant 40 : index
    %c0_580 = arith.constant 0 : index
    %659 = vector.load %arg10[%c40_579, %c0_580] : memref<360x256xbf16, #tpu.memory_space<vmem>>, vector<8x256xbf16>
    tpu.vector_store %arg10[%c40_579, %c0_580], %658 {strides = array<i32>} : memref<360x256xbf16, #tpu.memory_space<vmem>>, vector<8x256xbf16>,
    %c241_i32_581 = arith.constant 241 : i32
    %660 = tpu.dynamic_rotate %627 by %c241_i32_581 dim 1 : vector<8x256xf32>, i32 -> vector<8x256xf32>
    %c6_582 = arith.constant 6 : index
    %c0_583 = arith.constant 0 : index
    %c0_584 = arith.constant 0 : index
    %661 = vector.load %arg8[%c6_582, %c0_583, %c0_584] : memref<9x8x256xf32, #tpu.memory_space<vmem>>, vector<1x8x256xf32>
    %662 = vector.shape_cast %661 : vector<1x8x256xf32> to vector<8x256xf32>
    %663 = arith.mulf %660, %662 : vector<8x256xf32>
    %664 = arith.truncf %663 : vector<8x256xf32> to vector<8x256xbf16>
    %c48_585 = arith.constant 48 : index
    %c0_586 = arith.constant 0 : index
    %665 = vector.load %arg10[%c48_585, %c0_586] : memref<360x256xbf16, #tpu.memory_space<vmem>>, vector<8x256xbf16>
    tpu.vector_store %arg10[%c48_585, %c0_586], %664 {strides = array<i32>} : memref<360x256xbf16, #tpu.memory_space<vmem>>, vector<8x256xbf16>,
    %c240_i32_587 = arith.constant 240 : i32
    %666 = tpu.dynamic_rotate %627 by %c240_i32_587 dim 1 : vector<8x256xf32>, i32 -> vector<8x256xf32>
    %c7_588 = arith.constant 7 : index
    %c0_589 = arith.constant 0 : index
    %c0_590 = arith.constant 0 : index
    %667 = vector.load %arg8[%c7_588, %c0_589, %c0_590] : memref<9x8x256xf32, #tpu.memory_space<vmem>>, vector<1x8x256xf32>
    %668 = vector.shape_cast %667 : vector<1x8x256xf32> to vector<8x256xf32>
    %669 = arith.mulf %666, %668 : vector<8x256xf32>
    %670 = arith.truncf %669 : vector<8x256xf32> to vector<8x256xbf16>
    %c56_591 = arith.constant 56 : index
    %c0_592 = arith.constant 0 : index
    %671 = vector.load %arg10[%c56_591, %c0_592] : memref<360x256xbf16, #tpu.memory_space<vmem>>, vector<8x256xbf16>
    tpu.vector_store %arg10[%c56_591, %c0_592], %670 {strides = array<i32>} : memref<360x256xbf16, #tpu.memory_space<vmem>>, vector<8x256xbf16>,
    %c239_i32_593 = arith.constant 239 : i32
    %672 = tpu.dynamic_rotate %627 by %c239_i32_593 dim 1 : vector<8x256xf32>, i32 -> vector<8x256xf32>
    %c8_594 = arith.constant 8 : index
    %c0_595 = arith.constant 0 : index
    %c0_596 = arith.constant 0 : index
    %673 = vector.load %arg8[%c8_594, %c0_595, %c0_596] : memref<9x8x256xf32, #tpu.memory_space<vmem>>, vector<1x8x256xf32>
    %674 = vector.shape_cast %673 : vector<1x8x256xf32> to vector<8x256xf32>
    %675 = arith.mulf %672, %674 : vector<8x256xf32>
    %676 = arith.truncf %675 : vector<8x256xf32> to vector<8x256xbf16>
    %c64_597 = arith.constant 64 : index
    %c0_598 = arith.constant 0 : index
    %677 = vector.load %arg10[%c64_597, %c0_598] : memref<360x256xbf16, #tpu.memory_space<vmem>>, vector<8x256xbf16>
    tpu.vector_store %arg10[%c64_597, %c0_598], %676 {strides = array<i32>} : memref<360x256xbf16, #tpu.memory_space<vmem>>, vector<8x256xbf16>,
    %c2_599 = arith.constant 2 : index
    %c0_600 = arith.constant 0 : index
    %c0_601 = arith.constant 0 : index
    %678 = vector.load %arg2[%c2_599, %c0_600, %c0_601] : memref<3x8x72xbf16, #tpu.memory_space<vmem>>, vector<1x8x72xbf16>
    %679 = vector.shape_cast %678 : vector<1x8x72xbf16> to vector<8x72xbf16>
    %c0_602 = arith.constant 0 : index
    %c0_603 = arith.constant 0 : index
    %680 = vector.load %arg10[%c0_602, %c0_603] : memref<360x256xbf16, #tpu.memory_space<vmem>>, vector<72x256xbf16>
    %cst_604 = arith.constant dense<0.000000e+00> : vector<8x256xf32>
    %681 = tpu.matmul %679, %680, %cst_604 {dimension_numbers = #tpu.dot_dimension_numbers<[1], [0], [0], [1], [0, 0, 1, 1], [], []>} : vector<8x72xbf16>, vector<72x256xbf16>, vector<8x256xf32> -> vector<8x256xf32>
    %c10 = arith.constant 10 : index
    %c0_605 = arith.constant 0 : index
    %c0_606 = arith.constant 0 : index
    %682 = vector.load %arg7[%c10, %c0_605, %c0_606] : memref<15x8x1xf32, #tpu.memory_space<vmem>>, vector<1x8x1xf32>
    %683 = vector.shape_cast %682 : vector<1x8x1xf32> to vector<8x1xf32>
    %684 = vector.broadcast %683 : vector<8x1xf32> to vector<8x256xf32>
    %685 = arith.addf %681, %684 : vector<8x256xf32>
    %cst_607 = arith.constant 0.000000e+00 : f32
    %686 = vector.broadcast %cst_607 : f32 to vector<8x256xf32>
    %687 = arith.cmpf oge, %685, %686 : vector<8x256xf32>
    %cst_608 = arith.constant 2.000000e-01 : f32
    %688 = vector.broadcast %cst_608 : f32 to vector<8x256xf32>
    %689 = arith.mulf %688, %685 : vector<8x256xf32>
    %690 = arith.select %687, %685, %689 : vector<8x256xi1>, vector<8x256xf32>
    %c17_i32_609 = arith.constant 17 : i32
    %691 = tpu.dynamic_rotate %690 by %c17_i32_609 dim 1 : vector<8x256xf32>, i32 -> vector<8x256xf32>
    %c0_610 = arith.constant 0 : index
    %c0_611 = arith.constant 0 : index
    %c0_612 = arith.constant 0 : index
    %692 = vector.load %arg8[%c0_610, %c0_611, %c0_612] : memref<9x8x256xf32, #tpu.memory_space<vmem>>, vector<1x8x256xf32>
    %693 = vector.shape_cast %692 : vector<1x8x256xf32> to vector<8x256xf32>
    %694 = arith.mulf %691, %693 : vector<8x256xf32>
    %695 = arith.truncf %694 : vector<8x256xf32> to vector<8x256xbf16>
    %c72_613 = arith.constant 72 : index
    %c0_614 = arith.constant 0 : index
    %696 = vector.load %arg10[%c72_613, %c0_614] : memref<360x256xbf16, #tpu.memory_space<vmem>>, vector<8x256xbf16>
    tpu.vector_store %arg10[%c72_613, %c0_614], %695 {strides = array<i32>} : memref<360x256xbf16, #tpu.memory_space<vmem>>, vector<8x256xbf16>,
    %c16_i32_615 = arith.constant 16 : i32
    %697 = tpu.dynamic_rotate %690 by %c16_i32_615 dim 1 : vector<8x256xf32>, i32 -> vector<8x256xf32>
    %c1_616 = arith.constant 1 : index
    %c0_617 = arith.constant 0 : index
    %c0_618 = arith.constant 0 : index
    %698 = vector.load %arg8[%c1_616, %c0_617, %c0_618] : memref<9x8x256xf32, #tpu.memory_space<vmem>>, vector<1x8x256xf32>
    %699 = vector.shape_cast %698 : vector<1x8x256xf32> to vector<8x256xf32>
    %700 = arith.mulf %697, %699 : vector<8x256xf32>
    %701 = arith.truncf %700 : vector<8x256xf32> to vector<8x256xbf16>
    %c80_619 = arith.constant 80 : index
    %c0_620 = arith.constant 0 : index
    %702 = vector.load %arg10[%c80_619, %c0_620] : memref<360x256xbf16, #tpu.memory_space<vmem>>, vector<8x256xbf16>
    tpu.vector_store %arg10[%c80_619, %c0_620], %701 {strides = array<i32>} : memref<360x256xbf16, #tpu.memory_space<vmem>>, vector<8x256xbf16>,
    %c15_i32_621 = arith.constant 15 : i32
    %703 = tpu.dynamic_rotate %690 by %c15_i32_621 dim 1 : vector<8x256xf32>, i32 -> vector<8x256xf32>
    %c2_622 = arith.constant 2 : index
    %c0_623 = arith.constant 0 : index
    %c0_624 = arith.constant 0 : index
    %704 = vector.load %arg8[%c2_622, %c0_623, %c0_624] : memref<9x8x256xf32, #tpu.memory_space<vmem>>, vector<1x8x256xf32>
    %705 = vector.shape_cast %704 : vector<1x8x256xf32> to vector<8x256xf32>
    %706 = arith.mulf %703, %705 : vector<8x256xf32>
    %707 = arith.truncf %706 : vector<8x256xf32> to vector<8x256xbf16>
    %c88_625 = arith.constant 88 : index
    %c0_626 = arith.constant 0 : index
    %708 = vector.load %arg10[%c88_625, %c0_626] : memref<360x256xbf16, #tpu.memory_space<vmem>>, vector<8x256xbf16>
    tpu.vector_store %arg10[%c88_625, %c0_626], %707 {strides = array<i32>} : memref<360x256xbf16, #tpu.memory_space<vmem>>, vector<8x256xbf16>,
    %c1_i32_627 = arith.constant 1 : i32
    %709 = tpu.dynamic_rotate %690 by %c1_i32_627 dim 1 : vector<8x256xf32>, i32 -> vector<8x256xf32>
    %c3_628 = arith.constant 3 : index
    %c0_629 = arith.constant 0 : index
    %c0_630 = arith.constant 0 : index
    %710 = vector.load %arg8[%c3_628, %c0_629, %c0_630] : memref<9x8x256xf32, #tpu.memory_space<vmem>>, vector<1x8x256xf32>
    %711 = vector.shape_cast %710 : vector<1x8x256xf32> to vector<8x256xf32>
    %712 = arith.mulf %709, %711 : vector<8x256xf32>
    %713 = arith.truncf %712 : vector<8x256xf32> to vector<8x256xbf16>
    %c96_631 = arith.constant 96 : index
    %c0_632 = arith.constant 0 : index
    %714 = vector.load %arg10[%c96_631, %c0_632] : memref<360x256xbf16, #tpu.memory_space<vmem>>, vector<8x256xbf16>
    tpu.vector_store %arg10[%c96_631, %c0_632], %713 {strides = array<i32>} : memref<360x256xbf16, #tpu.memory_space<vmem>>, vector<8x256xbf16>,
    %715 = arith.truncf %690 : vector<8x256xf32> to vector<8x256xbf16>
    %c104_633 = arith.constant 104 : index
    %c0_634 = arith.constant 0 : index
    %716 = vector.load %arg10[%c104_633, %c0_634] : memref<360x256xbf16, #tpu.memory_space<vmem>>, vector<8x256xbf16>
    tpu.vector_store %arg10[%c104_633, %c0_634], %715 {strides = array<i32>} : memref<360x256xbf16, #tpu.memory_space<vmem>>, vector<8x256xbf16>,
    %c255_i32_635 = arith.constant 255 : i32
    %717 = tpu.dynamic_rotate %690 by %c255_i32_635 dim 1 : vector<8x256xf32>, i32 -> vector<8x256xf32>
    %c5_636 = arith.constant 5 : index
    %c0_637 = arith.constant 0 : index
    %c0_638 = arith.constant 0 : index
    %718 = vector.load %arg8[%c5_636, %c0_637, %c0_638] : memref<9x8x256xf32, #tpu.memory_space<vmem>>, vector<1x8x256xf32>
    %719 = vector.shape_cast %718 : vector<1x8x256xf32> to vector<8x256xf32>
    %720 = arith.mulf %717, %719 : vector<8x256xf32>
    %721 = arith.truncf %720 : vector<8x256xf32> to vector<8x256xbf16>
    %c112_639 = arith.constant 112 : index
    %c0_640 = arith.constant 0 : index
    %722 = vector.load %arg10[%c112_639, %c0_640] : memref<360x256xbf16, #tpu.memory_space<vmem>>, vector<8x256xbf16>
    tpu.vector_store %arg10[%c112_639, %c0_640], %721 {strides = array<i32>} : memref<360x256xbf16, #tpu.memory_space<vmem>>, vector<8x256xbf16>,
    %c241_i32_641 = arith.constant 241 : i32
    %723 = tpu.dynamic_rotate %690 by %c241_i32_641 dim 1 : vector<8x256xf32>, i32 -> vector<8x256xf32>
    %c6_642 = arith.constant 6 : index
    %c0_643 = arith.constant 0 : index
    %c0_644 = arith.constant 0 : index
    %724 = vector.load %arg8[%c6_642, %c0_643, %c0_644] : memref<9x8x256xf32, #tpu.memory_space<vmem>>, vector<1x8x256xf32>
    %725 = vector.shape_cast %724 : vector<1x8x256xf32> to vector<8x256xf32>
    %726 = arith.mulf %723, %725 : vector<8x256xf32>
    %727 = arith.truncf %726 : vector<8x256xf32> to vector<8x256xbf16>
    %c120_645 = arith.constant 120 : index
    %c0_646 = arith.constant 0 : index
    %728 = vector.load %arg10[%c120_645, %c0_646] : memref<360x256xbf16, #tpu.memory_space<vmem>>, vector<8x256xbf16>
    tpu.vector_store %arg10[%c120_645, %c0_646], %727 {strides = array<i32>} : memref<360x256xbf16, #tpu.memory_space<vmem>>, vector<8x256xbf16>,
    %c240_i32_647 = arith.constant 240 : i32
    %729 = tpu.dynamic_rotate %690 by %c240_i32_647 dim 1 : vector<8x256xf32>, i32 -> vector<8x256xf32>
    %c7_648 = arith.constant 7 : index
    %c0_649 = arith.constant 0 : index
    %c0_650 = arith.constant 0 : index
    %730 = vector.load %arg8[%c7_648, %c0_649, %c0_650] : memref<9x8x256xf32, #tpu.memory_space<vmem>>, vector<1x8x256xf32>
    %731 = vector.shape_cast %730 : vector<1x8x256xf32> to vector<8x256xf32>
    %732 = arith.mulf %729, %731 : vector<8x256xf32>
    %733 = arith.truncf %732 : vector<8x256xf32> to vector<8x256xbf16>
    %c128_651 = arith.constant 128 : index
    %c0_652 = arith.constant 0 : index
    %734 = vector.load %arg10[%c128_651, %c0_652] : memref<360x256xbf16, #tpu.memory_space<vmem>>, vector<8x256xbf16>
    tpu.vector_store %arg10[%c128_651, %c0_652], %733 {strides = array<i32>} : memref<360x256xbf16, #tpu.memory_space<vmem>>, vector<8x256xbf16>,
    %c239_i32_653 = arith.constant 239 : i32
    %735 = tpu.dynamic_rotate %690 by %c239_i32_653 dim 1 : vector<8x256xf32>, i32 -> vector<8x256xf32>
    %c8_654 = arith.constant 8 : index
    %c0_655 = arith.constant 0 : index
    %c0_656 = arith.constant 0 : index
    %736 = vector.load %arg8[%c8_654, %c0_655, %c0_656] : memref<9x8x256xf32, #tpu.memory_space<vmem>>, vector<1x8x256xf32>
    %737 = vector.shape_cast %736 : vector<1x8x256xf32> to vector<8x256xf32>
    %738 = arith.mulf %735, %737 : vector<8x256xf32>
    %739 = arith.truncf %738 : vector<8x256xf32> to vector<8x256xbf16>
    %c136_657 = arith.constant 136 : index
    %c0_658 = arith.constant 0 : index
    %740 = vector.load %arg10[%c136_657, %c0_658] : memref<360x256xbf16, #tpu.memory_space<vmem>>, vector<8x256xbf16>
    tpu.vector_store %arg10[%c136_657, %c0_658], %739 {strides = array<i32>} : memref<360x256xbf16, #tpu.memory_space<vmem>>, vector<8x256xbf16>,
    %c2_659 = arith.constant 2 : index
    %c0_660 = arith.constant 0 : index
    %c0_661 = arith.constant 0 : index
    %741 = vector.load %arg3[%c2_659, %c0_660, %c0_661] : memref<3x8x144xbf16, #tpu.memory_space<vmem>>, vector<1x8x144xbf16>
    %742 = vector.shape_cast %741 : vector<1x8x144xbf16> to vector<8x144xbf16>
    %c0_662 = arith.constant 0 : index
    %c0_663 = arith.constant 0 : index
    %743 = vector.load %arg10[%c0_662, %c0_663] : memref<360x256xbf16, #tpu.memory_space<vmem>>, vector<144x256xbf16>
    %cst_664 = arith.constant dense<0.000000e+00> : vector<8x256xf32>
    %744 = tpu.matmul %742, %743, %cst_664 {dimension_numbers = #tpu.dot_dimension_numbers<[1], [0], [0], [1], [0, 0, 1, 1], [], []>} : vector<8x144xbf16>, vector<144x256xbf16>, vector<8x256xf32> -> vector<8x256xf32>
    %c11 = arith.constant 11 : index
    %c0_665 = arith.constant 0 : index
    %c0_666 = arith.constant 0 : index
    %745 = vector.load %arg7[%c11, %c0_665, %c0_666] : memref<15x8x1xf32, #tpu.memory_space<vmem>>, vector<1x8x1xf32>
    %746 = vector.shape_cast %745 : vector<1x8x1xf32> to vector<8x1xf32>
    %747 = vector.broadcast %746 : vector<8x1xf32> to vector<8x256xf32>
    %748 = arith.addf %744, %747 : vector<8x256xf32>
    %cst_667 = arith.constant 0.000000e+00 : f32
    %749 = vector.broadcast %cst_667 : f32 to vector<8x256xf32>
    %750 = arith.cmpf oge, %748, %749 : vector<8x256xf32>
    %cst_668 = arith.constant 2.000000e-01 : f32
    %751 = vector.broadcast %cst_668 : f32 to vector<8x256xf32>
    %752 = arith.mulf %751, %748 : vector<8x256xf32>
    %753 = arith.select %750, %748, %752 : vector<8x256xi1>, vector<8x256xf32>
    %c17_i32_669 = arith.constant 17 : i32
    %754 = tpu.dynamic_rotate %753 by %c17_i32_669 dim 1 : vector<8x256xf32>, i32 -> vector<8x256xf32>
    %c0_670 = arith.constant 0 : index
    %c0_671 = arith.constant 0 : index
    %c0_672 = arith.constant 0 : index
    %755 = vector.load %arg8[%c0_670, %c0_671, %c0_672] : memref<9x8x256xf32, #tpu.memory_space<vmem>>, vector<1x8x256xf32>
    %756 = vector.shape_cast %755 : vector<1x8x256xf32> to vector<8x256xf32>
    %757 = arith.mulf %754, %756 : vector<8x256xf32>
    %758 = arith.truncf %757 : vector<8x256xf32> to vector<8x256xbf16>
    %c144_673 = arith.constant 144 : index
    %c0_674 = arith.constant 0 : index
    %759 = vector.load %arg10[%c144_673, %c0_674] : memref<360x256xbf16, #tpu.memory_space<vmem>>, vector<8x256xbf16>
    tpu.vector_store %arg10[%c144_673, %c0_674], %758 {strides = array<i32>} : memref<360x256xbf16, #tpu.memory_space<vmem>>, vector<8x256xbf16>,
    %c16_i32_675 = arith.constant 16 : i32
    %760 = tpu.dynamic_rotate %753 by %c16_i32_675 dim 1 : vector<8x256xf32>, i32 -> vector<8x256xf32>
    %c1_676 = arith.constant 1 : index
    %c0_677 = arith.constant 0 : index
    %c0_678 = arith.constant 0 : index
    %761 = vector.load %arg8[%c1_676, %c0_677, %c0_678] : memref<9x8x256xf32, #tpu.memory_space<vmem>>, vector<1x8x256xf32>
    %762 = vector.shape_cast %761 : vector<1x8x256xf32> to vector<8x256xf32>
    %763 = arith.mulf %760, %762 : vector<8x256xf32>
    %764 = arith.truncf %763 : vector<8x256xf32> to vector<8x256xbf16>
    %c152_679 = arith.constant 152 : index
    %c0_680 = arith.constant 0 : index
    %765 = vector.load %arg10[%c152_679, %c0_680] : memref<360x256xbf16, #tpu.memory_space<vmem>>, vector<8x256xbf16>
    tpu.vector_store %arg10[%c152_679, %c0_680], %764 {strides = array<i32>} : memref<360x256xbf16, #tpu.memory_space<vmem>>, vector<8x256xbf16>,
    %c15_i32_681 = arith.constant 15 : i32
    %766 = tpu.dynamic_rotate %753 by %c15_i32_681 dim 1 : vector<8x256xf32>, i32 -> vector<8x256xf32>
    %c2_682 = arith.constant 2 : index
    %c0_683 = arith.constant 0 : index
    %c0_684 = arith.constant 0 : index
    %767 = vector.load %arg8[%c2_682, %c0_683, %c0_684] : memref<9x8x256xf32, #tpu.memory_space<vmem>>, vector<1x8x256xf32>
    %768 = vector.shape_cast %767 : vector<1x8x256xf32> to vector<8x256xf32>
    %769 = arith.mulf %766, %768 : vector<8x256xf32>
    %770 = arith.truncf %769 : vector<8x256xf32> to vector<8x256xbf16>
    %c160_685 = arith.constant 160 : index
    %c0_686 = arith.constant 0 : index
    %771 = vector.load %arg10[%c160_685, %c0_686] : memref<360x256xbf16, #tpu.memory_space<vmem>>, vector<8x256xbf16>
    tpu.vector_store %arg10[%c160_685, %c0_686], %770 {strides = array<i32>} : memref<360x256xbf16, #tpu.memory_space<vmem>>, vector<8x256xbf16>,
    %c1_i32_687 = arith.constant 1 : i32
    %772 = tpu.dynamic_rotate %753 by %c1_i32_687 dim 1 : vector<8x256xf32>, i32 -> vector<8x256xf32>
    %c3_688 = arith.constant 3 : index
    %c0_689 = arith.constant 0 : index
    %c0_690 = arith.constant 0 : index
    %773 = vector.load %arg8[%c3_688, %c0_689, %c0_690] : memref<9x8x256xf32, #tpu.memory_space<vmem>>, vector<1x8x256xf32>
    %774 = vector.shape_cast %773 : vector<1x8x256xf32> to vector<8x256xf32>
    %775 = arith.mulf %772, %774 : vector<8x256xf32>
    %776 = arith.truncf %775 : vector<8x256xf32> to vector<8x256xbf16>
    %c168_691 = arith.constant 168 : index
    %c0_692 = arith.constant 0 : index
    %777 = vector.load %arg10[%c168_691, %c0_692] : memref<360x256xbf16, #tpu.memory_space<vmem>>, vector<8x256xbf16>
    tpu.vector_store %arg10[%c168_691, %c0_692], %776 {strides = array<i32>} : memref<360x256xbf16, #tpu.memory_space<vmem>>, vector<8x256xbf16>,
    %778 = arith.truncf %753 : vector<8x256xf32> to vector<8x256xbf16>
    %c176_693 = arith.constant 176 : index
    %c0_694 = arith.constant 0 : index
    %779 = vector.load %arg10[%c176_693, %c0_694] : memref<360x256xbf16, #tpu.memory_space<vmem>>, vector<8x256xbf16>
    tpu.vector_store %arg10[%c176_693, %c0_694], %778 {strides = array<i32>} : memref<360x256xbf16, #tpu.memory_space<vmem>>, vector<8x256xbf16>,
    %c255_i32_695 = arith.constant 255 : i32
    %780 = tpu.dynamic_rotate %753 by %c255_i32_695 dim 1 : vector<8x256xf32>, i32 -> vector<8x256xf32>
    %c5_696 = arith.constant 5 : index
    %c0_697 = arith.constant 0 : index
    %c0_698 = arith.constant 0 : index
    %781 = vector.load %arg8[%c5_696, %c0_697, %c0_698] : memref<9x8x256xf32, #tpu.memory_space<vmem>>, vector<1x8x256xf32>
    %782 = vector.shape_cast %781 : vector<1x8x256xf32> to vector<8x256xf32>
    %783 = arith.mulf %780, %782 : vector<8x256xf32>
    %784 = arith.truncf %783 : vector<8x256xf32> to vector<8x256xbf16>
    %c184_699 = arith.constant 184 : index
    %c0_700 = arith.constant 0 : index
    %785 = vector.load %arg10[%c184_699, %c0_700] : memref<360x256xbf16, #tpu.memory_space<vmem>>, vector<8x256xbf16>
    tpu.vector_store %arg10[%c184_699, %c0_700], %784 {strides = array<i32>} : memref<360x256xbf16, #tpu.memory_space<vmem>>, vector<8x256xbf16>,
    %c241_i32_701 = arith.constant 241 : i32
    %786 = tpu.dynamic_rotate %753 by %c241_i32_701 dim 1 : vector<8x256xf32>, i32 -> vector<8x256xf32>
    %c6_702 = arith.constant 6 : index
    %c0_703 = arith.constant 0 : index
    %c0_704 = arith.constant 0 : index
    %787 = vector.load %arg8[%c6_702, %c0_703, %c0_704] : memref<9x8x256xf32, #tpu.memory_space<vmem>>, vector<1x8x256xf32>
    %788 = vector.shape_cast %787 : vector<1x8x256xf32> to vector<8x256xf32>
    %789 = arith.mulf %786, %788 : vector<8x256xf32>
    %790 = arith.truncf %789 : vector<8x256xf32> to vector<8x256xbf16>
    %c192_705 = arith.constant 192 : index
    %c0_706 = arith.constant 0 : index
    %791 = vector.load %arg10[%c192_705, %c0_706] : memref<360x256xbf16, #tpu.memory_space<vmem>>, vector<8x256xbf16>
    tpu.vector_store %arg10[%c192_705, %c0_706], %790 {strides = array<i32>} : memref<360x256xbf16, #tpu.memory_space<vmem>>, vector<8x256xbf16>,
    %c240_i32_707 = arith.constant 240 : i32
    %792 = tpu.dynamic_rotate %753 by %c240_i32_707 dim 1 : vector<8x256xf32>, i32 -> vector<8x256xf32>
    %c7_708 = arith.constant 7 : index
    %c0_709 = arith.constant 0 : index
    %c0_710 = arith.constant 0 : index
    %793 = vector.load %arg8[%c7_708, %c0_709, %c0_710] : memref<9x8x256xf32, #tpu.memory_space<vmem>>, vector<1x8x256xf32>
    %794 = vector.shape_cast %793 : vector<1x8x256xf32> to vector<8x256xf32>
    %795 = arith.mulf %792, %794 : vector<8x256xf32>
    %796 = arith.truncf %795 : vector<8x256xf32> to vector<8x256xbf16>
    %c200_711 = arith.constant 200 : index
    %c0_712 = arith.constant 0 : index
    %797 = vector.load %arg10[%c200_711, %c0_712] : memref<360x256xbf16, #tpu.memory_space<vmem>>, vector<8x256xbf16>
    tpu.vector_store %arg10[%c200_711, %c0_712], %796 {strides = array<i32>} : memref<360x256xbf16, #tpu.memory_space<vmem>>, vector<8x256xbf16>,
    %c239_i32_713 = arith.constant 239 : i32
    %798 = tpu.dynamic_rotate %753 by %c239_i32_713 dim 1 : vector<8x256xf32>, i32 -> vector<8x256xf32>
    %c8_714 = arith.constant 8 : index
    %c0_715 = arith.constant 0 : index
    %c0_716 = arith.constant 0 : index
    %799 = vector.load %arg8[%c8_714, %c0_715, %c0_716] : memref<9x8x256xf32, #tpu.memory_space<vmem>>, vector<1x8x256xf32>
    %800 = vector.shape_cast %799 : vector<1x8x256xf32> to vector<8x256xf32>
    %801 = arith.mulf %798, %800 : vector<8x256xf32>
    %802 = arith.truncf %801 : vector<8x256xf32> to vector<8x256xbf16>
    %c208_717 = arith.constant 208 : index
    %c0_718 = arith.constant 0 : index
    %803 = vector.load %arg10[%c208_717, %c0_718] : memref<360x256xbf16, #tpu.memory_space<vmem>>, vector<8x256xbf16>
    tpu.vector_store %arg10[%c208_717, %c0_718], %802 {strides = array<i32>} : memref<360x256xbf16, #tpu.memory_space<vmem>>, vector<8x256xbf16>,
    %c2_719 = arith.constant 2 : index
    %c0_720 = arith.constant 0 : index
    %c0_721 = arith.constant 0 : index
    %804 = vector.load %arg4[%c2_719, %c0_720, %c0_721] : memref<3x8x216xbf16, #tpu.memory_space<vmem>>, vector<1x8x216xbf16>
    %805 = vector.shape_cast %804 : vector<1x8x216xbf16> to vector<8x216xbf16>
    %c0_722 = arith.constant 0 : index
    %c0_723 = arith.constant 0 : index
    %806 = vector.load %arg10[%c0_722, %c0_723] : memref<360x256xbf16, #tpu.memory_space<vmem>>, vector<216x256xbf16>
    %cst_724 = arith.constant dense<0.000000e+00> : vector<8x256xf32>
    %807 = tpu.matmul %805, %806, %cst_724 {dimension_numbers = #tpu.dot_dimension_numbers<[1], [0], [0], [1], [0, 0, 1, 1], [], []>} : vector<8x216xbf16>, vector<216x256xbf16>, vector<8x256xf32> -> vector<8x256xf32>
    %c12 = arith.constant 12 : index
    %c0_725 = arith.constant 0 : index
    %c0_726 = arith.constant 0 : index
    %808 = vector.load %arg7[%c12, %c0_725, %c0_726] : memref<15x8x1xf32, #tpu.memory_space<vmem>>, vector<1x8x1xf32>
    %809 = vector.shape_cast %808 : vector<1x8x1xf32> to vector<8x1xf32>
    %810 = vector.broadcast %809 : vector<8x1xf32> to vector<8x256xf32>
    %811 = arith.addf %807, %810 : vector<8x256xf32>
    %cst_727 = arith.constant 0.000000e+00 : f32
    %812 = vector.broadcast %cst_727 : f32 to vector<8x256xf32>
    %813 = arith.cmpf oge, %811, %812 : vector<8x256xf32>
    %cst_728 = arith.constant 2.000000e-01 : f32
    %814 = vector.broadcast %cst_728 : f32 to vector<8x256xf32>
    %815 = arith.mulf %814, %811 : vector<8x256xf32>
    %816 = arith.select %813, %811, %815 : vector<8x256xi1>, vector<8x256xf32>
    %c17_i32_729 = arith.constant 17 : i32
    %817 = tpu.dynamic_rotate %816 by %c17_i32_729 dim 1 : vector<8x256xf32>, i32 -> vector<8x256xf32>
    %c0_730 = arith.constant 0 : index
    %c0_731 = arith.constant 0 : index
    %c0_732 = arith.constant 0 : index
    %818 = vector.load %arg8[%c0_730, %c0_731, %c0_732] : memref<9x8x256xf32, #tpu.memory_space<vmem>>, vector<1x8x256xf32>
    %819 = vector.shape_cast %818 : vector<1x8x256xf32> to vector<8x256xf32>
    %820 = arith.mulf %817, %819 : vector<8x256xf32>
    %821 = arith.truncf %820 : vector<8x256xf32> to vector<8x256xbf16>
    %c216_733 = arith.constant 216 : index
    %c0_734 = arith.constant 0 : index
    %822 = vector.load %arg10[%c216_733, %c0_734] : memref<360x256xbf16, #tpu.memory_space<vmem>>, vector<8x256xbf16>
    tpu.vector_store %arg10[%c216_733, %c0_734], %821 {strides = array<i32>} : memref<360x256xbf16, #tpu.memory_space<vmem>>, vector<8x256xbf16>,
    %c16_i32_735 = arith.constant 16 : i32
    %823 = tpu.dynamic_rotate %816 by %c16_i32_735 dim 1 : vector<8x256xf32>, i32 -> vector<8x256xf32>
    %c1_736 = arith.constant 1 : index
    %c0_737 = arith.constant 0 : index
    %c0_738 = arith.constant 0 : index
    %824 = vector.load %arg8[%c1_736, %c0_737, %c0_738] : memref<9x8x256xf32, #tpu.memory_space<vmem>>, vector<1x8x256xf32>
    %825 = vector.shape_cast %824 : vector<1x8x256xf32> to vector<8x256xf32>
    %826 = arith.mulf %823, %825 : vector<8x256xf32>
    %827 = arith.truncf %826 : vector<8x256xf32> to vector<8x256xbf16>
    %c224_739 = arith.constant 224 : index
    %c0_740 = arith.constant 0 : index
    %828 = vector.load %arg10[%c224_739, %c0_740] : memref<360x256xbf16, #tpu.memory_space<vmem>>, vector<8x256xbf16>
    tpu.vector_store %arg10[%c224_739, %c0_740], %827 {strides = array<i32>} : memref<360x256xbf16, #tpu.memory_space<vmem>>, vector<8x256xbf16>,
    %c15_i32_741 = arith.constant 15 : i32
    %829 = tpu.dynamic_rotate %816 by %c15_i32_741 dim 1 : vector<8x256xf32>, i32 -> vector<8x256xf32>
    %c2_742 = arith.constant 2 : index
    %c0_743 = arith.constant 0 : index
    %c0_744 = arith.constant 0 : index
    %830 = vector.load %arg8[%c2_742, %c0_743, %c0_744] : memref<9x8x256xf32, #tpu.memory_space<vmem>>, vector<1x8x256xf32>
    %831 = vector.shape_cast %830 : vector<1x8x256xf32> to vector<8x256xf32>
    %832 = arith.mulf %829, %831 : vector<8x256xf32>
    %833 = arith.truncf %832 : vector<8x256xf32> to vector<8x256xbf16>
    %c232_745 = arith.constant 232 : index
    %c0_746 = arith.constant 0 : index
    %834 = vector.load %arg10[%c232_745, %c0_746] : memref<360x256xbf16, #tpu.memory_space<vmem>>, vector<8x256xbf16>
    tpu.vector_store %arg10[%c232_745, %c0_746], %833 {strides = array<i32>} : memref<360x256xbf16, #tpu.memory_space<vmem>>, vector<8x256xbf16>,
    %c1_i32_747 = arith.constant 1 : i32
    %835 = tpu.dynamic_rotate %816 by %c1_i32_747 dim 1 : vector<8x256xf32>, i32 -> vector<8x256xf32>
    %c3_748 = arith.constant 3 : index
    %c0_749 = arith.constant 0 : index
    %c0_750 = arith.constant 0 : index
    %836 = vector.load %arg8[%c3_748, %c0_749, %c0_750] : memref<9x8x256xf32, #tpu.memory_space<vmem>>, vector<1x8x256xf32>
    %837 = vector.shape_cast %836 : vector<1x8x256xf32> to vector<8x256xf32>
    %838 = arith.mulf %835, %837 : vector<8x256xf32>
    %839 = arith.truncf %838 : vector<8x256xf32> to vector<8x256xbf16>
    %c240_751 = arith.constant 240 : index
    %c0_752 = arith.constant 0 : index
    %840 = vector.load %arg10[%c240_751, %c0_752] : memref<360x256xbf16, #tpu.memory_space<vmem>>, vector<8x256xbf16>
    tpu.vector_store %arg10[%c240_751, %c0_752], %839 {strides = array<i32>} : memref<360x256xbf16, #tpu.memory_space<vmem>>, vector<8x256xbf16>,
    %841 = arith.truncf %816 : vector<8x256xf32> to vector<8x256xbf16>
    %c248_753 = arith.constant 248 : index
    %c0_754 = arith.constant 0 : index
    %842 = vector.load %arg10[%c248_753, %c0_754] : memref<360x256xbf16, #tpu.memory_space<vmem>>, vector<8x256xbf16>
    tpu.vector_store %arg10[%c248_753, %c0_754], %841 {strides = array<i32>} : memref<360x256xbf16, #tpu.memory_space<vmem>>, vector<8x256xbf16>,
    %c255_i32_755 = arith.constant 255 : i32
    %843 = tpu.dynamic_rotate %816 by %c255_i32_755 dim 1 : vector<8x256xf32>, i32 -> vector<8x256xf32>
    %c5_756 = arith.constant 5 : index
    %c0_757 = arith.constant 0 : index
    %c0_758 = arith.constant 0 : index
    %844 = vector.load %arg8[%c5_756, %c0_757, %c0_758] : memref<9x8x256xf32, #tpu.memory_space<vmem>>, vector<1x8x256xf32>
    %845 = vector.shape_cast %844 : vector<1x8x256xf32> to vector<8x256xf32>
    %846 = arith.mulf %843, %845 : vector<8x256xf32>
    %847 = arith.truncf %846 : vector<8x256xf32> to vector<8x256xbf16>
    %c256_759 = arith.constant 256 : index
    %c0_760 = arith.constant 0 : index
    %848 = vector.load %arg10[%c256_759, %c0_760] : memref<360x256xbf16, #tpu.memory_space<vmem>>, vector<8x256xbf16>
    tpu.vector_store %arg10[%c256_759, %c0_760], %847 {strides = array<i32>} : memref<360x256xbf16, #tpu.memory_space<vmem>>, vector<8x256xbf16>,
    %c241_i32_761 = arith.constant 241 : i32
    %849 = tpu.dynamic_rotate %816 by %c241_i32_761 dim 1 : vector<8x256xf32>, i32 -> vector<8x256xf32>
    %c6_762 = arith.constant 6 : index
    %c0_763 = arith.constant 0 : index
    %c0_764 = arith.constant 0 : index
    %850 = vector.load %arg8[%c6_762, %c0_763, %c0_764] : memref<9x8x256xf32, #tpu.memory_space<vmem>>, vector<1x8x256xf32>
    %851 = vector.shape_cast %850 : vector<1x8x256xf32> to vector<8x256xf32>
    %852 = arith.mulf %849, %851 : vector<8x256xf32>
    %853 = arith.truncf %852 : vector<8x256xf32> to vector<8x256xbf16>
    %c264_765 = arith.constant 264 : index
    %c0_766 = arith.constant 0 : index
    %854 = vector.load %arg10[%c264_765, %c0_766] : memref<360x256xbf16, #tpu.memory_space<vmem>>, vector<8x256xbf16>
    tpu.vector_store %arg10[%c264_765, %c0_766], %853 {strides = array<i32>} : memref<360x256xbf16, #tpu.memory_space<vmem>>, vector<8x256xbf16>,
    %c240_i32_767 = arith.constant 240 : i32
    %855 = tpu.dynamic_rotate %816 by %c240_i32_767 dim 1 : vector<8x256xf32>, i32 -> vector<8x256xf32>
    %c7_768 = arith.constant 7 : index
    %c0_769 = arith.constant 0 : index
    %c0_770 = arith.constant 0 : index
    %856 = vector.load %arg8[%c7_768, %c0_769, %c0_770] : memref<9x8x256xf32, #tpu.memory_space<vmem>>, vector<1x8x256xf32>
    %857 = vector.shape_cast %856 : vector<1x8x256xf32> to vector<8x256xf32>
    %858 = arith.mulf %855, %857 : vector<8x256xf32>
    %859 = arith.truncf %858 : vector<8x256xf32> to vector<8x256xbf16>
    %c272_771 = arith.constant 272 : index
    %c0_772 = arith.constant 0 : index
    %860 = vector.load %arg10[%c272_771, %c0_772] : memref<360x256xbf16, #tpu.memory_space<vmem>>, vector<8x256xbf16>
    tpu.vector_store %arg10[%c272_771, %c0_772], %859 {strides = array<i32>} : memref<360x256xbf16, #tpu.memory_space<vmem>>, vector<8x256xbf16>,
    %c239_i32_773 = arith.constant 239 : i32
    %861 = tpu.dynamic_rotate %816 by %c239_i32_773 dim 1 : vector<8x256xf32>, i32 -> vector<8x256xf32>
    %c8_774 = arith.constant 8 : index
    %c0_775 = arith.constant 0 : index
    %c0_776 = arith.constant 0 : index
    %862 = vector.load %arg8[%c8_774, %c0_775, %c0_776] : memref<9x8x256xf32, #tpu.memory_space<vmem>>, vector<1x8x256xf32>
    %863 = vector.shape_cast %862 : vector<1x8x256xf32> to vector<8x256xf32>
    %864 = arith.mulf %861, %863 : vector<8x256xf32>
    %865 = arith.truncf %864 : vector<8x256xf32> to vector<8x256xbf16>
    %c280_777 = arith.constant 280 : index
    %c0_778 = arith.constant 0 : index
    %866 = vector.load %arg10[%c280_777, %c0_778] : memref<360x256xbf16, #tpu.memory_space<vmem>>, vector<8x256xbf16>
    tpu.vector_store %arg10[%c280_777, %c0_778], %865 {strides = array<i32>} : memref<360x256xbf16, #tpu.memory_space<vmem>>, vector<8x256xbf16>,
    %c2_779 = arith.constant 2 : index
    %c0_780 = arith.constant 0 : index
    %c0_781 = arith.constant 0 : index
    %867 = vector.load %arg5[%c2_779, %c0_780, %c0_781] : memref<3x8x288xbf16, #tpu.memory_space<vmem>>, vector<1x8x288xbf16>
    %868 = vector.shape_cast %867 : vector<1x8x288xbf16> to vector<8x288xbf16>
    %c0_782 = arith.constant 0 : index
    %c0_783 = arith.constant 0 : index
    %869 = vector.load %arg10[%c0_782, %c0_783] : memref<360x256xbf16, #tpu.memory_space<vmem>>, vector<288x256xbf16>
    %cst_784 = arith.constant dense<0.000000e+00> : vector<8x256xf32>
    %870 = tpu.matmul %868, %869, %cst_784 {dimension_numbers = #tpu.dot_dimension_numbers<[1], [0], [0], [1], [0, 0, 1, 1], [], []>} : vector<8x288xbf16>, vector<288x256xbf16>, vector<8x256xf32> -> vector<8x256xf32>
    %c13 = arith.constant 13 : index
    %c0_785 = arith.constant 0 : index
    %c0_786 = arith.constant 0 : index
    %871 = vector.load %arg7[%c13, %c0_785, %c0_786] : memref<15x8x1xf32, #tpu.memory_space<vmem>>, vector<1x8x1xf32>
    %872 = vector.shape_cast %871 : vector<1x8x1xf32> to vector<8x1xf32>
    %873 = vector.broadcast %872 : vector<8x1xf32> to vector<8x256xf32>
    %874 = arith.addf %870, %873 : vector<8x256xf32>
    %cst_787 = arith.constant 0.000000e+00 : f32
    %875 = vector.broadcast %cst_787 : f32 to vector<8x256xf32>
    %876 = arith.cmpf oge, %874, %875 : vector<8x256xf32>
    %cst_788 = arith.constant 2.000000e-01 : f32
    %877 = vector.broadcast %cst_788 : f32 to vector<8x256xf32>
    %878 = arith.mulf %877, %874 : vector<8x256xf32>
    %879 = arith.select %876, %874, %878 : vector<8x256xi1>, vector<8x256xf32>
    %c17_i32_789 = arith.constant 17 : i32
    %880 = tpu.dynamic_rotate %879 by %c17_i32_789 dim 1 : vector<8x256xf32>, i32 -> vector<8x256xf32>
    %c0_790 = arith.constant 0 : index
    %c0_791 = arith.constant 0 : index
    %c0_792 = arith.constant 0 : index
    %881 = vector.load %arg8[%c0_790, %c0_791, %c0_792] : memref<9x8x256xf32, #tpu.memory_space<vmem>>, vector<1x8x256xf32>
    %882 = vector.shape_cast %881 : vector<1x8x256xf32> to vector<8x256xf32>
    %883 = arith.mulf %880, %882 : vector<8x256xf32>
    %884 = arith.truncf %883 : vector<8x256xf32> to vector<8x256xbf16>
    %c288_793 = arith.constant 288 : index
    %c0_794 = arith.constant 0 : index
    %885 = vector.load %arg10[%c288_793, %c0_794] : memref<360x256xbf16, #tpu.memory_space<vmem>>, vector<8x256xbf16>
    tpu.vector_store %arg10[%c288_793, %c0_794], %884 {strides = array<i32>} : memref<360x256xbf16, #tpu.memory_space<vmem>>, vector<8x256xbf16>,
    %c16_i32_795 = arith.constant 16 : i32
    %886 = tpu.dynamic_rotate %879 by %c16_i32_795 dim 1 : vector<8x256xf32>, i32 -> vector<8x256xf32>
    %c1_796 = arith.constant 1 : index
    %c0_797 = arith.constant 0 : index
    %c0_798 = arith.constant 0 : index
    %887 = vector.load %arg8[%c1_796, %c0_797, %c0_798] : memref<9x8x256xf32, #tpu.memory_space<vmem>>, vector<1x8x256xf32>
    %888 = vector.shape_cast %887 : vector<1x8x256xf32> to vector<8x256xf32>
    %889 = arith.mulf %886, %888 : vector<8x256xf32>
    %890 = arith.truncf %889 : vector<8x256xf32> to vector<8x256xbf16>
    %c296_799 = arith.constant 296 : index
    %c0_800 = arith.constant 0 : index
    %891 = vector.load %arg10[%c296_799, %c0_800] : memref<360x256xbf16, #tpu.memory_space<vmem>>, vector<8x256xbf16>
    tpu.vector_store %arg10[%c296_799, %c0_800], %890 {strides = array<i32>} : memref<360x256xbf16, #tpu.memory_space<vmem>>, vector<8x256xbf16>,
    %c15_i32_801 = arith.constant 15 : i32
    %892 = tpu.dynamic_rotate %879 by %c15_i32_801 dim 1 : vector<8x256xf32>, i32 -> vector<8x256xf32>
    %c2_802 = arith.constant 2 : index
    %c0_803 = arith.constant 0 : index
    %c0_804 = arith.constant 0 : index
    %893 = vector.load %arg8[%c2_802, %c0_803, %c0_804] : memref<9x8x256xf32, #tpu.memory_space<vmem>>, vector<1x8x256xf32>
    %894 = vector.shape_cast %893 : vector<1x8x256xf32> to vector<8x256xf32>
    %895 = arith.mulf %892, %894 : vector<8x256xf32>
    %896 = arith.truncf %895 : vector<8x256xf32> to vector<8x256xbf16>
    %c304_805 = arith.constant 304 : index
    %c0_806 = arith.constant 0 : index
    %897 = vector.load %arg10[%c304_805, %c0_806] : memref<360x256xbf16, #tpu.memory_space<vmem>>, vector<8x256xbf16>
    tpu.vector_store %arg10[%c304_805, %c0_806], %896 {strides = array<i32>} : memref<360x256xbf16, #tpu.memory_space<vmem>>, vector<8x256xbf16>,
    %c1_i32_807 = arith.constant 1 : i32
    %898 = tpu.dynamic_rotate %879 by %c1_i32_807 dim 1 : vector<8x256xf32>, i32 -> vector<8x256xf32>
    %c3_808 = arith.constant 3 : index
    %c0_809 = arith.constant 0 : index
    %c0_810 = arith.constant 0 : index
    %899 = vector.load %arg8[%c3_808, %c0_809, %c0_810] : memref<9x8x256xf32, #tpu.memory_space<vmem>>, vector<1x8x256xf32>
    %900 = vector.shape_cast %899 : vector<1x8x256xf32> to vector<8x256xf32>
    %901 = arith.mulf %898, %900 : vector<8x256xf32>
    %902 = arith.truncf %901 : vector<8x256xf32> to vector<8x256xbf16>
    %c312_811 = arith.constant 312 : index
    %c0_812 = arith.constant 0 : index
    %903 = vector.load %arg10[%c312_811, %c0_812] : memref<360x256xbf16, #tpu.memory_space<vmem>>, vector<8x256xbf16>
    tpu.vector_store %arg10[%c312_811, %c0_812], %902 {strides = array<i32>} : memref<360x256xbf16, #tpu.memory_space<vmem>>, vector<8x256xbf16>,
    %904 = arith.truncf %879 : vector<8x256xf32> to vector<8x256xbf16>
    %c320_813 = arith.constant 320 : index
    %c0_814 = arith.constant 0 : index
    %905 = vector.load %arg10[%c320_813, %c0_814] : memref<360x256xbf16, #tpu.memory_space<vmem>>, vector<8x256xbf16>
    tpu.vector_store %arg10[%c320_813, %c0_814], %904 {strides = array<i32>} : memref<360x256xbf16, #tpu.memory_space<vmem>>, vector<8x256xbf16>,
    %c255_i32_815 = arith.constant 255 : i32
    %906 = tpu.dynamic_rotate %879 by %c255_i32_815 dim 1 : vector<8x256xf32>, i32 -> vector<8x256xf32>
    %c5_816 = arith.constant 5 : index
    %c0_817 = arith.constant 0 : index
    %c0_818 = arith.constant 0 : index
    %907 = vector.load %arg8[%c5_816, %c0_817, %c0_818] : memref<9x8x256xf32, #tpu.memory_space<vmem>>, vector<1x8x256xf32>
    %908 = vector.shape_cast %907 : vector<1x8x256xf32> to vector<8x256xf32>
    %909 = arith.mulf %906, %908 : vector<8x256xf32>
    %910 = arith.truncf %909 : vector<8x256xf32> to vector<8x256xbf16>
    %c328_819 = arith.constant 328 : index
    %c0_820 = arith.constant 0 : index
    %911 = vector.load %arg10[%c328_819, %c0_820] : memref<360x256xbf16, #tpu.memory_space<vmem>>, vector<8x256xbf16>
    tpu.vector_store %arg10[%c328_819, %c0_820], %910 {strides = array<i32>} : memref<360x256xbf16, #tpu.memory_space<vmem>>, vector<8x256xbf16>,
    %c241_i32_821 = arith.constant 241 : i32
    %912 = tpu.dynamic_rotate %879 by %c241_i32_821 dim 1 : vector<8x256xf32>, i32 -> vector<8x256xf32>
    %c6_822 = arith.constant 6 : index
    %c0_823 = arith.constant 0 : index
    %c0_824 = arith.constant 0 : index
    %913 = vector.load %arg8[%c6_822, %c0_823, %c0_824] : memref<9x8x256xf32, #tpu.memory_space<vmem>>, vector<1x8x256xf32>
    %914 = vector.shape_cast %913 : vector<1x8x256xf32> to vector<8x256xf32>
    %915 = arith.mulf %912, %914 : vector<8x256xf32>
    %916 = arith.truncf %915 : vector<8x256xf32> to vector<8x256xbf16>
    %c336_825 = arith.constant 336 : index
    %c0_826 = arith.constant 0 : index
    %917 = vector.load %arg10[%c336_825, %c0_826] : memref<360x256xbf16, #tpu.memory_space<vmem>>, vector<8x256xbf16>
    tpu.vector_store %arg10[%c336_825, %c0_826], %916 {strides = array<i32>} : memref<360x256xbf16, #tpu.memory_space<vmem>>, vector<8x256xbf16>,
    %c240_i32_827 = arith.constant 240 : i32
    %918 = tpu.dynamic_rotate %879 by %c240_i32_827 dim 1 : vector<8x256xf32>, i32 -> vector<8x256xf32>
    %c7_828 = arith.constant 7 : index
    %c0_829 = arith.constant 0 : index
    %c0_830 = arith.constant 0 : index
    %919 = vector.load %arg8[%c7_828, %c0_829, %c0_830] : memref<9x8x256xf32, #tpu.memory_space<vmem>>, vector<1x8x256xf32>
    %920 = vector.shape_cast %919 : vector<1x8x256xf32> to vector<8x256xf32>
    %921 = arith.mulf %918, %920 : vector<8x256xf32>
    %922 = arith.truncf %921 : vector<8x256xf32> to vector<8x256xbf16>
    %c344_831 = arith.constant 344 : index
    %c0_832 = arith.constant 0 : index
    %923 = vector.load %arg10[%c344_831, %c0_832] : memref<360x256xbf16, #tpu.memory_space<vmem>>, vector<8x256xbf16>
    tpu.vector_store %arg10[%c344_831, %c0_832], %922 {strides = array<i32>} : memref<360x256xbf16, #tpu.memory_space<vmem>>, vector<8x256xbf16>,
    %c239_i32_833 = arith.constant 239 : i32
    %924 = tpu.dynamic_rotate %879 by %c239_i32_833 dim 1 : vector<8x256xf32>, i32 -> vector<8x256xf32>
    %c8_834 = arith.constant 8 : index
    %c0_835 = arith.constant 0 : index
    %c0_836 = arith.constant 0 : index
    %925 = vector.load %arg8[%c8_834, %c0_835, %c0_836] : memref<9x8x256xf32, #tpu.memory_space<vmem>>, vector<1x8x256xf32>
    %926 = vector.shape_cast %925 : vector<1x8x256xf32> to vector<8x256xf32>
    %927 = arith.mulf %924, %926 : vector<8x256xf32>
    %928 = arith.truncf %927 : vector<8x256xf32> to vector<8x256xbf16>
    %c352_837 = arith.constant 352 : index
    %c0_838 = arith.constant 0 : index
    %929 = vector.load %arg10[%c352_837, %c0_838] : memref<360x256xbf16, #tpu.memory_space<vmem>>, vector<8x256xbf16>
    tpu.vector_store %arg10[%c352_837, %c0_838], %928 {strides = array<i32>} : memref<360x256xbf16, #tpu.memory_space<vmem>>, vector<8x256xbf16>,
    %c2_839 = arith.constant 2 : index
    %c0_840 = arith.constant 0 : index
    %c0_841 = arith.constant 0 : index
    %930 = vector.load %arg6[%c2_839, %c0_840, %c0_841] : memref<3x8x360xbf16, #tpu.memory_space<vmem>>, vector<1x8x360xbf16>
    %931 = vector.shape_cast %930 : vector<1x8x360xbf16> to vector<8x360xbf16>
    %c0_842 = arith.constant 0 : index
    %c0_843 = arith.constant 0 : index
    %932 = vector.load %arg10[%c0_842, %c0_843] : memref<360x256xbf16, #tpu.memory_space<vmem>>, vector<360x256xbf16>
    %cst_844 = arith.constant dense<0.000000e+00> : vector<8x256xf32>
    %933 = tpu.matmul %931, %932, %cst_844 {dimension_numbers = #tpu.dot_dimension_numbers<[1], [0], [0], [1], [0, 0, 1, 1], [], []>} : vector<8x360xbf16>, vector<360x256xbf16>, vector<8x256xf32> -> vector<8x256xf32>
    %c14 = arith.constant 14 : index
    %c0_845 = arith.constant 0 : index
    %c0_846 = arith.constant 0 : index
    %934 = vector.load %arg7[%c14, %c0_845, %c0_846] : memref<15x8x1xf32, #tpu.memory_space<vmem>>, vector<1x8x1xf32>
    %935 = vector.shape_cast %934 : vector<1x8x1xf32> to vector<8x1xf32>
    %936 = vector.broadcast %935 : vector<8x1xf32> to vector<8x256xf32>
    %937 = arith.addf %933, %936 : vector<8x256xf32>
    %cst_847 = arith.constant 2.000000e-01 : f32
    %938 = vector.broadcast %cst_847 : f32 to vector<8x256xf32>
    %939 = arith.mulf %937, %938 : vector<8x256xf32>
    %940 = arith.addf %939, %627 : vector<8x256xf32>
    %941 = vector.extract_strided_slice %940 {offsets = [0, 0], sizes = [4, 256], strides = [1, 1]} : vector<8x256xf32> to vector<4x256xf32>
    %cst_848 = arith.constant 2.000000e-01 : f32
    %942 = vector.broadcast %cst_848 : f32 to vector<4x256xf32>
    %943 = arith.mulf %941, %942 : vector<4x256xf32>
    %944 = vector.extract_strided_slice %1 {offsets = [0, 0], sizes = [4, 256], strides = [1, 1]} : vector<8x256xf32> to vector<4x256xf32>
    %945 = arith.addf %943, %944 : vector<4x256xf32>
    %c0_849 = arith.constant 0 : index
    %c0_850 = arith.constant 0 : index
    %c0_851 = arith.constant 0 : index
    %946 = vector.load %arg9[%c0_849, %c0_850, %c0_851] : memref<1x4x256xf32, #tpu.memory_space<vmem>>, vector<1x4x256xf32>
    %947 = vector.shape_cast %946 : vector<1x4x256xf32> to vector<4x256xf32>
    %948 = vector.shape_cast %945 : vector<4x256xf32> to vector<1x4x256xf32>
    tpu.vector_store %arg9[%c0_849, %c0_850, %c0_851], %948 {strides = array<i32>} : memref<1x4x256xf32, #tpu.memory_space<vmem>>, vector<1x4x256xf32>,
    return
  }
  func.func @transform_0(%arg0: i32) -> (i32, i32, i32) {
    %c0_i32 = arith.constant 0 : i32
    %c0_i32_0 = arith.constant 0 : i32
    %c0_i32_1 = arith.constant 0 : i32
    return %arg0, %c0_i32, %c0_i32_0 : i32, i32, i32
  }
  func.func @transform_1(%arg0: i32) -> (i32, i32, i32) {
    %c0_i32 = arith.constant 0 : i32
    %c0_i32_0 = arith.constant 0 : i32
    %c0_i32_1 = arith.constant 0 : i32
    %c0_i32_2 = arith.constant 0 : i32
    return %c0_i32, %c0_i32_0, %c0_i32_1 : i32, i32, i32
  }
  func.func @transform_2(%arg0: i32) -> (i32, i32, i32) {
    %c0_i32 = arith.constant 0 : i32
    %c0_i32_0 = arith.constant 0 : i32
    %c0_i32_1 = arith.constant 0 : i32
    %c0_i32_2 = arith.constant 0 : i32
    return %c0_i32, %c0_i32_0, %c0_i32_1 : i32, i32, i32
  }
  func.func @transform_3(%arg0: i32) -> (i32, i32, i32) {
    %c0_i32 = arith.constant 0 : i32
    %c0_i32_0 = arith.constant 0 : i32
    %c0_i32_1 = arith.constant 0 : i32
    %c0_i32_2 = arith.constant 0 : i32
    return %c0_i32, %c0_i32_0, %c0_i32_1 : i32, i32, i32
  }
  func.func @transform_4(%arg0: i32) -> (i32, i32, i32) {
    %c0_i32 = arith.constant 0 : i32
    %c0_i32_0 = arith.constant 0 : i32
    %c0_i32_1 = arith.constant 0 : i32
    %c0_i32_2 = arith.constant 0 : i32
    return %c0_i32, %c0_i32_0, %c0_i32_1 : i32, i32, i32
  }
  func.func @transform_5(%arg0: i32) -> (i32, i32, i32) {
    %c0_i32 = arith.constant 0 : i32
    %c0_i32_0 = arith.constant 0 : i32
    %c0_i32_1 = arith.constant 0 : i32
    %c0_i32_2 = arith.constant 0 : i32
    return %c0_i32, %c0_i32_0, %c0_i32_1 : i32, i32, i32
  }
  func.func @transform_6(%arg0: i32) -> (i32, i32, i32) {
    %c0_i32 = arith.constant 0 : i32
    %c0_i32_0 = arith.constant 0 : i32
    %c0_i32_1 = arith.constant 0 : i32
    %c0_i32_2 = arith.constant 0 : i32
    return %c0_i32, %c0_i32_0, %c0_i32_1 : i32, i32, i32
  }
  func.func @transform_7(%arg0: i32) -> (i32, i32, i32) {
    %c0_i32 = arith.constant 0 : i32
    %c0_i32_0 = arith.constant 0 : i32
    %c0_i32_1 = arith.constant 0 : i32
    %c0_i32_2 = arith.constant 0 : i32
    return %c0_i32, %c0_i32_0, %c0_i32_1 : i32, i32, i32
  }
  func.func @transform_8(%arg0: i32) -> (i32, i32, i32) {
    %c0_i32 = arith.constant 0 : i32
    %c0_i32_0 = arith.constant 0 : i32
    %c0_i32_1 = arith.constant 0 : i32
    return %arg0, %c0_i32, %c0_i32_0 : i32, i32, i32
  }
}

</mosaic_0001>

<llo_original>
// kernel: forward.1
$region0: #{forward.1}
  #allocation0 [shape = 'u32[]', space=smem, size = 0x4, offset = 0x4, fixed_abs, tag = 'smem constant byte address 0x4 - core index']
  #allocation1 [shape = 'u32[144,128]{1,0:T(1,128)}', space=vmem, size = 0x12000, scoped, tag = 'internal scratch']
  #allocation2 [shape = 'bf16[360,256]{1,0:T(8,128)(2,1)}', space=vmem, size = 0x2d000, scoped, tag = 'scratch operand']
  %s0 = inlined_call_operand.vmem [shape: f32[2,8,256], index: 0, kind: input, shape index: {}]
  %s1 = inlined_call_operand.vmem [shape: bf16[3,8,72], index: 1, kind: input, shape index: {}]
  %s2 = inlined_call_operand.vmem [shape: bf16[3,8,144], index: 2, kind: input, shape index: {}]
  %s3 = inlined_call_operand.vmem [shape: bf16[3,8,216], index: 3, kind: input, shape index: {}]
  %s4 = inlined_call_operand.vmem [shape: bf16[3,8,288], index: 4, kind: input, shape index: {}]
  %s5 = inlined_call_operand.vmem [shape: bf16[3,8,360], index: 5, kind: input, shape index: {}]
  %s6 = inlined_call_operand.vmem [shape: f32[15,8,1], index: 6, kind: input, shape index: {}]
  %s7 = inlined_call_operand.vmem [shape: f32[9,8,256], index: 7, kind: input, shape index: {}]
  %s8 = inlined_call_operand.vmem [shape: f32[2,4,256], index: 8, kind: output, shape index: {}]
  %s9 = sld [smem:[#allocation0]]
  $region65: #{forward.1} parent=0
    _
  %s11 = ssub.s32 1, %s9
  %s12 = scalar_select 0, %s11, %s9
  loop: start=0, step=1, limit=4
  $region2: #{forward.1} parent=0 // loop_pre_header
    _
  $region3: #{forward.1} parent=0 // loop_header
    %s14 = sphi 0, %s18
    %p15 = scmp.ge.s32.totalorder %s14, 4
    %s24 = sphi 0, %s26
    %s27 = sphi 0, %s24
    %s28 = sphi 0, %s27
    %s44 = sphi 0, %s28
    %s48 = sphi 0, %s48
    %s50 = sphi 0, %s48
    %s51 = sphi 0, %s50
    %s65 = sphi 0, %s51
    %s69 = sphi 0, %s69
    %s71 = sphi 0, %s69
    %s72 = sphi 0, %s71
    %s86 = sphi 0, %s72
    %s90 = sphi 0, %s90
    %s92 = sphi 0, %s90
    %s93 = sphi 0, %s92
    %s107 = sphi 0, %s93
    %s111 = sphi 0, %s111
    %s113 = sphi 0, %s111
    %s114 = sphi 0, %s113
    %s128 = sphi 0, %s114
    %s132 = sphi 0, %s132
    %s134 = sphi 0, %s132
    %s135 = sphi 0, %s134
    %s149 = sphi 0, %s135
    %s153 = sphi 0, %s153
    %s155 = sphi 0, %s153
    %s156 = sphi 0, %s155
    %s170 = sphi 0, %s156
    %s174 = sphi 0, %s174
    %s176 = sphi 0, %s174
    %s177 = sphi 0, %s176
    %s191 = sphi 0, %s177
    %s197 = sphi 0, %s199
    %s200 = sphi 0, %s197
    %s201 = sphi 0, %s200
    %s217 = sphi 0, %s201
  $region4: #{forward.1} parent=0 // loop_header_branch
    %17 = sbr.rel (%p15) target = $region8
  $region5: #{forward.1} parent=0 // loop_body
    %s19 = ssub.s32 %s14, 1
    %s20 = ssub.s32 %s14, 2
    %s21 = sadd.s32 %s14, 1
    %s22 = ssub.s32 %s14, %s21
    %p23 = scmp.eq.s32.totalorder %s22, 0
    %s25 = sadd.s32 %s24, 1
    %s26 = scalar_select %p23, %s24, %s25
    %p29 = pneg %p23
    %p30 = scmp.eq.s32.totalorder %s14, 1
    %p31 = por %p29, %p30
    %p32 = scmp.ne.s32.totalorder %s24, %s27
    %p33 = scmp.eq.s32.totalorder %s14, 0
    %p34 = por %p32, %p33
    %p35 = scmp.ne.s32.totalorder %s24, %s27
    %p36 = scmp.eq.s32.totalorder %s19, 1
    %p37 = por %p35, %p36
    %p38 = scmp.ne.s32.totalorder %s27, %s28
    %p39 = scmp.eq.s32.totalorder %s19, 0
    %p40 = por %p38, %p39
    %p41 = scmp.ne.s32.totalorder %s27, %s28
    %p42 = scmp.eq.s32.totalorder %s20, 1
    %p43 = por %p41, %p42
    %p45 = scmp.ne.s32.totalorder %s28, %s44
    %p46 = scmp.eq.s32.totalorder %s20, 0
    %p47 = por %p45, %p46
    %s49 = sadd.s32 %s48, 1
    %p52 = scmp.eq.s32.totalorder %s14, 1
    %p53 = scmp.ne.s32.totalorder %s48, %s50
    %p54 = scmp.eq.s32.totalorder %s14, 0
    %p55 = por %p53, %p54
    %p56 = scmp.ne.s32.totalorder %s48, %s50
    %p57 = scmp.eq.s32.totalorder %s19, 1
    %p58 = por %p56, %p57
    %p59 = scmp.ne.s32.totalorder %s50, %s51
    %p60 = scmp.eq.s32.totalorder %s19, 0
    %p61 = por %p59, %p60
    %p62 = scmp.ne.s32.totalorder %s50, %s51
    %p63 = scmp.eq.s32.totalorder %s20, 1
    %p64 = por %p62, %p63
    %p66 = scmp.ne.s32.totalorder %s51, %s65
    %p67 = scmp.eq.s32.totalorder %s20, 0
    %p68 = por %p66, %p67
    %s70 = sadd.s32 %s69, 1
    %p73 = scmp.eq.s32.totalorder %s14, 1
    %p74 = scmp.ne.s32.totalorder %s69, %s71
    %p75 = scmp.eq.s32.totalorder %s14, 0
    %p76 = por %p74, %p75
    %p77 = scmp.ne.s32.totalorder %s69, %s71
    %p78 = scmp.eq.s32.totalorder %s19, 1
    %p79 = por %p77, %p78
    %p80 = scmp.ne.s32.totalorder %s71, %s72
    %p81 = scmp.eq.s32.totalorder %s19, 0
    %p82 = por %p80, %p81
    %p83 = scmp.ne.s32.totalorder %s71, %s72
    %p84 = scmp.eq.s32.totalorder %s20, 1
    %p85 = por %p83, %p84
    %p87 = scmp.ne.s32.totalorder %s72, %s86
    %p88 = scmp.eq.s32.totalorder %s20, 0
    %p89 = por %p87, %p88
    %s91 = sadd.s32 %s90, 1
    %p94 = scmp.eq.s32.totalorder %s14, 1
    %p95 = scmp.ne.s32.totalorder %s90, %s92
    %p96 = scmp.eq.s32.totalorder %s14, 0
    %p97 = por %p95, %p96
    %p98 = scmp.ne.s32.totalorder %s90, %s92
    %p99 = scmp.eq.s32.totalorder %s19, 1
    %p100 = por %p98, %p99
    %p101 = scmp.ne.s32.totalorder %s92, %s93
    %p102 = scmp.eq.s32.totalorder %s19, 0
    %p103 = por %p101, %p102
    %p104 = scmp.ne.s32.totalorder %s92, %s93
    %p105 = scmp.eq.s32.totalorder %s20, 1
    %p106 = por %p104, %p105
    %p108 = scmp.ne.s32.totalorder %s93, %s107
    %p109 = scmp.eq.s32.totalorder %s20, 0
    %p110 = por %p108, %p109
    %s112 = sadd.s32 %s111, 1
    %p115 = scmp.eq.s32.totalorder %s14, 1
    %p116 = scmp.ne.s32.totalorder %s111, %s113
    %p117 = scmp.eq.s32.totalorder %s14, 0
    %p118 = por %p116, %p117
    %p119 = scmp.ne.s32.totalorder %s111, %s113
    %p120 = scmp.eq.s32.totalorder %s19, 1
    %p121 = por %p119, %p120
    %p122 = scmp.ne.s32.totalorder %s113, %s114
    %p123 = scmp.eq.s32.totalorder %s19, 0
    %p124 = por %p122, %p123
    %p125 = scmp.ne.s32.totalorder %s113, %s114
    %p126 = scmp.eq.s32.totalorder %s20, 1
    %p127 = por %p125, %p126
    %p129 = scmp.ne.s32.totalorder %s114, %s128
    %p130 = scmp.eq.s32.totalorder %s20, 0
    %p131 = por %p129, %p130
    %s133 = sadd.s32 %s132, 1
    %p136 = scmp.eq.s32.totalorder %s14, 1
    %p137 = scmp.ne.s32.totalorder %s132, %s134
    %p138 = scmp.eq.s32.totalorder %s14, 0
    %p139 = por %p137, %p138
    %p140 = scmp.ne.s32.totalorder %s132, %s134
    %p141 = scmp.eq.s32.totalorder %s19, 1
    %p142 = por %p140, %p141
    %p143 = scmp.ne.s32.totalorder %s134, %s135
    %p144 = scmp.eq.s32.totalorder %s19, 0
    %p145 = por %p143, %p144
    %p146 = scmp.ne.s32.totalorder %s134, %s135
    %p147 = scmp.eq.s32.totalorder %s20, 1
    %p148 = por %p146, %p147
    %p150 = scmp.ne.s32.totalorder %s135, %s149
    %p151 = scmp.eq.s32.totalorder %s20, 0
    %p152 = por %p150, %p151
    %s154 = sadd.s32 %s153, 1
    %p157 = scmp.eq.s32.totalorder %s14, 1
    %p158 = scmp.ne.s32.totalorder %s153, %s155
    %p159 = scmp.eq.s32.totalorder %s14, 0
    %p160 = por %p158, %p159
    %p161 = scmp.ne.s32.totalorder %s153, %s155
    %p162 = scmp.eq.s32.totalorder %s19, 1
    %p163 = por %p161, %p162
    %p164 = scmp.ne.s32.totalorder %s155, %s156
    %p165 = scmp.eq.s32.totalorder %s19, 0
    %p166 = por %p164, %p165
    %p167 = scmp.ne.s32.totalorder %s155, %s156
    %p168 = scmp.eq.s32.totalorder %s20, 1
    %p169 = por %p167, %p168
    %p171 = scmp.ne.s32.totalorder %s156, %s170
    %p172 = scmp.eq.s32.totalorder %s20, 0
    %p173 = por %p171, %p172
    %s175 = sadd.s32 %s174, 1
    %p178 = scmp.eq.s32.totalorder %s14, 1
    %p179 = scmp.ne.s32.totalorder %s174, %s176
    %p180 = scmp.eq.s32.totalorder %s14, 0
    %p181 = por %p179, %p180
    %p182 = scmp.ne.s32.totalorder %s174, %s176
    %p183 = scmp.eq.s32.totalorder %s19, 1
    %p184 = por %p182, %p183
    %p185 = scmp.ne.s32.totalorder %s176, %s177
    %p186 = scmp.eq.s32.totalorder %s19, 0
    %p187 = por %p185, %p186
    %p188 = scmp.ne.s32.totalorder %s176, %s177
    %p189 = scmp.eq.s32.totalorder %s20, 1
    %p190 = por %p188, %p189
    %p192 = scmp.ne.s32.totalorder %s177, %s191
    %p193 = scmp.eq.s32.totalorder %s20, 0
    %p194 = por %p192, %p193
    %s195 = ssub.s32 %s14, %s21
    %p196 = scmp.eq.s32.totalorder %s195, 0
    %s198 = sadd.s32 %s197, 1
    %s199 = scalar_select %p196, %s197, %s198
    %p202 = pneg %p196
    %p203 = scmp.eq.s32.totalorder %s14, 1
    %p204 = por %p202, %p203
    %p205 = scmp.ne.s32.totalorder %s197, %s200
    %p206 = scmp.eq.s32.totalorder %s14, 0
    %p207 = por %p205, %p206
    %p208 = scmp.ne.s32.totalorder %s197, %s200
    %p209 = scmp.eq.s32.totalorder %s19, 1
    %p210 = por %p208, %p209
    %p211 = scmp.ne.s32.totalorder %s200, %s201
    %p212 = scmp.eq.s32.totalorder %s19, 0
    %p213 = por %p211, %p212
    %p214 = scmp.ne.s32.totalorder %s200, %s201
    %p215 = scmp.eq.s32.totalorder %s20, 1
    %p216 = por %p214, %p215
    %p218 = scmp.ne.s32.totalorder %s201, %s217
    %p219 = scmp.eq.s32.totalorder %s20, 0
    %p220 = por %p218, %p219
    %p221 = scmp.le.s32.totalorder 1, %s14
    %p222 = scmp.lt.s32.totalorder %s14, 3
    %p223 = pnand %p221, %p222
    %p224 = pneg %p223
    // Predicated region
    $region9: #{forward.1} parent=5 // pred_check
      _
    $region10: #{forward.1} parent=5 // pred_check_branch
      %226 = sbr.rel (%p223) target = $region12
    $region11: #{forward.1} parent=5 // pred_region
      %s227 = ssub.s32 %s14, 1
      // Predicated region
      $region13: #{forward.1} parent=11 // pred_check
        %p228 = pneg %p61
      $region14: #{forward.1} parent=11 // pred_check_branch
        %230 = sbr.rel (%p228) target = $region16
      $region15: #{forward.1} parent=11 // pred_region
        _
      $region16: #{forward.1} parent=11 // pred_fallthru
        _
      // Predicated region
      $region17: #{forward.1} parent=11 // pred_check
        %p231 = pneg %p82
      $region18: #{forward.1} parent=11 // pred_check_branch
        %233 = sbr.rel (%p231) target = $region20
      $region19: #{forward.1} parent=11 // pred_region
        _
      $region20: #{forward.1} parent=11 // pred_fallthru
        _
      // Predicated region
      $region21: #{forward.1} parent=11 // pred_check
        %p234 = pneg %p103
      $region22: #{forward.1} parent=11 // pred_check_branch
        %236 = sbr.rel (%p234) target = $region24
      $region23: #{forward.1} parent=11 // pred_region
        _
      $region24: #{forward.1} parent=11 // pred_fallthru
        _
      // Predicated region
      $region25: #{forward.1} parent=11 // pred_check
        %p237 = pneg %p124
      $region26: #{forward.1} parent=11 // pred_check_branch
        %239 = sbr.rel (%p237) target = $region28
      $region27: #{forward.1} parent=11 // pred_region
        _
      $region28: #{forward.1} parent=11 // pred_fallthru
        _
      // Predicated region
      $region29: #{forward.1} parent=11 // pred_check
        %p240 = pneg %p145
      $region30: #{forward.1} parent=11 // pred_check_branch
        %242 = sbr.rel (%p240) target = $region32
      $region31: #{forward.1} parent=11 // pred_region
        _
      $region32: #{forward.1} parent=11 // pred_fallthru
        _
      // Predicated region
      $region33: #{forward.1} parent=11 // pred_check
        %p243 = pneg %p166
      $region34: #{forward.1} parent=11 // pred_check_branch
        %245 = sbr.rel (%p243) target = $region36
      $region35: #{forward.1} parent=11 // pred_region
        _
      $region36: #{forward.1} parent=11 // pred_fallthru
        _
      // Predicated region
      $region37: #{forward.1} parent=11 // pred_check
        %p246 = pneg %p187
      $region38: #{forward.1} parent=11 // pred_check_branch
        %248 = sbr.rel (%p246) target = $region40
      $region39: #{forward.1} parent=11 // pred_region
        _
      $region40: #{forward.1} parent=11 // pred_fallthru
        _
    $region12: #{forward.1} parent=5 // pred_fallthru
      _
    %p249 = scmp.lt.s32.totalorder %s14, 2
    // Predicated region
    $region41: #{forward.1} parent=5 // pred_check
      %p250 = pneg %p249
    $region42: #{forward.1} parent=5 // pred_check_branch
      %252 = sbr.rel (%p250) target = $region44
    $region43: #{forward.1} parent=5 // pred_region
      // Predicated region
      $region45: #{forward.1} parent=43 // pred_check
        %p253 = pneg %p34
      $region46: #{forward.1} parent=43 // pred_check_branch
        %255 = sbr.rel (%p253) target = $region48
      $region47: #{forward.1} parent=43 // pred_region
        %p256 = scmp.lt.s32.totalorder %s14, 1
        %s257 = scalar_select %p256, %s14, 1
        %s258 = smul.addr %s257, 2
        %s259 = smul.addr %s258, 8
        %s260 = scalar_lea.vmem %s0, %s259
      $region48: #{forward.1} parent=43 // pred_fallthru
        _
    $region44: #{forward.1} parent=5 // pred_fallthru
      _
    %p261 = scmp.le.s32.totalorder 1, %s14
    %p262 = scmp.lt.s32.totalorder %s14, 3
    %p263 = pnand %p261, %p262
    %p264 = pneg %p263
    // Predicated region
    $region49: #{forward.1} parent=5 // pred_check
      _
    $region50: #{forward.1} parent=5 // pred_check_branch
      %266 = sbr.rel (%p263) target = $region52
    $region51: #{forward.1} parent=5 // pred_region
      %s267 = ssub.s32 %s14, 1
      %p268 = scmp.lt.s32.totalorder %s19, 1
      %s269 = scalar_select %p268, %s19, 1
      %s270 = smul.addr %s269, 2
      %s271 = smul.addr %s270, 8
      %s272 = scalar_lea.vmem %s0, %s271
      %p273 = pneg %p40
      %p274 = pneg %p37
      %p275 = pneg %p61
      %p276 = pneg %p58
      %p277 = pneg %p82
      %p278 = pneg %p79
      %p279 = pneg %p103
      %p280 = pneg %p100
      %p281 = pneg %p124
      %p282 = pneg %p121
      %p283 = pneg %p145
      %p284 = pneg %p142
      %p285 = pneg %p166
      %p286 = pneg %p163
      %p287 = pneg %p187
      %p288 = pneg %p184
      %p289 = pneg %p213
      %p290 = pneg %p210
      %p291 = scmp.lt.s32.totalorder %s19, 1
      %s292 = scalar_select %p291, %s19, 1
      %s293 = smul.addr %s292, 2
      %s294 = smul.addr %s293, 4
      %s295 = scalar_lea.vmem %s8, %s294
      %p296 = scmp.lt.s32.totalorder %s19, 1
      %s297 = scalar_select %p296, %s19, 1
      %s298 = smul.addr %s297, 2
      %s299 = smul.addr %s298, 8
      %s300 = scalar_lea.vmem %s0, %s299
      %p301 = scmp.lt.s32.totalorder %s19, 1
      %s302 = scalar_select %p301, %s19, 1
      %s303 = smul.addr %s302, 2
      %s304 = smul.addr %s303, 4
      %s305 = scalar_lea.vmem %s8, %s304
      %v307 = vld [vmem:[%s300] sm:$0xff]
      %v308 = vld [vmem:[%s300 + $0x8] sm:$0xff]
      %309 = vrot.lane.b32.xlu0 %v307, 17
      %v310 = vpop.permute.xlu0 %309
      %311 = vrot.lane.b32.xlu0 %v308, 17
      %v312 = vpop.permute.xlu0 %311
      %v313 = vlaneseq
      %v314 = vand.u32 %v313, 127
      %vm315 = vcmp.lt.s32.totalorder %v314, 17
      %v316 = vsel %vm315, %v310, %v312
      %v317 = vsel %vm315, %v312, %v310
      %v318 = vld [vmem:[%s7] sm:$0xff]
      %v319 = vld [vmem:[%s7 + $0x8] sm:$0xff]
      %v320 = vmul.f32 %v317, %v318
      %v321 = vmul.f32 %v316, %v319
      %v322 = vpack.c.bf16 %v320, %v320
      %v323 = vpack.c.bf16 %v321, %v321
      %v326 = vunpack.c.l.b16 %v322
      %v327 = vunpack.c.l.b16 %v323
      %v328 = vpack.c.b16 %v327, %v326
      %330 = vst [vmem:[#allocation2] sm:$0xff] %v328
      %331 = vrot.lane.b32.xlu0 %v307, 16
      %v332 = vpop.permute.xlu0 %331
      %333 = vrot.lane.b32.xlu0 %v308, 16
      %v334 = vpop.permute.xlu0 %333
      %vm335 = vcmp.lt.s32.totalorder %v314, 16
      %v336 = vsel %vm335, %v332, %v334
      %v337 = vsel %vm335, %v334, %v332
      %s338 = scalar_lea.vmem %s7, 16
      %v339 = vld [vmem:[%s338] sm:$0xff]
      %v340 = vld [vmem:[%s338 + $0x8] sm:$0xff]
      %v341 = vmul.f32 %v337, %v339
      %v342 = vmul.f32 %v336, %v340
      %v343 = vpack.c.bf16 %v341, %v341
      %v344 = vpack.c.bf16 %v342, %v342
      %v347 = vunpack.c.l.b16 %v343
      %v348 = vunpack.c.l.b16 %v344
      %v349 = vpack.c.b16 %v348, %v347
      %351 = vst [vmem:[#allocation2 + $0x8] sm:$0xff] %v349
      %352 = vrot.lane.b32.xlu0 %v307, 15
      %v353 = vpop.permute.xlu0 %352
      %354 = vrot.lane.b32.xlu0 %v308, 15
      %v355 = vpop.permute.xlu0 %354
      %vm356 = vcmp.lt.s32.totalorder %v314, 15
      %v357 = vsel %vm356, %v353, %v355
      %v358 = vsel %vm356, %v355, %v353
      %s359 = scalar_lea.vmem %s7, 32
      %v360 = vld [vmem:[%s359] sm:$0xff]
      %v361 = vld [vmem:[%s359 + $0x8] sm:$0xff]
      %v362 = vmul.f32 %v358, %v360
      %v363 = vmul.f32 %v357, %v361
      %v364 = vpack.c.bf16 %v362, %v362
      %v365 = vpack.c.bf16 %v363, %v363
      %v368 = vunpack.c.l.b16 %v364
      %v369 = vunpack.c.l.b16 %v365
      %v370 = vpack.c.b16 %v369, %v368
      %372 = vst [vmem:[#allocation2 + $0x10] sm:$0xff] %v370
      %373 = vrot.lane.b32.xlu0 %v307, 1
      %v374 = vpop.permute.xlu0 %373
      %375 = vrot.lane.b32.xlu0 %v308, 1
      %v376 = vpop.permute.xlu0 %375
      %vm377 = vcmp.lt.s32.totalorder %v314, 1
      %v378 = vsel %vm377, %v374, %v376
      %v379 = vsel %vm377, %v376, %v374
      %s380 = scalar_lea.vmem %s7, 48
      %v381 = vld [vmem:[%s380] sm:$0xff]
      %v382 = vld [vmem:[%s380 + $0x8] sm:$0xff]
      %v383 = vmul.f32 %v379, %v381
      %v384 = vmul.f32 %v378, %v382
      %v385 = vpack.c.bf16 %v383, %v383
      %v386 = vpack.c.bf16 %v384, %v384
      %v389 = vunpack.c.l.b16 %v385
      %v390 = vunpack.c.l.b16 %v386
      %v391 = vpack.c.b16 %v390, %v389
      %393 = vst [vmem:[#allocation2 + $0x18] sm:$0xff] %v391
      %v394 = vpack.c.bf16 %v307, %v307
      %v395 = vpack.c.bf16 %v308, %v308
      %v398 = vunpack.c.l.b16 %v394
      %v399 = vunpack.c.l.b16 %v395
      %v400 = vpack.c.b16 %v399, %v398
      %402 = vst [vmem:[#allocation2 + $0x20] sm:$0xff] %v400
      %403 = vrot.lane.b32.xlu0 %v307, 127
      %v404 = vpop.permute.xlu0 %403
      %405 = vrot.lane.b32.xlu0 %v308, 127
      %v406 = vpop.permute.xlu0 %405
      %vm407 = vcmp.lt.s32.totalorder %v314, 127
      %v408 = vsel %vm407, %v404, %v406
      %v409 = vsel %vm407, %v406, %v404
      %s410 = scalar_lea.vmem %s7, 80
      %v411 = vld [vmem:[%s410] sm:$0xff]
      %v412 = vld [vmem:[%s410 + $0x8] sm:$0xff]
      %v413 = vmul.f32 %v408, %v411
      %v414 = vmul.f32 %v409, %v412
      %v415 = vpack.c.bf16 %v413, %v413
      %v416 = vpack.c.bf16 %v414, %v414
      %v419 = vunpack.c.l.b16 %v415
      %v420 = vunpack.c.l.b16 %v416
      %v421 = vpack.c.b16 %v420, %v419
      %423 = vst [vmem:[#allocation2 + $0x28] sm:$0xff] %v421
      %424 = vrot.lane.b32.xlu0 %v307, 113
      %v425 = vpop.permute.xlu0 %424
      %426 = vrot.lane.b32.xlu0 %v308, 113
      %v427 = vpop.permute.xlu0 %426
      %vm428 = vcmp.lt.s32.totalorder %v314, 113
      %v429 = vsel %vm428, %v425, %v427
      %v430 = vsel %vm428, %v427, %v425
      %s431 = scalar_lea.vmem %s7, 96
      %v432 = vld [vmem:[%s431] sm:$0xff]
      %v433 = vld [vmem:[%s431 + $0x8] sm:$0xff]
      %v434 = vmul.f32 %v429, %v432
      %v435 = vmul.f32 %v430, %v433
      %v436 = vpack.c.bf16 %v434, %v434
      %v437 = vpack.c.bf16 %v435, %v435
      %v440 = vunpack.c.l.b16 %v436
      %v441 = vunpack.c.l.b16 %v437
      %v442 = vpack.c.b16 %v441, %v440
      %444 = vst [vmem:[#allocation2 + $0x30] sm:$0xff] %v442
      %445 = vrot.lane.b32.xlu0 %v307, 112
      %v446 = vpop.permute.xlu0 %445
      %447 = vrot.lane.b32.xlu0 %v308, 112
      %v448 = vpop.permute.xlu0 %447
      %vm449 = vcmp.lt.s32.totalorder %v314, 112
      %v450 = vsel %vm449, %v446, %v448
      %v451 = vsel %vm449, %v448, %v446
      %s452 = scalar_lea.vmem %s7, 112
      %v453 = vld [vmem:[%s452] sm:$0xff]
      %v454 = vld [vmem:[%s452 + $0x8] sm:$0xff]
      %v455 = vmul.f32 %v450, %v453
      %v456 = vmul.f32 %v451, %v454
      %v457 = vpack.c.bf16 %v455, %v455
      %v458 = vpack.c.bf16 %v456, %v456
      %v461 = vunpack.c.l.b16 %v457
      %v462 = vunpack.c.l.b16 %v458
      %v463 = vpack.c.b16 %v462, %v461
      %465 = vst [vmem:[#allocation2 + $0x38] sm:$0xff] %v463
      %466 = vrot.lane.b32.xlu0 %v307, 111
      %v467 = vpop.permute.xlu0 %466
      %468 = vrot.lane.b32.xlu0 %v308, 111
      %v469 = vpop.permute.xlu0 %468
      %vm470 = vcmp.lt.s32.totalorder %v314, 111
      %v471 = vsel %vm470, %v467, %v469
      %v472 = vsel %vm470, %v469, %v467
      %s473 = scalar_lea.vmem %s7, 128
      %v474 = vld [vmem:[%s473] sm:$0xff]
      %v475 = vld [vmem:[%s473 + $0x8] sm:$0xff]
      %v476 = vmul.f32 %v471, %v474
      %v477 = vmul.f32 %v472, %v475
      %v478 = vpack.c.bf16 %v476, %v476
      %v479 = vpack.c.bf16 %v477, %v477
      %v482 = vunpack.c.l.b16 %v478
      %v483 = vunpack.c.l.b16 %v479
      %v484 = vpack.c.b16 %v483, %v482
      %486 = vst [vmem:[#allocation2 + $0x40] sm:$0xff] %v484
      %v487 = vld [vmem:[%s1] sm:$0xf]
      %v488 = vld [vmem:[#allocation2] sm:$0xff]
      %v489 = vld [vmem:[#allocation2 + $0x8] sm:$0xff]
      %v490 = vld [vmem:[#allocation2 + $0x10] sm:$0xff]
      %v491 = vld [vmem:[#allocation2 + $0x18] sm:$0xff]
      %v492 = vld [vmem:[#allocation2 + $0x20] sm:$0xff]
      %v493 = vld [vmem:[#allocation2 + $0x28] sm:$0xff]
      %v494 = vld [vmem:[#allocation2 + $0x30] sm:$0xff]
      %v495 = vld [vmem:[#allocation2 + $0x38] sm:$0xff]
      %v496 = vld [vmem:[#allocation2 + $0x40] sm:$0xff]
      %v497 = vld [vmem:[%s6] sm:$0xff]
      %499 = vset.pattern.permute.xlu0 0
      %500 = vperm.xlu0 %499, %v497
      %v501 = vpop.permute.xlu0 %500
      %v512 = vunpack.c.l.b16 %v488
      %v513 = vunpack.c.h.b16 %v488
      %v514 = vunpack.c.l.b16 %v489
      %v515 = vunpack.c.h.b16 %v489
      %v516 = vunpack.c.l.b16 %v490
      %v517 = vunpack.c.h.b16 %v490
      %v518 = vunpack.c.l.b16 %v491
      %v519 = vunpack.c.h.b16 %v491
      %v520 = vunpack.c.l.b16 %v492
      %v521 = vunpack.c.h.b16 %v492
      %v522 = vunpack.c.l.b16 %v493
      %v523 = vunpack.c.h.b16 %v493
      %v524 = vunpack.c.l.b16 %v494
      %v525 = vunpack.c.h.b16 %v494
      %v526 = vunpack.c.l.b16 %v495
      %v527 = vunpack.c.h.b16 %v495
      %v528 = vunpack.c.l.b16 %v496
      %v529 = vunpack.c.h.b16 %v496
      %v530 = vpack.c.b16 %v514, %v512
      %v531 = vpack.c.b16 %v515, %v513
      %v532 = vpack.c.b16 %v518, %v516
      %v533 = vpack.c.b16 %v519, %v517
      %v534 = vpack.c.b16 %v522, %v520
      %v535 = vpack.c.b16 %v523, %v521
      %v536 = vpack.c.b16 %v526, %v524
      %v537 = vpack.c.b16 %v527, %v525
      %v538 = vpack.c.b16 %v528, %v528
      %v539 = vpack.c.b16 %v529, %v529
      %vm548 = vcmask 588800
      %v550 = vsel %vm548, %v487, 0
      %vm552 = vcmask 1043456
      %v554 = vsel %vm552, %v538, 0
      %v557 = vsel %vm552, %v539, 0
      %559 = vmatprep.subr.bf16.mxu0 0
      %560 = vmatpush1.bf16.msra.mxu0 0
      %561 = vmatprep.subr.bf16.mxu0 0
      %562 = vmatpush1.bf16.msra.mxu0 0
      %563 = vmatprep.subr.bf16.mxu0 0
      %564 = vmatpush1.bf16.msra.mxu0 0
      %565 = vmatprep.subr.bf16.mxu0 %v557
      %566 = vmatpush1.bf16.msra.mxu0 %v554
      %567 = vmatprep.subr.bf16.mxu0 %v537
      %568 = vmatpush1.bf16.msra.mxu0 %v536
      %569 = vmatprep.subr.bf16.mxu0 %v535
      %570 = vmatpush1.bf16.msra.mxu0 %v534
      %571 = vmatprep.subr.bf16.mxu0 %v533
      %572 = vmatpush1.bf16.msra.mxu0 %v532
      %573 = vmatprep.subr.bf16.mxu0 %v531
      %574 = vmatpush1.bf16.msra.mxu0 %v530
      %575 = vmatprep.subr.bf16.mxu0 0
      %576 = vmatpush2.bf16.msra.mxu0 0
      %577 = vmatprep.subr.bf16.mxu0 0
      %578 = vmatpush2.bf16.msra.mxu0 0
      %579 = vmatprep.subr.bf16.mxu0 0
      %580 = vmatpush2.bf16.msra.mxu0 0
      %581 = vmatprep.subr.bf16.mxu0 0
      %582 = vmatpush2.bf16.msra.mxu0 0
      %583 = vmatprep.subr.bf16.mxu0 0
      %584 = vmatpush2.bf16.msra.mxu0 0
      %585 = vmatprep.subr.bf16.mxu0 0
      %586 = vmatpush2.bf16.msra.mxu0 0
      %587 = vmatprep.subr.bf16.mxu0 0
      %588 = vmatpush2.bf16.msra.mxu0 0
      %589 = vmatprep.subr.bf16.mxu0 0
      %590 = vmatpush2.bf16.msra.mxu0 0
      %591 = vmatprep.mubr.bf16.mxu0 0
      %592 = vmatmul.mubr.bf16.gmra.mxu0 %v550
      %v593 = vpop.f32.mrf.mxu0
      %v594 = vadd.f32 %v501, %v593
      %v595 = vpop.f32.mrf.mxu0
      %v596 = vadd.f32 %v501, %v595
      %v597 = vpop.f32.mrf.mxu0
      %v598 = vpop.f32.mrf.mxu0
      %599 = vdwg.mxu0
      %vm600 = vcmp.ge.f32.partialorder %v594, 0.0
      %vm601 = vcmp.ge.f32.partialorder %v596, 0.0
      %v602 = vmul.f32 %v594, 0.2
      %v603 = vmul.f32 %v596, 0.2
      %v604 = vsel %vm600, %v594, %v602
      %v605 = vsel %vm601, %v596, %v603
      %606 = vrot.lane.b32.xlu0 %v604, 17
      %v607 = vpop.permute.xlu0 %606
      %608 = vrot.lane.b32.xlu0 %v605, 17
      %v609 = vpop.permute.xlu0 %608
      %v610 = vsel %vm315, %v607, %v609
      %v611 = vsel %vm315, %v609, %v607
      %v612 = vld [vmem:[%s7] sm:$0xff]
      %v613 = vld [vmem:[%s7 + $0x8] sm:$0xff]
      %v614 = vmul.f32 %v611, %v612
      %v615 = vmul.f32 %v610, %v613
      %v616 = vpack.c.bf16 %v614, %v614
      %v617 = vpack.c.bf16 %v615, %v615
      %v620 = vunpack.c.l.b16 %v616
      %v621 = vunpack.c.l.b16 %v617
      %v622 = vpack.c.b16 %v621, %v620
      %624 = vst [vmem:[#allocation2 + $0x48] sm:$0xff] %v622
      %625 = vrot.lane.b32.xlu0 %v604, 16
      %v626 = vpop.permute.xlu0 %625
      %627 = vrot.lane.b32.xlu0 %v605, 16
      %v628 = vpop.permute.xlu0 %627
      %v629 = vsel %vm335, %v626, %v628
      %v630 = vsel %vm335, %v628, %v626
      %v631 = vld [vmem:[%s338] sm:$0xff]
      %v632 = vld [vmem:[%s338 + $0x8] sm:$0xff]
      %v633 = vmul.f32 %v630, %v631
      %v634 = vmul.f32 %v629, %v632
      %v635 = vpack.c.bf16 %v633, %v633
      %v636 = vpack.c.bf16 %v634, %v634
      %v639 = vunpack.c.l.b16 %v635
      %v640 = vunpack.c.l.b16 %v636
      %v641 = vpack.c.b16 %v640, %v639
      %643 = vst [vmem:[#allocation2 + $0x50] sm:$0xff] %v641
      %644 = vrot.lane.b32.xlu0 %v604, 15
      %v645 = vpop.permute.xlu0 %644
      %646 = vrot.lane.b32.xlu0 %v605, 15
      %v647 = vpop.permute.xlu0 %646
      %v648 = vsel %vm356, %v645, %v647
      %v649 = vsel %vm356, %v647, %v645
      %v650 = vld [vmem:[%s359] sm:$0xff]
      %v651 = vld [vmem:[%s359 + $0x8] sm:$0xff]
      %v652 = vmul.f32 %v649, %v650
      %v653 = vmul.f32 %v648, %v651
      %v654 = vpack.c.bf16 %v652, %v652
      %v655 = vpack.c.bf16 %v653, %v653
      %v658 = vunpack.c.l.b16 %v654
      %v659 = vunpack.c.l.b16 %v655
      %v660 = vpack.c.b16 %v659, %v658
      %662 = vst [vmem:[#allocation2 + $0x58] sm:$0xff] %v660
      %663 = vrot.lane.b32.xlu0 %v604, 1
      %v664 = vpop.permute.xlu0 %663
      %665 = vrot.lane.b32.xlu0 %v605, 1
      %v666 = vpop.permute.xlu0 %665
      %v667 = vsel %vm377, %v664, %v666
      %v668 = vsel %vm377, %v666, %v664
      %v669 = vld [vmem:[%s380] sm:$0xff]
      %v670 = vld [vmem:[%s380 + $0x8] sm:$0xff]
      %v671 = vmul.f32 %v668, %v669
      %v672 = vmul.f32 %v667, %v670
      %v673 = vpack.c.bf16 %v671, %v671
      %v674 = vpack.c.bf16 %v672, %v672
      %v677 = vunpack.c.l.b16 %v673
      %v678 = vunpack.c.l.b16 %v674
      %v679 = vpack.c.b16 %v678, %v677
      %681 = vst [vmem:[#allocation2 + $0x60] sm:$0xff] %v679
      %v682 = vpack.c.bf16 %v604, %v604
      %v683 = vpack.c.bf16 %v605, %v605
      %v686 = vunpack.c.l.b16 %v682
      %v687 = vunpack.c.l.b16 %v683
      %v688 = vpack.c.b16 %v687, %v686
      %690 = vst [vmem:[#allocation2 + $0x68] sm:$0xff] %v688
      %691 = vrot.lane.b32.xlu0 %v604, 127
      %v692 = vpop.permute.xlu0 %691
      %693 = vrot.lane.b32.xlu0 %v605, 127
      %v694 = vpop.permute.xlu0 %693
      %v695 = vsel %vm407, %v692, %v694
      %v696 = vsel %vm407, %v694, %v692
      %v697 = vld [vmem:[%s410] sm:$0xff]
      %v698 = vld [vmem:[%s410 + $0x8] sm:$0xff]
      %v699 = vmul.f32 %v695, %v697
      %v700 = vmul.f32 %v696, %v698
      %v701 = vpack.c.bf16 %v699, %v699
      %v702 = vpack.c.bf16 %v700, %v700
      %v705 = vunpack.c.l.b16 %v701
      %v706 = vunpack.c.l.b16 %v702
      %v707 = vpack.c.b16 %v706, %v705
      %709 = vst [vmem:[#allocation2 + $0x70] sm:$0xff] %v707
      %710 = vrot.lane.b32.xlu0 %v604, 113
      %v711 = vpop.permute.xlu0 %710
      %712 = vrot.lane.b32.xlu0 %v605, 113
      %v713 = vpop.permute.xlu0 %712
      %v714 = vsel %vm428, %v711, %v713
      %v715 = vsel %vm428, %v713, %v711
      %v716 = vld [vmem:[%s431] sm:$0xff]
      %v717 = vld [vmem:[%s431 + $0x8] sm:$0xff]
      %v718 = vmul.f32 %v714, %v716
      %v719 = vmul.f32 %v715, %v717
      %v720 = vpack.c.bf16 %v718, %v718
      %v721 = vpack.c.bf16 %v719, %v719
      %v724 = vunpack.c.l.b16 %v720
      %v725 = vunpack.c.l.b16 %v721
      %v726 = vpack.c.b16 %v725, %v724
      %728 = vst [vmem:[#allocation2 + $0x78] sm:$0xff] %v726
      %729 = vrot.lane.b32.xlu0 %v604, 112
      %v730 = vpop.permute.xlu0 %729
      %731 = vrot.lane.b32.xlu0 %v605, 112
      %v732 = vpop.permute.xlu0 %731
      %v733 = vsel %vm449, %v730, %v732
      %v734 = vsel %vm449, %v732, %v730
      %v735 = vld [vmem:[%s452] sm:$0xff]
      %v736 = vld [vmem:[%s452 + $0x8] sm:$0xff]
      %v737 = vmul.f32 %v733, %v735
      %v738 = vmul.f32 %v734, %v736
      %v739 = vpack.c.bf16 %v737, %v737
      %v740 = vpack.c.bf16 %v738, %v738
      %v743 = vunpack.c.l.b16 %v739
      %v744 = vunpack.c.l.b16 %v740
      %v745 = vpack.c.b16 %v744, %v743
      %747 = vst [vmem:[#allocation2 + $0x80] sm:$0xff] %v745
      %748 = vrot.lane.b32.xlu0 %v604, 111
      %v749 = vpop.permute.xlu0 %748
      %750 = vrot.lane.b32.xlu0 %v605, 111
      %v751 = vpop.permute.xlu0 %750
      %v752 = vsel %vm470, %v749, %v751
      %v753 = vsel %vm470, %v751, %v749
      %v754 = vld [vmem:[%s473] sm:$0xff]
      %v755 = vld [vmem:[%s473 + $0x8] sm:$0xff]
      %v756 = vmul.f32 %v752, %v754
      %v757 = vmul.f32 %v753, %v755
      %v758 = vpack.c.bf16 %v756, %v756
      %v759 = vpack.c.bf16 %v757, %v757
      %v762 = vunpack.c.l.b16 %v758
      %v763 = vunpack.c.l.b16 %v759
      %v764 = vpack.c.b16 %v763, %v762
      %766 = vst [vmem:[#allocation2 + $0x88] sm:$0xff] %v764
      %v767 = vld [vmem:[%s2] sm:$0xff]
      %v768 = vld [vmem:[#allocation2] sm:$0xff]
      %v769 = vld [vmem:[#allocation2 + $0x8] sm:$0xff]
      %v770 = vld [vmem:[#allocation2 + $0x10] sm:$0xff]
      %v771 = vld [vmem:[#allocation2 + $0x18] sm:$0xff]
      %v772 = vld [vmem:[#allocation2 + $0x20] sm:$0xff]
      %v773 = vld [vmem:[#allocation2 + $0x28] sm:$0xff]
      %v774 = vld [vmem:[#allocation2 + $0x30] sm:$0xff]
      %v775 = vld [vmem:[#allocation2 + $0x38] sm:$0xff]
      %v776 = vld [vmem:[#allocation2 + $0x40] sm:$0xff]
      %v777 = vld [vmem:[#allocation2 + $0x48] sm:$0xff]
      %v778 = vld [vmem:[#allocation2 + $0x50] sm:$0xff]
      %v779 = vld [vmem:[#allocation2 + $0x58] sm:$0xff]
      %v780 = vld [vmem:[#allocation2 + $0x60] sm:$0xff]
      %v781 = vld [vmem:[#allocation2 + $0x68] sm:$0xff]
      %v782 = vld [vmem:[#allocation2 + $0x70] sm:$0xff]
      %v783 = vld [vmem:[#allocation2 + $0x78] sm:$0xff]
      %v784 = vld [vmem:[#allocation2 + $0x80] sm:$0xff]
      %v785 = vld [vmem:[#allocation2 + $0x88] sm:$0xff]
      %s786 = scalar_lea.vmem %s6, 8
      %v787 = vld [vmem:[%s786] sm:$0xff]
      %789 = vset.pattern.permute.xlu0 0
      %790 = vperm.xlu0 %789, %v787
      %v791 = vpop.permute.xlu0 %790
      %v794 = vunpack.c.l.b16 %v767
      %v795 = vunpack.c.h.b16 %v767
      %v796 = vpack.c.b16 %v794, %v794
      %v797 = vpack.c.b16 %v795, %v795
      %v817 = vunpack.c.l.b16 %v768
      %v818 = vunpack.c.h.b16 %v768
      %v819 = vunpack.c.l.b16 %v769
      %v820 = vunpack.c.h.b16 %v769
      %v821 = vunpack.c.l.b16 %v770
      %v822 = vunpack.c.h.b16 %v770
      %v823 = vunpack.c.l.b16 %v771
      %v824 = vunpack.c.h.b16 %v771
      %v825 = vunpack.c.l.b16 %v772
      %v826 = vunpack.c.h.b16 %v772
      %v827 = vunpack.c.l.b16 %v773
      %v828 = vunpack.c.h.b16 %v773
      %v829 = vunpack.c.l.b16 %v774
      %v830 = vunpack.c.h.b16 %v774
      %v831 = vunpack.c.l.b16 %v775
      %v832 = vunpack.c.h.b16 %v775
      %v833 = vunpack.c.l.b16 %v776
      %v834 = vunpack.c.h.b16 %v776
      %v835 = vunpack.c.l.b16 %v777
      %v836 = vunpack.c.h.b16 %v777
      %v837 = vunpack.c.l.b16 %v778
      %v838 = vunpack.c.h.b16 %v778
      %v839 = vunpack.c.l.b16 %v779
      %v840 = vunpack.c.h.b16 %v779
      %v841 = vunpack.c.l.b16 %v780
      %v842 = vunpack.c.h.b16 %v780
      %v843 = vunpack.c.l.b16 %v781
      %v844 = vunpack.c.h.b16 %v781
      %v845 = vunpack.c.l.b16 %v782
      %v846 = vunpack.c.h.b16 %v782
      %v847 = vunpack.c.l.b16 %v783
      %v848 = vunpack.c.h.b16 %v783
      %v849 = vunpack.c.l.b16 %v784
      %v850 = vunpack.c.h.b16 %v784
      %v851 = vunpack.c.l.b16 %v785
      %v852 = vunpack.c.h.b16 %v785
      %v853 = vpack.c.b16 %v819, %v817
      %v854 = vpack.c.b16 %v820, %v818
      %v855 = vpack.c.b16 %v823, %v821
      %v856 = vpack.c.b16 %v824, %v822
      %v857 = vpack.c.b16 %v827, %v825
      %v858 = vpack.c.b16 %v828, %v826
      %v859 = vpack.c.b16 %v831, %v829
      %v860 = vpack.c.b16 %v832, %v830
      %v861 = vpack.c.b16 %v835, %v833
      %v862 = vpack.c.b16 %v836, %v834
      %v863 = vpack.c.b16 %v839, %v837
      %v864 = vpack.c.b16 %v840, %v838
      %v865 = vpack.c.b16 %v843, %v841
      %v866 = vpack.c.b16 %v844, %v842
      %v867 = vpack.c.b16 %v847, %v845
      %v868 = vpack.c.b16 %v848, %v846
      %v869 = vpack.c.b16 %v851, %v849
      %v870 = vpack.c.b16 %v852, %v850
      %vm889 = vcmask 130048
      %v891 = vsel %vm889, %v797, 0
      %893 = vmatprep.subr.bf16.mxu0 %v868
      %894 = vmatpush1.bf16.msra.mxu0 %v867
      %895 = vmatprep.subr.bf16.mxu0 %v866
      %896 = vmatpush1.bf16.msra.mxu0 %v865
      %897 = vmatprep.subr.bf16.mxu0 %v864
      %898 = vmatpush1.bf16.msra.mxu0 %v863
      %899 = vmatprep.subr.bf16.mxu0 %v862
      %900 = vmatpush1.bf16.msra.mxu0 %v861
      %901 = vmatprep.subr.bf16.mxu0 %v860
      %902 = vmatpush1.bf16.msra.mxu0 %v859
      %903 = vmatprep.subr.bf16.mxu0 %v858
      %904 = vmatpush1.bf16.msra.mxu0 %v857
      %905 = vmatprep.subr.bf16.mxu0 %v856
      %906 = vmatpush1.bf16.msra.mxu0 %v855
      %907 = vmatprep.subr.bf16.mxu0 %v854
      %908 = vmatpush1.bf16.msra.mxu0 %v853
      %909 = vmatprep.subr.bf16.mxu0 0
      %910 = vmatpush2.bf16.msra.mxu0 0
      %911 = vmatprep.subr.bf16.mxu0 0
      %912 = vmatpush2.bf16.msra.mxu0 0
      %913 = vmatprep.subr.bf16.mxu0 0
      %914 = vmatpush2.bf16.msra.mxu0 0
      %915 = vmatprep.subr.bf16.mxu0 0
      %916 = vmatpush2.bf16.msra.mxu0 0
      %917 = vmatprep.subr.bf16.mxu0 0
      %918 = vmatpush2.bf16.msra.mxu0 0
      %919 = vmatprep.subr.bf16.mxu0 0
      %920 = vmatpush2.bf16.msra.mxu0 0
      %921 = vmatprep.subr.bf16.mxu0 0
      %922 = vmatpush2.bf16.msra.mxu0 0
      %923 = vmatprep.subr.bf16.mxu0 %v870
      %924 = vmatpush2.bf16.msra.mxu0 %v869
      %925 = vmatprep.mubr.bf16.mxu0 %v891
      %926 = vmatmul.mubr.bf16.gmra.mxu0 %v796
      %v927 = vpop.f32.mrf.mxu0
      %v928 = vadd.f32 %v791, %v927
      %v929 = vpop.f32.mrf.mxu0
      %v930 = vadd.f32 %v791, %v929
      %v931 = vpop.f32.mrf.mxu0
      %v932 = vpop.f32.mrf.mxu0
      %933 = vdwg.mxu0
      %vm934 = vcmp.ge.f32.partialorder %v928, 0.0
      %vm935 = vcmp.ge.f32.partialorder %v930, 0.0
      %v936 = vmul.f32 %v928, 0.2
      %v937 = vmul.f32 %v930, 0.2
      %v938 = vsel %vm934, %v928, %v936
      %v939 = vsel %vm935, %v930, %v937
      %940 = vrot.lane.b32.xlu0 %v938, 17
      %v941 = vpop.permute.xlu0 %940
      %942 = vrot.lane.b32.xlu0 %v939, 17
      %v943 = vpop.permute.xlu0 %942
      %v944 = vsel %vm315, %v941, %v943
      %v945 = vsel %vm315, %v943, %v941
      %v946 = vld [vmem:[%s7] sm:$0xff]
      %v947 = vld [vmem:[%s7 + $0x8] sm:$0xff]
      %v948 = vmul.f32 %v945, %v946
      %v949 = vmul.f32 %v944, %v947
      %v950 = vpack.c.bf16 %v948, %v948
      %v951 = vpack.c.bf16 %v949, %v949
      %v954 = vunpack.c.l.b16 %v950
      %v955 = vunpack.c.l.b16 %v951
      %v956 = vpack.c.b16 %v955, %v954
      %958 = vst [vmem:[#allocation2 + $0x90] sm:$0xff] %v956
      %959 = vrot.lane.b32.xlu0 %v938, 16
      %v960 = vpop.permute.xlu0 %959
      %961 = vrot.lane.b32.xlu0 %v939, 16
      %v962 = vpop.permute.xlu0 %961
      %v963 = vsel %vm335, %v960, %v962
      %v964 = vsel %vm335, %v962, %v960
      %v965 = vld [vmem:[%s338] sm:$0xff]
      %v966 = vld [vmem:[%s338 + $0x8] sm:$0xff]
      %v967 = vmul.f32 %v964, %v965
      %v968 = vmul.f32 %v963, %v966
      %v969 = vpack.c.bf16 %v967, %v967
      %v970 = vpack.c.bf16 %v968, %v968
      %v973 = vunpack.c.l.b16 %v969
      %v974 = vunpack.c.l.b16 %v970
      %v975 = vpack.c.b16 %v974, %v973
      %977 = vst [vmem:[#allocation2 + $0x98] sm:$0xff] %v975
      %978 = vrot.lane.b32.xlu0 %v938, 15
      %v979 = vpop.permute.xlu0 %978
      %980 = vrot.lane.b32.xlu0 %v939, 15
      %v981 = vpop.permute.xlu0 %980
      %v982 = vsel %vm356, %v979, %v981
      %v983 = vsel %vm356, %v981, %v979
      %v984 = vld [vmem:[%s359] sm:$0xff]
      %v985 = vld [vmem:[%s359 + $0x8] sm:$0xff]
      %v986 = vmul.f32 %v983, %v984
      %v987 = vmul.f32 %v982, %v985
      %v988 = vpack.c.bf16 %v986, %v986
      %v989 = vpack.c.bf16 %v987, %v987
      %v992 = vunpack.c.l.b16 %v988
      %v993 = vunpack.c.l.b16 %v989
      %v994 = vpack.c.b16 %v993, %v992
      %996 = vst [vmem:[#allocation2 + $0xa0] sm:$0xff] %v994
      %997 = vrot.lane.b32.xlu0 %v938, 1
      %v998 = vpop.permute.xlu0 %997
      %999 = vrot.lane.b32.xlu0 %v939, 1
      %v1000 = vpop.permute.xlu0 %999
      %v1001 = vsel %vm377, %v998, %v1000
      %v1002 = vsel %vm377, %v1000, %v998
      %v1003 = vld [vmem:[%s380] sm:$0xff]
      %v1004 = vld [vmem:[%s380 + $0x8] sm:$0xff]
      %v1005 = vmul.f32 %v1002, %v1003
      %v1006 = vmul.f32 %v1001, %v1004
      %v1007 = vpack.c.bf16 %v1005, %v1005
      %v1008 = vpack.c.bf16 %v1006, %v1006
      %v1011 = vunpack.c.l.b16 %v1007
      %v1012 = vunpack.c.l.b16 %v1008
      %v1013 = vpack.c.b16 %v1012, %v1011
      %1015 = vst [vmem:[#allocation2 + $0xa8] sm:$0xff] %v1013
      %v1016 = vpack.c.bf16 %v938, %v938
      %v1017 = vpack.c.bf16 %v939, %v939
      %v1020 = vunpack.c.l.b16 %v1016
      %v1021 = vunpack.c.l.b16 %v1017
      %v1022 = vpack.c.b16 %v1021, %v1020
      %1024 = vst [vmem:[#allocation2 + $0xb0] sm:$0xff] %v1022
      %1025 = vrot.lane.b32.xlu0 %v938, 127
      %v1026 = vpop.permute.xlu0 %1025
      %1027 = vrot.lane.b32.xlu0 %v939, 127
      %v1028 = vpop.permute.xlu0 %1027
      %v1029 = vsel %vm407, %v1026, %v1028
      %v1030 = vsel %vm407, %v1028, %v1026
      %v1031 = vld [vmem:[%s410] sm:$0xff]
      %v1032 = vld [vmem:[%s410 + $0x8] sm:$0xff]
      %v1033 = vmul.f32 %v1029, %v1031
      %v1034 = vmul.f32 %v1030, %v1032
      %v1035 = vpack.c.bf16 %v1033, %v1033
      %v1036 = vpack.c.bf16 %v1034, %v1034
      %v1039 = vunpack.c.l.b16 %v1035
      %v1040 = vunpack.c.l.b16 %v1036
      %v1041 = vpack.c.b16 %v1040, %v1039
      %1043 = vst [vmem:[#allocation2 + $0xb8] sm:$0xff] %v1041
      %1044 = vrot.lane.b32.xlu0 %v938, 113
      %v1045 = vpop.permute.xlu0 %1044
      %1046 = vrot.lane.b32.xlu0 %v939, 113
      %v1047 = vpop.permute.xlu0 %1046
      %v1048 = vsel %vm428, %v1045, %v1047
      %v1049 = vsel %vm428, %v1047, %v1045
      %v1050 = vld [vmem:[%s431] sm:$0xff]
      %v1051 = vld [vmem:[%s431 + $0x8] sm:$0xff]
      %v1052 = vmul.f32 %v1048, %v1050
      %v1053 = vmul.f32 %v1049, %v1051
      %v1054 = vpack.c.bf16 %v1052, %v1052
      %v1055 = vpack.c.bf16 %v1053, %v1053
      %v1058 = vunpack.c.l.b16 %v1054
      %v1059 = vunpack.c.l.b16 %v1055
      %v1060 = vpack.c.b16 %v1059, %v1058
      %1062 = vst [vmem:[#allocation2 + $0xc0] sm:$0xff] %v1060
      %1063 = vrot.lane.b32.xlu0 %v938, 112
      %v1064 = vpop.permute.xlu0 %1063
      %1065 = vrot.lane.b32.xlu0 %v939, 112
      %v1066 = vpop.permute.xlu0 %1065
      %v1067 = vsel %vm449, %v1064, %v1066
      %v1068 = vsel %vm449, %v1066, %v1064
      %v1069 = vld [vmem:[%s452] sm:$0xff]
      %v1070 = vld [vmem:[%s452 + $0x8] sm:$0xff]
      %v1071 = vmul.f32 %v1067, %v1069
      %v1072 = vmul.f32 %v1068, %v1070
      %v1073 = vpack.c.bf16 %v1071, %v1071
      %v1074 = vpack.c.bf16 %v1072, %v1072
      %v1077 = vunpack.c.l.b16 %v1073
      %v1078 = vunpack.c.l.b16 %v1074
      %v1079 = vpack.c.b16 %v1078, %v1077
      %1081 = vst [vmem:[#allocation2 + $0xc8] sm:$0xff] %v1079
      %1082 = vrot.lane.b32.xlu0 %v938, 111
      %v1083 = vpop.permute.xlu0 %1082
      %1084 = vrot.lane.b32.xlu0 %v939, 111
      %v1085 = vpop.permute.xlu0 %1084
      %v1086 = vsel %vm470, %v1083, %v1085
      %v1087 = vsel %vm470, %v1085, %v1083
      %v1088 = vld [vmem:[%s473] sm:$0xff]
      %v1089 = vld [vmem:[%s473 + $0x8] sm:$0xff]
      %v1090 = vmul.f32 %v1086, %v1088
      %v1091 = vmul.f32 %v1087, %v1089
      %v1092 = vpack.c.bf16 %v1090, %v1090
      %v1093 = vpack.c.bf16 %v1091, %v1091
      %v1096 = vunpack.c.l.b16 %v1092
      %v1097 = vunpack.c.l.b16 %v1093
      %v1098 = vpack.c.b16 %v1097, %v1096
      %1100 = vst [vmem:[#allocation2 + $0xd0] sm:$0xff] %v1098
      %v1101 = vld [vmem:[%s3] sm:$0xff]
      %v1102 = vld [vmem:[#allocation2] sm:$0xff]
      %v1103 = vld [vmem:[#allocation2 + $0x8] sm:$0xff]
      %v1104 = vld [vmem:[#allocation2 + $0x10] sm:$0xff]
      %v1105 = vld [vmem:[#allocation2 + $0x18] sm:$0xff]
      %v1106 = vld [vmem:[#allocation2 + $0x20] sm:$0xff]
      %v1107 = vld [vmem:[#allocation2 + $0x28] sm:$0xff]
      %v1108 = vld [vmem:[#allocation2 + $0x30] sm:$0xff]
      %v1109 = vld [vmem:[#allocation2 + $0x38] sm:$0xff]
      %v1110 = vld [vmem:[#allocation2 + $0x40] sm:$0xff]
      %v1111 = vld [vmem:[#allocation2 + $0x48] sm:$0xff]
      %v1112 = vld [vmem:[#allocation2 + $0x50] sm:$0xff]
      %v1113 = vld [vmem:[#allocation2 + $0x58] sm:$0xff]
      %v1114 = vld [vmem:[#allocation2 + $0x60] sm:$0xff]
      %v1115 = vld [vmem:[#allocation2 + $0x68] sm:$0xff]
      %v1116 = vld [vmem:[#allocation2 + $0x70] sm:$0xff]
      %v1117 = vld [vmem:[#allocation2 + $0x78] sm:$0xff]
      %v1118 = vld [vmem:[#allocation2 + $0x80] sm:$0xff]
      %v1119 = vld [vmem:[#allocation2 + $0x88] sm:$0xff]
      %v1120 = vld [vmem:[#allocation2 + $0x90] sm:$0xff]
      %v1121 = vld [vmem:[#allocation2 + $0x98] sm:$0xff]
      %v1122 = vld [vmem:[#allocation2 + $0xa0] sm:$0xff]
      %v1123 = vld [vmem:[#allocation2 + $0xa8] sm:$0xff]
      %v1124 = vld [vmem:[#allocation2 + $0xb0] sm:$0xff]
      %v1125 = vld [vmem:[#allocation2 + $0xb8] sm:$0xff]
      %v1126 = vld [vmem:[#allocation2 + $0xc0] sm:$0xff]
      %v1127 = vld [vmem:[#allocation2 + $0xc8] sm:$0xff]
      %v1128 = vld [vmem:[#allocation2 + $0xd0] sm:$0xff]
      %s1129 = scalar_lea.vmem %s6, 16
      %v1130 = vld [vmem:[%s1129] sm:$0xff]
      %1132 = vset.pattern.permute.xlu0 0
      %1133 = vperm.xlu0 %1132, %v1130
      %v1134 = vpop.permute.xlu0 %1133
      %v1137 = vunpack.c.l.b16 %v1101
      %v1138 = vunpack.c.h.b16 %v1101
      %v1139 = vpack.c.b16 %v1137, %v1137
      %v1140 = vpack.c.b16 %v1138, %v1138
      %v1169 = vunpack.c.l.b16 %v1102
      %v1170 = vunpack.c.h.b16 %v1102
      %v1171 = vunpack.c.l.b16 %v1103
      %v1172 = vunpack.c.h.b16 %v1103
      %v1173 = vunpack.c.l.b16 %v1104
      %v1174 = vunpack.c.h.b16 %v1104
      %v1175 = vunpack.c.l.b16 %v1105
      %v1176 = vunpack.c.h.b16 %v1105
      %v1177 = vunpack.c.l.b16 %v1106
      %v1178 = vunpack.c.h.b16 %v1106
      %v1179 = vunpack.c.l.b16 %v1107
      %v1180 = vunpack.c.h.b16 %v1107
      %v1181 = vunpack.c.l.b16 %v1108
      %v1182 = vunpack.c.h.b16 %v1108
      %v1183 = vunpack.c.l.b16 %v1109
      %v1184 = vunpack.c.h.b16 %v1109
      %v1185 = vunpack.c.l.b16 %v1110
      %v1186 = vunpack.c.h.b16 %v1110
      %v1187 = vunpack.c.l.b16 %v1111
      %v1188 = vunpack.c.h.b16 %v1111
      %v1189 = vunpack.c.l.b16 %v1112
      %v1190 = vunpack.c.h.b16 %v1112
      %v1191 = vunpack.c.l.b16 %v1113
      %v1192 = vunpack.c.h.b16 %v1113
      %v1193 = vunpack.c.l.b16 %v1114
      %v1194 = vunpack.c.h.b16 %v1114
      %v1195 = vunpack.c.l.b16 %v1115
      %v1196 = vunpack.c.h.b16 %v1115
      %v1197 = vunpack.c.l.b16 %v1116
      %v1198 = vunpack.c.h.b16 %v1116
      %v1199 = vunpack.c.l.b16 %v1117
      %v1200 = vunpack.c.h.b16 %v1117
      %v1201 = vunpack.c.l.b16 %v1118
      %v1202 = vunpack.c.h.b16 %v1118
      %v1203 = vunpack.c.l.b16 %v1119
      %v1204 = vunpack.c.h.b16 %v1119
      %v1205 = vunpack.c.l.b16 %v1120
      %v1206 = vunpack.c.h.b16 %v1120
      %v1207 = vunpack.c.l.b16 %v1121
      %v1208 = vunpack.c.h.b16 %v1121
      %v1209 = vunpack.c.l.b16 %v1122
      %v1210 = vunpack.c.h.b16 %v1122
      %v1211 = vunpack.c.l.b16 %v1123
      %v1212 = vunpack.c.h.b16 %v1123
      %v1213 = vunpack.c.l.b16 %v1124
      %v1214 = vunpack.c.h.b16 %v1124
      %v1215 = vunpack.c.l.b16 %v1125
      %v1216 = vunpack.c.h.b16 %v1125
      %v1217 = vunpack.c.l.b16 %v1126
      %v1218 = vunpack.c.h.b16 %v1126
      %v1219 = vunpack.c.l.b16 %v1127
      %v1220 = vunpack.c.h.b16 %v1127
      %v1221 = vunpack.c.l.b16 %v1128
      %v1222 = vunpack.c.h.b16 %v1128
      %v1223 = vpack.c.b16 %v1171, %v1169
      %v1224 = vpack.c.b16 %v1172, %v1170
      %v1225 = vpack.c.b16 %v1175, %v1173
      %v1226 = vpack.c.b16 %v1176, %v1174
      %v1227 = vpack.c.b16 %v1179, %v1177
      %v1228 = vpack.c.b16 %v1180, %v1178
      %v1229 = vpack.c.b16 %v1183, %v1181
      %v1230 = vpack.c.b16 %v1184, %v1182
      %v1231 = vpack.c.b16 %v1187, %v1185
      %v1232 = vpack.c.b16 %v1188, %v1186
      %v1233 = vpack.c.b16 %v1191, %v1189
      %v1234 = vpack.c.b16 %v1192, %v1190
      %v1235 = vpack.c.b16 %v1195, %v1193
      %v1236 = vpack.c.b16 %v1196, %v1194
      %v1237 = vpack.c.b16 %v1199, %v1197
      %v1238 = vpack.c.b16 %v1200, %v1198
      %v1239 = vpack.c.b16 %v1203, %v1201
      %v1240 = vpack.c.b16 %v1204, %v1202
      %v1241 = vpack.c.b16 %v1207, %v1205
      %v1242 = vpack.c.b16 %v1208, %v1206
      %v1243 = vpack.c.b16 %v1211, %v1209
      %v1244 = vpack.c.b16 %v1212, %v1210
      %v1245 = vpack.c.b16 %v1215, %v1213
      %v1246 = vpack.c.b16 %v1216, %v1214
      %v1247 = vpack.c.b16 %v1219, %v1217
      %v1248 = vpack.c.b16 %v1220, %v1218
      %v1249 = vpack.c.b16 %v1221, %v1221
      %v1250 = vpack.c.b16 %v1222, %v1222
      %vm1277 = vcmask 719872
      %v1279 = vsel %vm1277, %v1140, 0
      %v1282 = vsel %vm552, %v1249, 0
      %v1285 = vsel %vm552, %v1250, 0
      %1287 = vmatprep.subr.bf16.mxu0 %v1238
      %1288 = vmatpush1.bf16.msra.mxu0 %v1237
      %1289 = vmatprep.subr.bf16.mxu0 %v1236
      %1290 = vmatpush1.bf16.msra.mxu0 %v1235
      %1291 = vmatprep.subr.bf16.mxu0 %v1234
      %1292 = vmatpush1.bf16.msra.mxu0 %v1233
      %1293 = vmatprep.subr.bf16.mxu0 %v1232
      %1294 = vmatpush1.bf16.msra.mxu0 %v1231
      %1295 = vmatprep.subr.bf16.mxu0 %v1230
      %1296 = vmatpush1.bf16.msra.mxu0 %v1229
      %1297 = vmatprep.subr.bf16.mxu0 %v1228
      %1298 = vmatpush1.bf16.msra.mxu0 %v1227
      %1299 = vmatprep.subr.bf16.mxu0 %v1226
      %1300 = vmatpush1.bf16.msra.mxu0 %v1225
      %1301 = vmatprep.subr.bf16.mxu0 %v1224
      %1302 = vmatpush1.bf16.msra.mxu0 %v1223
      %1303 = vmatprep.subr.bf16.mxu0 0
      %1304 = vmatpush2.bf16.msra.mxu0 0
      %1305 = vmatprep.subr.bf16.mxu0 0
      %1306 = vmatpush2.bf16.msra.mxu0 0
      %1307 = vmatprep.subr.bf16.mxu0 %v1285
      %1308 = vmatpush2.bf16.msra.mxu0 %v1282
      %1309 = vmatprep.subr.bf16.mxu0 %v1248
      %1310 = vmatpush2.bf16.msra.mxu0 %v1247
      %1311 = vmatprep.subr.bf16.mxu0 %v1246
      %1312 = vmatpush2.bf16.msra.mxu0 %v1245
      %1313 = vmatprep.subr.bf16.mxu0 %v1244
      %1314 = vmatpush2.bf16.msra.mxu0 %v1243
      %1315 = vmatprep.subr.bf16.mxu0 %v1242
      %1316 = vmatpush2.bf16.msra.mxu0 %v1241
      %1317 = vmatprep.subr.bf16.mxu0 %v1240
      %1318 = vmatpush2.bf16.msra.mxu0 %v1239
      %1319 = vmatprep.mubr.bf16.mxu0 %v1279
      %1320 = vmatmul.mubr.bf16.gmra.mxu0 %v1139
      %v1321 = vpop.f32.mrf.mxu0
      %v1322 = vadd.f32 %v1134, %v1321
      %v1323 = vpop.f32.mrf.mxu0
      %v1324 = vadd.f32 %v1134, %v1323
      %v1325 = vpop.f32.mrf.mxu0
      %v1326 = vpop.f32.mrf.mxu0
      %1327 = vdwg.mxu0
      %vm1328 = vcmp.ge.f32.partialorder %v1322, 0.0
      %vm1329 = vcmp.ge.f32.partialorder %v1324, 0.0
      %v1330 = vmul.f32 %v1322, 0.2
      %v1331 = vmul.f32 %v1324, 0.2
      %v1332 = vsel %vm1328, %v1322, %v1330
      %v1333 = vsel %vm1329, %v1324, %v1331
      %1334 = vrot.lane.b32.xlu0 %v1332, 17
      %v1335 = vpop.permute.xlu0 %1334
      %1336 = vrot.lane.b32.xlu0 %v1333, 17
      %v1337 = vpop.permute.xlu0 %1336
      %v1338 = vsel %vm315, %v1335, %v1337
      %v1339 = vsel %vm315, %v1337, %v1335
      %v1340 = vld [vmem:[%s7] sm:$0xff]
      %v1341 = vld [vmem:[%s7 + $0x8] sm:$0xff]
      %v1342 = vmul.f32 %v1339, %v1340
      %v1343 = vmul.f32 %v1338, %v1341
      %v1344 = vpack.c.bf16 %v1342, %v1342
      %v1345 = vpack.c.bf16 %v1343, %v1343
      %v1348 = vunpack.c.l.b16 %v1344
      %v1349 = vunpack.c.l.b16 %v1345
      %v1350 = vpack.c.b16 %v1349, %v1348
      %1352 = vst [vmem:[#allocation2 + $0xd8] sm:$0xff] %v1350
      %1353 = vrot.lane.b32.xlu0 %v1332, 16
      %v1354 = vpop.permute.xlu0 %1353
      %1355 = vrot.lane.b32.xlu0 %v1333, 16
      %v1356 = vpop.permute.xlu0 %1355
      %v1357 = vsel %vm335, %v1354, %v1356
      %v1358 = vsel %vm335, %v1356, %v1354
      %v1359 = vld [vmem:[%s338] sm:$0xff]
      %v1360 = vld [vmem:[%s338 + $0x8] sm:$0xff]
      %v1361 = vmul.f32 %v1358, %v1359
      %v1362 = vmul.f32 %v1357, %v1360
      %v1363 = vpack.c.bf16 %v1361, %v1361
      %v1364 = vpack.c.bf16 %v1362, %v1362
      %v1367 = vunpack.c.l.b16 %v1363
      %v1368 = vunpack.c.l.b16 %v1364
      %v1369 = vpack.c.b16 %v1368, %v1367
      %1371 = vst [vmem:[#allocation2 + $0xe0] sm:$0xff] %v1369
      %1372 = vrot.lane.b32.xlu0 %v1332, 15
      %v1373 = vpop.permute.xlu0 %1372
      %1374 = vrot.lane.b32.xlu0 %v1333, 15
      %v1375 = vpop.permute.xlu0 %1374
      %v1376 = vsel %vm356, %v1373, %v1375
      %v1377 = vsel %vm356, %v1375, %v1373
      %v1378 = vld [vmem:[%s359] sm:$0xff]
      %v1379 = vld [vmem:[%s359 + $0x8] sm:$0xff]
      %v1380 = vmul.f32 %v1377, %v1378
      %v1381 = vmul.f32 %v1376, %v1379
      %v1382 = vpack.c.bf16 %v1380, %v1380
      %v1383 = vpack.c.bf16 %v1381, %v1381
      %v1386 = vunpack.c.l.b16 %v1382
      %v1387 = vunpack.c.l.b16 %v1383
      %v1388 = vpack.c.b16 %v1387, %v1386
      %1390 = vst [vmem:[#allocation2 + $0xe8] sm:$0xff] %v1388
      %1391 = vrot.lane.b32.xlu0 %v1332, 1
      %v1392 = vpop.permute.xlu0 %1391
      %1393 = vrot.lane.b32.xlu0 %v1333, 1
      %v1394 = vpop.permute.xlu0 %1393
      %v1395 = vsel %vm377, %v1392, %v1394
      %v1396 = vsel %vm377, %v1394, %v1392
      %v1397 = vld [vmem:[%s380] sm:$0xff]
      %v1398 = vld [vmem:[%s380 + $0x8] sm:$0xff]
      %v1399 = vmul.f32 %v1396, %v1397
      %v1400 = vmul.f32 %v1395, %v1398
      %v1401 = vpack.c.bf16 %v1399, %v1399
      %v1402 = vpack.c.bf16 %v1400, %v1400
      %v1405 = vunpack.c.l.b16 %v1401
      %v1406 = vunpack.c.l.b16 %v1402
      %v1407 = vpack.c.b16 %v1406, %v1405
      %1409 = vst [vmem:[#allocation2 + $0xf0] sm:$0xff] %v1407
      %v1410 = vpack.c.bf16 %v1332, %v1332
      %v1411 = vpack.c.bf16 %v1333, %v1333
      %v1414 = vunpack.c.l.b16 %v1410
      %v1415 = vunpack.c.l.b16 %v1411
      %v1416 = vpack.c.b16 %v1415, %v1414
      %1418 = vst [vmem:[#allocation2 + $0xf8] sm:$0xff] %v1416
      %1419 = vrot.lane.b32.xlu0 %v1332, 127
      %v1420 = vpop.permute.xlu0 %1419
      %1421 = vrot.lane.b32.xlu0 %v1333, 127
      %v1422 = vpop.permute.xlu0 %1421
      %v1423 = vsel %vm407, %v1420, %v1422
      %v1424 = vsel %vm407, %v1422, %v1420
      %v1425 = vld [vmem:[%s410] sm:$0xff]
      %v1426 = vld [vmem:[%s410 + $0x8] sm:$0xff]
      %v1427 = vmul.f32 %v1423, %v1425
      %v1428 = vmul.f32 %v1424, %v1426
      %v1429 = vpack.c.bf16 %v1427, %v1427
      %v1430 = vpack.c.bf16 %v1428, %v1428
      %v1433 = vunpack.c.l.b16 %v1429
      %v1434 = vunpack.c.l.b16 %v1430
      %v1435 = vpack.c.b16 %v1434, %v1433
      %1437 = vst [vmem:[#allocation2 + $0x100] sm:$0xff] %v1435
      %1438 = vrot.lane.b32.xlu0 %v1332, 113
      %v1439 = vpop.permute.xlu0 %1438
      %1440 = vrot.lane.b32.xlu0 %v1333, 113
      %v1441 = vpop.permute.xlu0 %1440
      %v1442 = vsel %vm428, %v1439, %v1441
      %v1443 = vsel %vm428, %v1441, %v1439
      %v1444 = vld [vmem:[%s431] sm:$0xff]
      %v1445 = vld [vmem:[%s431 + $0x8] sm:$0xff]
      %v1446 = vmul.f32 %v1442, %v1444
      %v1447 = vmul.f32 %v1443, %v1445
      %v1448 = vpack.c.bf16 %v1446, %v1446
      %v1449 = vpack.c.bf16 %v1447, %v1447
      %v1452 = vunpack.c.l.b16 %v1448
      %v1453 = vunpack.c.l.b16 %v1449
      %v1454 = vpack.c.b16 %v1453, %v1452
      %1456 = vst [vmem:[#allocation2 + $0x108] sm:$0xff] %v1454
      %1457 = vrot.lane.b32.xlu0 %v1332, 112
      %v1458 = vpop.permute.xlu0 %1457
      %1459 = vrot.lane.b32.xlu0 %v1333, 112
      %v1460 = vpop.permute.xlu0 %1459
      %v1461 = vsel %vm449, %v1458, %v1460
      %v1462 = vsel %vm449, %v1460, %v1458
      %v1463 = vld [vmem:[%s452] sm:$0xff]
      %v1464 = vld [vmem:[%s452 + $0x8] sm:$0xff]
      %v1465 = vmul.f32 %v1461, %v1463
      %v1466 = vmul.f32 %v1462, %v1464
      %v1467 = vpack.c.bf16 %v1465, %v1465
      %v1468 = vpack.c.bf16 %v1466, %v1466
      %v1471 = vunpack.c.l.b16 %v1467
      %v1472 = vunpack.c.l.b16 %v1468
      %v1473 = vpack.c.b16 %v1472, %v1471
      %1475 = vst [vmem:[#allocation2 + $0x110] sm:$0xff] %v1473
      %1476 = vrot.lane.b32.xlu0 %v1332, 111
      %v1477 = vpop.permute.xlu0 %1476
      %1478 = vrot.lane.b32.xlu0 %v1333, 111
      %v1479 = vpop.permute.xlu0 %1478
      %v1480 = vsel %vm470, %v1477, %v1479
      %v1481 = vsel %vm470, %v1479, %v1477
      %v1482 = vld [vmem:[%s473] sm:$0xff]
      %v1483 = vld [vmem:[%s473 + $0x8] sm:$0xff]
      %v1484 = vmul.f32 %v1480, %v1482
      %v1485 = vmul.f32 %v1481, %v1483
      %v1486 = vpack.c.bf16 %v1484, %v1484
      %v1487 = vpack.c.bf16 %v1485, %v1485
      %v1490 = vunpack.c.l.b16 %v1486
      %v1491 = vunpack.c.l.b16 %v1487
      %v1492 = vpack.c.b16 %v1491, %v1490
      %1494 = vst [vmem:[#allocation2 + $0x118] sm:$0xff] %v1492
      %v1495 = vld [vmem:[%s4] sm:$0xff]
      %v1496 = vld [vmem:[%s4 + $0x8] sm:$0xf]
      %v1497 = vld [vmem:[#allocation2] sm:$0xff]
      %v1498 = vld [vmem:[#allocation2 + $0x8] sm:$0xff]
      %v1499 = vld [vmem:[#allocation2 + $0x10] sm:$0xff]
      %v1500 = vld [vmem:[#allocation2 + $0x18] sm:$0xff]
      %v1501 = vld [vmem:[#allocation2 + $0x20] sm:$0xff]
      %v1502 = vld [vmem:[#allocation2 + $0x28] sm:$0xff]
      %v1503 = vld [vmem:[#allocation2 + $0x30] sm:$0xff]
      %v1504 = vld [vmem:[#allocation2 + $0x38] sm:$0xff]
      %v1505 = vld [vmem:[#allocation2 + $0x40] sm:$0xff]
      %v1506 = vld [vmem:[#allocation2 + $0x48] sm:$0xff]
      %v1507 = vld [vmem:[#allocation2 + $0x50] sm:$0xff]
      %v1508 = vld [vmem:[#allocation2 + $0x58] sm:$0xff]
      %v1509 = vld [vmem:[#allocation2 + $0x60] sm:$0xff]
      %v1510 = vld [vmem:[#allocation2 + $0x68] sm:$0xff]
      %v1511 = vld [vmem:[#allocation2 + $0x70] sm:$0xff]
      %v1512 = vld [vmem:[#allocation2 + $0x78] sm:$0xff]
      %v1513 = vld [vmem:[#allocation2 + $0x80] sm:$0xff]
      %v1514 = vld [vmem:[#allocation2 + $0x88] sm:$0xff]
      %v1515 = vld [vmem:[#allocation2 + $0x90] sm:$0xff]
      %v1516 = vld [vmem:[#allocation2 + $0x98] sm:$0xff]
      %v1517 = vld [vmem:[#allocation2 + $0xa0] sm:$0xff]
      %v1518 = vld [vmem:[#allocation2 + $0xa8] sm:$0xff]
      %v1519 = vld [vmem:[#allocation2 + $0xb0] sm:$0xff]
      %v1520 = vld [vmem:[#allocation2 + $0xb8] sm:$0xff]
      %v1521 = vld [vmem:[#allocation2 + $0xc0] sm:$0xff]
      %v1522 = vld [vmem:[#allocation2 + $0xc8] sm:$0xff]
      %v1523 = vld [vmem:[#allocation2 + $0xd0] sm:$0xff]
      %v1524 = vld [vmem:[#allocation2 + $0xd8] sm:$0xff]
      %v1525 = vld [vmem:[#allocation2 + $0xe0] sm:$0xff]
      %v1526 = vld [vmem:[#allocation2 + $0xe8] sm:$0xff]
      %v1527 = vld [vmem:[#allocation2 + $0xf0] sm:$0xff]
      %v1528 = vld [vmem:[#allocation2 + $0xf8] sm:$0xff]
      %v1529 = vld [vmem:[#allocation2 + $0x100] sm:$0xff]
      %v1530 = vld [vmem:[#allocation2 + $0x108] sm:$0xff]
      %v1531 = vld [vmem:[#allocation2 + $0x110] sm:$0xff]
      %v1532 = vld [vmem:[#allocation2 + $0x118] sm:$0xff]
      %s1533 = scalar_lea.vmem %s6, 24
      %v1534 = vld [vmem:[%s1533] sm:$0xff]
      %1536 = vset.pattern.permute.xlu0 0
      %1537 = vperm.xlu0 %1536, %v1534
      %v1538 = vpop.permute.xlu0 %1537
      %v1542 = vunpack.c.l.b16 %v1495
      %v1543 = vunpack.c.h.b16 %v1495
      %v1544 = vunpack.c.l.b16 %v1496
      %v1545 = vpack.c.b16 %v1542, %v1542
      %v1546 = vpack.c.b16 %v1543, %v1543
      %v1547 = vpack.c.b16 %v1544, %v1544
      %v1586 = vunpack.c.l.b16 %v1497
      %v1587 = vunpack.c.h.b16 %v1497
      %v1588 = vunpack.c.l.b16 %v1498
      %v1589 = vunpack.c.h.b16 %v1498
      %v1590 = vunpack.c.l.b16 %v1499
      %v1591 = vunpack.c.h.b16 %v1499
      %v1592 = vunpack.c.l.b16 %v1500
      %v1593 = vunpack.c.h.b16 %v1500
      %v1594 = vunpack.c.l.b16 %v1501
      %v1595 = vunpack.c.h.b16 %v1501
      %v1596 = vunpack.c.l.b16 %v1502
      %v1597 = vunpack.c.h.b16 %v1502
      %v1598 = vunpack.c.l.b16 %v1503
      %v1599 = vunpack.c.h.b16 %v1503
      %v1600 = vunpack.c.l.b16 %v1504
      %v1601 = vunpack.c.h.b16 %v1504
      %v1602 = vunpack.c.l.b16 %v1505
      %v1603 = vunpack.c.h.b16 %v1505
      %v1604 = vunpack.c.l.b16 %v1506
      %v1605 = vunpack.c.h.b16 %v1506
      %v1606 = vunpack.c.l.b16 %v1507
      %v1607 = vunpack.c.h.b16 %v1507
      %v1608 = vunpack.c.l.b16 %v1508
      %v1609 = vunpack.c.h.b16 %v1508
      %v1610 = vunpack.c.l.b16 %v1509
      %v1611 = vunpack.c.h.b16 %v1509
      %v1612 = vunpack.c.l.b16 %v1510
      %v1613 = vunpack.c.h.b16 %v1510
      %v1614 = vunpack.c.l.b16 %v1511
      %v1615 = vunpack.c.h.b16 %v1511
      %v1616 = vunpack.c.l.b16 %v1512
      %v1617 = vunpack.c.h.b16 %v1512
      %v1618 = vunpack.c.l.b16 %v1513
      %v1619 = vunpack.c.h.b16 %v1513
      %v1620 = vunpack.c.l.b16 %v1514
      %v1621 = vunpack.c.h.b16 %v1514
      %v1622 = vunpack.c.l.b16 %v1515
      %v1623 = vunpack.c.h.b16 %v1515
      %v1624 = vunpack.c.l.b16 %v1516
      %v1625 = vunpack.c.h.b16 %v1516
      %v1626 = vunpack.c.l.b16 %v1517
      %v1627 = vunpack.c.h.b16 %v1517
      %v1628 = vunpack.c.l.b16 %v1518
      %v1629 = vunpack.c.h.b16 %v1518
      %v1630 = vunpack.c.l.b16 %v1519
      %v1631 = vunpack.c.h.b16 %v1519
      %v1632 = vunpack.c.l.b16 %v1520
      %v1633 = vunpack.c.h.b16 %v1520
      %v1634 = vunpack.c.l.b16 %v1521
      %v1635 = vunpack.c.h.b16 %v1521
      %v1636 = vunpack.c.l.b16 %v1522
      %v1637 = vunpack.c.h.b16 %v1522
      %v1638 = vunpack.c.l.b16 %v1523
      %v1639 = vunpack.c.h.b16 %v1523
      %v1640 = vunpack.c.l.b16 %v1524
      %v1641 = vunpack.c.h.b16 %v1524
      %v1642 = vunpack.c.l.b16 %v1525
      %v1643 = vunpack.c.h.b16 %v1525
      %v1644 = vunpack.c.l.b16 %v1526
      %v1645 = vunpack.c.h.b16 %v1526
      %v1646 = vunpack.c.l.b16 %v1527
      %v1647 = vunpack.c.h.b16 %v1527
      %v1648 = vunpack.c.l.b16 %v1528
      %v1649 = vunpack.c.h.b16 %v1528
      %v1650 = vunpack.c.l.b16 %v1529
      %v1651 = vunpack.c.h.b16 %v1529
      %v1652 = vunpack.c.l.b16 %v1530
      %v1653 = vunpack.c.h.b16 %v1530
      %v1654 = vunpack.c.l.b16 %v1531
      %v1655 = vunpack.c.h.b16 %v1531
      %v1656 = vunpack.c.l.b16 %v1532
      %v1657 = vunpack.c.h.b16 %v1532
      %v1658 = vpack.c.b16 %v1588, %v1586
      %v1659 = vpack.c.b16 %v1589, %v1587
      %v1660 = vpack.c.b16 %v1592, %v1590
      %v1661 = vpack.c.b16 %v1593, %v1591
      %v1662 = vpack.c.b16 %v1596, %v1594
      %v1663 = vpack.c.b16 %v1597, %v1595
      %v1664 = vpack.c.b16 %v1600, %v1598
      %v1665 = vpack.c.b16 %v1601, %v1599
      %v1666 = vpack.c.b16 %v1604, %v1602
      %v1667 = vpack.c.b16 %v1605, %v1603
      %v1668 = vpack.c.b16 %v1608, %v1606
      %v1669 = vpack.c.b16 %v1609, %v1607
      %v1670 = vpack.c.b16 %v1612, %v1610
      %v1671 = vpack.c.b16 %v1613, %v1611
      %v1672 = vpack.c.b16 %v1616, %v1614
      %v1673 = vpack.c.b16 %v1617, %v1615
      %v1674 = vpack.c.b16 %v1620, %v1618
      %v1675 = vpack.c.b16 %v1621, %v1619
      %v1676 = vpack.c.b16 %v1624, %v1622
      %v1677 = vpack.c.b16 %v1625, %v1623
      %v1678 = vpack.c.b16 %v1628, %v1626
      %v1679 = vpack.c.b16 %v1629, %v1627
      %v1680 = vpack.c.b16 %v1632, %v1630
      %v1681 = vpack.c.b16 %v1633, %v1631
      %v1682 = vpack.c.b16 %v1636, %v1634
      %v1683 = vpack.c.b16 %v1637, %v1635
      %v1684 = vpack.c.b16 %v1640, %v1638
      %v1685 = vpack.c.b16 %v1641, %v1639
      %v1686 = vpack.c.b16 %v1644, %v1642
      %v1687 = vpack.c.b16 %v1645, %v1643
      %v1688 = vpack.c.b16 %v1648, %v1646
      %v1689 = vpack.c.b16 %v1649, %v1647
      %v1690 = vpack.c.b16 %v1652, %v1650
      %v1691 = vpack.c.b16 %v1653, %v1651
      %v1692 = vpack.c.b16 %v1656, %v1654
      %v1693 = vpack.c.b16 %v1657, %v1655
      %vm1730 = vcmask 261120
      %v1732 = vsel %vm1730, %v1547, 0
      %1734 = vmatprep.subr.bf16.mxu0 %v1673
      %1735 = vmatpush1.bf16.msra.mxu0 %v1672
      %1736 = vmatprep.subr.bf16.mxu0 %v1671
      %1737 = vmatpush1.bf16.msra.mxu0 %v1670
      %1738 = vmatprep.subr.bf16.mxu0 %v1669
      %1739 = vmatpush1.bf16.msra.mxu0 %v1668
      %1740 = vmatprep.subr.bf16.mxu0 %v1667
      %1741 = vmatpush1.bf16.msra.mxu0 %v1666
      %1742 = vmatprep.subr.bf16.mxu0 %v1665
      %1743 = vmatpush1.bf16.msra.mxu0 %v1664
      %1744 = vmatprep.subr.bf16.mxu0 %v1663
      %1745 = vmatpush1.bf16.msra.mxu0 %v1662
      %1746 = vmatprep.subr.bf16.mxu0 %v1661
      %1747 = vmatpush1.bf16.msra.mxu0 %v1660
      %1748 = vmatprep.subr.bf16.mxu0 %v1659
      %1749 = vmatpush1.bf16.msra.mxu0 %v1658
      %1750 = vmatprep.subr.bf16.mxu0 %v1689
      %1751 = vmatpush2.bf16.msra.mxu0 %v1688
      %1752 = vmatprep.subr.bf16.mxu0 %v1687
      %1753 = vmatpush2.bf16.msra.mxu0 %v1686
      %1754 = vmatprep.subr.bf16.mxu0 %v1685
      %1755 = vmatpush2.bf16.msra.mxu0 %v1684
      %1756 = vmatprep.subr.bf16.mxu0 %v1683
      %1757 = vmatpush2.bf16.msra.mxu0 %v1682
      %1758 = vmatprep.subr.bf16.mxu0 %v1681
      %1759 = vmatpush2.bf16.msra.mxu0 %v1680
      %1760 = vmatprep.subr.bf16.mxu0 %v1679
      %1761 = vmatpush2.bf16.msra.mxu0 %v1678
      %1762 = vmatprep.subr.bf16.mxu0 %v1677
      %1763 = vmatpush2.bf16.msra.mxu0 %v1676
      %1764 = vmatprep.subr.bf16.mxu0 %v1675
      %1765 = vmatpush2.bf16.msra.mxu0 %v1674
      %1766 = vmatprep.mubr.bf16.mxu0 %v1546
      %1767 = vmatmul.mubr.bf16.gmra.mxu0 %v1545
      %v1768 = vpop.f32.mrf.mxu0
      %v1769 = vadd.f32 %v1538, %v1768
      %v1770 = vpop.f32.mrf.mxu0
      %v1771 = vadd.f32 %v1538, %v1770
      %v1772 = vpop.f32.mrf.mxu0
      %v1773 = vpop.f32.mrf.mxu0
      %1774 = vdwg.mxu0
      %1775 = vmatprep.subr.bf16.mxu0 0
      %1776 = vmatpush1.bf16.msra.mxu0 0
      %1777 = vmatprep.subr.bf16.mxu0 0
      %1778 = vmatpush1.bf16.msra.mxu0 0
      %1779 = vmatprep.subr.bf16.mxu0 0
      %1780 = vmatpush1.bf16.msra.mxu0 0
      %1781 = vmatprep.subr.bf16.mxu0 0
      %1782 = vmatpush1.bf16.msra.mxu0 0
      %1783 = vmatprep.subr.bf16.mxu0 0
      %1784 = vmatpush1.bf16.msra.mxu0 0
      %1785 = vmatprep.subr.bf16.mxu0 0
      %1786 = vmatpush1.bf16.msra.mxu0 0
      %1787 = vmatprep.subr.bf16.mxu0 %v1693
      %1788 = vmatpush1.bf16.msra.mxu0 %v1692
      %1789 = vmatprep.subr.bf16.mxu0 %v1691
      %1790 = vmatpush1.bf16.msra.mxu0 %v1690
      %1791 = vmatprep.subr.bf16.mxu0 0
      %1792 = vmatpush2.bf16.msra.mxu0 0
      %1793 = vmatprep.subr.bf16.mxu0 0
      %1794 = vmatpush2.bf16.msra.mxu0 0
      %1795 = vmatprep.subr.bf16.mxu0 0
      %1796 = vmatpush2.bf16.msra.mxu0 0
      %1797 = vmatprep.subr.bf16.mxu0 0
      %1798 = vmatpush2.bf16.msra.mxu0 0
      %1799 = vmatprep.subr.bf16.mxu0 0
      %1800 = vmatpush2.bf16.msra.mxu0 0
      %1801 = vmatprep.subr.bf16.mxu0 0
      %1802 = vmatpush2.bf16.msra.mxu0 0
      %1803 = vmatprep.subr.bf16.mxu0 0
      %1804 = vmatpush2.bf16.msra.mxu0 0
      %1805 = vmatprep.subr.bf16.mxu0 0
      %1806 = vmatpush2.bf16.msra.mxu0 0
      %1807 = vmatprep.mubr.bf16.mxu0 0
      %1808 = vmatmul.mubr.bf16.gmra.mxu0 %v1732
      %v1809 = vpop.f32.mrf.mxu0
      %v1810 = vadd.f32 %v1769, %v1809
      %v1811 = vpop.f32.mrf.mxu0
      %v1812 = vadd.f32 %v1771, %v1811
      %v1813 = vpop.f32.mrf.mxu0
      %v1814 = vpop.f32.mrf.mxu0
      %1815 = vdwg.mxu0
      %vm1816 = vcmp.ge.f32.partialorder %v1810, 0.0
      %vm1817 = vcmp.ge.f32.partialorder %v1812, 0.0
      %v1818 = vmul.f32 %v1810, 0.2
      %v1819 = vmul.f32 %v1812, 0.2
      %v1820 = vsel %vm1816, %v1810, %v1818
      %v1821 = vsel %vm1817, %v1812, %v1819
      %1822 = vrot.lane.b32.xlu0 %v1820, 17
      %v1823 = vpop.permute.xlu0 %1822
      %1824 = vrot.lane.b32.xlu0 %v1821, 17
      %v1825 = vpop.permute.xlu0 %1824
      %v1826 = vsel %vm315, %v1823, %v1825
      %v1827 = vsel %vm315, %v1825, %v1823
      %v1828 = vld [vmem:[%s7] sm:$0xff]
      %v1829 = vld [vmem:[%s7 + $0x8] sm:$0xff]
      %v1830 = vmul.f32 %v1827, %v1828
      %v1831 = vmul.f32 %v1826, %v1829
      %v1832 = vpack.c.bf16 %v1830, %v1830
      %v1833 = vpack.c.bf16 %v1831, %v1831
      %v1836 = vunpack.c.l.b16 %v1832
      %v1837 = vunpack.c.l.b16 %v1833
      %v1838 = vpack.c.b16 %v1837, %v1836
      %1840 = vst [vmem:[#allocation2 + $0x120] sm:$0xff] %v1838
      %1841 = vrot.lane.b32.xlu0 %v1820, 16
      %v1842 = vpop.permute.xlu0 %1841
      %1843 = vrot.lane.b32.xlu0 %v1821, 16
      %v1844 = vpop.permute.xlu0 %1843
      %v1845 = vsel %vm335, %v1842, %v1844
      %v1846 = vsel %vm335, %v1844, %v1842
      %v1847 = vld [vmem:[%s338] sm:$0xff]
      %v1848 = vld [vmem:[%s338 + $0x8] sm:$0xff]
      %v1849 = vmul.f32 %v1846, %v1847
      %v1850 = vmul.f32 %v1845, %v1848
      %v1851 = vpack.c.bf16 %v1849, %v1849
      %v1852 = vpack.c.bf16 %v1850, %v1850
      %v1855 = vunpack.c.l.b16 %v1851
      %v1856 = vunpack.c.l.b16 %v1852
      %v1857 = vpack.c.b16 %v1856, %v1855
      %1859 = vst [vmem:[#allocation2 + $0x128] sm:$0xff] %v1857
      %1860 = vrot.lane.b32.xlu0 %v1820, 15
      %v1861 = vpop.permute.xlu0 %1860
      %1862 = vrot.lane.b32.xlu0 %v1821, 15
      %v1863 = vpop.permute.xlu0 %1862
      %v1864 = vsel %vm356, %v1861, %v1863
      %v1865 = vsel %vm356, %v1863, %v1861
      %v1866 = vld [vmem:[%s359] sm:$0xff]
      %v1867 = vld [vmem:[%s359 + $0x8] sm:$0xff]
      %v1868 = vmul.f32 %v1865, %v1866
      %v1869 = vmul.f32 %v1864, %v1867
      %v1870 = vpack.c.bf16 %v1868, %v1868
      %v1871 = vpack.c.bf16 %v1869, %v1869
      %v1874 = vunpack.c.l.b16 %v1870
      %v1875 = vunpack.c.l.b16 %v1871
      %v1876 = vpack.c.b16 %v1875, %v1874
      %1878 = vst [vmem:[#allocation2 + $0x130] sm:$0xff] %v1876
      %1879 = vrot.lane.b32.xlu0 %v1820, 1
      %v1880 = vpop.permute.xlu0 %1879
      %1881 = vrot.lane.b32.xlu0 %v1821, 1
      %v1882 = vpop.permute.xlu0 %1881
      %v1883 = vsel %vm377, %v1880, %v1882
      %v1884 = vsel %vm377, %v1882, %v1880
      %v1885 = vld [vmem:[%s380] sm:$0xff]
      %v1886 = vld [vmem:[%s380 + $0x8] sm:$0xff]
      %v1887 = vmul.f32 %v1884, %v1885
      %v1888 = vmul.f32 %v1883, %v1886
      %v1889 = vpack.c.bf16 %v1887, %v1887
      %v1890 = vpack.c.bf16 %v1888, %v1888
      %v1893 = vunpack.c.l.b16 %v1889
      %v1894 = vunpack.c.l.b16 %v1890
      %v1895 = vpack.c.b16 %v1894, %v1893
      %1897 = vst [vmem:[#allocation2 + $0x138] sm:$0xff] %v1895
      %v1898 = vpack.c.bf16 %v1820, %v1820
      %v1899 = vpack.c.bf16 %v1821, %v1821
      %v1902 = vunpack.c.l.b16 %v1898
      %v1903 = vunpack.c.l.b16 %v1899
      %v1904 = vpack.c.b16 %v1903, %v1902
      %1906 = vst [vmem:[#allocation2 + $0x140] sm:$0xff] %v1904
      %1907 = vrot.lane.b32.xlu0 %v1820, 127
      %v1908 = vpop.permute.xlu0 %1907
      %1909 = vrot.lane.b32.xlu0 %v1821, 127
      %v1910 = vpop.permute.xlu0 %1909
      %v1911 = vsel %vm407, %v1908, %v1910
      %v1912 = vsel %vm407, %v1910, %v1908
      %v1913 = vld [vmem:[%s410] sm:$0xff]
      %v1914 = vld [vmem:[%s410 + $0x8] sm:$0xff]
      %v1915 = vmul.f32 %v1911, %v1913
      %v1916 = vmul.f32 %v1912, %v1914
      %v1917 = vpack.c.bf16 %v1915, %v1915
      %v1918 = vpack.c.bf16 %v1916, %v1916
      %v1921 = vunpack.c.l.b16 %v1917
      %v1922 = vunpack.c.l.b16 %v1918
      %v1923 = vpack.c.b16 %v1922, %v1921
      %1925 = vst [vmem:[#allocation2 + $0x148] sm:$0xff] %v1923
      %1926 = vrot.lane.b32.xlu0 %v1820, 113
      %v1927 = vpop.permute.xlu0 %1926
      %1928 = vrot.lane.b32.xlu0 %v1821, 113
      %v1929 = vpop.permute.xlu0 %1928
      %v1930 = vsel %vm428, %v1927, %v1929
      %v1931 = vsel %vm428, %v1929, %v1927
      %v1932 = vld [vmem:[%s431] sm:$0xff]
      %v1933 = vld [vmem:[%s431 + $0x8] sm:$0xff]
      %v1934 = vmul.f32 %v1930, %v1932
      %v1935 = vmul.f32 %v1931, %v1933
      %v1936 = vpack.c.bf16 %v1934, %v1934
      %v1937 = vpack.c.bf16 %v1935, %v1935
      %v1940 = vunpack.c.l.b16 %v1936
      %v1941 = vunpack.c.l.b16 %v1937
      %v1942 = vpack.c.b16 %v1941, %v1940
      %1944 = vst [vmem:[#allocation2 + $0x150] sm:$0xff] %v1942
      %1945 = vrot.lane.b32.xlu0 %v1820, 112
      %v1946 = vpop.permute.xlu0 %1945
      %1947 = vrot.lane.b32.xlu0 %v1821, 112
      %v1948 = vpop.permute.xlu0 %1947
      %v1949 = vsel %vm449, %v1946, %v1948
      %v1950 = vsel %vm449, %v1948, %v1946
      %v1951 = vld [vmem:[%s452] sm:$0xff]
      %v1952 = vld [vmem:[%s452 + $0x8] sm:$0xff]
      %v1953 = vmul.f32 %v1949, %v1951
      %v1954 = vmul.f32 %v1950, %v1952
      %v1955 = vpack.c.bf16 %v1953, %v1953
      %v1956 = vpack.c.bf16 %v1954, %v1954
      %v1959 = vunpack.c.l.b16 %v1955
      %v1960 = vunpack.c.l.b16 %v1956
      %v1961 = vpack.c.b16 %v1960, %v1959
      %1963 = vst [vmem:[#allocation2 + $0x158] sm:$0xff] %v1961
      %1964 = vrot.lane.b32.xlu0 %v1820, 111
      %v1965 = vpop.permute.xlu0 %1964
      %1966 = vrot.lane.b32.xlu0 %v1821, 111
      %v1967 = vpop.permute.xlu0 %1966
      %v1968 = vsel %vm470, %v1965, %v1967
      %v1969 = vsel %vm470, %v1967, %v1965
      %v1970 = vld [vmem:[%s473] sm:$0xff]
      %v1971 = vld [vmem:[%s473 + $0x8] sm:$0xff]
      %v1972 = vmul.f32 %v1968, %v1970
      %v1973 = vmul.f32 %v1969, %v1971
      %v1974 = vpack.c.bf16 %v1972, %v1972
      %v1975 = vpack.c.bf16 %v1973, %v1973
      %v1978 = vunpack.c.l.b16 %v1974
      %v1979 = vunpack.c.l.b16 %v1975
      %v1980 = vpack.c.b16 %v1979, %v1978
      %1982 = vst [vmem:[#allocation2 + $0x160] sm:$0xff] %v1980
      %v1983 = vld [vmem:[%s5] sm:$0xff]
      %v1984 = vld [vmem:[%s5 + $0x8] sm:$0xf]
      %v1985 = vld [vmem:[#allocation2] sm:$0xff]
      %v1986 = vld [vmem:[#allocation2 + $0x8] sm:$0xff]
      %v1987 = vld [vmem:[#allocation2 + $0x10] sm:$0xff]
      %v1988 = vld [vmem:[#allocation2 + $0x18] sm:$0xff]
      %v1989 = vld [vmem:[#allocation2 + $0x20] sm:$0xff]
      %v1990 = vld [vmem:[#allocation2 + $0x28] sm:$0xff]
      %v1991 = vld [vmem:[#allocation2 + $0x30] sm:$0xff]
      %v1992 = vld [vmem:[#allocation2 + $0x38] sm:$0xff]
      %v1993 = vld [vmem:[#allocation2 + $0x40] sm:$0xff]
      %v1994 = vld [vmem:[#allocation2 + $0x48] sm:$0xff]
      %v1995 = vld [vmem:[#allocation2 + $0x50] sm:$0xff]
      %v1996 = vld [vmem:[#allocation2 + $0x58] sm:$0xff]
      %v1997 = vld [vmem:[#allocation2 + $0x60] sm:$0xff]
      %v1998 = vld [vmem:[#allocation2 + $0x68] sm:$0xff]
      %v1999 = vld [vmem:[#allocation2 + $0x70] sm:$0xff]
      %v2000 = vld [vmem:[#allocation2 + $0x78] sm:$0xff]
      %v2001 = vld [vmem:[#allocation2 + $0x80] sm:$0xff]
      %v2002 = vld [vmem:[#allocation2 + $0x88] sm:$0xff]
      %v2003 = vld [vmem:[#allocation2 + $0x90] sm:$0xff]
      %v2004 = vld [vmem:[#allocation2 + $0x98] sm:$0xff]
      %v2005 = vld [vmem:[#allocation2 + $0xa0] sm:$0xff]
      %v2006 = vld [vmem:[#allocation2 + $0xa8] sm:$0xff]
      %v2007 = vld [vmem:[#allocation2 + $0xb0] sm:$0xff]
      %v2008 = vld [vmem:[#allocation2 + $0xb8] sm:$0xff]
      %v2009 = vld [vmem:[#allocation2 + $0xc0] sm:$0xff]
      %v2010 = vld [vmem:[#allocation2 + $0xc8] sm:$0xff]
      %v2011 = vld [vmem:[#allocation2 + $0xd0] sm:$0xff]
      %v2012 = vld [vmem:[#allocation2 + $0xd8] sm:$0xff]
      %v2013 = vld [vmem:[#allocation2 + $0xe0] sm:$0xff]
      %v2014 = vld [vmem:[#allocation2 + $0xe8] sm:$0xff]
      %v2015 = vld [vmem:[#allocation2 + $0xf0] sm:$0xff]
      %v2016 = vld [vmem:[#allocation2 + $0xf8] sm:$0xff]
      %v2017 = vld [vmem:[#allocation2 + $0x100] sm:$0xff]
      %v2018 = vld [vmem:[#allocation2 + $0x108] sm:$0xff]
      %v2019 = vld [vmem:[#allocation2 + $0x110] sm:$0xff]
      %v2020 = vld [vmem:[#allocation2 + $0x118] sm:$0xff]
      %v2021 = vld [vmem:[#allocation2 + $0x120] sm:$0xff]
      %v2022 = vld [vmem:[#allocation2 + $0x128] sm:$0xff]
      %v2023 = vld [vmem:[#allocation2 + $0x130] sm:$0xff]
      %v2024 = vld [vmem:[#allocation2 + $0x138] sm:$0xff]
      %v2025 = vld [vmem:[#allocation2 + $0x140] sm:$0xff]
      %v2026 = vld [vmem:[#allocation2 + $0x148] sm:$0xff]
      %v2027 = vld [vmem:[#allocation2 + $0x150] sm:$0xff]
      %v2028 = vld [vmem:[#allocation2 + $0x158] sm:$0xff]
      %v2029 = vld [vmem:[#allocation2 + $0x160] sm:$0xff]
      %s2030 = scalar_lea.vmem %s6, 32
      %v2031 = vld [vmem:[%s2030] sm:$0xff]
      %2033 = vset.pattern.permute.xlu0 0
      %2034 = vperm.xlu0 %2033, %v2031
      %v2035 = vpop.permute.xlu0 %2034
      %v2039 = vunpack.c.l.b16 %v1983
      %v2040 = vunpack.c.h.b16 %v1983
      %v2041 = vunpack.c.l.b16 %v1984
      %v2042 = vpack.c.b16 %v2039, %v2039
      %v2043 = vpack.c.b16 %v2040, %v2040
      %v2044 = vpack.c.b16 %v2041, %v2041
      %v2092 = vunpack.c.l.b16 %v1985
      %v2093 = vunpack.c.h.b16 %v1985
      %v2094 = vunpack.c.l.b16 %v1986
      %v2095 = vunpack.c.h.b16 %v1986
      %v2096 = vunpack.c.l.b16 %v1987
      %v2097 = vunpack.c.h.b16 %v1987
      %v2098 = vunpack.c.l.b16 %v1988
      %v2099 = vunpack.c.h.b16 %v1988
      %v2100 = vunpack.c.l.b16 %v1989
      %v2101 = vunpack.c.h.b16 %v1989
      %v2102 = vunpack.c.l.b16 %v1990
      %v2103 = vunpack.c.h.b16 %v1990
      %v2104 = vunpack.c.l.b16 %v1991
      %v2105 = vunpack.c.h.b16 %v1991
      %v2106 = vunpack.c.l.b16 %v1992
      %v2107 = vunpack.c.h.b16 %v1992
      %v2108 = vunpack.c.l.b16 %v1993
      %v2109 = vunpack.c.h.b16 %v1993
      %v2110 = vunpack.c.l.b16 %v1994
      %v2111 = vunpack.c.h.b16 %v1994
      %v2112 = vunpack.c.l.b16 %v1995
      %v2113 = vunpack.c.h.b16 %v1995
      %v2114 = vunpack.c.l.b16 %v1996
      %v2115 = vunpack.c.h.b16 %v1996
      %v2116 = vunpack.c.l.b16 %v1997
      %v2117 = vunpack.c.h.b16 %v1997
      %v2118 = vunpack.c.l.b16 %v1998
      %v2119 = vunpack.c.h.b16 %v1998
      %v2120 = vunpack.c.l.b16 %v1999
      %v2121 = vunpack.c.h.b16 %v1999
      %v2122 = vunpack.c.l.b16 %v2000
      %v2123 = vunpack.c.h.b16 %v2000
      %v2124 = vunpack.c.l.b16 %v2001
      %v2125 = vunpack.c.h.b16 %v2001
      %v2126 = vunpack.c.l.b16 %v2002
      %v2127 = vunpack.c.h.b16 %v2002
      %v2128 = vunpack.c.l.b16 %v2003
      %v2129 = vunpack.c.h.b16 %v2003
      %v2130 = vunpack.c.l.b16 %v2004
      %v2131 = vunpack.c.h.b16 %v2004
      %v2132 = vunpack.c.l.b16 %v2005
      %v2133 = vunpack.c.h.b16 %v2005
      %v2134 = vunpack.c.l.b16 %v2006
      %v2135 = vunpack.c.h.b16 %v2006
      %v2136 = vunpack.c.l.b16 %v2007
      %v2137 = vunpack.c.h.b16 %v2007
      %v2138 = vunpack.c.l.b16 %v2008
      %v2139 = vunpack.c.h.b16 %v2008
      %v2140 = vunpack.c.l.b16 %v2009
      %v2141 = vunpack.c.h.b16 %v2009
      %v2142 = vunpack.c.l.b16 %v2010
      %v2143 = vunpack.c.h.b16 %v2010
      %v2144 = vunpack.c.l.b16 %v2011
      %v2145 = vunpack.c.h.b16 %v2011
      %v2146 = vunpack.c.l.b16 %v2012
      %v2147 = vunpack.c.h.b16 %v2012
      %v2148 = vunpack.c.l.b16 %v2013
      %v2149 = vunpack.c.h.b16 %v2013
      %v2150 = vunpack.c.l.b16 %v2014
      %v2151 = vunpack.c.h.b16 %v2014
      %v2152 = vunpack.c.l.b16 %v2015
      %v2153 = vunpack.c.h.b16 %v2015
      %v2154 = vunpack.c.l.b16 %v2016
      %v2155 = vunpack.c.h.b16 %v2016
      %v2156 = vunpack.c.l.b16 %v2017
      %v2157 = vunpack.c.h.b16 %v2017
      %v2158 = vunpack.c.l.b16 %v2018
      %v2159 = vunpack.c.h.b16 %v2018
      %v2160 = vunpack.c.l.b16 %v2019
      %v2161 = vunpack.c.h.b16 %v2019
      %v2162 = vunpack.c.l.b16 %v2020
      %v2163 = vunpack.c.h.b16 %v2020
      %v2164 = vunpack.c.l.b16 %v2021
      %v2165 = vunpack.c.h.b16 %v2021
      %v2166 = vunpack.c.l.b16 %v2022
      %v2167 = vunpack.c.h.b16 %v2022
      %v2168 = vunpack.c.l.b16 %v2023
      %v2169 = vunpack.c.h.b16 %v2023
      %v2170 = vunpack.c.l.b16 %v2024
      %v2171 = vunpack.c.h.b16 %v2024
      %v2172 = vunpack.c.l.b16 %v2025
      %v2173 = vunpack.c.h.b16 %v2025
      %v2174 = vunpack.c.l.b16 %v2026
      %v2175 = vunpack.c.h.b16 %v2026
      %v2176 = vunpack.c.l.b16 %v2027
      %v2177 = vunpack.c.h.b16 %v2027
      %v2178 = vunpack.c.l.b16 %v2028
      %v2179 = vunpack.c.h.b16 %v2028
      %v2180 = vunpack.c.l.b16 %v2029
      %v2181 = vunpack.c.h.b16 %v2029
      %v2182 = vpack.c.b16 %v2094, %v2092
      %v2183 = vpack.c.b16 %v2095, %v2093
      %v2184 = vpack.c.b16 %v2098, %v2096
      %v2185 = vpack.c.b16 %v2099, %v2097
      %v2186 = vpack.c.b16 %v2102, %v2100
      %v2187 = vpack.c.b16 %v2103, %v2101
      %v2188 = vpack.c.b16 %v2106, %v2104
      %v2189 = vpack.c.b16 %v2107, %v2105
      %v2190 = vpack.c.b16 %v2110, %v2108
      %v2191 = vpack.c.b16 %v2111, %v2109
      %v2192 = vpack.c.b16 %v2114, %v2112
      %v2193 = vpack.c.b16 %v2115, %v2113
      %v2194 = vpack.c.b16 %v2118, %v2116
      %v2195 = vpack.c.b16 %v2119, %v2117
      %v2196 = vpack.c.b16 %v2122, %v2120
      %v2197 = vpack.c.b16 %v2123, %v2121
      %v2198 = vpack.c.b16 %v2126, %v2124
      %v2199 = vpack.c.b16 %v2127, %v2125
      %v2200 = vpack.c.b16 %v2130, %v2128
      %v2201 = vpack.c.b16 %v2131, %v2129
      %v2202 = vpack.c.b16 %v2134, %v2132
      %v2203 = vpack.c.b16 %v2135, %v2133
      %v2204 = vpack.c.b16 %v2138, %v2136
      %v2205 = vpack.c.b16 %v2139, %v2137
      %v2206 = vpack.c.b16 %v2142, %v2140
      %v2207 = vpack.c.b16 %v2143, %v2141
      %v2208 = vpack.c.b16 %v2146, %v2144
      %v2209 = vpack.c.b16 %v2147, %v2145
      %v2210 = vpack.c.b16 %v2150, %v2148
      %v2211 = vpack.c.b16 %v2151, %v2149
      %v2212 = vpack.c.b16 %v2154, %v2152
      %v2213 = vpack.c.b16 %v2155, %v2153
      %v2214 = vpack.c.b16 %v2158, %v2156
      %v2215 = vpack.c.b16 %v2159, %v2157
      %v2216 = vpack.c.b16 %v2162, %v2160
      %v2217 = vpack.c.b16 %v2163, %v2161
      %v2218 = vpack.c.b16 %v2166, %v2164
      %v2219 = vpack.c.b16 %v2167, %v2165
      %v2220 = vpack.c.b16 %v2170, %v2168
      %v2221 = vpack.c.b16 %v2171, %v2169
      %v2222 = vpack.c.b16 %v2174, %v2172
      %v2223 = vpack.c.b16 %v2175, %v2173
      %v2224 = vpack.c.b16 %v2178, %v2176
      %v2225 = vpack.c.b16 %v2179, %v2177
      %v2226 = vpack.c.b16 %v2180, %v2180
      %v2227 = vpack.c.b16 %v2181, %v2181
      %vm2272 = vcmask 850944
      %v2274 = vsel %vm2272, %v2044, 0
      %v2277 = vsel %vm552, %v2226, 0
      %v2280 = vsel %vm552, %v2227, 0
      %2282 = vmatprep.subr.bf16.mxu0 %v2197
      %2283 = vmatpush1.bf16.msra.mxu0 %v2196
      %2284 = vmatprep.subr.bf16.mxu0 %v2195
      %2285 = vmatpush1.bf16.msra.mxu0 %v2194
      %2286 = vmatprep.subr.bf16.mxu0 %v2193
      %2287 = vmatpush1.bf16.msra.mxu0 %v2192
      %2288 = vmatprep.subr.bf16.mxu0 %v2191
      %2289 = vmatpush1.bf16.msra.mxu0 %v2190
      %2290 = vmatprep.subr.bf16.mxu0 %v2189
      %2291 = vmatpush1.bf16.msra.mxu0 %v2188
      %2292 = vmatprep.subr.bf16.mxu0 %v2187
      %2293 = vmatpush1.bf16.msra.mxu0 %v2186
      %2294 = vmatprep.subr.bf16.mxu0 %v2185
      %2295 = vmatpush1.bf16.msra.mxu0 %v2184
      %2296 = vmatprep.subr.bf16.mxu0 %v2183
      %2297 = vmatpush1.bf16.msra.mxu0 %v2182
      %2298 = vmatprep.subr.bf16.mxu0 %v2213
      %2299 = vmatpush2.bf16.msra.mxu0 %v2212
      %2300 = vmatprep.subr.bf16.mxu0 %v2211
      %2301 = vmatpush2.bf16.msra.mxu0 %v2210
      %2302 = vmatprep.subr.bf16.mxu0 %v2209
      %2303 = vmatpush2.bf16.msra.mxu0 %v2208
      %2304 = vmatprep.subr.bf16.mxu0 %v2207
      %2305 = vmatpush2.bf16.msra.mxu0 %v2206
      %2306 = vmatprep.subr.bf16.mxu0 %v2205
      %2307 = vmatpush2.bf16.msra.mxu0 %v2204
      %2308 = vmatprep.subr.bf16.mxu0 %v2203
      %2309 = vmatpush2.bf16.msra.mxu0 %v2202
      %2310 = vmatprep.subr.bf16.mxu0 %v2201
      %2311 = vmatpush2.bf16.msra.mxu0 %v2200
      %2312 = vmatprep.subr.bf16.mxu0 %v2199
      %2313 = vmatpush2.bf16.msra.mxu0 %v2198
      %2314 = vmatprep.mubr.bf16.mxu0 %v2043
      %2315 = vmatmul.mubr.bf16.gmra.mxu0 %v2042
      %v2316 = vpop.f32.mrf.mxu0
      %v2317 = vadd.f32 %v2035, %v2316
      %v2318 = vpop.f32.mrf.mxu0
      %v2319 = vadd.f32 %v2035, %v2318
      %v2320 = vpop.f32.mrf.mxu0
      %v2321 = vpop.f32.mrf.mxu0
      %2322 = vdwg.mxu0
      %2323 = vmatprep.subr.bf16.mxu0 0
      %2324 = vmatpush1.bf16.msra.mxu0 0
      %2325 = vmatprep.subr.bf16.mxu0 %v2280
      %2326 = vmatpush1.bf16.msra.mxu0 %v2277
      %2327 = vmatprep.subr.bf16.mxu0 %v2225
      %2328 = vmatpush1.bf16.msra.mxu0 %v2224
      %2329 = vmatprep.subr.bf16.mxu0 %v2223
      %2330 = vmatpush1.bf16.msra.mxu0 %v2222
      %2331 = vmatprep.subr.bf16.mxu0 %v2221
      %2332 = vmatpush1.bf16.msra.mxu0 %v2220
      %2333 = vmatprep.subr.bf16.mxu0 %v2219
      %2334 = vmatpush1.bf16.msra.mxu0 %v2218
      %2335 = vmatprep.subr.bf16.mxu0 %v2217
      %2336 = vmatpush1.bf16.msra.mxu0 %v2216
      %2337 = vmatprep.subr.bf16.mxu0 %v2215
      %2338 = vmatpush1.bf16.msra.mxu0 %v2214
      %2339 = vmatprep.subr.bf16.mxu0 0
      %2340 = vmatpush2.bf16.msra.mxu0 0
      %2341 = vmatprep.subr.bf16.mxu0 0
      %2342 = vmatpush2.bf16.msra.mxu0 0
      %2343 = vmatprep.subr.bf16.mxu0 0
      %2344 = vmatpush2.bf16.msra.mxu0 0
      %2345 = vmatprep.subr.bf16.mxu0 0
      %2346 = vmatpush2.bf16.msra.mxu0 0
      %2347 = vmatprep.subr.bf16.mxu0 0
      %2348 = vmatpush2.bf16.msra.mxu0 0
      %2349 = vmatprep.subr.bf16.mxu0 0
      %2350 = vmatpush2.bf16.msra.mxu0 0
      %2351 = vmatprep.subr.bf16.mxu0 0
      %2352 = vmatpush2.bf16.msra.mxu0 0
      %2353 = vmatprep.subr.bf16.mxu0 0
      %2354 = vmatpush2.bf16.msra.mxu0 0
      %2355 = vmatprep.mubr.bf16.mxu0 0
      %2356 = vmatmul.mubr.bf16.gmra.mxu0 %v2274
      %v2357 = vpop.f32.mrf.mxu0
      %v2358 = vadd.f32 %v2317, %v2357
      %v2359 = vpop.f32.mrf.mxu0
      %v2360 = vadd.f32 %v2319, %v2359
      %v2361 = vpop.f32.mrf.mxu0
      %v2362 = vpop.f32.mrf.mxu0
      %2363 = vdwg.mxu0
      %v2364 = vmul.f32 %v2358, 0.2
      %v2365 = vmul.f32 %v2360, 0.2
      %v2366 = vadd.f32 %v2364, %v307
      %v2367 = vadd.f32 %v2365, %v308
      %2368 = vrot.lane.b32.xlu0 %v2366, 17
      %v2369 = vpop.permute.xlu0 %2368
      %2370 = vrot.lane.b32.xlu0 %v2367, 17
      %v2371 = vpop.permute.xlu0 %2370
      %v2372 = vsel %vm315, %v2369, %v2371
      %v2373 = vsel %vm315, %v2371, %v2369
      %v2374 = vld [vmem:[%s7] sm:$0xff]
      %v2375 = vld [vmem:[%s7 + $0x8] sm:$0xff]
      %v2376 = vmul.f32 %v2373, %v2374
      %v2377 = vmul.f32 %v2372, %v2375
      %v2378 = vpack.c.bf16 %v2376, %v2376
      %v2379 = vpack.c.bf16 %v2377, %v2377
      %v2382 = vunpack.c.l.b16 %v2378
      %v2383 = vunpack.c.l.b16 %v2379
      %v2384 = vpack.c.b16 %v2383, %v2382
      %2386 = vst [vmem:[#allocation2] sm:$0xff] %v2384
      %2387 = vrot.lane.b32.xlu0 %v2366, 16
      %v2388 = vpop.permute.xlu0 %2387
      %2389 = vrot.lane.b32.xlu0 %v2367, 16
      %v2390 = vpop.permute.xlu0 %2389
      %v2391 = vsel %vm335, %v2388, %v2390
      %v2392 = vsel %vm335, %v2390, %v2388
      %v2393 = vld [vmem:[%s338] sm:$0xff]
      %v2394 = vld [vmem:[%s338 + $0x8] sm:$0xff]
      %v2395 = vmul.f32 %v2392, %v2393
      %v2396 = vmul.f32 %v2391, %v2394
      %v2397 = vpack.c.bf16 %v2395, %v2395
      %v2398 = vpack.c.bf16 %v2396, %v2396
      %v2401 = vunpack.c.l.b16 %v2397
      %v2402 = vunpack.c.l.b16 %v2398
      %v2403 = vpack.c.b16 %v2402, %v2401
      %2405 = vst [vmem:[#allocation2 + $0x8] sm:$0xff] %v2403
      %2406 = vrot.lane.b32.xlu0 %v2366, 15
      %v2407 = vpop.permute.xlu0 %2406
      %2408 = vrot.lane.b32.xlu0 %v2367, 15
      %v2409 = vpop.permute.xlu0 %2408
      %v2410 = vsel %vm356, %v2407, %v2409
      %v2411 = vsel %vm356, %v2409, %v2407
      %v2412 = vld [vmem:[%s359] sm:$0xff]
      %v2413 = vld [vmem:[%s359 + $0x8] sm:$0xff]
      %v2414 = vmul.f32 %v2411, %v2412
      %v2415 = vmul.f32 %v2410, %v2413
      %v2416 = vpack.c.bf16 %v2414, %v2414
      %v2417 = vpack.c.bf16 %v2415, %v2415
      %v2420 = vunpack.c.l.b16 %v2416
      %v2421 = vunpack.c.l.b16 %v2417
      %v2422 = vpack.c.b16 %v2421, %v2420
      %2424 = vst [vmem:[#allocation2 + $0x10] sm:$0xff] %v2422
      %2425 = vrot.lane.b32.xlu0 %v2366, 1
      %v2426 = vpop.permute.xlu0 %2425
      %2427 = vrot.lane.b32.xlu0 %v2367, 1
      %v2428 = vpop.permute.xlu0 %2427
      %v2429 = vsel %vm377, %v2426, %v2428
      %v2430 = vsel %vm377, %v2428, %v2426
      %v2431 = vld [vmem:[%s380] sm:$0xff]
      %v2432 = vld [vmem:[%s380 + $0x8] sm:$0xff]
      %v2433 = vmul.f32 %v2430, %v2431
      %v2434 = vmul.f32 %v2429, %v2432
      %v2435 = vpack.c.bf16 %v2433, %v2433
      %v2436 = vpack.c.bf16 %v2434, %v2434
      %v2439 = vunpack.c.l.b16 %v2435
      %v2440 = vunpack.c.l.b16 %v2436
      %v2441 = vpack.c.b16 %v2440, %v2439
      %2443 = vst [vmem:[#allocation2 + $0x18] sm:$0xff] %v2441
      %v2444 = vpack.c.bf16 %v2366, %v2366
      %v2445 = vpack.c.bf16 %v2367, %v2367
      %v2448 = vunpack.c.l.b16 %v2444
      %v2449 = vunpack.c.l.b16 %v2445
      %v2450 = vpack.c.b16 %v2449, %v2448
      %2452 = vst [vmem:[#allocation2 + $0x20] sm:$0xff] %v2450
      %2453 = vrot.lane.b32.xlu0 %v2366, 127
      %v2454 = vpop.permute.xlu0 %2453
      %2455 = vrot.lane.b32.xlu0 %v2367, 127
      %v2456 = vpop.permute.xlu0 %2455
      %v2457 = vsel %vm407, %v2454, %v2456
      %v2458 = vsel %vm407, %v2456, %v2454
      %v2459 = vld [vmem:[%s410] sm:$0xff]
      %v2460 = vld [vmem:[%s410 + $0x8] sm:$0xff]
      %v2461 = vmul.f32 %v2457, %v2459
      %v2462 = vmul.f32 %v2458, %v2460
      %v2463 = vpack.c.bf16 %v2461, %v2461
      %v2464 = vpack.c.bf16 %v2462, %v2462
      %v2467 = vunpack.c.l.b16 %v2463
      %v2468 = vunpack.c.l.b16 %v2464
      %v2469 = vpack.c.b16 %v2468, %v2467
      %2471 = vst [vmem:[#allocation2 + $0x28] sm:$0xff] %v2469
      %2472 = vrot.lane.b32.xlu0 %v2366, 113
      %v2473 = vpop.permute.xlu0 %2472
      %2474 = vrot.lane.b32.xlu0 %v2367, 113
      %v2475 = vpop.permute.xlu0 %2474
      %v2476 = vsel %vm428, %v2473, %v2475
      %v2477 = vsel %vm428, %v2475, %v2473
      %v2478 = vld [vmem:[%s431] sm:$0xff]
      %v2479 = vld [vmem:[%s431 + $0x8] sm:$0xff]
      %v2480 = vmul.f32 %v2476, %v2478
      %v2481 = vmul.f32 %v2477, %v2479
      %v2482 = vpack.c.bf16 %v2480, %v2480
      %v2483 = vpack.c.bf16 %v2481, %v2481
      %v2486 = vunpack.c.l.b16 %v2482
      %v2487 = vunpack.c.l.b16 %v2483
      %v2488 = vpack.c.b16 %v2487, %v2486
      %2490 = vst [vmem:[#allocation2 + $0x30] sm:$0xff] %v2488
      %2491 = vrot.lane.b32.xlu0 %v2366, 112
      %v2492 = vpop.permute.xlu0 %2491
      %2493 = vrot.lane.b32.xlu0 %v2367, 112
      %v2494 = vpop.permute.xlu0 %2493
      %v2495 = vsel %vm449, %v2492, %v2494
      %v2496 = vsel %vm449, %v2494, %v2492
      %v2497 = vld [vmem:[%s452] sm:$0xff]
      %v2498 = vld [vmem:[%s452 + $0x8] sm:$0xff]
      %v2499 = vmul.f32 %v2495, %v2497
      %v2500 = vmul.f32 %v2496, %v2498
      %v2501 = vpack.c.bf16 %v2499, %v2499
      %v2502 = vpack.c.bf16 %v2500, %v2500
      %v2505 = vunpack.c.l.b16 %v2501
      %v2506 = vunpack.c.l.b16 %v2502
      %v2507 = vpack.c.b16 %v2506, %v2505
      %2509 = vst [vmem:[#allocation2 + $0x38] sm:$0xff] %v2507
      %2510 = vrot.lane.b32.xlu0 %v2366, 111
      %v2511 = vpop.permute.xlu0 %2510
      %2512 = vrot.lane.b32.xlu0 %v2367, 111
      %v2513 = vpop.permute.xlu0 %2512
      %v2514 = vsel %vm470, %v2511, %v2513
      %v2515 = vsel %vm470, %v2513, %v2511
      %v2516 = vld [vmem:[%s473] sm:$0xff]
      %v2517 = vld [vmem:[%s473 + $0x8] sm:$0xff]
      %v2518 = vmul.f32 %v2514, %v2516
      %v2519 = vmul.f32 %v2515, %v2517
      %v2520 = vpack.c.bf16 %v2518, %v2518
      %v2521 = vpack.c.bf16 %v2519, %v2519
      %v2524 = vunpack.c.l.b16 %v2520
      %v2525 = vunpack.c.l.b16 %v2521
      %v2526 = vpack.c.b16 %v2525, %v2524
      %2528 = vst [vmem:[#allocation2 + $0x40] sm:$0xff] %v2526
      %s2529 = scalar_lea.vmem %s1, 4
      %v2530 = vld [vmem:[%s2529] sm:$0xf]
      %v2531 = vld [vmem:[#allocation2] sm:$0xff]
      %v2532 = vld [vmem:[#allocation2 + $0x8] sm:$0xff]
      %v2533 = vld [vmem:[#allocation2 + $0x10] sm:$0xff]
      %v2534 = vld [vmem:[#allocation2 + $0x18] sm:$0xff]
      %v2535 = vld [vmem:[#allocation2 + $0x20] sm:$0xff]
      %v2536 = vld [vmem:[#allocation2 + $0x28] sm:$0xff]
      %v2537 = vld [vmem:[#allocation2 + $0x30] sm:$0xff]
      %v2538 = vld [vmem:[#allocation2 + $0x38] sm:$0xff]
      %v2539 = vld [vmem:[#allocation2 + $0x40] sm:$0xff]
      %s2540 = scalar_lea.vmem %s6, 40
      %v2541 = vld [vmem:[%s2540] sm:$0xff]
      %2543 = vset.pattern.permute.xlu0 0
      %2544 = vperm.xlu0 %2543, %v2541
      %v2545 = vpop.permute.xlu0 %2544
      %v2556 = vunpack.c.l.b16 %v2531
      %v2557 = vunpack.c.h.b16 %v2531
      %v2558 = vunpack.c.l.b16 %v2532
      %v2559 = vunpack.c.h.b16 %v2532
      %v2560 = vunpack.c.l.b16 %v2533
      %v2561 = vunpack.c.h.b16 %v2533
      %v2562 = vunpack.c.l.b16 %v2534
      %v2563 = vunpack.c.h.b16 %v2534
      %v2564 = vunpack.c.l.b16 %v2535
      %v2565 = vunpack.c.h.b16 %v2535
      %v2566 = vunpack.c.l.b16 %v2536
      %v2567 = vunpack.c.h.b16 %v2536
      %v2568 = vunpack.c.l.b16 %v2537
      %v2569 = vunpack.c.h.b16 %v2537
      %v2570 = vunpack.c.l.b16 %v2538
      %v2571 = vunpack.c.h.b16 %v2538
      %v2572 = vunpack.c.l.b16 %v2539
      %v2573 = vunpack.c.h.b16 %v2539
      %v2574 = vpack.c.b16 %v2558, %v2556
      %v2575 = vpack.c.b16 %v2559, %v2557
      %v2576 = vpack.c.b16 %v2562, %v2560
      %v2577 = vpack.c.b16 %v2563, %v2561
      %v2578 = vpack.c.b16 %v2566, %v2564
      %v2579 = vpack.c.b16 %v2567, %v2565
      %v2580 = vpack.c.b16 %v2570, %v2568
      %v2581 = vpack.c.b16 %v2571, %v2569
      %v2582 = vpack.c.b16 %v2572, %v2572
      %v2583 = vpack.c.b16 %v2573, %v2573
      %v2593 = vsel %vm548, %v2530, 0
      %v2596 = vsel %vm552, %v2582, 0
      %v2599 = vsel %vm552, %v2583, 0
      %2601 = vmatprep.subr.bf16.mxu0 0
      %2602 = vmatpush1.bf16.msra.mxu0 0
      %2603 = vmatprep.subr.bf16.mxu0 0
      %2604 = vmatpush1.bf16.msra.mxu0 0
      %2605 = vmatprep.subr.bf16.mxu0 0
      %2606 = vmatpush1.bf16.msra.mxu0 0
      %2607 = vmatprep.subr.bf16.mxu0 %v2599
      %2608 = vmatpush1.bf16.msra.mxu0 %v2596
      %2609 = vmatprep.subr.bf16.mxu0 %v2581
      %2610 = vmatpush1.bf16.msra.mxu0 %v2580
      %2611 = vmatprep.subr.bf16.mxu0 %v2579
      %2612 = vmatpush1.bf16.msra.mxu0 %v2578
      %2613 = vmatprep.subr.bf16.mxu0 %v2577
      %2614 = vmatpush1.bf16.msra.mxu0 %v2576
      %2615 = vmatprep.subr.bf16.mxu0 %v2575
      %2616 = vmatpush1.bf16.msra.mxu0 %v2574
      %2617 = vmatprep.subr.bf16.mxu0 0
      %2618 = vmatpush2.bf16.msra.mxu0 0
      %2619 = vmatprep.subr.bf16.mxu0 0
      %2620 = vmatpush2.bf16.msra.mxu0 0
      %2621 = vmatprep.subr.bf16.mxu0 0
      %2622 = vmatpush2.bf16.msra.mxu0 0
      %2623 = vmatprep.subr.bf16.mxu0 0
      %2624 = vmatpush2.bf16.msra.mxu0 0
      %2625 = vmatprep.subr.bf16.mxu0 0
      %2626 = vmatpush2.bf16.msra.mxu0 0
      %2627 = vmatprep.subr.bf16.mxu0 0
      %2628 = vmatpush2.bf16.msra.mxu0 0
      %2629 = vmatprep.subr.bf16.mxu0 0
      %2630 = vmatpush2.bf16.msra.mxu0 0
      %2631 = vmatprep.subr.bf16.mxu0 0
      %2632 = vmatpush2.bf16.msra.mxu0 0
      %2633 = vmatprep.mubr.bf16.mxu0 0
      %2634 = vmatmul.mubr.bf16.gmra.mxu0 %v2593
      %v2635 = vpop.f32.mrf.mxu0
      %v2636 = vadd.f32 %v2545, %v2635
      %v2637 = vpop.f32.mrf.mxu0
      %v2638 = vadd.f32 %v2545, %v2637
      %v2639 = vpop.f32.mrf.mxu0
      %v2640 = vpop.f32.mrf.mxu0
      %2641 = vdwg.mxu0
      %vm2642 = vcmp.ge.f32.partialorder %v2636, 0.0
      %vm2643 = vcmp.ge.f32.partialorder %v2638, 0.0
      %v2644 = vmul.f32 %v2636, 0.2
      %v2645 = vmul.f32 %v2638, 0.2
      %v2646 = vsel %vm2642, %v2636, %v2644
      %v2647 = vsel %vm2643, %v2638, %v2645
      %2648 = vrot.lane.b32.xlu0 %v2646, 17
      %v2649 = vpop.permute.xlu0 %2648
      %2650 = vrot.lane.b32.xlu0 %v2647, 17
      %v2651 = vpop.permute.xlu0 %2650
      %v2652 = vsel %vm315, %v2649, %v2651
      %v2653 = vsel %vm315, %v2651, %v2649
      %v2654 = vld [vmem:[%s7] sm:$0xff]
      %v2655 = vld [vmem:[%s7 + $0x8] sm:$0xff]
      %v2656 = vmul.f32 %v2653, %v2654
      %v2657 = vmul.f32 %v2652, %v2655
      %v2658 = vpack.c.bf16 %v2656, %v2656
      %v2659 = vpack.c.bf16 %v2657, %v2657
      %v2662 = vunpack.c.l.b16 %v2658
      %v2663 = vunpack.c.l.b16 %v2659
      %v2664 = vpack.c.b16 %v2663, %v2662
      %2666 = vst [vmem:[#allocation2 + $0x48] sm:$0xff] %v2664
      %2667 = vrot.lane.b32.xlu0 %v2646, 16
      %v2668 = vpop.permute.xlu0 %2667
      %2669 = vrot.lane.b32.xlu0 %v2647, 16
      %v2670 = vpop.permute.xlu0 %2669
      %v2671 = vsel %vm335, %v2668, %v2670
      %v2672 = vsel %vm335, %v2670, %v2668
      %v2673 = vld [vmem:[%s338] sm:$0xff]
      %v2674 = vld [vmem:[%s338 + $0x8] sm:$0xff]
      %v2675 = vmul.f32 %v2672, %v2673
      %v2676 = vmul.f32 %v2671, %v2674
      %v2677 = vpack.c.bf16 %v2675, %v2675
      %v2678 = vpack.c.bf16 %v2676, %v2676
      %v2681 = vunpack.c.l.b16 %v2677
      %v2682 = vunpack.c.l.b16 %v2678
      %v2683 = vpack.c.b16 %v2682, %v2681
      %2685 = vst [vmem:[#allocation2 + $0x50] sm:$0xff] %v2683
      %2686 = vrot.lane.b32.xlu0 %v2646, 15
      %v2687 = vpop.permute.xlu0 %2686
      %2688 = vrot.lane.b32.xlu0 %v2647, 15
      %v2689 = vpop.permute.xlu0 %2688
      %v2690 = vsel %vm356, %v2687, %v2689
      %v2691 = vsel %vm356, %v2689, %v2687
      %v2692 = vld [vmem:[%s359] sm:$0xff]
      %v2693 = vld [vmem:[%s359 + $0x8] sm:$0xff]
      %v2694 = vmul.f32 %v2691, %v2692
      %v2695 = vmul.f32 %v2690, %v2693
      %v2696 = vpack.c.bf16 %v2694, %v2694
      %v2697 = vpack.c.bf16 %v2695, %v2695
      %v2700 = vunpack.c.l.b16 %v2696
      %v2701 = vunpack.c.l.b16 %v2697
      %v2702 = vpack.c.b16 %v2701, %v2700
      %2704 = vst [vmem:[#allocation2 + $0x58] sm:$0xff] %v2702
      %2705 = vrot.lane.b32.xlu0 %v2646, 1
      %v2706 = vpop.permute.xlu0 %2705
      %2707 = vrot.lane.b32.xlu0 %v2647, 1
      %v2708 = vpop.permute.xlu0 %2707
      %v2709 = vsel %vm377, %v2706, %v2708
      %v2710 = vsel %vm377, %v2708, %v2706
      %v2711 = vld [vmem:[%s380] sm:$0xff]
      %v2712 = vld [vmem:[%s380 + $0x8] sm:$0xff]
      %v2713 = vmul.f32 %v2710, %v2711
      %v2714 = vmul.f32 %v2709, %v2712
      %v2715 = vpack.c.bf16 %v2713, %v2713
      %v2716 = vpack.c.bf16 %v2714, %v2714
      %v2719 = vunpack.c.l.b16 %v2715
      %v2720 = vunpack.c.l.b16 %v2716
      %v2721 = vpack.c.b16 %v2720, %v2719
      %2723 = vst [vmem:[#allocation2 + $0x60] sm:$0xff] %v2721
      %v2724 = vpack.c.bf16 %v2646, %v2646
      %v2725 = vpack.c.bf16 %v2647, %v2647
      %v2728 = vunpack.c.l.b16 %v2724
      %v2729 = vunpack.c.l.b16 %v2725
      %v2730 = vpack.c.b16 %v2729, %v2728
      %2732 = vst [vmem:[#allocation2 + $0x68] sm:$0xff] %v2730
      %2733 = vrot.lane.b32.xlu0 %v2646, 127
      %v2734 = vpop.permute.xlu0 %2733
      %2735 = vrot.lane.b32.xlu0 %v2647, 127
      %v2736 = vpop.permute.xlu0 %2735
      %v2737 = vsel %vm407, %v2734, %v2736
      %v2738 = vsel %vm407, %v2736, %v2734
      %v2739 = vld [vmem:[%s410] sm:$0xff]
      %v2740 = vld [vmem:[%s410 + $0x8] sm:$0xff]
      %v2741 = vmul.f32 %v2737, %v2739
      %v2742 = vmul.f32 %v2738, %v2740
      %v2743 = vpack.c.bf16 %v2741, %v2741
      %v2744 = vpack.c.bf16 %v2742, %v2742
      %v2747 = vunpack.c.l.b16 %v2743
      %v2748 = vunpack.c.l.b16 %v2744
      %v2749 = vpack.c.b16 %v2748, %v2747
      %2751 = vst [vmem:[#allocation2 + $0x70] sm:$0xff] %v2749
      %2752 = vrot.lane.b32.xlu0 %v2646, 113
      %v2753 = vpop.permute.xlu0 %2752
      %2754 = vrot.lane.b32.xlu0 %v2647, 113
      %v2755 = vpop.permute.xlu0 %2754
      %v2756 = vsel %vm428, %v2753, %v2755
      %v2757 = vsel %vm428, %v2755, %v2753
      %v2758 = vld [vmem:[%s431] sm:$0xff]
      %v2759 = vld [vmem:[%s431 + $0x8] sm:$0xff]
      %v2760 = vmul.f32 %v2756, %v2758
      %v2761 = vmul.f32 %v2757, %v2759
      %v2762 = vpack.c.bf16 %v2760, %v2760
      %v2763 = vpack.c.bf16 %v2761, %v2761
      %v2766 = vunpack.c.l.b16 %v2762
      %v2767 = vunpack.c.l.b16 %v2763
      %v2768 = vpack.c.b16 %v2767, %v2766
      %2770 = vst [vmem:[#allocation2 + $0x78] sm:$0xff] %v2768
      %2771 = vrot.lane.b32.xlu0 %v2646, 112
      %v2772 = vpop.permute.xlu0 %2771
      %2773 = vrot.lane.b32.xlu0 %v2647, 112
      %v2774 = vpop.permute.xlu0 %2773
      %v2775 = vsel %vm449, %v2772, %v2774
      %v2776 = vsel %vm449, %v2774, %v2772
      %v2777 = vld [vmem:[%s452] sm:$0xff]
      %v2778 = vld [vmem:[%s452 + $0x8] sm:$0xff]
      %v2779 = vmul.f32 %v2775, %v2777
      %v2780 = vmul.f32 %v2776, %v2778
      %v2781 = vpack.c.bf16 %v2779, %v2779
      %v2782 = vpack.c.bf16 %v2780, %v2780
      %v2785 = vunpack.c.l.b16 %v2781
      %v2786 = vunpack.c.l.b16 %v2782
      %v2787 = vpack.c.b16 %v2786, %v2785
      %2789 = vst [vmem:[#allocation2 + $0x80] sm:$0xff] %v2787
      %2790 = vrot.lane.b32.xlu0 %v2646, 111
      %v2791 = vpop.permute.xlu0 %2790
      %2792 = vrot.lane.b32.xlu0 %v2647, 111
      %v2793 = vpop.permute.xlu0 %2792
      %v2794 = vsel %vm470, %v2791, %v2793
      %v2795 = vsel %vm470, %v2793, %v2791
      %v2796 = vld [vmem:[%s473] sm:$0xff]
      %v2797 = vld [vmem:[%s473 + $0x8] sm:$0xff]
      %v2798 = vmul.f32 %v2794, %v2796
      %v2799 = vmul.f32 %v2795, %v2797
      %v2800 = vpack.c.bf16 %v2798, %v2798
      %v2801 = vpack.c.bf16 %v2799, %v2799
      %v2804 = vunpack.c.l.b16 %v2800
      %v2805 = vunpack.c.l.b16 %v2801
      %v2806 = vpack.c.b16 %v2805, %v2804
      %2808 = vst [vmem:[#allocation2 + $0x88] sm:$0xff] %v2806
      %s2809 = scalar_lea.vmem %s2, 8
      %v2810 = vld [vmem:[%s2809] sm:$0xff]
      %v2811 = vld [vmem:[#allocation2] sm:$0xff]
      %v2812 = vld [vmem:[#allocation2 + $0x8] sm:$0xff]
      %v2813 = vld [vmem:[#allocation2 + $0x10] sm:$0xff]
      %v2814 = vld [vmem:[#allocation2 + $0x18] sm:$0xff]
      %v2815 = vld [vmem:[#allocation2 + $0x20] sm:$0xff]
      %v2816 = vld [vmem:[#allocation2 + $0x28] sm:$0xff]
      %v2817 = vld [vmem:[#allocation2 + $0x30] sm:$0xff]
      %v2818 = vld [vmem:[#allocation2 + $0x38] sm:$0xff]
      %v2819 = vld [vmem:[#allocation2 + $0x40] sm:$0xff]
      %v2820 = vld [vmem:[#allocation2 + $0x48] sm:$0xff]
      %v2821 = vld [vmem:[#allocation2 + $0x50] sm:$0xff]
      %v2822 = vld [vmem:[#allocation2 + $0x58] sm:$0xff]
      %v2823 = vld [vmem:[#allocation2 + $0x60] sm:$0xff]
      %v2824 = vld [vmem:[#allocation2 + $0x68] sm:$0xff]
      %v2825 = vld [vmem:[#allocation2 + $0x70] sm:$0xff]
      %v2826 = vld [vmem:[#allocation2 + $0x78] sm:$0xff]
      %v2827 = vld [vmem:[#allocation2 + $0x80] sm:$0xff]
      %v2828 = vld [vmem:[#allocation2 + $0x88] sm:$0xff]
      %s2829 = scalar_lea.vmem %s6, 48
      %v2830 = vld [vmem:[%s2829] sm:$0xff]
      %2832 = vset.pattern.permute.xlu0 0
      %2833 = vperm.xlu0 %2832, %v2830
      %v2834 = vpop.permute.xlu0 %2833
      %v2837 = vunpack.c.l.b16 %v2810
      %v2838 = vunpack.c.h.b16 %v2810
      %v2839 = vpack.c.b16 %v2837, %v2837
      %v2840 = vpack.c.b16 %v2838, %v2838
      %v2860 = vunpack.c.l.b16 %v2811
      %v2861 = vunpack.c.h.b16 %v2811
      %v2862 = vunpack.c.l.b16 %v2812
      %v2863 = vunpack.c.h.b16 %v2812
      %v2864 = vunpack.c.l.b16 %v2813
      %v2865 = vunpack.c.h.b16 %v2813
      %v2866 = vunpack.c.l.b16 %v2814
      %v2867 = vunpack.c.h.b16 %v2814
      %v2868 = vunpack.c.l.b16 %v2815
      %v2869 = vunpack.c.h.b16 %v2815
      %v2870 = vunpack.c.l.b16 %v2816
      %v2871 = vunpack.c.h.b16 %v2816
      %v2872 = vunpack.c.l.b16 %v2817
      %v2873 = vunpack.c.h.b16 %v2817
      %v2874 = vunpack.c.l.b16 %v2818
      %v2875 = vunpack.c.h.b16 %v2818
      %v2876 = vunpack.c.l.b16 %v2819
      %v2877 = vunpack.c.h.b16 %v2819
      %v2878 = vunpack.c.l.b16 %v2820
      %v2879 = vunpack.c.h.b16 %v2820
      %v2880 = vunpack.c.l.b16 %v2821
      %v2881 = vunpack.c.h.b16 %v2821
      %v2882 = vunpack.c.l.b16 %v2822
      %v2883 = vunpack.c.h.b16 %v2822
      %v2884 = vunpack.c.l.b16 %v2823
      %v2885 = vunpack.c.h.b16 %v2823
      %v2886 = vunpack.c.l.b16 %v2824
      %v2887 = vunpack.c.h.b16 %v2824
      %v2888 = vunpack.c.l.b16 %v2825
      %v2889 = vunpack.c.h.b16 %v2825
      %v2890 = vunpack.c.l.b16 %v2826
      %v2891 = vunpack.c.h.b16 %v2826
      %v2892 = vunpack.c.l.b16 %v2827
      %v2893 = vunpack.c.h.b16 %v2827
      %v2894 = vunpack.c.l.b16 %v2828
      %v2895 = vunpack.c.h.b16 %v2828
      %v2896 = vpack.c.b16 %v2862, %v2860
      %v2897 = vpack.c.b16 %v2863, %v2861
      %v2898 = vpack.c.b16 %v2866, %v2864
      %v2899 = vpack.c.b16 %v2867, %v2865
      %v2900 = vpack.c.b16 %v2870, %v2868
      %v2901 = vpack.c.b16 %v2871, %v2869
      %v2902 = vpack.c.b16 %v2874, %v2872
      %v2903 = vpack.c.b16 %v2875, %v2873
      %v2904 = vpack.c.b16 %v2878, %v2876
      %v2905 = vpack.c.b16 %v2879, %v2877
      %v2906 = vpack.c.b16 %v2882, %v2880
      %v2907 = vpack.c.b16 %v2883, %v2881
      %v2908 = vpack.c.b16 %v2886, %v2884
      %v2909 = vpack.c.b16 %v2887, %v2885
      %v2910 = vpack.c.b16 %v2890, %v2888
      %v2911 = vpack.c.b16 %v2891, %v2889
      %v2912 = vpack.c.b16 %v2894, %v2892
      %v2913 = vpack.c.b16 %v2895, %v2893
      %v2933 = vsel %vm889, %v2840, 0
      %2935 = vmatprep.subr.bf16.mxu0 %v2911
      %2936 = vmatpush1.bf16.msra.mxu0 %v2910
      %2937 = vmatprep.subr.bf16.mxu0 %v2909
      %2938 = vmatpush1.bf16.msra.mxu0 %v2908
      %2939 = vmatprep.subr.bf16.mxu0 %v2907
      %2940 = vmatpush1.bf16.msra.mxu0 %v2906
      %2941 = vmatprep.subr.bf16.mxu0 %v2905
      %2942 = vmatpush1.bf16.msra.mxu0 %v2904
      %2943 = vmatprep.subr.bf16.mxu0 %v2903
      %2944 = vmatpush1.bf16.msra.mxu0 %v2902
      %2945 = vmatprep.subr.bf16.mxu0 %v2901
      %2946 = vmatpush1.bf16.msra.mxu0 %v2900
      %2947 = vmatprep.subr.bf16.mxu0 %v2899
      %2948 = vmatpush1.bf16.msra.mxu0 %v2898
      %2949 = vmatprep.subr.bf16.mxu0 %v2897
      %2950 = vmatpush1.bf16.msra.mxu0 %v2896
      %2951 = vmatprep.subr.bf16.mxu0 0
      %2952 = vmatpush2.bf16.msra.mxu0 0
      %2953 = vmatprep.subr.bf16.mxu0 0
      %2954 = vmatpush2.bf16.msra.mxu0 0
      %2955 = vmatprep.subr.bf16.mxu0 0
      %2956 = vmatpush2.bf16.msra.mxu0 0
      %2957 = vmatprep.subr.bf16.mxu0 0
      %2958 = vmatpush2.bf16.msra.mxu0 0
      %2959 = vmatprep.subr.bf16.mxu0 0
      %2960 = vmatpush2.bf16.msra.mxu0 0
      %2961 = vmatprep.subr.bf16.mxu0 0
      %2962 = vmatpush2.bf16.msra.mxu0 0
      %2963 = vmatprep.subr.bf16.mxu0 0
      %2964 = vmatpush2.bf16.msra.mxu0 0
      %2965 = vmatprep.subr.bf16.mxu0 %v2913
      %2966 = vmatpush2.bf16.msra.mxu0 %v2912
      %2967 = vmatprep.mubr.bf16.mxu0 %v2933
      %2968 = vmatmul.mubr.bf16.gmra.mxu0 %v2839
      %v2969 = vpop.f32.mrf.mxu0
      %v2970 = vadd.f32 %v2834, %v2969
      %v2971 = vpop.f32.mrf.mxu0
      %v2972 = vadd.f32 %v2834, %v2971
      %v2973 = vpop.f32.mrf.mxu0
      %v2974 = vpop.f32.mrf.mxu0
      %2975 = vdwg.mxu0
      %vm2976 = vcmp.ge.f32.partialorder %v2970, 0.0
      %vm2977 = vcmp.ge.f32.partialorder %v2972, 0.0
      %v2978 = vmul.f32 %v2970, 0.2
      %v2979 = vmul.f32 %v2972, 0.2
      %v2980 = vsel %vm2976, %v2970, %v2978
      %v2981 = vsel %vm2977, %v2972, %v2979
      %2982 = vrot.lane.b32.xlu0 %v2980, 17
      %v2983 = vpop.permute.xlu0 %2982
      %2984 = vrot.lane.b32.xlu0 %v2981, 17
      %v2985 = vpop.permute.xlu0 %2984
      %v2986 = vsel %vm315, %v2983, %v2985
      %v2987 = vsel %vm315, %v2985, %v2983
      %v2988 = vld [vmem:[%s7] sm:$0xff]
      %v2989 = vld [vmem:[%s7 + $0x8] sm:$0xff]
      %v2990 = vmul.f32 %v2987, %v2988
      %v2991 = vmul.f32 %v2986, %v2989
      %v2992 = vpack.c.bf16 %v2990, %v2990
      %v2993 = vpack.c.bf16 %v2991, %v2991
      %v2996 = vunpack.c.l.b16 %v2992
      %v2997 = vunpack.c.l.b16 %v2993
      %v2998 = vpack.c.b16 %v2997, %v2996
      %3000 = vst [vmem:[#allocation2 + $0x90] sm:$0xff] %v2998
      %3001 = vrot.lane.b32.xlu0 %v2980, 16
      %v3002 = vpop.permute.xlu0 %3001
      %3003 = vrot.lane.b32.xlu0 %v2981, 16
      %v3004 = vpop.permute.xlu0 %3003
      %v3005 = vsel %vm335, %v3002, %v3004
      %v3006 = vsel %vm335, %v3004, %v3002
      %v3007 = vld [vmem:[%s338] sm:$0xff]
      %v3008 = vld [vmem:[%s338 + $0x8] sm:$0xff]
      %v3009 = vmul.f32 %v3006, %v3007
      %v3010 = vmul.f32 %v3005, %v3008
      %v3011 = vpack.c.bf16 %v3009, %v3009
      %v3012 = vpack.c.bf16 %v3010, %v3010
      %v3015 = vunpack.c.l.b16 %v3011
      %v3016 = vunpack.c.l.b16 %v3012
      %v3017 = vpack.c.b16 %v3016, %v3015
      %3019 = vst [vmem:[#allocation2 + $0x98] sm:$0xff] %v3017
      %3020 = vrot.lane.b32.xlu0 %v2980, 15
      %v3021 = vpop.permute.xlu0 %3020
      %3022 = vrot.lane.b32.xlu0 %v2981, 15
      %v3023 = vpop.permute.xlu0 %3022
      %v3024 = vsel %vm356, %v3021, %v3023
      %v3025 = vsel %vm356, %v3023, %v3021
      %v3026 = vld [vmem:[%s359] sm:$0xff]
      %v3027 = vld [vmem:[%s359 + $0x8] sm:$0xff]
      %v3028 = vmul.f32 %v3025, %v3026
      %v3029 = vmul.f32 %v3024, %v3027
      %v3030 = vpack.c.bf16 %v3028, %v3028
      %v3031 = vpack.c.bf16 %v3029, %v3029
      %v3034 = vunpack.c.l.b16 %v3030
      %v3035 = vunpack.c.l.b16 %v3031
      %v3036 = vpack.c.b16 %v3035, %v3034
      %3038 = vst [vmem:[#allocation2 + $0xa0] sm:$0xff] %v3036
      %3039 = vrot.lane.b32.xlu0 %v2980, 1
      %v3040 = vpop.permute.xlu0 %3039
      %3041 = vrot.lane.b32.xlu0 %v2981, 1
      %v3042 = vpop.permute.xlu0 %3041
      %v3043 = vsel %vm377, %v3040, %v3042
      %v3044 = vsel %vm377, %v3042, %v3040
      %v3045 = vld [vmem:[%s380] sm:$0xff]
      %v3046 = vld [vmem:[%s380 + $0x8] sm:$0xff]
      %v3047 = vmul.f32 %v3044, %v3045
      %v3048 = vmul.f32 %v3043, %v3046
      %v3049 = vpack.c.bf16 %v3047, %v3047
      %v3050 = vpack.c.bf16 %v3048, %v3048
      %v3053 = vunpack.c.l.b16 %v3049
      %v3054 = vunpack.c.l.b16 %v3050
      %v3055 = vpack.c.b16 %v3054, %v3053
      %3057 = vst [vmem:[#allocation2 + $0xa8] sm:$0xff] %v3055
      %v3058 = vpack.c.bf16 %v2980, %v2980
      %v3059 = vpack.c.bf16 %v2981, %v2981
      %v3062 = vunpack.c.l.b16 %v3058
      %v3063 = vunpack.c.l.b16 %v3059
      %v3064 = vpack.c.b16 %v3063, %v3062
      %3066 = vst [vmem:[#allocation2 + $0xb0] sm:$0xff] %v3064
      %3067 = vrot.lane.b32.xlu0 %v2980, 127
      %v3068 = vpop.permute.xlu0 %3067
      %3069 = vrot.lane.b32.xlu0 %v2981, 127
      %v3070 = vpop.permute.xlu0 %3069
      %v3071 = vsel %vm407, %v3068, %v3070
      %v3072 = vsel %vm407, %v3070, %v3068
      %v3073 = vld [vmem:[%s410] sm:$0xff]
      %v3074 = vld [vmem:[%s410 + $0x8] sm:$0xff]
      %v3075 = vmul.f32 %v3071, %v3073
      %v3076 = vmul.f32 %v3072, %v3074
      %v3077 = vpack.c.bf16 %v3075, %v3075
      %v3078 = vpack.c.bf16 %v3076, %v3076
      %v3081 = vunpack.c.l.b16 %v3077
      %v3082 = vunpack.c.l.b16 %v3078
      %v3083 = vpack.c.b16 %v3082, %v3081
      %3085 = vst [vmem:[#allocation2 + $0xb8] sm:$0xff] %v3083
      %3086 = vrot.lane.b32.xlu0 %v2980, 113
      %v3087 = vpop.permute.xlu0 %3086
      %3088 = vrot.lane.b32.xlu0 %v2981, 113
      %v3089 = vpop.permute.xlu0 %3088
      %v3090 = vsel %vm428, %v3087, %v3089
      %v3091 = vsel %vm428, %v3089, %v3087
      %v3092 = vld [vmem:[%s431] sm:$0xff]
      %v3093 = vld [vmem:[%s431 + $0x8] sm:$0xff]
      %v3094 = vmul.f32 %v3090, %v3092
      %v3095 = vmul.f32 %v3091, %v3093
      %v3096 = vpack.c.bf16 %v3094, %v3094
      %v3097 = vpack.c.bf16 %v3095, %v3095
      %v3100 = vunpack.c.l.b16 %v3096
      %v3101 = vunpack.c.l.b16 %v3097
      %v3102 = vpack.c.b16 %v3101, %v3100
      %3104 = vst [vmem:[#allocation2 + $0xc0] sm:$0xff] %v3102
      %3105 = vrot.lane.b32.xlu0 %v2980, 112
      %v3106 = vpop.permute.xlu0 %3105
      %3107 = vrot.lane.b32.xlu0 %v2981, 112
      %v3108 = vpop.permute.xlu0 %3107
      %v3109 = vsel %vm449, %v3106, %v3108
      %v3110 = vsel %vm449, %v3108, %v3106
      %v3111 = vld [vmem:[%s452] sm:$0xff]
      %v3112 = vld [vmem:[%s452 + $0x8] sm:$0xff]
      %v3113 = vmul.f32 %v3109, %v3111
      %v3114 = vmul.f32 %v3110, %v3112
      %v3115 = vpack.c.bf16 %v3113, %v3113
      %v3116 = vpack.c.bf16 %v3114, %v3114
      %v3119 = vunpack.c.l.b16 %v3115
      %v3120 = vunpack.c.l.b16 %v3116
      %v3121 = vpack.c.b16 %v3120, %v3119
      %3123 = vst [vmem:[#allocation2 + $0xc8] sm:$0xff] %v3121
      %3124 = vrot.lane.b32.xlu0 %v2980, 111
      %v3125 = vpop.permute.xlu0 %3124
      %3126 = vrot.lane.b32.xlu0 %v2981, 111
      %v3127 = vpop.permute.xlu0 %3126
      %v3128 = vsel %vm470, %v3125, %v3127
      %v3129 = vsel %vm470, %v3127, %v3125
      %v3130 = vld [vmem:[%s473] sm:$0xff]
      %v3131 = vld [vmem:[%s473 + $0x8] sm:$0xff]
      %v3132 = vmul.f32 %v3128, %v3130
      %v3133 = vmul.f32 %v3129, %v3131
      %v3134 = vpack.c.bf16 %v3132, %v3132
      %v3135 = vpack.c.bf16 %v3133, %v3133
      %v3138 = vunpack.c.l.b16 %v3134
      %v3139 = vunpack.c.l.b16 %v3135
      %v3140 = vpack.c.b16 %v3139, %v3138
      %3142 = vst [vmem:[#allocation2 + $0xd0] sm:$0xff] %v3140
      %s3143 = scalar_lea.vmem %s3, 8
      %v3144 = vld [vmem:[%s3143] sm:$0xff]
      %v3145 = vld [vmem:[#allocation2] sm:$0xff]
      %v3146 = vld [vmem:[#allocation2 + $0x8] sm:$0xff]
      %v3147 = vld [vmem:[#allocation2 + $0x10] sm:$0xff]
      %v3148 = vld [vmem:[#allocation2 + $0x18] sm:$0xff]
      %v3149 = vld [vmem:[#allocation2 + $0x20] sm:$0xff]
      %v3150 = vld [vmem:[#allocation2 + $0x28] sm:$0xff]
      %v3151 = vld [vmem:[#allocation2 + $0x30] sm:$0xff]
      %v3152 = vld [vmem:[#allocation2 + $0x38] sm:$0xff]
      %v3153 = vld [vmem:[#allocation2 + $0x40] sm:$0xff]
      %v3154 = vld [vmem:[#allocation2 + $0x48] sm:$0xff]
      %v3155 = vld [vmem:[#allocation2 + $0x50] sm:$0xff]
      %v3156 = vld [vmem:[#allocation2 + $0x58] sm:$0xff]
      %v3157 = vld [vmem:[#allocation2 + $0x60] sm:$0xff]
      %v3158 = vld [vmem:[#allocation2 + $0x68] sm:$0xff]
      %v3159 = vld [vmem:[#allocation2 + $0x70] sm:$0xff]
      %v3160 = vld [vmem:[#allocation2 + $0x78] sm:$0xff]
      %v3161 = vld [vmem:[#allocation2 + $0x80] sm:$0xff]
      %v3162 = vld [vmem:[#allocation2 + $0x88] sm:$0xff]
      %v3163 = vld [vmem:[#allocation2 + $0x90] sm:$0xff]
      %v3164 = vld [vmem:[#allocation2 + $0x98] sm:$0xff]
      %v3165 = vld [vmem:[#allocation2 + $0xa0] sm:$0xff]
      %v3166 = vld [vmem:[#allocation2 + $0xa8] sm:$0xff]
      %v3167 = vld [vmem:[#allocation2 + $0xb0] sm:$0xff]
      %v3168 = vld [vmem:[#allocation2 + $0xb8] sm:$0xff]
      %v3169 = vld [vmem:[#allocation2 + $0xc0] sm:$0xff]
      %v3170 = vld [vmem:[#allocation2 + $0xc8] sm:$0xff]
      %v3171 = vld [vmem:[#allocation2 + $0xd0] sm:$0xff]
      %s3172 = scalar_lea.vmem %s6, 56
      %v3173 = vld [vmem:[%s3172] sm:$0xff]
      %3175 = vset.pattern.permute.xlu0 0
      %3176 = vperm.xlu0 %3175, %v3173
      %v3177 = vpop.permute.xlu0 %3176
      %v3180 = vunpack.c.l.b16 %v3144
      %v3181 = vunpack.c.h.b16 %v3144
      %v3182 = vpack.c.b16 %v3180, %v3180
      %v3183 = vpack.c.b16 %v3181, %v3181
      %v3212 = vunpack.c.l.b16 %v3145
      %v3213 = vunpack.c.h.b16 %v3145
      %v3214 = vunpack.c.l.b16 %v3146
      %v3215 = vunpack.c.h.b16 %v3146
      %v3216 = vunpack.c.l.b16 %v3147
      %v3217 = vunpack.c.h.b16 %v3147
      %v3218 = vunpack.c.l.b16 %v3148
      %v3219 = vunpack.c.h.b16 %v3148
      %v3220 = vunpack.c.l.b16 %v3149
      %v3221 = vunpack.c.h.b16 %v3149
      %v3222 = vunpack.c.l.b16 %v3150
      %v3223 = vunpack.c.h.b16 %v3150
      %v3224 = vunpack.c.l.b16 %v3151
      %v3225 = vunpack.c.h.b16 %v3151
      %v3226 = vunpack.c.l.b16 %v3152
      %v3227 = vunpack.c.h.b16 %v3152
      %v3228 = vunpack.c.l.b16 %v3153
      %v3229 = vunpack.c.h.b16 %v3153
      %v3230 = vunpack.c.l.b16 %v3154
      %v3231 = vunpack.c.h.b16 %v3154
      %v3232 = vunpack.c.l.b16 %v3155
      %v3233 = vunpack.c.h.b16 %v3155
      %v3234 = vunpack.c.l.b16 %v3156
      %v3235 = vunpack.c.h.b16 %v3156
      %v3236 = vunpack.c.l.b16 %v3157
      %v3237 = vunpack.c.h.b16 %v3157
      %v3238 = vunpack.c.l.b16 %v3158
      %v3239 = vunpack.c.h.b16 %v3158
      %v3240 = vunpack.c.l.b16 %v3159
      %v3241 = vunpack.c.h.b16 %v3159
      %v3242 = vunpack.c.l.b16 %v3160
      %v3243 = vunpack.c.h.b16 %v3160
      %v3244 = vunpack.c.l.b16 %v3161
      %v3245 = vunpack.c.h.b16 %v3161
      %v3246 = vunpack.c.l.b16 %v3162
      %v3247 = vunpack.c.h.b16 %v3162
      %v3248 = vunpack.c.l.b16 %v3163
      %v3249 = vunpack.c.h.b16 %v3163
      %v3250 = vunpack.c.l.b16 %v3164
      %v3251 = vunpack.c.h.b16 %v3164
      %v3252 = vunpack.c.l.b16 %v3165
      %v3253 = vunpack.c.h.b16 %v3165
      %v3254 = vunpack.c.l.b16 %v3166
      %v3255 = vunpack.c.h.b16 %v3166
      %v3256 = vunpack.c.l.b16 %v3167
      %v3257 = vunpack.c.h.b16 %v3167
      %v3258 = vunpack.c.l.b16 %v3168
      %v3259 = vunpack.c.h.b16 %v3168
      %v3260 = vunpack.c.l.b16 %v3169
      %v3261 = vunpack.c.h.b16 %v3169
      %v3262 = vunpack.c.l.b16 %v3170
      %v3263 = vunpack.c.h.b16 %v3170
      %v3264 = vunpack.c.l.b16 %v3171
      %v3265 = vunpack.c.h.b16 %v3171
      %v3266 = vpack.c.b16 %v3214, %v3212
      %v3267 = vpack.c.b16 %v3215, %v3213
      %v3268 = vpack.c.b16 %v3218, %v3216
      %v3269 = vpack.c.b16 %v3219, %v3217
      %v3270 = vpack.c.b16 %v3222, %v3220
      %v3271 = vpack.c.b16 %v3223, %v3221
      %v3272 = vpack.c.b16 %v3226, %v3224
      %v3273 = vpack.c.b16 %v3227, %v3225
      %v3274 = vpack.c.b16 %v3230, %v3228
      %v3275 = vpack.c.b16 %v3231, %v3229
      %v3276 = vpack.c.b16 %v3234, %v3232
      %v3277 = vpack.c.b16 %v3235, %v3233
      %v3278 = vpack.c.b16 %v3238, %v3236
      %v3279 = vpack.c.b16 %v3239, %v3237
      %v3280 = vpack.c.b16 %v3242, %v3240
      %v3281 = vpack.c.b16 %v3243, %v3241
      %v3282 = vpack.c.b16 %v3246, %v3244
      %v3283 = vpack.c.b16 %v3247, %v3245
      %v3284 = vpack.c.b16 %v3250, %v3248
      %v3285 = vpack.c.b16 %v3251, %v3249
      %v3286 = vpack.c.b16 %v3254, %v3252
      %v3287 = vpack.c.b16 %v3255, %v3253
      %v3288 = vpack.c.b16 %v3258, %v3256
      %v3289 = vpack.c.b16 %v3259, %v3257
      %v3290 = vpack.c.b16 %v3262, %v3260
      %v3291 = vpack.c.b16 %v3263, %v3261
      %v3292 = vpack.c.b16 %v3264, %v3264
      %v3293 = vpack.c.b16 %v3265, %v3265
      %v3321 = vsel %vm1277, %v3183, 0
      %v3324 = vsel %vm552, %v3292, 0
      %v3327 = vsel %vm552, %v3293, 0
      %3329 = vmatprep.subr.bf16.mxu0 %v3281
      %3330 = vmatpush1.bf16.msra.mxu0 %v3280
      %3331 = vmatprep.subr.bf16.mxu0 %v3279
      %3332 = vmatpush1.bf16.msra.mxu0 %v3278
      %3333 = vmatprep.subr.bf16.mxu0 %v3277
      %3334 = vmatpush1.bf16.msra.mxu0 %v3276
      %3335 = vmatprep.subr.bf16.mxu0 %v3275
      %3336 = vmatpush1.bf16.msra.mxu0 %v3274
      %3337 = vmatprep.subr.bf16.mxu0 %v3273
      %3338 = vmatpush1.bf16.msra.mxu0 %v3272
      %3339 = vmatprep.subr.bf16.mxu0 %v3271
      %3340 = vmatpush1.bf16.msra.mxu0 %v3270
      %3341 = vmatprep.subr.bf16.mxu0 %v3269
      %3342 = vmatpush1.bf16.msra.mxu0 %v3268
      %3343 = vmatprep.subr.bf16.mxu0 %v3267
      %3344 = vmatpush1.bf16.msra.mxu0 %v3266
      %3345 = vmatprep.subr.bf16.mxu0 0
      %3346 = vmatpush2.bf16.msra.mxu0 0
      %3347 = vmatprep.subr.bf16.mxu0 0
      %3348 = vmatpush2.bf16.msra.mxu0 0
      %3349 = vmatprep.subr.bf16.mxu0 %v3327
      %3350 = vmatpush2.bf16.msra.mxu0 %v3324
      %3351 = vmatprep.subr.bf16.mxu0 %v3291
      %3352 = vmatpush2.bf16.msra.mxu0 %v3290
      %3353 = vmatprep.subr.bf16.mxu0 %v3289
      %3354 = vmatpush2.bf16.msra.mxu0 %v3288
      %3355 = vmatprep.subr.bf16.mxu0 %v3287
      %3356 = vmatpush2.bf16.msra.mxu0 %v3286
      %3357 = vmatprep.subr.bf16.mxu0 %v3285
      %3358 = vmatpush2.bf16.msra.mxu0 %v3284
      %3359 = vmatprep.subr.bf16.mxu0 %v3283
      %3360 = vmatpush2.bf16.msra.mxu0 %v3282
      %3361 = vmatprep.mubr.bf16.mxu0 %v3321
      %3362 = vmatmul.mubr.bf16.gmra.mxu0 %v3182
      %v3363 = vpop.f32.mrf.mxu0
      %v3364 = vadd.f32 %v3177, %v3363
      %v3365 = vpop.f32.mrf.mxu0
      %v3366 = vadd.f32 %v3177, %v3365
      %v3367 = vpop.f32.mrf.mxu0
      %v3368 = vpop.f32.mrf.mxu0
      %3369 = vdwg.mxu0
      %vm3370 = vcmp.ge.f32.partialorder %v3364, 0.0
      %vm3371 = vcmp.ge.f32.partialorder %v3366, 0.0
      %v3372 = vmul.f32 %v3364, 0.2
      %v3373 = vmul.f32 %v3366, 0.2
      %v3374 = vsel %vm3370, %v3364, %v3372
      %v3375 = vsel %vm3371, %v3366, %v3373
      %3376 = vrot.lane.b32.xlu0 %v3374, 17
      %v3377 = vpop.permute.xlu0 %3376
      %3378 = vrot.lane.b32.xlu0 %v3375, 17
      %v3379 = vpop.permute.xlu0 %3378
      %v3380 = vsel %vm315, %v3377, %v3379
      %v3381 = vsel %vm315, %v3379, %v3377
      %v3382 = vld [vmem:[%s7] sm:$0xff]
      %v3383 = vld [vmem:[%s7 + $0x8] sm:$0xff]
      %v3384 = vmul.f32 %v3381, %v3382
      %v3385 = vmul.f32 %v3380, %v3383
      %v3386 = vpack.c.bf16 %v3384, %v3384
      %v3387 = vpack.c.bf16 %v3385, %v3385
      %v3390 = vunpack.c.l.b16 %v3386
      %v3391 = vunpack.c.l.b16 %v3387
      %v3392 = vpack.c.b16 %v3391, %v3390
      %3394 = vst [vmem:[#allocation2 + $0xd8] sm:$0xff] %v3392
      %3395 = vrot.lane.b32.xlu0 %v3374, 16
      %v3396 = vpop.permute.xlu0 %3395
      %3397 = vrot.lane.b32.xlu0 %v3375, 16
      %v3398 = vpop.permute.xlu0 %3397
      %v3399 = vsel %vm335, %v3396, %v3398
      %v3400 = vsel %vm335, %v3398, %v3396
      %v3401 = vld [vmem:[%s338] sm:$0xff]
      %v3402 = vld [vmem:[%s338 + $0x8] sm:$0xff]
      %v3403 = vmul.f32 %v3400, %v3401
      %v3404 = vmul.f32 %v3399, %v3402
      %v3405 = vpack.c.bf16 %v3403, %v3403
      %v3406 = vpack.c.bf16 %v3404, %v3404
      %v3409 = vunpack.c.l.b16 %v3405
      %v3410 = vunpack.c.l.b16 %v3406
      %v3411 = vpack.c.b16 %v3410, %v3409
      %3413 = vst [vmem:[#allocation2 + $0xe0] sm:$0xff] %v3411
      %3414 = vrot.lane.b32.xlu0 %v3374, 15
      %v3415 = vpop.permute.xlu0 %3414
      %3416 = vrot.lane.b32.xlu0 %v3375, 15
      %v3417 = vpop.permute.xlu0 %3416
      %v3418 = vsel %vm356, %v3415, %v3417
      %v3419 = vsel %vm356, %v3417, %v3415
      %v3420 = vld [vmem:[%s359] sm:$0xff]
      %v3421 = vld [vmem:[%s359 + $0x8] sm:$0xff]
      %v3422 = vmul.f32 %v3419, %v3420
      %v3423 = vmul.f32 %v3418, %v3421
      %v3424 = vpack.c.bf16 %v3422, %v3422
      %v3425 = vpack.c.bf16 %v3423, %v3423
      %v3428 = vunpack.c.l.b16 %v3424
      %v3429 = vunpack.c.l.b16 %v3425
      %v3430 = vpack.c.b16 %v3429, %v3428
      %3432 = vst [vmem:[#allocation2 + $0xe8] sm:$0xff] %v3430
      %3433 = vrot.lane.b32.xlu0 %v3374, 1
      %v3434 = vpop.permute.xlu0 %3433
      %3435 = vrot.lane.b32.xlu0 %v3375, 1
      %v3436 = vpop.permute.xlu0 %3435
      %v3437 = vsel %vm377, %v3434, %v3436
      %v3438 = vsel %vm377, %v3436, %v3434
      %v3439 = vld [vmem:[%s380] sm:$0xff]
      %v3440 = vld [vmem:[%s380 + $0x8] sm:$0xff]
      %v3441 = vmul.f32 %v3438, %v3439
      %v3442 = vmul.f32 %v3437, %v3440
      %v3443 = vpack.c.bf16 %v3441, %v3441
      %v3444 = vpack.c.bf16 %v3442, %v3442
      %v3447 = vunpack.c.l.b16 %v3443
      %v3448 = vunpack.c.l.b16 %v3444
      %v3449 = vpack.c.b16 %v3448, %v3447
      %3451 = vst [vmem:[#allocation2 + $0xf0] sm:$0xff] %v3449
      %v3452 = vpack.c.bf16 %v3374, %v3374
      %v3453 = vpack.c.bf16 %v3375, %v3375
      %v3456 = vunpack.c.l.b16 %v3452
      %v3457 = vunpack.c.l.b16 %v3453
      %v3458 = vpack.c.b16 %v3457, %v3456
      %3460 = vst [vmem:[#allocation2 + $0xf8] sm:$0xff] %v3458
      %3461 = vrot.lane.b32.xlu0 %v3374, 127
      %v3462 = vpop.permute.xlu0 %3461
      %3463 = vrot.lane.b32.xlu0 %v3375, 127
      %v3464 = vpop.permute.xlu0 %3463
      %v3465 = vsel %vm407, %v3462, %v3464
      %v3466 = vsel %vm407, %v3464, %v3462
      %v3467 = vld [vmem:[%s410] sm:$0xff]
      %v3468 = vld [vmem:[%s410 + $0x8] sm:$0xff]
      %v3469 = vmul.f32 %v3465, %v3467
      %v3470 = vmul.f32 %v3466, %v3468
      %v3471 = vpack.c.bf16 %v3469, %v3469
      %v3472 = vpack.c.bf16 %v3470, %v3470
      %v3475 = vunpack.c.l.b16 %v3471
      %v3476 = vunpack.c.l.b16 %v3472
      %v3477 = vpack.c.b16 %v3476, %v3475
      %3479 = vst [vmem:[#allocation2 + $0x100] sm:$0xff] %v3477
      %3480 = vrot.lane.b32.xlu0 %v3374, 113
      %v3481 = vpop.permute.xlu0 %3480
      %3482 = vrot.lane.b32.xlu0 %v3375, 113
      %v3483 = vpop.permute.xlu0 %3482
      %v3484 = vsel %vm428, %v3481, %v3483
      %v3485 = vsel %vm428, %v3483, %v3481
      %v3486 = vld [vmem:[%s431] sm:$0xff]
      %v3487 = vld [vmem:[%s431 + $0x8] sm:$0xff]
      %v3488 = vmul.f32 %v3484, %v3486
      %v3489 = vmul.f32 %v3485, %v3487
      %v3490 = vpack.c.bf16 %v3488, %v3488
      %v3491 = vpack.c.bf16 %v3489, %v3489
      %v3494 = vunpack.c.l.b16 %v3490
      %v3495 = vunpack.c.l.b16 %v3491
      %v3496 = vpack.c.b16 %v3495, %v3494
      %3498 = vst [vmem:[#allocation2 + $0x108] sm:$0xff] %v3496
      %3499 = vrot.lane.b32.xlu0 %v3374, 112
      %v3500 = vpop.permute.xlu0 %3499
      %3501 = vrot.lane.b32.xlu0 %v3375, 112
      %v3502 = vpop.permute.xlu0 %3501
      %v3503 = vsel %vm449, %v3500, %v3502
      %v3504 = vsel %vm449, %v3502, %v3500
      %v3505 = vld [vmem:[%s452] sm:$0xff]
      %v3506 = vld [vmem:[%s452 + $0x8] sm:$0xff]
      %v3507 = vmul.f32 %v3503, %v3505
      %v3508 = vmul.f32 %v3504, %v3506
      %v3509 = vpack.c.bf16 %v3507, %v3507
      %v3510 = vpack.c.bf16 %v3508, %v3508
      %v3513 = vunpack.c.l.b16 %v3509
      %v3514 = vunpack.c.l.b16 %v3510
      %v3515 = vpack.c.b16 %v3514, %v3513
      %3517 = vst [vmem:[#allocation2 + $0x110] sm:$0xff] %v3515
      %3518 = vrot.lane.b32.xlu0 %v3374, 111
      %v3519 = vpop.permute.xlu0 %3518
      %3520 = vrot.lane.b32.xlu0 %v3375, 111
      %v3521 = vpop.permute.xlu0 %3520
      %v3522 = vsel %vm470, %v3519, %v3521
      %v3523 = vsel %vm470, %v3521, %v3519
      %v3524 = vld [vmem:[%s473] sm:$0xff]
      %v3525 = vld [vmem:[%s473 + $0x8] sm:$0xff]
      %v3526 = vmul.f32 %v3522, %v3524
      %v3527 = vmul.f32 %v3523, %v3525
      %v3528 = vpack.c.bf16 %v3526, %v3526
      %v3529 = vpack.c.bf16 %v3527, %v3527
      %v3532 = vunpack.c.l.b16 %v3528
      %v3533 = vunpack.c.l.b16 %v3529
      %v3534 = vpack.c.b16 %v3533, %v3532
      %3536 = vst [vmem:[#allocation2 + $0x118] sm:$0xff] %v3534
      %s3537 = scalar_lea.vmem %s4, 12
      %v3538 = vld [vmem:[%s3537] sm:$0xff]
      %v3539 = vld [vmem:[%s3537 + $0x8] sm:$0xf]
      %v3540 = vld [vmem:[#allocation2] sm:$0xff]
      %v3541 = vld [vmem:[#allocation2 + $0x8] sm:$0xff]
      %v3542 = vld [vmem:[#allocation2 + $0x10] sm:$0xff]
      %v3543 = vld [vmem:[#allocation2 + $0x18] sm:$0xff]
      %v3544 = vld [vmem:[#allocation2 + $0x20] sm:$0xff]
      %v3545 = vld [vmem:[#allocation2 + $0x28] sm:$0xff]
      %v3546 = vld [vmem:[#allocation2 + $0x30] sm:$0xff]
      %v3547 = vld [vmem:[#allocation2 + $0x38] sm:$0xff]
      %v3548 = vld [vmem:[#allocation2 + $0x40] sm:$0xff]
      %v3549 = vld [vmem:[#allocation2 + $0x48] sm:$0xff]
      %v3550 = vld [vmem:[#allocation2 + $0x50] sm:$0xff]
      %v3551 = vld [vmem:[#allocation2 + $0x58] sm:$0xff]
      %v3552 = vld [vmem:[#allocation2 + $0x60] sm:$0xff]
      %v3553 = vld [vmem:[#allocation2 + $0x68] sm:$0xff]
      %v3554 = vld [vmem:[#allocation2 + $0x70] sm:$0xff]
      %v3555 = vld [vmem:[#allocation2 + $0x78] sm:$0xff]
      %v3556 = vld [vmem:[#allocation2 + $0x80] sm:$0xff]
      %v3557 = vld [vmem:[#allocation2 + $0x88] sm:$0xff]
      %v3558 = vld [vmem:[#allocation2 + $0x90] sm:$0xff]
      %v3559 = vld [vmem:[#allocation2 + $0x98] sm:$0xff]
      %v3560 = vld [vmem:[#allocation2 + $0xa0] sm:$0xff]
      %v3561 = vld [vmem:[#allocation2 + $0xa8] sm:$0xff]
      %v3562 = vld [vmem:[#allocation2 + $0xb0] sm:$0xff]
      %v3563 = vld [vmem:[#allocation2 + $0xb8] sm:$0xff]
      %v3564 = vld [vmem:[#allocation2 + $0xc0] sm:$0xff]
      %v3565 = vld [vmem:[#allocation2 + $0xc8] sm:$0xff]
      %v3566 = vld [vmem:[#allocation2 + $0xd0] sm:$0xff]
      %v3567 = vld [vmem:[#allocation2 + $0xd8] sm:$0xff]
      %v3568 = vld [vmem:[#allocation2 + $0xe0] sm:$0xff]
      %v3569 = vld [vmem:[#allocation2 + $0xe8] sm:$0xff]
      %v3570 = vld [vmem:[#allocation2 + $0xf0] sm:$0xff]
      %v3571 = vld [vmem:[#allocation2 + $0xf8] sm:$0xff]
      %v3572 = vld [vmem:[#allocation2 + $0x100] sm:$0xff]
      %v3573 = vld [vmem:[#allocation2 + $0x108] sm:$0xff]
      %v3574 = vld [vmem:[#allocation2 + $0x110] sm:$0xff]
      %v3575 = vld [vmem:[#allocation2 + $0x118] sm:$0xff]
      %s3576 = scalar_lea.vmem %s6, 64
      %v3577 = vld [vmem:[%s3576] sm:$0xff]
      %3579 = vset.pattern.permute.xlu0 0
      %3580 = vperm.xlu0 %3579, %v3577
      %v3581 = vpop.permute.xlu0 %3580
      %v3585 = vunpack.c.l.b16 %v3538
      %v3586 = vunpack.c.h.b16 %v3538
      %v3587 = vunpack.c.l.b16 %v3539
      %v3588 = vpack.c.b16 %v3585, %v3585
      %v3589 = vpack.c.b16 %v3586, %v3586
      %v3590 = vpack.c.b16 %v3587, %v3587
      %v3629 = vunpack.c.l.b16 %v3540
      %v3630 = vunpack.c.h.b16 %v3540
      %v3631 = vunpack.c.l.b16 %v3541
      %v3632 = vunpack.c.h.b16 %v3541
      %v3633 = vunpack.c.l.b16 %v3542
      %v3634 = vunpack.c.h.b16 %v3542
      %v3635 = vunpack.c.l.b16 %v3543
      %v3636 = vunpack.c.h.b16 %v3543
      %v3637 = vunpack.c.l.b16 %v3544
      %v3638 = vunpack.c.h.b16 %v3544
      %v3639 = vunpack.c.l.b16 %v3545
      %v3640 = vunpack.c.h.b16 %v3545
      %v3641 = vunpack.c.l.b16 %v3546
      %v3642 = vunpack.c.h.b16 %v3546
      %v3643 = vunpack.c.l.b16 %v3547
      %v3644 = vunpack.c.h.b16 %v3547
      %v3645 = vunpack.c.l.b16 %v3548
      %v3646 = vunpack.c.h.b16 %v3548
      %v3647 = vunpack.c.l.b16 %v3549
      %v3648 = vunpack.c.h.b16 %v3549
      %v3649 = vunpack.c.l.b16 %v3550
      %v3650 = vunpack.c.h.b16 %v3550
      %v3651 = vunpack.c.l.b16 %v3551
      %v3652 = vunpack.c.h.b16 %v3551
      %v3653 = vunpack.c.l.b16 %v3552
      %v3654 = vunpack.c.h.b16 %v3552
      %v3655 = vunpack.c.l.b16 %v3553
      %v3656 = vunpack.c.h.b16 %v3553
      %v3657 = vunpack.c.l.b16 %v3554
      %v3658 = vunpack.c.h.b16 %v3554
      %v3659 = vunpack.c.l.b16 %v3555
      %v3660 = vunpack.c.h.b16 %v3555
      %v3661 = vunpack.c.l.b16 %v3556
      %v3662 = vunpack.c.h.b16 %v3556
      %v3663 = vunpack.c.l.b16 %v3557
      %v3664 = vunpack.c.h.b16 %v3557
      %v3665 = vunpack.c.l.b16 %v3558
      %v3666 = vunpack.c.h.b16 %v3558
      %v3667 = vunpack.c.l.b16 %v3559
      %v3668 = vunpack.c.h.b16 %v3559
      %v3669 = vunpack.c.l.b16 %v3560
      %v3670 = vunpack.c.h.b16 %v3560
      %v3671 = vunpack.c.l.b16 %v3561
      %v3672 = vunpack.c.h.b16 %v3561
      %v3673 = vunpack.c.l.b16 %v3562
      %v3674 = vunpack.c.h.b16 %v3562
      %v3675 = vunpack.c.l.b16 %v3563
      %v3676 = vunpack.c.h.b16 %v3563
      %v3677 = vunpack.c.l.b16 %v3564
      %v3678 = vunpack.c.h.b16 %v3564
      %v3679 = vunpack.c.l.b16 %v3565
      %v3680 = vunpack.c.h.b16 %v3565
      %v3681 = vunpack.c.l.b16 %v3566
      %v3682 = vunpack.c.h.b16 %v3566
      %v3683 = vunpack.c.l.b16 %v3567
      %v3684 = vunpack.c.h.b16 %v3567
      %v3685 = vunpack.c.l.b16 %v3568
      %v3686 = vunpack.c.h.b16 %v3568
      %v3687 = vunpack.c.l.b16 %v3569
      %v3688 = vunpack.c.h.b16 %v3569
      %v3689 = vunpack.c.l.b16 %v3570
      %v3690 = vunpack.c.h.b16 %v3570
      %v3691 = vunpack.c.l.b16 %v3571
      %v3692 = vunpack.c.h.b16 %v3571
      %v3693 = vunpack.c.l.b16 %v3572
      %v3694 = vunpack.c.h.b16 %v3572
      %v3695 = vunpack.c.l.b16 %v3573
      %v3696 = vunpack.c.h.b16 %v3573
      %v3697 = vunpack.c.l.b16 %v3574
      %v3698 = vunpack.c.h.b16 %v3574
      %v3699 = vunpack.c.l.b16 %v3575
      %v3700 = vunpack.c.h.b16 %v3575
      %v3701 = vpack.c.b16 %v3631, %v3629
      %v3702 = vpack.c.b16 %v3632, %v3630
      %v3703 = vpack.c.b16 %v3635, %v3633
      %v3704 = vpack.c.b16 %v3636, %v3634
      %v3705 = vpack.c.b16 %v3639, %v3637
      %v3706 = vpack.c.b16 %v3640, %v3638
      %v3707 = vpack.c.b16 %v3643, %v3641
      %v3708 = vpack.c.b16 %v3644, %v3642
      %v3709 = vpack.c.b16 %v3647, %v3645
      %v3710 = vpack.c.b16 %v3648, %v3646
      %v3711 = vpack.c.b16 %v3651, %v3649
      %v3712 = vpack.c.b16 %v3652, %v3650
      %v3713 = vpack.c.b16 %v3655, %v3653
      %v3714 = vpack.c.b16 %v3656, %v3654
      %v3715 = vpack.c.b16 %v3659, %v3657
      %v3716 = vpack.c.b16 %v3660, %v3658
      %v3717 = vpack.c.b16 %v3663, %v3661
      %v3718 = vpack.c.b16 %v3664, %v3662
      %v3719 = vpack.c.b16 %v3667, %v3665
      %v3720 = vpack.c.b16 %v3668, %v3666
      %v3721 = vpack.c.b16 %v3671, %v3669
      %v3722 = vpack.c.b16 %v3672, %v3670
      %v3723 = vpack.c.b16 %v3675, %v3673
      %v3724 = vpack.c.b16 %v3676, %v3674
      %v3725 = vpack.c.b16 %v3679, %v3677
      %v3726 = vpack.c.b16 %v3680, %v3678
      %v3727 = vpack.c.b16 %v3683, %v3681
      %v3728 = vpack.c.b16 %v3684, %v3682
      %v3729 = vpack.c.b16 %v3687, %v3685
      %v3730 = vpack.c.b16 %v3688, %v3686
      %v3731 = vpack.c.b16 %v3691, %v3689
      %v3732 = vpack.c.b16 %v3692, %v3690
      %v3733 = vpack.c.b16 %v3695, %v3693
      %v3734 = vpack.c.b16 %v3696, %v3694
      %v3735 = vpack.c.b16 %v3699, %v3697
      %v3736 = vpack.c.b16 %v3700, %v3698
      %v3774 = vsel %vm1730, %v3590, 0
      %3776 = vmatprep.subr.bf16.mxu0 %v3716
      %3777 = vmatpush1.bf16.msra.mxu0 %v3715
      %3778 = vmatprep.subr.bf16.mxu0 %v3714
      %3779 = vmatpush1.bf16.msra.mxu0 %v3713
      %3780 = vmatprep.subr.bf16.mxu0 %v3712
      %3781 = vmatpush1.bf16.msra.mxu0 %v3711
      %3782 = vmatprep.subr.bf16.mxu0 %v3710
      %3783 = vmatpush1.bf16.msra.mxu0 %v3709
      %3784 = vmatprep.subr.bf16.mxu0 %v3708
      %3785 = vmatpush1.bf16.msra.mxu0 %v3707
      %3786 = vmatprep.subr.bf16.mxu0 %v3706
      %3787 = vmatpush1.bf16.msra.mxu0 %v3705
      %3788 = vmatprep.subr.bf16.mxu0 %v3704
      %3789 = vmatpush1.bf16.msra.mxu0 %v3703
      %3790 = vmatprep.subr.bf16.mxu0 %v3702
      %3791 = vmatpush1.bf16.msra.mxu0 %v3701
      %3792 = vmatprep.subr.bf16.mxu0 %v3732
      %3793 = vmatpush2.bf16.msra.mxu0 %v3731
      %3794 = vmatprep.subr.bf16.mxu0 %v3730
      %3795 = vmatpush2.bf16.msra.mxu0 %v3729
      %3796 = vmatprep.subr.bf16.mxu0 %v3728
      %3797 = vmatpush2.bf16.msra.mxu0 %v3727
      %3798 = vmatprep.subr.bf16.mxu0 %v3726
      %3799 = vmatpush2.bf16.msra.mxu0 %v3725
      %3800 = vmatprep.subr.bf16.mxu0 %v3724
      %3801 = vmatpush2.bf16.msra.mxu0 %v3723
      %3802 = vmatprep.subr.bf16.mxu0 %v3722
      %3803 = vmatpush2.bf16.msra.mxu0 %v3721
      %3804 = vmatprep.subr.bf16.mxu0 %v3720
      %3805 = vmatpush2.bf16.msra.mxu0 %v3719
      %3806 = vmatprep.subr.bf16.mxu0 %v3718
      %3807 = vmatpush2.bf16.msra.mxu0 %v3717
      %3808 = vmatprep.mubr.bf16.mxu0 %v3589
      %3809 = vmatmul.mubr.bf16.gmra.mxu0 %v3588
      %v3810 = vpop.f32.mrf.mxu0
      %v3811 = vadd.f32 %v3581, %v3810
      %v3812 = vpop.f32.mrf.mxu0
      %v3813 = vadd.f32 %v3581, %v3812
      %v3814 = vpop.f32.mrf.mxu0
      %v3815 = vpop.f32.mrf.mxu0
      %3816 = vdwg.mxu0
      %3817 = vmatprep.subr.bf16.mxu0 0
      %3818 = vmatpush1.bf16.msra.mxu0 0
      %3819 = vmatprep.subr.bf16.mxu0 0
      %3820 = vmatpush1.bf16.msra.mxu0 0
      %3821 = vmatprep.subr.bf16.mxu0 0
      %3822 = vmatpush1.bf16.msra.mxu0 0
      %3823 = vmatprep.subr.bf16.mxu0 0
      %3824 = vmatpush1.bf16.msra.mxu0 0
      %3825 = vmatprep.subr.bf16.mxu0 0
      %3826 = vmatpush1.bf16.msra.mxu0 0
      %3827 = vmatprep.subr.bf16.mxu0 0
      %3828 = vmatpush1.bf16.msra.mxu0 0
      %3829 = vmatprep.subr.bf16.mxu0 %v3736
      %3830 = vmatpush1.bf16.msra.mxu0 %v3735
      %3831 = vmatprep.subr.bf16.mxu0 %v3734
      %3832 = vmatpush1.bf16.msra.mxu0 %v3733
      %3833 = vmatprep.subr.bf16.mxu0 0
      %3834 = vmatpush2.bf16.msra.mxu0 0
      %3835 = vmatprep.subr.bf16.mxu0 0
      %3836 = vmatpush2.bf16.msra.mxu0 0
      %3837 = vmatprep.subr.bf16.mxu0 0
      %3838 = vmatpush2.bf16.msra.mxu0 0
      %3839 = vmatprep.subr.bf16.mxu0 0
      %3840 = vmatpush2.bf16.msra.mxu0 0
      %3841 = vmatprep.subr.bf16.mxu0 0
      %3842 = vmatpush2.bf16.msra.mxu0 0
      %3843 = vmatprep.subr.bf16.mxu0 0
      %3844 = vmatpush2.bf16.msra.mxu0 0
      %3845 = vmatprep.subr.bf16.mxu0 0
      %3846 = vmatpush2.bf16.msra.mxu0 0
      %3847 = vmatprep.subr.bf16.mxu0 0
      %3848 = vmatpush2.bf16.msra.mxu0 0
      %3849 = vmatprep.mubr.bf16.mxu0 0
      %3850 = vmatmul.mubr.bf16.gmra.mxu0 %v3774
      %v3851 = vpop.f32.mrf.mxu0
      %v3852 = vadd.f32 %v3811, %v3851
      %v3853 = vpop.f32.mrf.mxu0
      %v3854 = vadd.f32 %v3813, %v3853
      %v3855 = vpop.f32.mrf.mxu0
      %v3856 = vpop.f32.mrf.mxu0
      %3857 = vdwg.mxu0
      %vm3858 = vcmp.ge.f32.partialorder %v3852, 0.0
      %vm3859 = vcmp.ge.f32.partialorder %v3854, 0.0
      %v3860 = vmul.f32 %v3852, 0.2
      %v3861 = vmul.f32 %v3854, 0.2
      %v3862 = vsel %vm3858, %v3852, %v3860
      %v3863 = vsel %vm3859, %v3854, %v3861
      %3864 = vrot.lane.b32.xlu0 %v3862, 17
      %v3865 = vpop.permute.xlu0 %3864
      %3866 = vrot.lane.b32.xlu0 %v3863, 17
      %v3867 = vpop.permute.xlu0 %3866
      %v3868 = vsel %vm315, %v3865, %v3867
      %v3869 = vsel %vm315, %v3867, %v3865
      %v3870 = vld [vmem:[%s7] sm:$0xff]
      %v3871 = vld [vmem:[%s7 + $0x8] sm:$0xff]
      %v3872 = vmul.f32 %v3869, %v3870
      %v3873 = vmul.f32 %v3868, %v3871
      %v3874 = vpack.c.bf16 %v3872, %v3872
      %v3875 = vpack.c.bf16 %v3873, %v3873
      %v3878 = vunpack.c.l.b16 %v3874
      %v3879 = vunpack.c.l.b16 %v3875
      %v3880 = vpack.c.b16 %v3879, %v3878
      %3882 = vst [vmem:[#allocation2 + $0x120] sm:$0xff] %v3880
      %3883 = vrot.lane.b32.xlu0 %v3862, 16
      %v3884 = vpop.permute.xlu0 %3883
      %3885 = vrot.lane.b32.xlu0 %v3863, 16
      %v3886 = vpop.permute.xlu0 %3885
      %v3887 = vsel %vm335, %v3884, %v3886
      %v3888 = vsel %vm335, %v3886, %v3884
      %v3889 = vld [vmem:[%s338] sm:$0xff]
      %v3890 = vld [vmem:[%s338 + $0x8] sm:$0xff]
      %v3891 = vmul.f32 %v3888, %v3889
      %v3892 = vmul.f32 %v3887, %v3890
      %v3893 = vpack.c.bf16 %v3891, %v3891
      %v3894 = vpack.c.bf16 %v3892, %v3892
      %v3897 = vunpack.c.l.b16 %v3893
      %v3898 = vunpack.c.l.b16 %v3894
      %v3899 = vpack.c.b16 %v3898, %v3897
      %3901 = vst [vmem:[#allocation2 + $0x128] sm:$0xff] %v3899
      %3902 = vrot.lane.b32.xlu0 %v3862, 15
      %v3903 = vpop.permute.xlu0 %3902
      %3904 = vrot.lane.b32.xlu0 %v3863, 15
      %v3905 = vpop.permute.xlu0 %3904
      %v3906 = vsel %vm356, %v3903, %v3905
      %v3907 = vsel %vm356, %v3905, %v3903
      %v3908 = vld [vmem:[%s359] sm:$0xff]
      %v3909 = vld [vmem:[%s359 + $0x8] sm:$0xff]
      %v3910 = vmul.f32 %v3907, %v3908
      %v3911 = vmul.f32 %v3906, %v3909
      %v3912 = vpack.c.bf16 %v3910, %v3910
      %v3913 = vpack.c.bf16 %v3911, %v3911
      %v3916 = vunpack.c.l.b16 %v3912
      %v3917 = vunpack.c.l.b16 %v3913
      %v3918 = vpack.c.b16 %v3917, %v3916
      %3920 = vst [vmem:[#allocation2 + $0x130] sm:$0xff] %v3918
      %3921 = vrot.lane.b32.xlu0 %v3862, 1
      %v3922 = vpop.permute.xlu0 %3921
      %3923 = vrot.lane.b32.xlu0 %v3863, 1
      %v3924 = vpop.permute.xlu0 %3923
      %v3925 = vsel %vm377, %v3922, %v3924
      %v3926 = vsel %vm377, %v3924, %v3922
      %v3927 = vld [vmem:[%s380] sm:$0xff]
      %v3928 = vld [vmem:[%s380 + $0x8] sm:$0xff]
      %v3929 = vmul.f32 %v3926, %v3927
      %v3930 = vmul.f32 %v3925, %v3928
      %v3931 = vpack.c.bf16 %v3929, %v3929
      %v3932 = vpack.c.bf16 %v3930, %v3930
      %v3935 = vunpack.c.l.b16 %v3931
      %v3936 = vunpack.c.l.b16 %v3932
      %v3937 = vpack.c.b16 %v3936, %v3935
      %3939 = vst [vmem:[#allocation2 + $0x138] sm:$0xff] %v3937
      %v3940 = vpack.c.bf16 %v3862, %v3862
      %v3941 = vpack.c.bf16 %v3863, %v3863
      %v3944 = vunpack.c.l.b16 %v3940
      %v3945 = vunpack.c.l.b16 %v3941
      %v3946 = vpack.c.b16 %v3945, %v3944
      %3948 = vst [vmem:[#allocation2 + $0x140] sm:$0xff] %v3946
      %3949 = vrot.lane.b32.xlu0 %v3862, 127
      %v3950 = vpop.permute.xlu0 %3949
      %3951 = vrot.lane.b32.xlu0 %v3863, 127
      %v3952 = vpop.permute.xlu0 %3951
      %v3953 = vsel %vm407, %v3950, %v3952
      %v3954 = vsel %vm407, %v3952, %v3950
      %v3955 = vld [vmem:[%s410] sm:$0xff]
      %v3956 = vld [vmem:[%s410 + $0x8] sm:$0xff]
      %v3957 = vmul.f32 %v3953, %v3955
      %v3958 = vmul.f32 %v3954, %v3956
      %v3959 = vpack.c.bf16 %v3957, %v3957
      %v3960 = vpack.c.bf16 %v3958, %v3958
      %v3963 = vunpack.c.l.b16 %v3959
      %v3964 = vunpack.c.l.b16 %v3960
      %v3965 = vpack.c.b16 %v3964, %v3963
      %3967 = vst [vmem:[#allocation2 + $0x148] sm:$0xff] %v3965
      %3968 = vrot.lane.b32.xlu0 %v3862, 113
      %v3969 = vpop.permute.xlu0 %3968
      %3970 = vrot.lane.b32.xlu0 %v3863, 113
      %v3971 = vpop.permute.xlu0 %3970
      %v3972 = vsel %vm428, %v3969, %v3971
      %v3973 = vsel %vm428, %v3971, %v3969
      %v3974 = vld [vmem:[%s431] sm:$0xff]
      %v3975 = vld [vmem:[%s431 + $0x8] sm:$0xff]
      %v3976 = vmul.f32 %v3972, %v3974
      %v3977 = vmul.f32 %v3973, %v3975
      %v3978 = vpack.c.bf16 %v3976, %v3976
      %v3979 = vpack.c.bf16 %v3977, %v3977
      %v3982 = vunpack.c.l.b16 %v3978
      %v3983 = vunpack.c.l.b16 %v3979
      %v3984 = vpack.c.b16 %v3983, %v3982
      %3986 = vst [vmem:[#allocation2 + $0x150] sm:$0xff] %v3984
      %3987 = vrot.lane.b32.xlu0 %v3862, 112
      %v3988 = vpop.permute.xlu0 %3987
      %3989 = vrot.lane.b32.xlu0 %v3863, 112
      %v3990 = vpop.permute.xlu0 %3989
      %v3991 = vsel %vm449, %v3988, %v3990
      %v3992 = vsel %vm449, %v3990, %v3988
      %v3993 = vld [vmem:[%s452] sm:$0xff]
      %v3994 = vld [vmem:[%s452 + $0x8] sm:$0xff]
      %v3995 = vmul.f32 %v3991, %v3993
      %v3996 = vmul.f32 %v3992, %v3994
      %v3997 = vpack.c.bf16 %v3995, %v3995
      %v3998 = vpack.c.bf16 %v3996, %v3996
      %v4001 = vunpack.c.l.b16 %v3997
      %v4002 = vunpack.c.l.b16 %v3998
      %v4003 = vpack.c.b16 %v4002, %v4001
      %4005 = vst [vmem:[#allocation2 + $0x158] sm:$0xff] %v4003
      %4006 = vrot.lane.b32.xlu0 %v3862, 111
      %v4007 = vpop.permute.xlu0 %4006
      %4008 = vrot.lane.b32.xlu0 %v3863, 111
      %v4009 = vpop.permute.xlu0 %4008
      %v4010 = vsel %vm470, %v4007, %v4009
      %v4011 = vsel %vm470, %v4009, %v4007
      %v4012 = vld [vmem:[%s473] sm:$0xff]
      %v4013 = vld [vmem:[%s473 + $0x8] sm:$0xff]
      %v4014 = vmul.f32 %v4010, %v4012
      %v4015 = vmul.f32 %v4011, %v4013
      %v4016 = vpack.c.bf16 %v4014, %v4014
      %v4017 = vpack.c.bf16 %v4015, %v4015
      %v4020 = vunpack.c.l.b16 %v4016
      %v4021 = vunpack.c.l.b16 %v4017
      %v4022 = vpack.c.b16 %v4021, %v4020
      %4024 = vst [vmem:[#allocation2 + $0x160] sm:$0xff] %v4022
      %s4025 = scalar_lea.vmem %s5, 12
      %v4026 = vld [vmem:[%s4025] sm:$0xff]
      %v4027 = vld [vmem:[%s4025 + $0x8] sm:$0xf]
      %v4028 = vld [vmem:[#allocation2] sm:$0xff]
      %v4029 = vld [vmem:[#allocation2 + $0x8] sm:$0xff]
      %v4030 = vld [vmem:[#allocation2 + $0x10] sm:$0xff]
      %v4031 = vld [vmem:[#allocation2 + $0x18] sm:$0xff]
      %v4032 = vld [vmem:[#allocation2 + $0x20] sm:$0xff]
      %v4033 = vld [vmem:[#allocation2 + $0x28] sm:$0xff]
      %v4034 = vld [vmem:[#allocation2 + $0x30] sm:$0xff]
      %v4035 = vld [vmem:[#allocation2 + $0x38] sm:$0xff]
      %v4036 = vld [vmem:[#allocation2 + $0x40] sm:$0xff]
      %v4037 = vld [vmem:[#allocation2 + $0x48] sm:$0xff]
      %v4038 = vld [vmem:[#allocation2 + $0x50] sm:$0xff]
      %v4039 = vld [vmem:[#allocation2 + $0x58] sm:$0xff]
      %v4040 = vld [vmem:[#allocation2 + $0x60] sm:$0xff]
      %v4041 = vld [vmem:[#allocation2 + $0x68] sm:$0xff]
      %v4042 = vld [vmem:[#allocation2 + $0x70] sm:$0xff]
      %v4043 = vld [vmem:[#allocation2 + $0x78] sm:$0xff]
      %v4044 = vld [vmem:[#allocation2 + $0x80] sm:$0xff]
      %v4045 = vld [vmem:[#allocation2 + $0x88] sm:$0xff]
      %v4046 = vld [vmem:[#allocation2 + $0x90] sm:$0xff]
      %v4047 = vld [vmem:[#allocation2 + $0x98] sm:$0xff]
      %v4048 = vld [vmem:[#allocation2 + $0xa0] sm:$0xff]
      %v4049 = vld [vmem:[#allocation2 + $0xa8] sm:$0xff]
      %v4050 = vld [vmem:[#allocation2 + $0xb0] sm:$0xff]
      %v4051 = vld [vmem:[#allocation2 + $0xb8] sm:$0xff]
      %v4052 = vld [vmem:[#allocation2 + $0xc0] sm:$0xff]
      %v4053 = vld [vmem:[#allocation2 + $0xc8] sm:$0xff]
      %v4054 = vld [vmem:[#allocation2 + $0xd0] sm:$0xff]
      %v4055 = vld [vmem:[#allocation2 + $0xd8] sm:$0xff]
      %v4056 = vld [vmem:[#allocation2 + $0xe0] sm:$0xff]
      %v4057 = vld [vmem:[#allocation2 + $0xe8] sm:$0xff]
      %v4058 = vld [vmem:[#allocation2 + $0xf0] sm:$0xff]
      %v4059 = vld [vmem:[#allocation2 + $0xf8] sm:$0xff]
      %v4060 = vld [vmem:[#allocation2 + $0x100] sm:$0xff]
      %v4061 = vld [vmem:[#allocation2 + $0x108] sm:$0xff]
      %v4062 = vld [vmem:[#allocation2 + $0x110] sm:$0xff]
      %v4063 = vld [vmem:[#allocation2 + $0x118] sm:$0xff]
      %v4064 = vld [vmem:[#allocation2 + $0x120] sm:$0xff]
      %v4065 = vld [vmem:[#allocation2 + $0x128] sm:$0xff]
      %v4066 = vld [vmem:[#allocation2 + $0x130] sm:$0xff]
      %v4067 = vld [vmem:[#allocation2 + $0x138] sm:$0xff]
      %v4068 = vld [vmem:[#allocation2 + $0x140] sm:$0xff]
      %v4069 = vld [vmem:[#allocation2 + $0x148] sm:$0xff]
      %v4070 = vld [vmem:[#allocation2 + $0x150] sm:$0xff]
      %v4071 = vld [vmem:[#allocation2 + $0x158] sm:$0xff]
      %v4072 = vld [vmem:[#allocation2 + $0x160] sm:$0xff]
      %s4073 = scalar_lea.vmem %s6, 72
      %v4074 = vld [vmem:[%s4073] sm:$0xff]
      %4076 = vset.pattern.permute.xlu0 0
      %4077 = vperm.xlu0 %4076, %v4074
      %v4078 = vpop.permute.xlu0 %4077
      %v4082 = vunpack.c.l.b16 %v4026
      %v4083 = vunpack.c.h.b16 %v4026
      %v4084 = vunpack.c.l.b16 %v4027
      %v4085 = vpack.c.b16 %v4082, %v4082
      %v4086 = vpack.c.b16 %v4083, %v4083
      %v4087 = vpack.c.b16 %v4084, %v4084
      %v4135 = vunpack.c.l.b16 %v4028
      %v4136 = vunpack.c.h.b16 %v4028
      %v4137 = vunpack.c.l.b16 %v4029
      %v4138 = vunpack.c.h.b16 %v4029
      %v4139 = vunpack.c.l.b16 %v4030
      %v4140 = vunpack.c.h.b16 %v4030
      %v4141 = vunpack.c.l.b16 %v4031
      %v4142 = vunpack.c.h.b16 %v4031
      %v4143 = vunpack.c.l.b16 %v4032
      %v4144 = vunpack.c.h.b16 %v4032
      %v4145 = vunpack.c.l.b16 %v4033
      %v4146 = vunpack.c.h.b16 %v4033
      %v4147 = vunpack.c.l.b16 %v4034
      %v4148 = vunpack.c.h.b16 %v4034
      %v4149 = vunpack.c.l.b16 %v4035
      %v4150 = vunpack.c.h.b16 %v4035
      %v4151 = vunpack.c.l.b16 %v4036
      %v4152 = vunpack.c.h.b16 %v4036
      %v4153 = vunpack.c.l.b16 %v4037
      %v4154 = vunpack.c.h.b16 %v4037
      %v4155 = vunpack.c.l.b16 %v4038
      %v4156 = vunpack.c.h.b16 %v4038
      %v4157 = vunpack.c.l.b16 %v4039
      %v4158 = vunpack.c.h.b16 %v4039
      %v4159 = vunpack.c.l.b16 %v4040
      %v4160 = vunpack.c.h.b16 %v4040
      %v4161 = vunpack.c.l.b16 %v4041
      %v4162 = vunpack.c.h.b16 %v4041
      %v4163 = vunpack.c.l.b16 %v4042
      %v4164 = vunpack.c.h.b16 %v4042
      %v4165 = vunpack.c.l.b16 %v4043
      %v4166 = vunpack.c.h.b16 %v4043
      %v4167 = vunpack.c.l.b16 %v4044
      %v4168 = vunpack.c.h.b16 %v4044
      %v4169 = vunpack.c.l.b16 %v4045
      %v4170 = vunpack.c.h.b16 %v4045
      %v4171 = vunpack.c.l.b16 %v4046
      %v4172 = vunpack.c.h.b16 %v4046
      %v4173 = vunpack.c.l.b16 %v4047
      %v4174 = vunpack.c.h.b16 %v4047
      %v4175 = vunpack.c.l.b16 %v4048
      %v4176 = vunpack.c.h.b16 %v4048
      %v4177 = vunpack.c.l.b16 %v4049
      %v4178 = vunpack.c.h.b16 %v4049
      %v4179 = vunpack.c.l.b16 %v4050
      %v4180 = vunpack.c.h.b16 %v4050
      %v4181 = vunpack.c.l.b16 %v4051
      %v4182 = vunpack.c.h.b16 %v4051
      %v4183 = vunpack.c.l.b16 %v4052
      %v4184 = vunpack.c.h.b16 %v4052
      %v4185 = vunpack.c.l.b16 %v4053
      %v4186 = vunpack.c.h.b16 %v4053
      %v4187 = vunpack.c.l.b16 %v4054
      %v4188 = vunpack.c.h.b16 %v4054
      %v4189 = vunpack.c.l.b16 %v4055
      %v4190 = vunpack.c.h.b16 %v4055
      %v4191 = vunpack.c.l.b16 %v4056
      %v4192 = vunpack.c.h.b16 %v4056
      %v4193 = vunpack.c.l.b16 %v4057
      %v4194 = vunpack.c.h.b16 %v4057
      %v4195 = vunpack.c.l.b16 %v4058
      %v4196 = vunpack.c.h.b16 %v4058
      %v4197 = vunpack.c.l.b16 %v4059
      %v4198 = vunpack.c.h.b16 %v4059
      %v4199 = vunpack.c.l.b16 %v4060
      %v4200 = vunpack.c.h.b16 %v4060
      %v4201 = vunpack.c.l.b16 %v4061
      %v4202 = vunpack.c.h.b16 %v4061
      %v4203 = vunpack.c.l.b16 %v4062
      %v4204 = vunpack.c.h.b16 %v4062
      %v4205 = vunpack.c.l.b16 %v4063
      %v4206 = vunpack.c.h.b16 %v4063
      %v4207 = vunpack.c.l.b16 %v4064
      %v4208 = vunpack.c.h.b16 %v4064
      %v4209 = vunpack.c.l.b16 %v4065
      %v4210 = vunpack.c.h.b16 %v4065
      %v4211 = vunpack.c.l.b16 %v4066
      %v4212 = vunpack.c.h.b16 %v4066
      %v4213 = vunpack.c.l.b16 %v4067
      %v4214 = vunpack.c.h.b16 %v4067
      %v4215 = vunpack.c.l.b16 %v4068
      %v4216 = vunpack.c.h.b16 %v4068
      %v4217 = vunpack.c.l.b16 %v4069
      %v4218 = vunpack.c.h.b16 %v4069
      %v4219 = vunpack.c.l.b16 %v4070
      %v4220 = vunpack.c.h.b16 %v4070
      %v4221 = vunpack.c.l.b16 %v4071
      %v4222 = vunpack.c.h.b16 %v4071
      %v4223 = vunpack.c.l.b16 %v4072
      %v4224 = vunpack.c.h.b16 %v4072
      %v4225 = vpack.c.b16 %v4137, %v4135
      %v4226 = vpack.c.b16 %v4138, %v4136
      %v4227 = vpack.c.b16 %v4141, %v4139
      %v4228 = vpack.c.b16 %v4142, %v4140
      %v4229 = vpack.c.b16 %v4145, %v4143
      %v4230 = vpack.c.b16 %v4146, %v4144
      %v4231 = vpack.c.b16 %v4149, %v4147
      %v4232 = vpack.c.b16 %v4150, %v4148
      %v4233 = vpack.c.b16 %v4153, %v4151
      %v4234 = vpack.c.b16 %v4154, %v4152
      %v4235 = vpack.c.b16 %v4157, %v4155
      %v4236 = vpack.c.b16 %v4158, %v4156
      %v4237 = vpack.c.b16 %v4161, %v4159
      %v4238 = vpack.c.b16 %v4162, %v4160
      %v4239 = vpack.c.b16 %v4165, %v4163
      %v4240 = vpack.c.b16 %v4166, %v4164
      %v4241 = vpack.c.b16 %v4169, %v4167
      %v4242 = vpack.c.b16 %v4170, %v4168
      %v4243 = vpack.c.b16 %v4173, %v4171
      %v4244 = vpack.c.b16 %v4174, %v4172
      %v4245 = vpack.c.b16 %v4177, %v4175
      %v4246 = vpack.c.b16 %v4178, %v4176
      %v4247 = vpack.c.b16 %v4181, %v4179
      %v4248 = vpack.c.b16 %v4182, %v4180
      %v4249 = vpack.c.b16 %v4185, %v4183
      %v4250 = vpack.c.b16 %v4186, %v4184
      %v4251 = vpack.c.b16 %v4189, %v4187
      %v4252 = vpack.c.b16 %v4190, %v4188
      %v4253 = vpack.c.b16 %v4193, %v4191
      %v4254 = vpack.c.b16 %v4194, %v4192
      %v4255 = vpack.c.b16 %v4197, %v4195
      %v4256 = vpack.c.b16 %v4198, %v4196
      %v4257 = vpack.c.b16 %v4201, %v4199
      %v4258 = vpack.c.b16 %v4202, %v4200
      %v4259 = vpack.c.b16 %v4205, %v4203
      %v4260 = vpack.c.b16 %v4206, %v4204
      %v4261 = vpack.c.b16 %v4209, %v4207
      %v4262 = vpack.c.b16 %v4210, %v4208
      %v4263 = vpack.c.b16 %v4213, %v4211
      %v4264 = vpack.c.b16 %v4214, %v4212
      %v4265 = vpack.c.b16 %v4217, %v4215
      %v4266 = vpack.c.b16 %v4218, %v4216
      %v4267 = vpack.c.b16 %v4221, %v4219
      %v4268 = vpack.c.b16 %v4222, %v4220
      %v4269 = vpack.c.b16 %v4223, %v4223
      %v4270 = vpack.c.b16 %v4224, %v4224
      %v4316 = vsel %vm2272, %v4087, 0
      %v4319 = vsel %vm552, %v4269, 0
      %v4322 = vsel %vm552, %v4270, 0
      %4324 = vmatprep.subr.bf16.mxu0 %v4240
      %4325 = vmatpush1.bf16.msra.mxu0 %v4239
      %4326 = vmatprep.subr.bf16.mxu0 %v4238
      %4327 = vmatpush1.bf16.msra.mxu0 %v4237
      %4328 = vmatprep.subr.bf16.mxu0 %v4236
      %4329 = vmatpush1.bf16.msra.mxu0 %v4235
      %4330 = vmatprep.subr.bf16.mxu0 %v4234
      %4331 = vmatpush1.bf16.msra.mxu0 %v4233
      %4332 = vmatprep.subr.bf16.mxu0 %v4232
      %4333 = vmatpush1.bf16.msra.mxu0 %v4231
      %4334 = vmatprep.subr.bf16.mxu0 %v4230
      %4335 = vmatpush1.bf16.msra.mxu0 %v4229
      %4336 = vmatprep.subr.bf16.mxu0 %v4228
      %4337 = vmatpush1.bf16.msra.mxu0 %v4227
      %4338 = vmatprep.subr.bf16.mxu0 %v4226
      %4339 = vmatpush1.bf16.msra.mxu0 %v4225
      %4340 = vmatprep.subr.bf16.mxu0 %v4256
      %4341 = vmatpush2.bf16.msra.mxu0 %v4255
      %4342 = vmatprep.subr.bf16.mxu0 %v4254
      %4343 = vmatpush2.bf16.msra.mxu0 %v4253
      %4344 = vmatprep.subr.bf16.mxu0 %v4252
      %4345 = vmatpush2.bf16.msra.mxu0 %v4251
      %4346 = vmatprep.subr.bf16.mxu0 %v4250
      %4347 = vmatpush2.bf16.msra.mxu0 %v4249
      %4348 = vmatprep.subr.bf16.mxu0 %v4248
      %4349 = vmatpush2.bf16.msra.mxu0 %v4247
      %4350 = vmatprep.subr.bf16.mxu0 %v4246
      %4351 = vmatpush2.bf16.msra.mxu0 %v4245
      %4352 = vmatprep.subr.bf16.mxu0 %v4244
      %4353 = vmatpush2.bf16.msra.mxu0 %v4243
      %4354 = vmatprep.subr.bf16.mxu0 %v4242
      %4355 = vmatpush2.bf16.msra.mxu0 %v4241
      %4356 = vmatprep.mubr.bf16.mxu0 %v4086
      %4357 = vmatmul.mubr.bf16.gmra.mxu0 %v4085
      %v4358 = vpop.f32.mrf.mxu0
      %v4359 = vadd.f32 %v4078, %v4358
      %v4360 = vpop.f32.mrf.mxu0
      %v4361 = vadd.f32 %v4078, %v4360
      %v4362 = vpop.f32.mrf.mxu0
      %v4363 = vpop.f32.mrf.mxu0
      %4364 = vdwg.mxu0
      %4365 = vmatprep.subr.bf16.mxu0 0
      %4366 = vmatpush1.bf16.msra.mxu0 0
      %4367 = vmatprep.subr.bf16.mxu0 %v4322
      %4368 = vmatpush1.bf16.msra.mxu0 %v4319
      %4369 = vmatprep.subr.bf16.mxu0 %v4268
      %4370 = vmatpush1.bf16.msra.mxu0 %v4267
      %4371 = vmatprep.subr.bf16.mxu0 %v4266
      %4372 = vmatpush1.bf16.msra.mxu0 %v4265
      %4373 = vmatprep.subr.bf16.mxu0 %v4264
      %4374 = vmatpush1.bf16.msra.mxu0 %v4263
      %4375 = vmatprep.subr.bf16.mxu0 %v4262
      %4376 = vmatpush1.bf16.msra.mxu0 %v4261
      %4377 = vmatprep.subr.bf16.mxu0 %v4260
      %4378 = vmatpush1.bf16.msra.mxu0 %v4259
      %4379 = vmatprep.subr.bf16.mxu0 %v4258
      %4380 = vmatpush1.bf16.msra.mxu0 %v4257
      %4381 = vmatprep.subr.bf16.mxu0 0
      %4382 = vmatpush2.bf16.msra.mxu0 0
      %4383 = vmatprep.subr.bf16.mxu0 0
      %4384 = vmatpush2.bf16.msra.mxu0 0
      %4385 = vmatprep.subr.bf16.mxu0 0
      %4386 = vmatpush2.bf16.msra.mxu0 0
      %4387 = vmatprep.subr.bf16.mxu0 0
      %4388 = vmatpush2.bf16.msra.mxu0 0
      %4389 = vmatprep.subr.bf16.mxu0 0
      %4390 = vmatpush2.bf16.msra.mxu0 0
      %4391 = vmatprep.subr.bf16.mxu0 0
      %4392 = vmatpush2.bf16.msra.mxu0 0
      %4393 = vmatprep.subr.bf16.mxu0 0
      %4394 = vmatpush2.bf16.msra.mxu0 0
      %4395 = vmatprep.subr.bf16.mxu0 0
      %4396 = vmatpush2.bf16.msra.mxu0 0
      %4397 = vmatprep.mubr.bf16.mxu0 0
      %4398 = vmatmul.mubr.bf16.gmra.mxu0 %v4316
      %v4399 = vpop.f32.mrf.mxu0
      %v4400 = vadd.f32 %v4359, %v4399
      %v4401 = vpop.f32.mrf.mxu0
      %v4402 = vadd.f32 %v4361, %v4401
      %v4403 = vpop.f32.mrf.mxu0
      %v4404 = vpop.f32.mrf.mxu0
      %4405 = vdwg.mxu0
      %v4406 = vmul.f32 %v4400, 0.2
      %v4407 = vmul.f32 %v4402, 0.2
      %v4408 = vadd.f32 %v4406, %v2366
      %v4409 = vadd.f32 %v4407, %v2367
      %4410 = vrot.lane.b32.xlu0 %v4408, 17
      %v4411 = vpop.permute.xlu0 %4410
      %4412 = vrot.lane.b32.xlu0 %v4409, 17
      %v4413 = vpop.permute.xlu0 %4412
      %v4414 = vsel %vm315, %v4411, %v4413
      %v4415 = vsel %vm315, %v4413, %v4411
      %v4416 = vld [vmem:[%s7] sm:$0xff]
      %v4417 = vld [vmem:[%s7 + $0x8] sm:$0xff]
      %v4418 = vmul.f32 %v4415, %v4416
      %v4419 = vmul.f32 %v4414, %v4417
      %v4420 = vpack.c.bf16 %v4418, %v4418
      %v4421 = vpack.c.bf16 %v4419, %v4419
      %v4424 = vunpack.c.l.b16 %v4420
      %v4425 = vunpack.c.l.b16 %v4421
      %v4426 = vpack.c.b16 %v4425, %v4424
      %4428 = vst [vmem:[#allocation2] sm:$0xff] %v4426
      %4429 = vrot.lane.b32.xlu0 %v4408, 16
      %v4430 = vpop.permute.xlu0 %4429
      %4431 = vrot.lane.b32.xlu0 %v4409, 16
      %v4432 = vpop.permute.xlu0 %4431
      %v4433 = vsel %vm335, %v4430, %v4432
      %v4434 = vsel %vm335, %v4432, %v4430
      %v4435 = vld [vmem:[%s338] sm:$0xff]
      %v4436 = vld [vmem:[%s338 + $0x8] sm:$0xff]
      %v4437 = vmul.f32 %v4434, %v4435
      %v4438 = vmul.f32 %v4433, %v4436
      %v4439 = vpack.c.bf16 %v4437, %v4437
      %v4440 = vpack.c.bf16 %v4438, %v4438
      %v4443 = vunpack.c.l.b16 %v4439
      %v4444 = vunpack.c.l.b16 %v4440
      %v4445 = vpack.c.b16 %v4444, %v4443
      %4447 = vst [vmem:[#allocation2 + $0x8] sm:$0xff] %v4445
      %4448 = vrot.lane.b32.xlu0 %v4408, 15
      %v4449 = vpop.permute.xlu0 %4448
      %4450 = vrot.lane.b32.xlu0 %v4409, 15
      %v4451 = vpop.permute.xlu0 %4450
      %v4452 = vsel %vm356, %v4449, %v4451
      %v4453 = vsel %vm356, %v4451, %v4449
      %v4454 = vld [vmem:[%s359] sm:$0xff]
      %v4455 = vld [vmem:[%s359 + $0x8] sm:$0xff]
      %v4456 = vmul.f32 %v4453, %v4454
      %v4457 = vmul.f32 %v4452, %v4455
      %v4458 = vpack.c.bf16 %v4456, %v4456
      %v4459 = vpack.c.bf16 %v4457, %v4457
      %v4462 = vunpack.c.l.b16 %v4458
      %v4463 = vunpack.c.l.b16 %v4459
      %v4464 = vpack.c.b16 %v4463, %v4462
      %4466 = vst [vmem:[#allocation2 + $0x10] sm:$0xff] %v4464
      %4467 = vrot.lane.b32.xlu0 %v4408, 1
      %v4468 = vpop.permute.xlu0 %4467
      %4469 = vrot.lane.b32.xlu0 %v4409, 1
      %v4470 = vpop.permute.xlu0 %4469
      %v4471 = vsel %vm377, %v4468, %v4470
      %v4472 = vsel %vm377, %v4470, %v4468
      %v4473 = vld [vmem:[%s380] sm:$0xff]
      %v4474 = vld [vmem:[%s380 + $0x8] sm:$0xff]
      %v4475 = vmul.f32 %v4472, %v4473
      %v4476 = vmul.f32 %v4471, %v4474
      %v4477 = vpack.c.bf16 %v4475, %v4475
      %v4478 = vpack.c.bf16 %v4476, %v4476
      %v4481 = vunpack.c.l.b16 %v4477
      %v4482 = vunpack.c.l.b16 %v4478
      %v4483 = vpack.c.b16 %v4482, %v4481
      %4485 = vst [vmem:[#allocation2 + $0x18] sm:$0xff] %v4483
      %v4486 = vpack.c.bf16 %v4408, %v4408
      %v4487 = vpack.c.bf16 %v4409, %v4409
      %v4490 = vunpack.c.l.b16 %v4486
      %v4491 = vunpack.c.l.b16 %v4487
      %v4492 = vpack.c.b16 %v4491, %v4490
      %4494 = vst [vmem:[#allocation2 + $0x20] sm:$0xff] %v4492
      %4495 = vrot.lane.b32.xlu0 %v4408, 127
      %v4496 = vpop.permute.xlu0 %4495
      %4497 = vrot.lane.b32.xlu0 %v4409, 127
      %v4498 = vpop.permute.xlu0 %4497
      %v4499 = vsel %vm407, %v4496, %v4498
      %v4500 = vsel %vm407, %v4498, %v4496
      %v4501 = vld [vmem:[%s410] sm:$0xff]
      %v4502 = vld [vmem:[%s410 + $0x8] sm:$0xff]
      %v4503 = vmul.f32 %v4499, %v4501
      %v4504 = vmul.f32 %v4500, %v4502
      %v4505 = vpack.c.bf16 %v4503, %v4503
      %v4506 = vpack.c.bf16 %v4504, %v4504
      %v4509 = vunpack.c.l.b16 %v4505
      %v4510 = vunpack.c.l.b16 %v4506
      %v4511 = vpack.c.b16 %v4510, %v4509
      %4513 = vst [vmem:[#allocation2 + $0x28] sm:$0xff] %v4511
      %4514 = vrot.lane.b32.xlu0 %v4408, 113
      %v4515 = vpop.permute.xlu0 %4514
      %4516 = vrot.lane.b32.xlu0 %v4409, 113
      %v4517 = vpop.permute.xlu0 %4516
      %v4518 = vsel %vm428, %v4515, %v4517
      %v4519 = vsel %vm428, %v4517, %v4515
      %v4520 = vld [vmem:[%s431] sm:$0xff]
      %v4521 = vld [vmem:[%s431 + $0x8] sm:$0xff]
      %v4522 = vmul.f32 %v4518, %v4520
      %v4523 = vmul.f32 %v4519, %v4521
      %v4524 = vpack.c.bf16 %v4522, %v4522
      %v4525 = vpack.c.bf16 %v4523, %v4523
      %v4528 = vunpack.c.l.b16 %v4524
      %v4529 = vunpack.c.l.b16 %v4525
      %v4530 = vpack.c.b16 %v4529, %v4528
      %4532 = vst [vmem:[#allocation2 + $0x30] sm:$0xff] %v4530
      %4533 = vrot.lane.b32.xlu0 %v4408, 112
      %v4534 = vpop.permute.xlu0 %4533
      %4535 = vrot.lane.b32.xlu0 %v4409, 112
      %v4536 = vpop.permute.xlu0 %4535
      %v4537 = vsel %vm449, %v4534, %v4536
      %v4538 = vsel %vm449, %v4536, %v4534
      %v4539 = vld [vmem:[%s452] sm:$0xff]
      %v4540 = vld [vmem:[%s452 + $0x8] sm:$0xff]
      %v4541 = vmul.f32 %v4537, %v4539
      %v4542 = vmul.f32 %v4538, %v4540
      %v4543 = vpack.c.bf16 %v4541, %v4541
      %v4544 = vpack.c.bf16 %v4542, %v4542
      %v4547 = vunpack.c.l.b16 %v4543
      %v4548 = vunpack.c.l.b16 %v4544
      %v4549 = vpack.c.b16 %v4548, %v4547
      %4551 = vst [vmem:[#allocation2 + $0x38] sm:$0xff] %v4549
      %4552 = vrot.lane.b32.xlu0 %v4408, 111
      %v4553 = vpop.permute.xlu0 %4552
      %4554 = vrot.lane.b32.xlu0 %v4409, 111
      %v4555 = vpop.permute.xlu0 %4554
      %v4556 = vsel %vm470, %v4553, %v4555
      %v4557 = vsel %vm470, %v4555, %v4553
      %v4558 = vld [vmem:[%s473] sm:$0xff]
      %v4559 = vld [vmem:[%s473 + $0x8] sm:$0xff]
      %v4560 = vmul.f32 %v4556, %v4558
      %v4561 = vmul.f32 %v4557, %v4559
      %v4562 = vpack.c.bf16 %v4560, %v4560
      %v4563 = vpack.c.bf16 %v4561, %v4561
      %v4566 = vunpack.c.l.b16 %v4562
      %v4567 = vunpack.c.l.b16 %v4563
      %v4568 = vpack.c.b16 %v4567, %v4566
      %4570 = vst [vmem:[#allocation2 + $0x40] sm:$0xff] %v4568
      %s4571 = scalar_lea.vmem %s1, 8
      %v4572 = vld [vmem:[%s4571] sm:$0xf]
      %v4573 = vld [vmem:[#allocation2] sm:$0xff]
      %v4574 = vld [vmem:[#allocation2 + $0x8] sm:$0xff]
      %v4575 = vld [vmem:[#allocation2 + $0x10] sm:$0xff]
      %v4576 = vld [vmem:[#allocation2 + $0x18] sm:$0xff]
      %v4577 = vld [vmem:[#allocation2 + $0x20] sm:$0xff]
      %v4578 = vld [vmem:[#allocation2 + $0x28] sm:$0xff]
      %v4579 = vld [vmem:[#allocation2 + $0x30] sm:$0xff]
      %v4580 = vld [vmem:[#allocation2 + $0x38] sm:$0xff]
      %v4581 = vld [vmem:[#allocation2 + $0x40] sm:$0xff]
      %s4582 = scalar_lea.vmem %s6, 80
      %v4583 = vld [vmem:[%s4582] sm:$0xff]
      %4585 = vset.pattern.permute.xlu0 0
      %4586 = vperm.xlu0 %4585, %v4583
      %v4587 = vpop.permute.xlu0 %4586
      %v4598 = vunpack.c.l.b16 %v4573
      %v4599 = vunpack.c.h.b16 %v4573
      %v4600 = vunpack.c.l.b16 %v4574
      %v4601 = vunpack.c.h.b16 %v4574
      %v4602 = vunpack.c.l.b16 %v4575
      %v4603 = vunpack.c.h.b16 %v4575
      %v4604 = vunpack.c.l.b16 %v4576
      %v4605 = vunpack.c.h.b16 %v4576
      %v4606 = vunpack.c.l.b16 %v4577
      %v4607 = vunpack.c.h.b16 %v4577
      %v4608 = vunpack.c.l.b16 %v4578
      %v4609 = vunpack.c.h.b16 %v4578
      %v4610 = vunpack.c.l.b16 %v4579
      %v4611 = vunpack.c.h.b16 %v4579
      %v4612 = vunpack.c.l.b16 %v4580
      %v4613 = vunpack.c.h.b16 %v4580
      %v4614 = vunpack.c.l.b16 %v4581
      %v4615 = vunpack.c.h.b16 %v4581
      %v4616 = vpack.c.b16 %v4600, %v4598
      %v4617 = vpack.c.b16 %v4601, %v4599
      %v4618 = vpack.c.b16 %v4604, %v4602
      %v4619 = vpack.c.b16 %v4605, %v4603
      %v4620 = vpack.c.b16 %v4608, %v4606
      %v4621 = vpack.c.b16 %v4609, %v4607
      %v4622 = vpack.c.b16 %v4612, %v4610
      %v4623 = vpack.c.b16 %v4613, %v4611
      %v4624 = vpack.c.b16 %v4614, %v4614
      %v4625 = vpack.c.b16 %v4615, %v4615
      %v4635 = vsel %vm548, %v4572, 0
      %v4638 = vsel %vm552, %v4624, 0
      %v4641 = vsel %vm552, %v4625, 0
      %4643 = vmatprep.subr.bf16.mxu0 0
      %4644 = vmatpush1.bf16.msra.mxu0 0
      %4645 = vmatprep.subr.bf16.mxu0 0
      %4646 = vmatpush1.bf16.msra.mxu0 0
      %4647 = vmatprep.subr.bf16.mxu0 0
      %4648 = vmatpush1.bf16.msra.mxu0 0
      %4649 = vmatprep.subr.bf16.mxu0 %v4641
      %4650 = vmatpush1.bf16.msra.mxu0 %v4638
      %4651 = vmatprep.subr.bf16.mxu0 %v4623
      %4652 = vmatpush1.bf16.msra.mxu0 %v4622
      %4653 = vmatprep.subr.bf16.mxu0 %v4621
      %4654 = vmatpush1.bf16.msra.mxu0 %v4620
      %4655 = vmatprep.subr.bf16.mxu0 %v4619
      %4656 = vmatpush1.bf16.msra.mxu0 %v4618
      %4657 = vmatprep.subr.bf16.mxu0 %v4617
      %4658 = vmatpush1.bf16.msra.mxu0 %v4616
      %4659 = vmatprep.subr.bf16.mxu0 0
      %4660 = vmatpush2.bf16.msra.mxu0 0
      %4661 = vmatprep.subr.bf16.mxu0 0
      %4662 = vmatpush2.bf16.msra.mxu0 0
      %4663 = vmatprep.subr.bf16.mxu0 0
      %4664 = vmatpush2.bf16.msra.mxu0 0
      %4665 = vmatprep.subr.bf16.mxu0 0
      %4666 = vmatpush2.bf16.msra.mxu0 0
      %4667 = vmatprep.subr.bf16.mxu0 0
      %4668 = vmatpush2.bf16.msra.mxu0 0
      %4669 = vmatprep.subr.bf16.mxu0 0
      %4670 = vmatpush2.bf16.msra.mxu0 0
      %4671 = vmatprep.subr.bf16.mxu0 0
      %4672 = vmatpush2.bf16.msra.mxu0 0
      %4673 = vmatprep.subr.bf16.mxu0 0
      %4674 = vmatpush2.bf16.msra.mxu0 0
      %4675 = vmatprep.mubr.bf16.mxu0 0
      %4676 = vmatmul.mubr.bf16.gmra.mxu0 %v4635
      %v4677 = vpop.f32.mrf.mxu0
      %v4678 = vadd.f32 %v4587, %v4677
      %v4679 = vpop.f32.mrf.mxu0
      %v4680 = vadd.f32 %v4587, %v4679
      %v4681 = vpop.f32.mrf.mxu0
      %v4682 = vpop.f32.mrf.mxu0
      %4683 = vdwg.mxu0
      %vm4684 = vcmp.ge.f32.partialorder %v4678, 0.0
      %vm4685 = vcmp.ge.f32.partialorder %v4680, 0.0
      %v4686 = vmul.f32 %v4678, 0.2
      %v4687 = vmul.f32 %v4680, 0.2
      %v4688 = vsel %vm4684, %v4678, %v4686
      %v4689 = vsel %vm4685, %v4680, %v4687
      %4690 = vrot.lane.b32.xlu0 %v4688, 17
      %v4691 = vpop.permute.xlu0 %4690
      %4692 = vrot.lane.b32.xlu0 %v4689, 17
      %v4693 = vpop.permute.xlu0 %4692
      %v4694 = vsel %vm315, %v4691, %v4693
      %v4695 = vsel %vm315, %v4693, %v4691
      %v4696 = vld [vmem:[%s7] sm:$0xff]
      %v4697 = vld [vmem:[%s7 + $0x8] sm:$0xff]
      %v4698 = vmul.f32 %v4695, %v4696
      %v4699 = vmul.f32 %v4694, %v4697
      %v4700 = vpack.c.bf16 %v4698, %v4698
      %v4701 = vpack.c.bf16 %v4699, %v4699
      %v4704 = vunpack.c.l.b16 %v4700
      %v4705 = vunpack.c.l.b16 %v4701
      %v4706 = vpack.c.b16 %v4705, %v4704
      %4708 = vst [vmem:[#allocation2 + $0x48] sm:$0xff] %v4706
      %4709 = vrot.lane.b32.xlu0 %v4688, 16
      %v4710 = vpop.permute.xlu0 %4709
      %4711 = vrot.lane.b32.xlu0 %v4689, 16
      %v4712 = vpop.permute.xlu0 %4711
      %v4713 = vsel %vm335, %v4710, %v4712
      %v4714 = vsel %vm335, %v4712, %v4710
      %v4715 = vld [vmem:[%s338] sm:$0xff]
      %v4716 = vld [vmem:[%s338 + $0x8] sm:$0xff]
      %v4717 = vmul.f32 %v4714, %v4715
      %v4718 = vmul.f32 %v4713, %v4716
      %v4719 = vpack.c.bf16 %v4717, %v4717
      %v4720 = vpack.c.bf16 %v4718, %v4718
      %v4723 = vunpack.c.l.b16 %v4719
      %v4724 = vunpack.c.l.b16 %v4720
      %v4725 = vpack.c.b16 %v4724, %v4723
      %4727 = vst [vmem:[#allocation2 + $0x50] sm:$0xff] %v4725
      %4728 = vrot.lane.b32.xlu0 %v4688, 15
      %v4729 = vpop.permute.xlu0 %4728
      %4730 = vrot.lane.b32.xlu0 %v4689, 15
      %v4731 = vpop.permute.xlu0 %4730
      %v4732 = vsel %vm356, %v4729, %v4731
      %v4733 = vsel %vm356, %v4731, %v4729
      %v4734 = vld [vmem:[%s359] sm:$0xff]
      %v4735 = vld [vmem:[%s359 + $0x8] sm:$0xff]
      %v4736 = vmul.f32 %v4733, %v4734
      %v4737 = vmul.f32 %v4732, %v4735
      %v4738 = vpack.c.bf16 %v4736, %v4736
      %v4739 = vpack.c.bf16 %v4737, %v4737
      %v4742 = vunpack.c.l.b16 %v4738
      %v4743 = vunpack.c.l.b16 %v4739
      %v4744 = vpack.c.b16 %v4743, %v4742
      %4746 = vst [vmem:[#allocation2 + $0x58] sm:$0xff] %v4744
      %4747 = vrot.lane.b32.xlu0 %v4688, 1
      %v4748 = vpop.permute.xlu0 %4747
      %4749 = vrot.lane.b32.xlu0 %v4689, 1
      %v4750 = vpop.permute.xlu0 %4749
      %v4751 = vsel %vm377, %v4748, %v4750
      %v4752 = vsel %vm377, %v4750, %v4748
      %v4753 = vld [vmem:[%s380] sm:$0xff]
      %v4754 = vld [vmem:[%s380 + $0x8] sm:$0xff]
      %v4755 = vmul.f32 %v4752, %v4753
      %v4756 = vmul.f32 %v4751, %v4754
      %v4757 = vpack.c.bf16 %v4755, %v4755
      %v4758 = vpack.c.bf16 %v4756, %v4756
      %v4761 = vunpack.c.l.b16 %v4757
      %v4762 = vunpack.c.l.b16 %v4758
      %v4763 = vpack.c.b16 %v4762, %v4761
      %4765 = vst [vmem:[#allocation2 + $0x60] sm:$0xff] %v4763
      %v4766 = vpack.c.bf16 %v4688, %v4688
      %v4767 = vpack.c.bf16 %v4689, %v4689
      %v4770 = vunpack.c.l.b16 %v4766
      %v4771 = vunpack.c.l.b16 %v4767
      %v4772 = vpack.c.b16 %v4771, %v4770
      %4774 = vst [vmem:[#allocation2 + $0x68] sm:$0xff] %v4772
      %4775 = vrot.lane.b32.xlu0 %v4688, 127
      %v4776 = vpop.permute.xlu0 %4775
      %4777 = vrot.lane.b32.xlu0 %v4689, 127
      %v4778 = vpop.permute.xlu0 %4777
      %v4779 = vsel %vm407, %v4776, %v4778
      %v4780 = vsel %vm407, %v4778, %v4776
      %v4781 = vld [vmem:[%s410] sm:$0xff]
      %v4782 = vld [vmem:[%s410 + $0x8] sm:$0xff]
      %v4783 = vmul.f32 %v4779, %v4781
      %v4784 = vmul.f32 %v4780, %v4782
      %v4785 = vpack.c.bf16 %v4783, %v4783
      %v4786 = vpack.c.bf16 %v4784, %v4784
      %v4789 = vunpack.c.l.b16 %v4785
      %v4790 = vunpack.c.l.b16 %v4786
      %v4791 = vpack.c.b16 %v4790, %v4789
      %4793 = vst [vmem:[#allocation2 + $0x70] sm:$0xff] %v4791
      %4794 = vrot.lane.b32.xlu0 %v4688, 113
      %v4795 = vpop.permute.xlu0 %4794
      %4796 = vrot.lane.b32.xlu0 %v4689, 113
      %v4797 = vpop.permute.xlu0 %4796
      %v4798 = vsel %vm428, %v4795, %v4797
      %v4799 = vsel %vm428, %v4797, %v4795
      %v4800 = vld [vmem:[%s431] sm:$0xff]
      %v4801 = vld [vmem:[%s431 + $0x8] sm:$0xff]
      %v4802 = vmul.f32 %v4798, %v4800
      %v4803 = vmul.f32 %v4799, %v4801
      %v4804 = vpack.c.bf16 %v4802, %v4802
      %v4805 = vpack.c.bf16 %v4803, %v4803
      %v4808 = vunpack.c.l.b16 %v4804
      %v4809 = vunpack.c.l.b16 %v4805
      %v4810 = vpack.c.b16 %v4809, %v4808
      %4812 = vst [vmem:[#allocation2 + $0x78] sm:$0xff] %v4810
      %4813 = vrot.lane.b32.xlu0 %v4688, 112
      %v4814 = vpop.permute.xlu0 %4813
      %4815 = vrot.lane.b32.xlu0 %v4689, 112
      %v4816 = vpop.permute.xlu0 %4815
      %v4817 = vsel %vm449, %v4814, %v4816
      %v4818 = vsel %vm449, %v4816, %v4814
      %v4819 = vld [vmem:[%s452] sm:$0xff]
      %v4820 = vld [vmem:[%s452 + $0x8] sm:$0xff]
      %v4821 = vmul.f32 %v4817, %v4819
      %v4822 = vmul.f32 %v4818, %v4820
      %v4823 = vpack.c.bf16 %v4821, %v4821
      %v4824 = vpack.c.bf16 %v4822, %v4822
      %v4827 = vunpack.c.l.b16 %v4823
      %v4828 = vunpack.c.l.b16 %v4824
      %v4829 = vpack.c.b16 %v4828, %v4827
      %4831 = vst [vmem:[#allocation2 + $0x80] sm:$0xff] %v4829
      %4832 = vrot.lane.b32.xlu0 %v4688, 111
      %v4833 = vpop.permute.xlu0 %4832
      %4834 = vrot.lane.b32.xlu0 %v4689, 111
      %v4835 = vpop.permute.xlu0 %4834
      %v4836 = vsel %vm470, %v4833, %v4835
      %v4837 = vsel %vm470, %v4835, %v4833
      %v4838 = vld [vmem:[%s473] sm:$0xff]
      %v4839 = vld [vmem:[%s473 + $0x8] sm:$0xff]
      %v4840 = vmul.f32 %v4836, %v4838
      %v4841 = vmul.f32 %v4837, %v4839
      %v4842 = vpack.c.bf16 %v4840, %v4840
      %v4843 = vpack.c.bf16 %v4841, %v4841
      %v4846 = vunpack.c.l.b16 %v4842
      %v4847 = vunpack.c.l.b16 %v4843
      %v4848 = vpack.c.b16 %v4847, %v4846
      %4850 = vst [vmem:[#allocation2 + $0x88] sm:$0xff] %v4848
      %s4851 = scalar_lea.vmem %s2, 16
      %v4852 = vld [vmem:[%s4851] sm:$0xff]
      %v4853 = vld [vmem:[#allocation2] sm:$0xff]
      %v4854 = vld [vmem:[#allocation2 + $0x8] sm:$0xff]
      %v4855 = vld [vmem:[#allocation2 + $0x10] sm:$0xff]
      %v4856 = vld [vmem:[#allocation2 + $0x18] sm:$0xff]
      %v4857 = vld [vmem:[#allocation2 + $0x20] sm:$0xff]
      %v4858 = vld [vmem:[#allocation2 + $0x28] sm:$0xff]
      %v4859 = vld [vmem:[#allocation2 + $0x30] sm:$0xff]
      %v4860 = vld [vmem:[#allocation2 + $0x38] sm:$0xff]
      %v4861 = vld [vmem:[#allocation2 + $0x40] sm:$0xff]
      %v4862 = vld [vmem:[#allocation2 + $0x48] sm:$0xff]
      %v4863 = vld [vmem:[#allocation2 + $0x50] sm:$0xff]
      %v4864 = vld [vmem:[#allocation2 + $0x58] sm:$0xff]
      %v4865 = vld [vmem:[#allocation2 + $0x60] sm:$0xff]
      %v4866 = vld [vmem:[#allocation2 + $0x68] sm:$0xff]
      %v4867 = vld [vmem:[#allocation2 + $0x70] sm:$0xff]
      %v4868 = vld [vmem:[#allocation2 + $0x78] sm:$0xff]
      %v4869 = vld [vmem:[#allocation2 + $0x80] sm:$0xff]
      %v4870 = vld [vmem:[#allocation2 + $0x88] sm:$0xff]
      %s4871 = scalar_lea.vmem %s6, 88
      %v4872 = vld [vmem:[%s4871] sm:$0xff]
      %4874 = vset.pattern.permute.xlu0 0
      %4875 = vperm.xlu0 %4874, %v4872
      %v4876 = vpop.permute.xlu0 %4875
      %v4879 = vunpack.c.l.b16 %v4852
      %v4880 = vunpack.c.h.b16 %v4852
      %v4881 = vpack.c.b16 %v4879, %v4879
      %v4882 = vpack.c.b16 %v4880, %v4880
      %v4902 = vunpack.c.l.b16 %v4853
      %v4903 = vunpack.c.h.b16 %v4853
      %v4904 = vunpack.c.l.b16 %v4854
      %v4905 = vunpack.c.h.b16 %v4854
      %v4906 = vunpack.c.l.b16 %v4855
      %v4907 = vunpack.c.h.b16 %v4855
      %v4908 = vunpack.c.l.b16 %v4856
      %v4909 = vunpack.c.h.b16 %v4856
      %v4910 = vunpack.c.l.b16 %v4857
      %v4911 = vunpack.c.h.b16 %v4857
      %v4912 = vunpack.c.l.b16 %v4858
      %v4913 = vunpack.c.h.b16 %v4858
      %v4914 = vunpack.c.l.b16 %v4859
      %v4915 = vunpack.c.h.b16 %v4859
      %v4916 = vunpack.c.l.b16 %v4860
      %v4917 = vunpack.c.h.b16 %v4860
      %v4918 = vunpack.c.l.b16 %v4861
      %v4919 = vunpack.c.h.b16 %v4861
      %v4920 = vunpack.c.l.b16 %v4862
      %v4921 = vunpack.c.h.b16 %v4862
      %v4922 = vunpack.c.l.b16 %v4863
      %v4923 = vunpack.c.h.b16 %v4863
      %v4924 = vunpack.c.l.b16 %v4864
      %v4925 = vunpack.c.h.b16 %v4864
      %v4926 = vunpack.c.l.b16 %v4865
      %v4927 = vunpack.c.h.b16 %v4865
      %v4928 = vunpack.c.l.b16 %v4866
      %v4929 = vunpack.c.h.b16 %v4866
      %v4930 = vunpack.c.l.b16 %v4867
      %v4931 = vunpack.c.h.b16 %v4867
      %v4932 = vunpack.c.l.b16 %v4868
      %v4933 = vunpack.c.h.b16 %v4868
      %v4934 = vunpack.c.l.b16 %v4869
      %v4935 = vunpack.c.h.b16 %v4869
      %v4936 = vunpack.c.l.b16 %v4870
      %v4937 = vunpack.c.h.b16 %v4870
      %v4938 = vpack.c.b16 %v4904, %v4902
      %v4939 = vpack.c.b16 %v4905, %v4903
      %v4940 = vpack.c.b16 %v4908, %v4906
      %v4941 = vpack.c.b16 %v4909, %v4907
      %v4942 = vpack.c.b16 %v4912, %v4910
      %v4943 = vpack.c.b16 %v4913, %v4911
      %v4944 = vpack.c.b16 %v4916, %v4914
      %v4945 = vpack.c.b16 %v4917, %v4915
      %v4946 = vpack.c.b16 %v4920, %v4918
      %v4947 = vpack.c.b16 %v4921, %v4919
      %v4948 = vpack.c.b16 %v4924, %v4922
      %v4949 = vpack.c.b16 %v4925, %v4923
      %v4950 = vpack.c.b16 %v4928, %v4926
      %v4951 = vpack.c.b16 %v4929, %v4927
      %v4952 = vpack.c.b16 %v4932, %v4930
      %v4953 = vpack.c.b16 %v4933, %v4931
      %v4954 = vpack.c.b16 %v4936, %v4934
      %v4955 = vpack.c.b16 %v4937, %v4935
      %v4975 = vsel %vm889, %v4882, 0
      %4977 = vmatprep.subr.bf16.mxu0 %v4953
      %4978 = vmatpush1.bf16.msra.mxu0 %v4952
      %4979 = vmatprep.subr.bf16.mxu0 %v4951
      %4980 = vmatpush1.bf16.msra.mxu0 %v4950
      %4981 = vmatprep.subr.bf16.mxu0 %v4949
      %4982 = vmatpush1.bf16.msra.mxu0 %v4948
      %4983 = vmatprep.subr.bf16.mxu0 %v4947
      %4984 = vmatpush1.bf16.msra.mxu0 %v4946
      %4985 = vmatprep.subr.bf16.mxu0 %v4945
      %4986 = vmatpush1.bf16.msra.mxu0 %v4944
      %4987 = vmatprep.subr.bf16.mxu0 %v4943
      %4988 = vmatpush1.bf16.msra.mxu0 %v4942
      %4989 = vmatprep.subr.bf16.mxu0 %v4941
      %4990 = vmatpush1.bf16.msra.mxu0 %v4940
      %4991 = vmatprep.subr.bf16.mxu0 %v4939
      %4992 = vmatpush1.bf16.msra.mxu0 %v4938
      %4993 = vmatprep.subr.bf16.mxu0 0
      %4994 = vmatpush2.bf16.msra.mxu0 0
      %4995 = vmatprep.subr.bf16.mxu0 0
      %4996 = vmatpush2.bf16.msra.mxu0 0
      %4997 = vmatprep.subr.bf16.mxu0 0
      %4998 = vmatpush2.bf16.msra.mxu0 0
      %4999 = vmatprep.subr.bf16.mxu0 0
      %5000 = vmatpush2.bf16.msra.mxu0 0
      %5001 = vmatprep.subr.bf16.mxu0 0
      %5002 = vmatpush2.bf16.msra.mxu0 0
      %5003 = vmatprep.subr.bf16.mxu0 0
      %5004 = vmatpush2.bf16.msra.mxu0 0
      %5005 = vmatprep.subr.bf16.mxu0 0
      %5006 = vmatpush2.bf16.msra.mxu0 0
      %5007 = vmatprep.subr.bf16.mxu0 %v4955
      %5008 = vmatpush2.bf16.msra.mxu0 %v4954
      %5009 = vmatprep.mubr.bf16.mxu0 %v4975
      %5010 = vmatmul.mubr.bf16.gmra.mxu0 %v4881
      %v5011 = vpop.f32.mrf.mxu0
      %v5012 = vadd.f32 %v4876, %v5011
      %v5013 = vpop.f32.mrf.mxu0
      %v5014 = vadd.f32 %v4876, %v5013
      %v5015 = vpop.f32.mrf.mxu0
      %v5016 = vpop.f32.mrf.mxu0
      %5017 = vdwg.mxu0
      %vm5018 = vcmp.ge.f32.partialorder %v5012, 0.0
      %vm5019 = vcmp.ge.f32.partialorder %v5014, 0.0
      %v5020 = vmul.f32 %v5012, 0.2
      %v5021 = vmul.f32 %v5014, 0.2
      %v5022 = vsel %vm5018, %v5012, %v5020
      %v5023 = vsel %vm5019, %v5014, %v5021
      %5024 = vrot.lane.b32.xlu0 %v5022, 17
      %v5025 = vpop.permute.xlu0 %5024
      %5026 = vrot.lane.b32.xlu0 %v5023, 17
      %v5027 = vpop.permute.xlu0 %5026
      %v5028 = vsel %vm315, %v5025, %v5027
      %v5029 = vsel %vm315, %v5027, %v5025
      %v5030 = vld [vmem:[%s7] sm:$0xff]
      %v5031 = vld [vmem:[%s7 + $0x8] sm:$0xff]
      %v5032 = vmul.f32 %v5029, %v5030
      %v5033 = vmul.f32 %v5028, %v5031
      %v5034 = vpack.c.bf16 %v5032, %v5032
      %v5035 = vpack.c.bf16 %v5033, %v5033
      %v5038 = vunpack.c.l.b16 %v5034
      %v5039 = vunpack.c.l.b16 %v5035
      %v5040 = vpack.c.b16 %v5039, %v5038
      %5042 = vst [vmem:[#allocation2 + $0x90] sm:$0xff] %v5040
      %5043 = vrot.lane.b32.xlu0 %v5022, 16
      %v5044 = vpop.permute.xlu0 %5043
      %5045 = vrot.lane.b32.xlu0 %v5023, 16
      %v5046 = vpop.permute.xlu0 %5045
      %v5047 = vsel %vm335, %v5044, %v5046
      %v5048 = vsel %vm335, %v5046, %v5044
      %v5049 = vld [vmem:[%s338] sm:$0xff]
      %v5050 = vld [vmem:[%s338 + $0x8] sm:$0xff]
      %v5051 = vmul.f32 %v5048, %v5049
      %v5052 = vmul.f32 %v5047, %v5050
      %v5053 = vpack.c.bf16 %v5051, %v5051
      %v5054 = vpack.c.bf16 %v5052, %v5052
      %v5057 = vunpack.c.l.b16 %v5053
      %v5058 = vunpack.c.l.b16 %v5054
      %v5059 = vpack.c.b16 %v5058, %v5057
      %5061 = vst [vmem:[#allocation2 + $0x98] sm:$0xff] %v5059
      %5062 = vrot.lane.b32.xlu0 %v5022, 15
      %v5063 = vpop.permute.xlu0 %5062
      %5064 = vrot.lane.b32.xlu0 %v5023, 15
      %v5065 = vpop.permute.xlu0 %5064
      %v5066 = vsel %vm356, %v5063, %v5065
      %v5067 = vsel %vm356, %v5065, %v5063
      %v5068 = vld [vmem:[%s359] sm:$0xff]
      %v5069 = vld [vmem:[%s359 + $0x8] sm:$0xff]
      %v5070 = vmul.f32 %v5067, %v5068
      %v5071 = vmul.f32 %v5066, %v5069
      %v5072 = vpack.c.bf16 %v5070, %v5070
      %v5073 = vpack.c.bf16 %v5071, %v5071
      %v5076 = vunpack.c.l.b16 %v5072
      %v5077 = vunpack.c.l.b16 %v5073
      %v5078 = vpack.c.b16 %v5077, %v5076
      %5080 = vst [vmem:[#allocation2 + $0xa0] sm:$0xff] %v5078
      %5081 = vrot.lane.b32.xlu0 %v5022, 1
      %v5082 = vpop.permute.xlu0 %5081
      %5083 = vrot.lane.b32.xlu0 %v5023, 1
      %v5084 = vpop.permute.xlu0 %5083
      %v5085 = vsel %vm377, %v5082, %v5084
      %v5086 = vsel %vm377, %v5084, %v5082
      %v5087 = vld [vmem:[%s380] sm:$0xff]
      %v5088 = vld [vmem:[%s380 + $0x8] sm:$0xff]
      %v5089 = vmul.f32 %v5086, %v5087
      %v5090 = vmul.f32 %v5085, %v5088
      %v5091 = vpack.c.bf16 %v5089, %v5089
      %v5092 = vpack.c.bf16 %v5090, %v5090
      %v5095 = vunpack.c.l.b16 %v5091
      %v5096 = vunpack.c.l.b16 %v5092
      %v5097 = vpack.c.b16 %v5096, %v5095
      %5099 = vst [vmem:[#allocation2 + $0xa8] sm:$0xff] %v5097
      %v5100 = vpack.c.bf16 %v5022, %v5022
      %v5101 = vpack.c.bf16 %v5023, %v5023
      %v5104 = vunpack.c.l.b16 %v5100
      %v5105 = vunpack.c.l.b16 %v5101
      %v5106 = vpack.c.b16 %v5105, %v5104
      %5108 = vst [vmem:[#allocation2 + $0xb0] sm:$0xff] %v5106
      %5109 = vrot.lane.b32.xlu0 %v5022, 127
      %v5110 = vpop.permute.xlu0 %5109
      %5111 = vrot.lane.b32.xlu0 %v5023, 127
      %v5112 = vpop.permute.xlu0 %5111
      %v5113 = vsel %vm407, %v5110, %v5112
      %v5114 = vsel %vm407, %v5112, %v5110
      %v5115 = vld [vmem:[%s410] sm:$0xff]
      %v5116 = vld [vmem:[%s410 + $0x8] sm:$0xff]
      %v5117 = vmul.f32 %v5113, %v5115
      %v5118 = vmul.f32 %v5114, %v5116
      %v5119 = vpack.c.bf16 %v5117, %v5117
      %v5120 = vpack.c.bf16 %v5118, %v5118
      %v5123 = vunpack.c.l.b16 %v5119
      %v5124 = vunpack.c.l.b16 %v5120
      %v5125 = vpack.c.b16 %v5124, %v5123
      %5127 = vst [vmem:[#allocation2 + $0xb8] sm:$0xff] %v5125
      %5128 = vrot.lane.b32.xlu0 %v5022, 113
      %v5129 = vpop.permute.xlu0 %5128
      %5130 = vrot.lane.b32.xlu0 %v5023, 113
      %v5131 = vpop.permute.xlu0 %5130
      %v5132 = vsel %vm428, %v5129, %v5131
      %v5133 = vsel %vm428, %v5131, %v5129
      %v5134 = vld [vmem:[%s431] sm:$0xff]
      %v5135 = vld [vmem:[%s431 + $0x8] sm:$0xff]
      %v5136 = vmul.f32 %v5132, %v5134
      %v5137 = vmul.f32 %v5133, %v5135
      %v5138 = vpack.c.bf16 %v5136, %v5136
      %v5139 = vpack.c.bf16 %v5137, %v5137
      %v5142 = vunpack.c.l.b16 %v5138
      %v5143 = vunpack.c.l.b16 %v5139
      %v5144 = vpack.c.b16 %v5143, %v5142
      %5146 = vst [vmem:[#allocation2 + $0xc0] sm:$0xff] %v5144
      %5147 = vrot.lane.b32.xlu0 %v5022, 112
      %v5148 = vpop.permute.xlu0 %5147
      %5149 = vrot.lane.b32.xlu0 %v5023, 112
      %v5150 = vpop.permute.xlu0 %5149
      %v5151 = vsel %vm449, %v5148, %v5150
      %v5152 = vsel %vm449, %v5150, %v5148
      %v5153 = vld [vmem:[%s452] sm:$0xff]
      %v5154 = vld [vmem:[%s452 + $0x8] sm:$0xff]
      %v5155 = vmul.f32 %v5151, %v5153
      %v5156 = vmul.f32 %v5152, %v5154
      %v5157 = vpack.c.bf16 %v5155, %v5155
      %v5158 = vpack.c.bf16 %v5156, %v5156
      %v5161 = vunpack.c.l.b16 %v5157
      %v5162 = vunpack.c.l.b16 %v5158
      %v5163 = vpack.c.b16 %v5162, %v5161
      %5165 = vst [vmem:[#allocation2 + $0xc8] sm:$0xff] %v5163
      %5166 = vrot.lane.b32.xlu0 %v5022, 111
      %v5167 = vpop.permute.xlu0 %5166
      %5168 = vrot.lane.b32.xlu0 %v5023, 111
      %v5169 = vpop.permute.xlu0 %5168
      %v5170 = vsel %vm470, %v5167, %v5169
      %v5171 = vsel %vm470, %v5169, %v5167
      %v5172 = vld [vmem:[%s473] sm:$0xff]
      %v5173 = vld [vmem:[%s473 + $0x8] sm:$0xff]
      %v5174 = vmul.f32 %v5170, %v5172
      %v5175 = vmul.f32 %v5171, %v5173
      %v5176 = vpack.c.bf16 %v5174, %v5174
      %v5177 = vpack.c.bf16 %v5175, %v5175
      %v5180 = vunpack.c.l.b16 %v5176
      %v5181 = vunpack.c.l.b16 %v5177
      %v5182 = vpack.c.b16 %v5181, %v5180
      %5184 = vst [vmem:[#allocation2 + $0xd0] sm:$0xff] %v5182
      %s5185 = scalar_lea.vmem %s3, 16
      %v5186 = vld [vmem:[%s5185] sm:$0xff]
      %v5187 = vld [vmem:[#allocation2] sm:$0xff]
      %v5188 = vld [vmem:[#allocation2 + $0x8] sm:$0xff]
      %v5189 = vld [vmem:[#allocation2 + $0x10] sm:$0xff]
      %v5190 = vld [vmem:[#allocation2 + $0x18] sm:$0xff]
      %v5191 = vld [vmem:[#allocation2 + $0x20] sm:$0xff]
      %v5192 = vld [vmem:[#allocation2 + $0x28] sm:$0xff]
      %v5193 = vld [vmem:[#allocation2 + $0x30] sm:$0xff]
      %v5194 = vld [vmem:[#allocation2 + $0x38] sm:$0xff]
      %v5195 = vld [vmem:[#allocation2 + $0x40] sm:$0xff]
      %v5196 = vld [vmem:[#allocation2 + $0x48] sm:$0xff]
      %v5197 = vld [vmem:[#allocation2 + $0x50] sm:$0xff]
      %v5198 = vld [vmem:[#allocation2 + $0x58] sm:$0xff]
      %v5199 = vld [vmem:[#allocation2 + $0x60] sm:$0xff]
      %v5200 = vld [vmem:[#allocation2 + $0x68] sm:$0xff]
      %v5201 = vld [vmem:[#allocation2 + $0x70] sm:$0xff]
      %v5202 = vld [vmem:[#allocation2 + $0x78] sm:$0xff]
      %v5203 = vld [vmem:[#allocation2 + $0x80] sm:$0xff]
      %v5204 = vld [vmem:[#allocation2 + $0x88] sm:$0xff]
      %v5205 = vld [vmem:[#allocation2 + $0x90] sm:$0xff]
      %v5206 = vld [vmem:[#allocation2 + $0x98] sm:$0xff]
      %v5207 = vld [vmem:[#allocation2 + $0xa0] sm:$0xff]
      %v5208 = vld [vmem:[#allocation2 + $0xa8] sm:$0xff]
      %v5209 = vld [vmem:[#allocation2 + $0xb0] sm:$0xff]
      %v5210 = vld [vmem:[#allocation2 + $0xb8] sm:$0xff]
      %v5211 = vld [vmem:[#allocation2 + $0xc0] sm:$0xff]
      %v5212 = vld [vmem:[#allocation2 + $0xc8] sm:$0xff]
      %v5213 = vld [vmem:[#allocation2 + $0xd0] sm:$0xff]
      %s5214 = scalar_lea.vmem %s6, 96
      %v5215 = vld [vmem:[%s5214] sm:$0xff]
      %5217 = vset.pattern.permute.xlu0 0
      %5218 = vperm.xlu0 %5217, %v5215
      %v5219 = vpop.permute.xlu0 %5218
      %v5222 = vunpack.c.l.b16 %v5186
      %v5223 = vunpack.c.h.b16 %v5186
      %v5224 = vpack.c.b16 %v5222, %v5222
      %v5225 = vpack.c.b16 %v5223, %v5223
      %v5254 = vunpack.c.l.b16 %v5187
      %v5255 = vunpack.c.h.b16 %v5187
      %v5256 = vunpack.c.l.b16 %v5188
      %v5257 = vunpack.c.h.b16 %v5188
      %v5258 = vunpack.c.l.b16 %v5189
      %v5259 = vunpack.c.h.b16 %v5189
      %v5260 = vunpack.c.l.b16 %v5190
      %v5261 = vunpack.c.h.b16 %v5190
      %v5262 = vunpack.c.l.b16 %v5191
      %v5263 = vunpack.c.h.b16 %v5191
      %v5264 = vunpack.c.l.b16 %v5192
      %v5265 = vunpack.c.h.b16 %v5192
      %v5266 = vunpack.c.l.b16 %v5193
      %v5267 = vunpack.c.h.b16 %v5193
      %v5268 = vunpack.c.l.b16 %v5194
      %v5269 = vunpack.c.h.b16 %v5194
      %v5270 = vunpack.c.l.b16 %v5195
      %v5271 = vunpack.c.h.b16 %v5195
      %v5272 = vunpack.c.l.b16 %v5196
      %v5273 = vunpack.c.h.b16 %v5196
      %v5274 = vunpack.c.l.b16 %v5197
      %v5275 = vunpack.c.h.b16 %v5197
      %v5276 = vunpack.c.l.b16 %v5198
      %v5277 = vunpack.c.h.b16 %v5198
      %v5278 = vunpack.c.l.b16 %v5199
      %v5279 = vunpack.c.h.b16 %v5199
      %v5280 = vunpack.c.l.b16 %v5200
      %v5281 = vunpack.c.h.b16 %v5200
      %v5282 = vunpack.c.l.b16 %v5201
      %v5283 = vunpack.c.h.b16 %v5201
      %v5284 = vunpack.c.l.b16 %v5202
      %v5285 = vunpack.c.h.b16 %v5202
      %v5286 = vunpack.c.l.b16 %v5203
      %v5287 = vunpack.c.h.b16 %v5203
      %v5288 = vunpack.c.l.b16 %v5204
      %v5289 = vunpack.c.h.b16 %v5204
      %v5290 = vunpack.c.l.b16 %v5205
      %v5291 = vunpack.c.h.b16 %v5205
      %v5292 = vunpack.c.l.b16 %v5206
      %v5293 = vunpack.c.h.b16 %v5206
      %v5294 = vunpack.c.l.b16 %v5207
      %v5295 = vunpack.c.h.b16 %v5207
      %v5296 = vunpack.c.l.b16 %v5208
      %v5297 = vunpack.c.h.b16 %v5208
      %v5298 = vunpack.c.l.b16 %v5209
      %v5299 = vunpack.c.h.b16 %v5209
      %v5300 = vunpack.c.l.b16 %v5210
      %v5301 = vunpack.c.h.b16 %v5210
      %v5302 = vunpack.c.l.b16 %v5211
      %v5303 = vunpack.c.h.b16 %v5211
      %v5304 = vunpack.c.l.b16 %v5212
      %v5305 = vunpack.c.h.b16 %v5212
      %v5306 = vunpack.c.l.b16 %v5213
      %v5307 = vunpack.c.h.b16 %v5213
      %v5308 = vpack.c.b16 %v5256, %v5254
      %v5309 = vpack.c.b16 %v5257, %v5255
      %v5310 = vpack.c.b16 %v5260, %v5258
      %v5311 = vpack.c.b16 %v5261, %v5259
      %v5312 = vpack.c.b16 %v5264, %v5262
      %v5313 = vpack.c.b16 %v5265, %v5263
      %v5314 = vpack.c.b16 %v5268, %v5266
      %v5315 = vpack.c.b16 %v5269, %v5267
      %v5316 = vpack.c.b16 %v5272, %v5270
      %v5317 = vpack.c.b16 %v5273, %v5271
      %v5318 = vpack.c.b16 %v5276, %v5274
      %v5319 = vpack.c.b16 %v5277, %v5275
      %v5320 = vpack.c.b16 %v5280, %v5278
      %v5321 = vpack.c.b16 %v5281, %v5279
      %v5322 = vpack.c.b16 %v5284, %v5282
      %v5323 = vpack.c.b16 %v5285, %v5283
      %v5324 = vpack.c.b16 %v5288, %v5286
      %v5325 = vpack.c.b16 %v5289, %v5287
      %v5326 = vpack.c.b16 %v5292, %v5290
      %v5327 = vpack.c.b16 %v5293, %v5291
      %v5328 = vpack.c.b16 %v5296, %v5294
      %v5329 = vpack.c.b16 %v5297, %v5295
      %v5330 = vpack.c.b16 %v5300, %v5298
      %v5331 = vpack.c.b16 %v5301, %v5299
      %v5332 = vpack.c.b16 %v5304, %v5302
      %v5333 = vpack.c.b16 %v5305, %v5303
      %v5334 = vpack.c.b16 %v5306, %v5306
      %v5335 = vpack.c.b16 %v5307, %v5307
      %v5363 = vsel %vm1277, %v5225, 0
      %v5366 = vsel %vm552, %v5334, 0
      %v5369 = vsel %vm552, %v5335, 0
      %5371 = vmatprep.subr.bf16.mxu0 %v5323
      %5372 = vmatpush1.bf16.msra.mxu0 %v5322
      %5373 = vmatprep.subr.bf16.mxu0 %v5321
      %5374 = vmatpush1.bf16.msra.mxu0 %v5320
      %5375 = vmatprep.subr.bf16.mxu0 %v5319
      %5376 = vmatpush1.bf16.msra.mxu0 %v5318
      %5377 = vmatprep.subr.bf16.mxu0 %v5317
      %5378 = vmatpush1.bf16.msra.mxu0 %v5316
      %5379 = vmatprep.subr.bf16.mxu0 %v5315
      %5380 = vmatpush1.bf16.msra.mxu0 %v5314
      %5381 = vmatprep.subr.bf16.mxu0 %v5313
      %5382 = vmatpush1.bf16.msra.mxu0 %v5312
      %5383 = vmatprep.subr.bf16.mxu0 %v5311
      %5384 = vmatpush1.bf16.msra.mxu0 %v5310
      %5385 = vmatprep.subr.bf16.mxu0 %v5309
      %5386 = vmatpush1.bf16.msra.mxu0 %v5308
      %5387 = vmatprep.subr.bf16.mxu0 0
      %5388 = vmatpush2.bf16.msra.mxu0 0
      %5389 = vmatprep.subr.bf16.mxu0 0
      %5390 = vmatpush2.bf16.msra.mxu0 0
      %5391 = vmatprep.subr.bf16.mxu0 %v5369
      %5392 = vmatpush2.bf16.msra.mxu0 %v5366
      %5393 = vmatprep.subr.bf16.mxu0 %v5333
      %5394 = vmatpush2.bf16.msra.mxu0 %v5332
      %5395 = vmatprep.subr.bf16.mxu0 %v5331
      %5396 = vmatpush2.bf16.msra.mxu0 %v5330
      %5397 = vmatprep.subr.bf16.mxu0 %v5329
      %5398 = vmatpush2.bf16.msra.mxu0 %v5328
      %5399 = vmatprep.subr.bf16.mxu0 %v5327
      %5400 = vmatpush2.bf16.msra.mxu0 %v5326
      %5401 = vmatprep.subr.bf16.mxu0 %v5325
      %5402 = vmatpush2.bf16.msra.mxu0 %v5324
      %5403 = vmatprep.mubr.bf16.mxu0 %v5363
      %5404 = vmatmul.mubr.bf16.gmra.mxu0 %v5224
      %v5405 = vpop.f32.mrf.mxu0
      %v5406 = vadd.f32 %v5219, %v5405
      %v5407 = vpop.f32.mrf.mxu0
      %v5408 = vadd.f32 %v5219, %v5407
      %v5409 = vpop.f32.mrf.mxu0
      %v5410 = vpop.f32.mrf.mxu0
      %5411 = vdwg.mxu0
      %vm5412 = vcmp.ge.f32.partialorder %v5406, 0.0
      %vm5413 = vcmp.ge.f32.partialorder %v5408, 0.0
      %v5414 = vmul.f32 %v5406, 0.2
      %v5415 = vmul.f32 %v5408, 0.2
      %v5416 = vsel %vm5412, %v5406, %v5414
      %v5417 = vsel %vm5413, %v5408, %v5415
      %5418 = vrot.lane.b32.xlu0 %v5416, 17
      %v5419 = vpop.permute.xlu0 %5418
      %5420 = vrot.lane.b32.xlu0 %v5417, 17
      %v5421 = vpop.permute.xlu0 %5420
      %v5422 = vsel %vm315, %v5419, %v5421
      %v5423 = vsel %vm315, %v5421, %v5419
      %v5424 = vld [vmem:[%s7] sm:$0xff]
      %v5425 = vld [vmem:[%s7 + $0x8] sm:$0xff]
      %v5426 = vmul.f32 %v5423, %v5424
      %v5427 = vmul.f32 %v5422, %v5425
      %v5428 = vpack.c.bf16 %v5426, %v5426
      %v5429 = vpack.c.bf16 %v5427, %v5427
      %v5432 = vunpack.c.l.b16 %v5428
      %v5433 = vunpack.c.l.b16 %v5429
      %v5434 = vpack.c.b16 %v5433, %v5432
      %5436 = vst [vmem:[#allocation2 + $0xd8] sm:$0xff] %v5434
      %5437 = vrot.lane.b32.xlu0 %v5416, 16
      %v5438 = vpop.permute.xlu0 %5437
      %5439 = vrot.lane.b32.xlu0 %v5417, 16
      %v5440 = vpop.permute.xlu0 %5439
      %v5441 = vsel %vm335, %v5438, %v5440
      %v5442 = vsel %vm335, %v5440, %v5438
      %v5443 = vld [vmem:[%s338] sm:$0xff]
      %v5444 = vld [vmem:[%s338 + $0x8] sm:$0xff]
      %v5445 = vmul.f32 %v5442, %v5443
      %v5446 = vmul.f32 %v5441, %v5444
      %v5447 = vpack.c.bf16 %v5445, %v5445
      %v5448 = vpack.c.bf16 %v5446, %v5446
      %v5451 = vunpack.c.l.b16 %v5447
      %v5452 = vunpack.c.l.b16 %v5448
      %v5453 = vpack.c.b16 %v5452, %v5451
      %5455 = vst [vmem:[#allocation2 + $0xe0] sm:$0xff] %v5453
      %5456 = vrot.lane.b32.xlu0 %v5416, 15
      %v5457 = vpop.permute.xlu0 %5456
      %5458 = vrot.lane.b32.xlu0 %v5417, 15
      %v5459 = vpop.permute.xlu0 %5458
      %v5460 = vsel %vm356, %v5457, %v5459
      %v5461 = vsel %vm356, %v5459, %v5457
      %v5462 = vld [vmem:[%s359] sm:$0xff]
      %v5463 = vld [vmem:[%s359 + $0x8] sm:$0xff]
      %v5464 = vmul.f32 %v5461, %v5462
      %v5465 = vmul.f32 %v5460, %v5463
      %v5466 = vpack.c.bf16 %v5464, %v5464
      %v5467 = vpack.c.bf16 %v5465, %v5465
      %v5470 = vunpack.c.l.b16 %v5466
      %v5471 = vunpack.c.l.b16 %v5467
      %v5472 = vpack.c.b16 %v5471, %v5470
      %5474 = vst [vmem:[#allocation2 + $0xe8] sm:$0xff] %v5472
      %5475 = vrot.lane.b32.xlu0 %v5416, 1
      %v5476 = vpop.permute.xlu0 %5475
      %5477 = vrot.lane.b32.xlu0 %v5417, 1
      %v5478 = vpop.permute.xlu0 %5477
      %v5479 = vsel %vm377, %v5476, %v5478
      %v5480 = vsel %vm377, %v5478, %v5476
      %v5481 = vld [vmem:[%s380] sm:$0xff]
      %v5482 = vld [vmem:[%s380 + $0x8] sm:$0xff]
      %v5483 = vmul.f32 %v5480, %v5481
      %v5484 = vmul.f32 %v5479, %v5482
      %v5485 = vpack.c.bf16 %v5483, %v5483
      %v5486 = vpack.c.bf16 %v5484, %v5484
      %v5489 = vunpack.c.l.b16 %v5485
      %v5490 = vunpack.c.l.b16 %v5486
      %v5491 = vpack.c.b16 %v5490, %v5489
      %5493 = vst [vmem:[#allocation2 + $0xf0] sm:$0xff] %v5491
      %v5494 = vpack.c.bf16 %v5416, %v5416
      %v5495 = vpack.c.bf16 %v5417, %v5417
      %v5498 = vunpack.c.l.b16 %v5494
      %v5499 = vunpack.c.l.b16 %v5495
      %v5500 = vpack.c.b16 %v5499, %v5498
      %5502 = vst [vmem:[#allocation2 + $0xf8] sm:$0xff] %v5500
      %5503 = vrot.lane.b32.xlu0 %v5416, 127
      %v5504 = vpop.permute.xlu0 %5503
      %5505 = vrot.lane.b32.xlu0 %v5417, 127
      %v5506 = vpop.permute.xlu0 %5505
      %v5507 = vsel %vm407, %v5504, %v5506
      %v5508 = vsel %vm407, %v5506, %v5504
      %v5509 = vld [vmem:[%s410] sm:$0xff]
      %v5510 = vld [vmem:[%s410 + $0x8] sm:$0xff]
      %v5511 = vmul.f32 %v5507, %v5509
      %v5512 = vmul.f32 %v5508, %v5510
      %v5513 = vpack.c.bf16 %v5511, %v5511
      %v5514 = vpack.c.bf16 %v5512, %v5512
      %v5517 = vunpack.c.l.b16 %v5513
      %v5518 = vunpack.c.l.b16 %v5514
      %v5519 = vpack.c.b16 %v5518, %v5517
      %5521 = vst [vmem:[#allocation2 + $0x100] sm:$0xff] %v5519
      %5522 = vrot.lane.b32.xlu0 %v5416, 113
      %v5523 = vpop.permute.xlu0 %5522
      %5524 = vrot.lane.b32.xlu0 %v5417, 113
      %v5525 = vpop.permute.xlu0 %5524
      %v5526 = vsel %vm428, %v5523, %v5525
      %v5527 = vsel %vm428, %v5525, %v5523
      %v5528 = vld [vmem:[%s431] sm:$0xff]
      %v5529 = vld [vmem:[%s431 + $0x8] sm:$0xff]
      %v5530 = vmul.f32 %v5526, %v5528
      %v5531 = vmul.f32 %v5527, %v5529
      %v5532 = vpack.c.bf16 %v5530, %v5530
      %v5533 = vpack.c.bf16 %v5531, %v5531
      %v5536 = vunpack.c.l.b16 %v5532
      %v5537 = vunpack.c.l.b16 %v5533
      %v5538 = vpack.c.b16 %v5537, %v5536
      %5540 = vst [vmem:[#allocation2 + $0x108] sm:$0xff] %v5538
      %5541 = vrot.lane.b32.xlu0 %v5416, 112
      %v5542 = vpop.permute.xlu0 %5541
      %5543 = vrot.lane.b32.xlu0 %v5417, 112
      %v5544 = vpop.permute.xlu0 %5543
      %v5545 = vsel %vm449, %v5542, %v5544
      %v5546 = vsel %vm449, %v5544, %v5542
      %v5547 = vld [vmem:[%s452] sm:$0xff]
      %v5548 = vld [vmem:[%s452 + $0x8] sm:$0xff]
      %v5549 = vmul.f32 %v5545, %v5547
      %v5550 = vmul.f32 %v5546, %v5548
      %v5551 = vpack.c.bf16 %v5549, %v5549
      %v5552 = vpack.c.bf16 %v5550, %v5550
      %v5555 = vunpack.c.l.b16 %v5551
      %v5556 = vunpack.c.l.b16 %v5552
      %v5557 = vpack.c.b16 %v5556, %v5555
      %5559 = vst [vmem:[#allocation2 + $0x110] sm:$0xff] %v5557
      %5560 = vrot.lane.b32.xlu0 %v5416, 111
      %v5561 = vpop.permute.xlu0 %5560
      %5562 = vrot.lane.b32.xlu0 %v5417, 111
      %v5563 = vpop.permute.xlu0 %5562
      %v5564 = vsel %vm470, %v5561, %v5563
      %v5565 = vsel %vm470, %v5563, %v5561
      %v5566 = vld [vmem:[%s473] sm:$0xff]
      %v5567 = vld [vmem:[%s473 + $0x8] sm:$0xff]
      %v5568 = vmul.f32 %v5564, %v5566
      %v5569 = vmul.f32 %v5565, %v5567
      %v5570 = vpack.c.bf16 %v5568, %v5568
      %v5571 = vpack.c.bf16 %v5569, %v5569
      %v5574 = vunpack.c.l.b16 %v5570
      %v5575 = vunpack.c.l.b16 %v5571
      %v5576 = vpack.c.b16 %v5575, %v5574
      %5578 = vst [vmem:[#allocation2 + $0x118] sm:$0xff] %v5576
      %s5579 = scalar_lea.vmem %s4, 24
      %v5580 = vld [vmem:[%s5579] sm:$0xff]
      %v5581 = vld [vmem:[%s5579 + $0x8] sm:$0xf]
      %v5582 = vld [vmem:[#allocation2] sm:$0xff]
      %v5583 = vld [vmem:[#allocation2 + $0x8] sm:$0xff]
      %v5584 = vld [vmem:[#allocation2 + $0x10] sm:$0xff]
      %v5585 = vld [vmem:[#allocation2 + $0x18] sm:$0xff]
      %v5586 = vld [vmem:[#allocation2 + $0x20] sm:$0xff]
      %v5587 = vld [vmem:[#allocation2 + $0x28] sm:$0xff]
      %v5588 = vld [vmem:[#allocation2 + $0x30] sm:$0xff]
      %v5589 = vld [vmem:[#allocation2 + $0x38] sm:$0xff]
      %v5590 = vld [vmem:[#allocation2 + $0x40] sm:$0xff]
      %v5591 = vld [vmem:[#allocation2 + $0x48] sm:$0xff]
      %v5592 = vld [vmem:[#allocation2 + $0x50] sm:$0xff]
      %v5593 = vld [vmem:[#allocation2 + $0x58] sm:$0xff]
      %v5594 = vld [vmem:[#allocation2 + $0x60] sm:$0xff]
      %v5595 = vld [vmem:[#allocation2 + $0x68] sm:$0xff]
      %v5596 = vld [vmem:[#allocation2 + $0x70] sm:$0xff]
      %v5597 = vld [vmem:[#allocation2 + $0x78] sm:$0xff]
      %v5598 = vld [vmem:[#allocation2 + $0x80] sm:$0xff]
      %v5599 = vld [vmem:[#allocation2 + $0x88] sm:$0xff]
      %v5600 = vld [vmem:[#allocation2 + $0x90] sm:$0xff]
      %v5601 = vld [vmem:[#allocation2 + $0x98] sm:$0xff]
      %v5602 = vld [vmem:[#allocation2 + $0xa0] sm:$0xff]
      %v5603 = vld [vmem:[#allocation2 + $0xa8] sm:$0xff]
      %v5604 = vld [vmem:[#allocation2 + $0xb0] sm:$0xff]
      %v5605 = vld [vmem:[#allocation2 + $0xb8] sm:$0xff]
      %v5606 = vld [vmem:[#allocation2 + $0xc0] sm:$0xff]
      %v5607 = vld [vmem:[#allocation2 + $0xc8] sm:$0xff]
      %v5608 = vld [vmem:[#allocation2 + $0xd0] sm:$0xff]
      %v5609 = vld [vmem:[#allocation2 + $0xd8] sm:$0xff]
      %v5610 = vld [vmem:[#allocation2 + $0xe0] sm:$0xff]
      %v5611 = vld [vmem:[#allocation2 + $0xe8] sm:$0xff]
      %v5612 = vld [vmem:[#allocation2 + $0xf0] sm:$0xff]
      %v5613 = vld [vmem:[#allocation2 + $0xf8] sm:$0xff]
      %v5614 = vld [vmem:[#allocation2 + $0x100] sm:$0xff]
      %v5615 = vld [vmem:[#allocation2 + $0x108] sm:$0xff]
      %v5616 = vld [vmem:[#allocation2 + $0x110] sm:$0xff]
      %v5617 = vld [vmem:[#allocation2 + $0x118] sm:$0xff]
      %s5618 = scalar_lea.vmem %s6, 104
      %v5619 = vld [vmem:[%s5618] sm:$0xff]
      %5621 = vset.pattern.permute.xlu0 0
      %5622 = vperm.xlu0 %5621, %v5619
      %v5623 = vpop.permute.xlu0 %5622
      %v5627 = vunpack.c.l.b16 %v5580
      %v5628 = vunpack.c.h.b16 %v5580
      %v5629 = vunpack.c.l.b16 %v5581
      %v5630 = vpack.c.b16 %v5627, %v5627
      %v5631 = vpack.c.b16 %v5628, %v5628
      %v5632 = vpack.c.b16 %v5629, %v5629
      %v5671 = vunpack.c.l.b16 %v5582
      %v5672 = vunpack.c.h.b16 %v5582
      %v5673 = vunpack.c.l.b16 %v5583
      %v5674 = vunpack.c.h.b16 %v5583
      %v5675 = vunpack.c.l.b16 %v5584
      %v5676 = vunpack.c.h.b16 %v5584
      %v5677 = vunpack.c.l.b16 %v5585
      %v5678 = vunpack.c.h.b16 %v5585
      %v5679 = vunpack.c.l.b16 %v5586
      %v5680 = vunpack.c.h.b16 %v5586
      %v5681 = vunpack.c.l.b16 %v5587
      %v5682 = vunpack.c.h.b16 %v5587
      %v5683 = vunpack.c.l.b16 %v5588
      %v5684 = vunpack.c.h.b16 %v5588
      %v5685 = vunpack.c.l.b16 %v5589
      %v5686 = vunpack.c.h.b16 %v5589
      %v5687 = vunpack.c.l.b16 %v5590
      %v5688 = vunpack.c.h.b16 %v5590
      %v5689 = vunpack.c.l.b16 %v5591
      %v5690 = vunpack.c.h.b16 %v5591
      %v5691 = vunpack.c.l.b16 %v5592
      %v5692 = vunpack.c.h.b16 %v5592
      %v5693 = vunpack.c.l.b16 %v5593
      %v5694 = vunpack.c.h.b16 %v5593
      %v5695 = vunpack.c.l.b16 %v5594
      %v5696 = vunpack.c.h.b16 %v5594
      %v5697 = vunpack.c.l.b16 %v5595
      %v5698 = vunpack.c.h.b16 %v5595
      %v5699 = vunpack.c.l.b16 %v5596
      %v5700 = vunpack.c.h.b16 %v5596
      %v5701 = vunpack.c.l.b16 %v5597
      %v5702 = vunpack.c.h.b16 %v5597
      %v5703 = vunpack.c.l.b16 %v5598
      %v5704 = vunpack.c.h.b16 %v5598
      %v5705 = vunpack.c.l.b16 %v5599
      %v5706 = vunpack.c.h.b16 %v5599
      %v5707 = vunpack.c.l.b16 %v5600
      %v5708 = vunpack.c.h.b16 %v5600
      %v5709 = vunpack.c.l.b16 %v5601
      %v5710 = vunpack.c.h.b16 %v5601
      %v5711 = vunpack.c.l.b16 %v5602
      %v5712 = vunpack.c.h.b16 %v5602
      %v5713 = vunpack.c.l.b16 %v5603
      %v5714 = vunpack.c.h.b16 %v5603
      %v5715 = vunpack.c.l.b16 %v5604
      %v5716 = vunpack.c.h.b16 %v5604
      %v5717 = vunpack.c.l.b16 %v5605
      %v5718 = vunpack.c.h.b16 %v5605
      %v5719 = vunpack.c.l.b16 %v5606
      %v5720 = vunpack.c.h.b16 %v5606
      %v5721 = vunpack.c.l.b16 %v5607
      %v5722 = vunpack.c.h.b16 %v5607
      %v5723 = vunpack.c.l.b16 %v5608
      %v5724 = vunpack.c.h.b16 %v5608
      %v5725 = vunpack.c.l.b16 %v5609
      %v5726 = vunpack.c.h.b16 %v5609
      %v5727 = vunpack.c.l.b16 %v5610
      %v5728 = vunpack.c.h.b16 %v5610
      %v5729 = vunpack.c.l.b16 %v5611
      %v5730 = vunpack.c.h.b16 %v5611
      %v5731 = vunpack.c.l.b16 %v5612
      %v5732 = vunpack.c.h.b16 %v5612
      %v5733 = vunpack.c.l.b16 %v5613
      %v5734 = vunpack.c.h.b16 %v5613
      %v5735 = vunpack.c.l.b16 %v5614
      %v5736 = vunpack.c.h.b16 %v5614
      %v5737 = vunpack.c.l.b16 %v5615
      %v5738 = vunpack.c.h.b16 %v5615
      %v5739 = vunpack.c.l.b16 %v5616
      %v5740 = vunpack.c.h.b16 %v5616
      %v5741 = vunpack.c.l.b16 %v5617
      %v5742 = vunpack.c.h.b16 %v5617
      %v5743 = vpack.c.b16 %v5673, %v5671
      %v5744 = vpack.c.b16 %v5674, %v5672
      %v5745 = vpack.c.b16 %v5677, %v5675
      %v5746 = vpack.c.b16 %v5678, %v5676
      %v5747 = vpack.c.b16 %v5681, %v5679
      %v5748 = vpack.c.b16 %v5682, %v5680
      %v5749 = vpack.c.b16 %v5685, %v5683
      %v5750 = vpack.c.b16 %v5686, %v5684
      %v5751 = vpack.c.b16 %v5689, %v5687
      %v5752 = vpack.c.b16 %v5690, %v5688
      %v5753 = vpack.c.b16 %v5693, %v5691
      %v5754 = vpack.c.b16 %v5694, %v5692
      %v5755 = vpack.c.b16 %v5697, %v5695
      %v5756 = vpack.c.b16 %v5698, %v5696
      %v5757 = vpack.c.b16 %v5701, %v5699
      %v5758 = vpack.c.b16 %v5702, %v5700
      %v5759 = vpack.c.b16 %v5705, %v5703
      %v5760 = vpack.c.b16 %v5706, %v5704
      %v5761 = vpack.c.b16 %v5709, %v5707
      %v5762 = vpack.c.b16 %v5710, %v5708
      %v5763 = vpack.c.b16 %v5713, %v5711
      %v5764 = vpack.c.b16 %v5714, %v5712
      %v5765 = vpack.c.b16 %v5717, %v5715
      %v5766 = vpack.c.b16 %v5718, %v5716
      %v5767 = vpack.c.b16 %v5721, %v5719
      %v5768 = vpack.c.b16 %v5722, %v5720
      %v5769 = vpack.c.b16 %v5725, %v5723
      %v5770 = vpack.c.b16 %v5726, %v5724
      %v5771 = vpack.c.b16 %v5729, %v5727
      %v5772 = vpack.c.b16 %v5730, %v5728
      %v5773 = vpack.c.b16 %v5733, %v5731
      %v5774 = vpack.c.b16 %v5734, %v5732
      %v5775 = vpack.c.b16 %v5737, %v5735
      %v5776 = vpack.c.b16 %v5738, %v5736
      %v5777 = vpack.c.b16 %v5741, %v5739
      %v5778 = vpack.c.b16 %v5742, %v5740
      %v5816 = vsel %vm1730, %v5632, 0
      %5818 = vmatprep.subr.bf16.mxu0 %v5758
      %5819 = vmatpush1.bf16.msra.mxu0 %v5757
      %5820 = vmatprep.subr.bf16.mxu0 %v5756
      %5821 = vmatpush1.bf16.msra.mxu0 %v5755
      %5822 = vmatprep.subr.bf16.mxu0 %v5754
      %5823 = vmatpush1.bf16.msra.mxu0 %v5753
      %5824 = vmatprep.subr.bf16.mxu0 %v5752
      %5825 = vmatpush1.bf16.msra.mxu0 %v5751
      %5826 = vmatprep.subr.bf16.mxu0 %v5750
      %5827 = vmatpush1.bf16.msra.mxu0 %v5749
      %5828 = vmatprep.subr.bf16.mxu0 %v5748
      %5829 = vmatpush1.bf16.msra.mxu0 %v5747
      %5830 = vmatprep.subr.bf16.mxu0 %v5746
      %5831 = vmatpush1.bf16.msra.mxu0 %v5745
      %5832 = vmatprep.subr.bf16.mxu0 %v5744
      %5833 = vmatpush1.bf16.msra.mxu0 %v5743
      %5834 = vmatprep.subr.bf16.mxu0 %v5774
      %5835 = vmatpush2.bf16.msra.mxu0 %v5773
      %5836 = vmatprep.subr.bf16.mxu0 %v5772
      %5837 = vmatpush2.bf16.msra.mxu0 %v5771
      %5838 = vmatprep.subr.bf16.mxu0 %v5770
      %5839 = vmatpush2.bf16.msra.mxu0 %v5769
      %5840 = vmatprep.subr.bf16.mxu0 %v5768
      %5841 = vmatpush2.bf16.msra.mxu0 %v5767
      %5842 = vmatprep.subr.bf16.mxu0 %v5766
      %5843 = vmatpush2.bf16.msra.mxu0 %v5765
      %5844 = vmatprep.subr.bf16.mxu0 %v5764
      %5845 = vmatpush2.bf16.msra.mxu0 %v5763
      %5846 = vmatprep.subr.bf16.mxu0 %v5762
      %5847 = vmatpush2.bf16.msra.mxu0 %v5761
      %5848 = vmatprep.subr.bf16.mxu0 %v5760
      %5849 = vmatpush2.bf16.msra.mxu0 %v5759
      %5850 = vmatprep.mubr.bf16.mxu0 %v5631
      %5851 = vmatmul.mubr.bf16.gmra.mxu0 %v5630
      %v5852 = vpop.f32.mrf.mxu0
      %v5853 = vadd.f32 %v5623, %v5852
      %v5854 = vpop.f32.mrf.mxu0
      %v5855 = vadd.f32 %v5623, %v5854
      %v5856 = vpop.f32.mrf.mxu0
      %v5857 = vpop.f32.mrf.mxu0
      %5858 = vdwg.mxu0
      %5859 = vmatprep.subr.bf16.mxu0 0
      %5860 = vmatpush1.bf16.msra.mxu0 0
      %5861 = vmatprep.subr.bf16.mxu0 0
      %5862 = vmatpush1.bf16.msra.mxu0 0
      %5863 = vmatprep.subr.bf16.mxu0 0
      %5864 = vmatpush1.bf16.msra.mxu0 0
      %5865 = vmatprep.subr.bf16.mxu0 0
      %5866 = vmatpush1.bf16.msra.mxu0 0
      %5867 = vmatprep.subr.bf16.mxu0 0
      %5868 = vmatpush1.bf16.msra.mxu0 0
      %5869 = vmatprep.subr.bf16.mxu0 0
      %5870 = vmatpush1.bf16.msra.mxu0 0
      %5871 = vmatprep.subr.bf16.mxu0 %v5778
      %5872 = vmatpush1.bf16.msra.mxu0 %v5777
      %5873 = vmatprep.subr.bf16.mxu0 %v5776
      %5874 = vmatpush1.bf16.msra.mxu0 %v5775
      %5875 = vmatprep.subr.bf16.mxu0 0
      %5876 = vmatpush2.bf16.msra.mxu0 0
      %5877 = vmatprep.subr.bf16.mxu0 0
      %5878 = vmatpush2.bf16.msra.mxu0 0
      %5879 = vmatprep.subr.bf16.mxu0 0
      %5880 = vmatpush2.bf16.msra.mxu0 0
      %5881 = vmatprep.subr.bf16.mxu0 0
      %5882 = vmatpush2.bf16.msra.mxu0 0
      %5883 = vmatprep.subr.bf16.mxu0 0
      %5884 = vmatpush2.bf16.msra.mxu0 0
      %5885 = vmatprep.subr.bf16.mxu0 0
      %5886 = vmatpush2.bf16.msra.mxu0 0
      %5887 = vmatprep.subr.bf16.mxu0 0
      %5888 = vmatpush2.bf16.msra.mxu0 0
      %5889 = vmatprep.subr.bf16.mxu0 0
      %5890 = vmatpush2.bf16.msra.mxu0 0
      %5891 = vmatprep.mubr.bf16.mxu0 0
      %5892 = vmatmul.mubr.bf16.gmra.mxu0 %v5816
      %v5893 = vpop.f32.mrf.mxu0
      %v5894 = vadd.f32 %v5853, %v5893
      %v5895 = vpop.f32.mrf.mxu0
      %v5896 = vadd.f32 %v5855, %v5895
      %v5897 = vpop.f32.mrf.mxu0
      %v5898 = vpop.f32.mrf.mxu0
      %5899 = vdwg.mxu0
      %vm5900 = vcmp.ge.f32.partialorder %v5894, 0.0
      %vm5901 = vcmp.ge.f32.partialorder %v5896, 0.0
      %v5902 = vmul.f32 %v5894, 0.2
      %v5903 = vmul.f32 %v5896, 0.2
      %v5904 = vsel %vm5900, %v5894, %v5902
      %v5905 = vsel %vm5901, %v5896, %v5903
      %5906 = vrot.lane.b32.xlu0 %v5904, 17
      %v5907 = vpop.permute.xlu0 %5906
      %5908 = vrot.lane.b32.xlu0 %v5905, 17
      %v5909 = vpop.permute.xlu0 %5908
      %v5910 = vsel %vm315, %v5907, %v5909
      %v5911 = vsel %vm315, %v5909, %v5907
      %v5912 = vld [vmem:[%s7] sm:$0xff]
      %v5913 = vld [vmem:[%s7 + $0x8] sm:$0xff]
      %v5914 = vmul.f32 %v5911, %v5912
      %v5915 = vmul.f32 %v5910, %v5913
      %v5916 = vpack.c.bf16 %v5914, %v5914
      %v5917 = vpack.c.bf16 %v5915, %v5915
      %v5920 = vunpack.c.l.b16 %v5916
      %v5921 = vunpack.c.l.b16 %v5917
      %v5922 = vpack.c.b16 %v5921, %v5920
      %5924 = vst [vmem:[#allocation2 + $0x120] sm:$0xff] %v5922
      %5925 = vrot.lane.b32.xlu0 %v5904, 16
      %v5926 = vpop.permute.xlu0 %5925
      %5927 = vrot.lane.b32.xlu0 %v5905, 16
      %v5928 = vpop.permute.xlu0 %5927
      %v5929 = vsel %vm335, %v5926, %v5928
      %v5930 = vsel %vm335, %v5928, %v5926
      %v5931 = vld [vmem:[%s338] sm:$0xff]
      %v5932 = vld [vmem:[%s338 + $0x8] sm:$0xff]
      %v5933 = vmul.f32 %v5930, %v5931
      %v5934 = vmul.f32 %v5929, %v5932
      %v5935 = vpack.c.bf16 %v5933, %v5933
      %v5936 = vpack.c.bf16 %v5934, %v5934
      %v5939 = vunpack.c.l.b16 %v5935
      %v5940 = vunpack.c.l.b16 %v5936
      %v5941 = vpack.c.b16 %v5940, %v5939
      %5943 = vst [vmem:[#allocation2 + $0x128] sm:$0xff] %v5941
      %5944 = vrot.lane.b32.xlu0 %v5904, 15
      %v5945 = vpop.permute.xlu0 %5944
      %5946 = vrot.lane.b32.xlu0 %v5905, 15
      %v5947 = vpop.permute.xlu0 %5946
      %v5948 = vsel %vm356, %v5945, %v5947
      %v5949 = vsel %vm356, %v5947, %v5945
      %v5950 = vld [vmem:[%s359] sm:$0xff]
      %v5951 = vld [vmem:[%s359 + $0x8] sm:$0xff]
      %v5952 = vmul.f32 %v5949, %v5950
      %v5953 = vmul.f32 %v5948, %v5951
      %v5954 = vpack.c.bf16 %v5952, %v5952
      %v5955 = vpack.c.bf16 %v5953, %v5953
      %v5958 = vunpack.c.l.b16 %v5954
      %v5959 = vunpack.c.l.b16 %v5955
      %v5960 = vpack.c.b16 %v5959, %v5958
      %5962 = vst [vmem:[#allocation2 + $0x130] sm:$0xff] %v5960
      %5963 = vrot.lane.b32.xlu0 %v5904, 1
      %v5964 = vpop.permute.xlu0 %5963
      %5965 = vrot.lane.b32.xlu0 %v5905, 1
      %v5966 = vpop.permute.xlu0 %5965
      %v5967 = vsel %vm377, %v5964, %v5966
      %v5968 = vsel %vm377, %v5966, %v5964
      %v5969 = vld [vmem:[%s380] sm:$0xff]
      %v5970 = vld [vmem:[%s380 + $0x8] sm:$0xff]
      %v5971 = vmul.f32 %v5968, %v5969
      %v5972 = vmul.f32 %v5967, %v5970
      %v5973 = vpack.c.bf16 %v5971, %v5971
      %v5974 = vpack.c.bf16 %v5972, %v5972
      %v5977 = vunpack.c.l.b16 %v5973
      %v5978 = vunpack.c.l.b16 %v5974
      %v5979 = vpack.c.b16 %v5978, %v5977
      %5981 = vst [vmem:[#allocation2 + $0x138] sm:$0xff] %v5979
      %v5982 = vpack.c.bf16 %v5904, %v5904
      %v5983 = vpack.c.bf16 %v5905, %v5905
      %v5986 = vunpack.c.l.b16 %v5982
      %v5987 = vunpack.c.l.b16 %v5983
      %v5988 = vpack.c.b16 %v5987, %v5986
      %5990 = vst [vmem:[#allocation2 + $0x140] sm:$0xff] %v5988
      %5991 = vrot.lane.b32.xlu0 %v5904, 127
      %v5992 = vpop.permute.xlu0 %5991
      %5993 = vrot.lane.b32.xlu0 %v5905, 127
      %v5994 = vpop.permute.xlu0 %5993
      %v5995 = vsel %vm407, %v5992, %v5994
      %v5996 = vsel %vm407, %v5994, %v5992
      %v5997 = vld [vmem:[%s410] sm:$0xff]
      %v5998 = vld [vmem:[%s410 + $0x8] sm:$0xff]
      %v5999 = vmul.f32 %v5995, %v5997
      %v6000 = vmul.f32 %v5996, %v5998
      %v6001 = vpack.c.bf16 %v5999, %v5999
      %v6002 = vpack.c.bf16 %v6000, %v6000
      %v6005 = vunpack.c.l.b16 %v6001
      %v6006 = vunpack.c.l.b16 %v6002
      %v6007 = vpack.c.b16 %v6006, %v6005
      %6009 = vst [vmem:[#allocation2 + $0x148] sm:$0xff] %v6007
      %6010 = vrot.lane.b32.xlu0 %v5904, 113
      %v6011 = vpop.permute.xlu0 %6010
      %6012 = vrot.lane.b32.xlu0 %v5905, 113
      %v6013 = vpop.permute.xlu0 %6012
      %v6014 = vsel %vm428, %v6011, %v6013
      %v6015 = vsel %vm428, %v6013, %v6011
      %v6016 = vld [vmem:[%s431] sm:$0xff]
      %v6017 = vld [vmem:[%s431 + $0x8] sm:$0xff]
      %v6018 = vmul.f32 %v6014, %v6016
      %v6019 = vmul.f32 %v6015, %v6017
      %v6020 = vpack.c.bf16 %v6018, %v6018
      %v6021 = vpack.c.bf16 %v6019, %v6019
      %v6024 = vunpack.c.l.b16 %v6020
      %v6025 = vunpack.c.l.b16 %v6021
      %v6026 = vpack.c.b16 %v6025, %v6024
      %6028 = vst [vmem:[#allocation2 + $0x150] sm:$0xff] %v6026
      %6029 = vrot.lane.b32.xlu0 %v5904, 112
      %v6030 = vpop.permute.xlu0 %6029
      %6031 = vrot.lane.b32.xlu0 %v5905, 112
      %v6032 = vpop.permute.xlu0 %6031
      %v6033 = vsel %vm449, %v6030, %v6032
      %v6034 = vsel %vm449, %v6032, %v6030
      %v6035 = vld [vmem:[%s452] sm:$0xff]
      %v6036 = vld [vmem:[%s452 + $0x8] sm:$0xff]
      %v6037 = vmul.f32 %v6033, %v6035
      %v6038 = vmul.f32 %v6034, %v6036
      %v6039 = vpack.c.bf16 %v6037, %v6037
      %v6040 = vpack.c.bf16 %v6038, %v6038
      %v6043 = vunpack.c.l.b16 %v6039
      %v6044 = vunpack.c.l.b16 %v6040
      %v6045 = vpack.c.b16 %v6044, %v6043
      %6047 = vst [vmem:[#allocation2 + $0x158] sm:$0xff] %v6045
      %6048 = vrot.lane.b32.xlu0 %v5904, 111
      %v6049 = vpop.permute.xlu0 %6048
      %6050 = vrot.lane.b32.xlu0 %v5905, 111
      %v6051 = vpop.permute.xlu0 %6050
      %v6052 = vsel %vm470, %v6049, %v6051
      %v6053 = vsel %vm470, %v6051, %v6049
      %v6054 = vld [vmem:[%s473] sm:$0xff]
      %v6055 = vld [vmem:[%s473 + $0x8] sm:$0xff]
      %v6056 = vmul.f32 %v6052, %v6054
      %v6057 = vmul.f32 %v6053, %v6055
      %v6058 = vpack.c.bf16 %v6056, %v6056
      %v6059 = vpack.c.bf16 %v6057, %v6057
      %v6062 = vunpack.c.l.b16 %v6058
      %v6063 = vunpack.c.l.b16 %v6059
      %v6064 = vpack.c.b16 %v6063, %v6062
      %6066 = vst [vmem:[#allocation2 + $0x160] sm:$0xff] %v6064
      %s6067 = scalar_lea.vmem %s5, 24
      %v6068 = vld [vmem:[%s6067] sm:$0xff]
      %v6069 = vld [vmem:[%s6067 + $0x8] sm:$0xf]
      %v6070 = vld [vmem:[#allocation2] sm:$0xff]
      %v6071 = vld [vmem:[#allocation2 + $0x8] sm:$0xff]
      %v6072 = vld [vmem:[#allocation2 + $0x10] sm:$0xff]
      %v6073 = vld [vmem:[#allocation2 + $0x18] sm:$0xff]
      %v6074 = vld [vmem:[#allocation2 + $0x20] sm:$0xff]
      %v6075 = vld [vmem:[#allocation2 + $0x28] sm:$0xff]
      %v6076 = vld [vmem:[#allocation2 + $0x30] sm:$0xff]
      %v6077 = vld [vmem:[#allocation2 + $0x38] sm:$0xff]
      %v6078 = vld [vmem:[#allocation2 + $0x40] sm:$0xff]
      %v6079 = vld [vmem:[#allocation2 + $0x48] sm:$0xff]
      %v6080 = vld [vmem:[#allocation2 + $0x50] sm:$0xff]
      %v6081 = vld [vmem:[#allocation2 + $0x58] sm:$0xff]
      %v6082 = vld [vmem:[#allocation2 + $0x60] sm:$0xff]
      %v6083 = vld [vmem:[#allocation2 + $0x68] sm:$0xff]
      %v6084 = vld [vmem:[#allocation2 + $0x70] sm:$0xff]
      %v6085 = vld [vmem:[#allocation2 + $0x78] sm:$0xff]
      %v6086 = vld [vmem:[#allocation2 + $0x80] sm:$0xff]
      %v6087 = vld [vmem:[#allocation2 + $0x88] sm:$0xff]
      %v6088 = vld [vmem:[#allocation2 + $0x90] sm:$0xff]
      %v6089 = vld [vmem:[#allocation2 + $0x98] sm:$0xff]
      %v6090 = vld [vmem:[#allocation2 + $0xa0] sm:$0xff]
      %v6091 = vld [vmem:[#allocation2 + $0xa8] sm:$0xff]
      %v6092 = vld [vmem:[#allocation2 + $0xb0] sm:$0xff]
      %v6093 = vld [vmem:[#allocation2 + $0xb8] sm:$0xff]
      %v6094 = vld [vmem:[#allocation2 + $0xc0] sm:$0xff]
      %v6095 = vld [vmem:[#allocation2 + $0xc8] sm:$0xff]
      %v6096 = vld [vmem:[#allocation2 + $0xd0] sm:$0xff]
      %v6097 = vld [vmem:[#allocation2 + $0xd8] sm:$0xff]
      %v6098 = vld [vmem:[#allocation2 + $0xe0] sm:$0xff]
      %v6099 = vld [vmem:[#allocation2 + $0xe8] sm:$0xff]
      %v6100 = vld [vmem:[#allocation2 + $0xf0] sm:$0xff]
      %v6101 = vld [vmem:[#allocation2 + $0xf8] sm:$0xff]
      %v6102 = vld [vmem:[#allocation2 + $0x100] sm:$0xff]
      %v6103 = vld [vmem:[#allocation2 + $0x108] sm:$0xff]
      %v6104 = vld [vmem:[#allocation2 + $0x110] sm:$0xff]
      %v6105 = vld [vmem:[#allocation2 + $0x118] sm:$0xff]
      %v6106 = vld [vmem:[#allocation2 + $0x120] sm:$0xff]
      %v6107 = vld [vmem:[#allocation2 + $0x128] sm:$0xff]
      %v6108 = vld [vmem:[#allocation2 + $0x130] sm:$0xff]
      %v6109 = vld [vmem:[#allocation2 + $0x138] sm:$0xff]
      %v6110 = vld [vmem:[#allocation2 + $0x140] sm:$0xff]
      %v6111 = vld [vmem:[#allocation2 + $0x148] sm:$0xff]
      %v6112 = vld [vmem:[#allocation2 + $0x150] sm:$0xff]
      %v6113 = vld [vmem:[#allocation2 + $0x158] sm:$0xff]
      %v6114 = vld [vmem:[#allocation2 + $0x160] sm:$0xff]
      %s6115 = scalar_lea.vmem %s6, 112
      %v6116 = vld [vmem:[%s6115] sm:$0xff]
      %6118 = vset.pattern.permute.xlu0 0
      %6119 = vperm.xlu0 %6118, %v6116
      %v6120 = vpop.permute.xlu0 %6119
      %v6124 = vunpack.c.l.b16 %v6068
      %v6125 = vunpack.c.h.b16 %v6068
      %v6126 = vunpack.c.l.b16 %v6069
      %v6127 = vpack.c.b16 %v6124, %v6124
      %v6128 = vpack.c.b16 %v6125, %v6125
      %v6129 = vpack.c.b16 %v6126, %v6126
      %v6177 = vunpack.c.l.b16 %v6070
      %v6178 = vunpack.c.h.b16 %v6070
      %v6179 = vunpack.c.l.b16 %v6071
      %v6180 = vunpack.c.h.b16 %v6071
      %v6181 = vunpack.c.l.b16 %v6072
      %v6182 = vunpack.c.h.b16 %v6072
      %v6183 = vunpack.c.l.b16 %v6073
      %v6184 = vunpack.c.h.b16 %v6073
      %v6185 = vunpack.c.l.b16 %v6074
      %v6186 = vunpack.c.h.b16 %v6074
      %v6187 = vunpack.c.l.b16 %v6075
      %v6188 = vunpack.c.h.b16 %v6075
      %v6189 = vunpack.c.l.b16 %v6076
      %v6190 = vunpack.c.h.b16 %v6076
      %v6191 = vunpack.c.l.b16 %v6077
      %v6192 = vunpack.c.h.b16 %v6077
      %v6193 = vunpack.c.l.b16 %v6078
      %v6194 = vunpack.c.h.b16 %v6078
      %v6195 = vunpack.c.l.b16 %v6079
      %v6196 = vunpack.c.h.b16 %v6079
      %v6197 = vunpack.c.l.b16 %v6080
      %v6198 = vunpack.c.h.b16 %v6080
      %v6199 = vunpack.c.l.b16 %v6081
      %v6200 = vunpack.c.h.b16 %v6081
      %v6201 = vunpack.c.l.b16 %v6082
      %v6202 = vunpack.c.h.b16 %v6082
      %v6203 = vunpack.c.l.b16 %v6083
      %v6204 = vunpack.c.h.b16 %v6083
      %v6205 = vunpack.c.l.b16 %v6084
      %v6206 = vunpack.c.h.b16 %v6084
      %v6207 = vunpack.c.l.b16 %v6085
      %v6208 = vunpack.c.h.b16 %v6085
      %v6209 = vunpack.c.l.b16 %v6086
      %v6210 = vunpack.c.h.b16 %v6086
      %v6211 = vunpack.c.l.b16 %v6087
      %v6212 = vunpack.c.h.b16 %v6087
      %v6213 = vunpack.c.l.b16 %v6088
      %v6214 = vunpack.c.h.b16 %v6088
      %v6215 = vunpack.c.l.b16 %v6089
      %v6216 = vunpack.c.h.b16 %v6089
      %v6217 = vunpack.c.l.b16 %v6090
      %v6218 = vunpack.c.h.b16 %v6090
      %v6219 = vunpack.c.l.b16 %v6091
      %v6220 = vunpack.c.h.b16 %v6091
      %v6221 = vunpack.c.l.b16 %v6092
      %v6222 = vunpack.c.h.b16 %v6092
      %v6223 = vunpack.c.l.b16 %v6093
      %v6224 = vunpack.c.h.b16 %v6093
      %v6225 = vunpack.c.l.b16 %v6094
      %v6226 = vunpack.c.h.b16 %v6094
      %v6227 = vunpack.c.l.b16 %v6095
      %v6228 = vunpack.c.h.b16 %v6095
      %v6229 = vunpack.c.l.b16 %v6096
      %v6230 = vunpack.c.h.b16 %v6096
      %v6231 = vunpack.c.l.b16 %v6097
      %v6232 = vunpack.c.h.b16 %v6097
      %v6233 = vunpack.c.l.b16 %v6098
      %v6234 = vunpack.c.h.b16 %v6098
      %v6235 = vunpack.c.l.b16 %v6099
      %v6236 = vunpack.c.h.b16 %v6099
      %v6237 = vunpack.c.l.b16 %v6100
      %v6238 = vunpack.c.h.b16 %v6100
      %v6239 = vunpack.c.l.b16 %v6101
      %v6240 = vunpack.c.h.b16 %v6101
      %v6241 = vunpack.c.l.b16 %v6102
      %v6242 = vunpack.c.h.b16 %v6102
      %v6243 = vunpack.c.l.b16 %v6103
      %v6244 = vunpack.c.h.b16 %v6103
      %v6245 = vunpack.c.l.b16 %v6104
      %v6246 = vunpack.c.h.b16 %v6104
      %v6247 = vunpack.c.l.b16 %v6105
      %v6248 = vunpack.c.h.b16 %v6105
      %v6249 = vunpack.c.l.b16 %v6106
      %v6250 = vunpack.c.h.b16 %v6106
      %v6251 = vunpack.c.l.b16 %v6107
      %v6252 = vunpack.c.h.b16 %v6107
      %v6253 = vunpack.c.l.b16 %v6108
      %v6254 = vunpack.c.h.b16 %v6108
      %v6255 = vunpack.c.l.b16 %v6109
      %v6256 = vunpack.c.h.b16 %v6109
      %v6257 = vunpack.c.l.b16 %v6110
      %v6258 = vunpack.c.h.b16 %v6110
      %v6259 = vunpack.c.l.b16 %v6111
      %v6260 = vunpack.c.h.b16 %v6111
      %v6261 = vunpack.c.l.b16 %v6112
      %v6262 = vunpack.c.h.b16 %v6112
      %v6263 = vunpack.c.l.b16 %v6113
      %v6264 = vunpack.c.h.b16 %v6113
      %v6265 = vunpack.c.l.b16 %v6114
      %v6266 = vunpack.c.h.b16 %v6114
      %v6267 = vpack.c.b16 %v6179, %v6177
      %v6268 = vpack.c.b16 %v6180, %v6178
      %v6269 = vpack.c.b16 %v6183, %v6181
      %v6270 = vpack.c.b16 %v6184, %v6182
      %v6271 = vpack.c.b16 %v6187, %v6185
      %v6272 = vpack.c.b16 %v6188, %v6186
      %v6273 = vpack.c.b16 %v6191, %v6189
      %v6274 = vpack.c.b16 %v6192, %v6190
      %v6275 = vpack.c.b16 %v6195, %v6193
      %v6276 = vpack.c.b16 %v6196, %v6194
      %v6277 = vpack.c.b16 %v6199, %v6197
      %v6278 = vpack.c.b16 %v6200, %v6198
      %v6279 = vpack.c.b16 %v6203, %v6201
      %v6280 = vpack.c.b16 %v6204, %v6202
      %v6281 = vpack.c.b16 %v6207, %v6205
      %v6282 = vpack.c.b16 %v6208, %v6206
      %v6283 = vpack.c.b16 %v6211, %v6209
      %v6284 = vpack.c.b16 %v6212, %v6210
      %v6285 = vpack.c.b16 %v6215, %v6213
      %v6286 = vpack.c.b16 %v6216, %v6214
      %v6287 = vpack.c.b16 %v6219, %v6217
      %v6288 = vpack.c.b16 %v6220, %v6218
      %v6289 = vpack.c.b16 %v6223, %v6221
      %v6290 = vpack.c.b16 %v6224, %v6222
      %v6291 = vpack.c.b16 %v6227, %v6225
      %v6292 = vpack.c.b16 %v6228, %v6226
      %v6293 = vpack.c.b16 %v6231, %v6229
      %v6294 = vpack.c.b16 %v6232, %v6230
      %v6295 = vpack.c.b16 %v6235, %v6233
      %v6296 = vpack.c.b16 %v6236, %v6234
      %v6297 = vpack.c.b16 %v6239, %v6237
      %v6298 = vpack.c.b16 %v6240, %v6238
      %v6299 = vpack.c.b16 %v6243, %v6241
      %v6300 = vpack.c.b16 %v6244, %v6242
      %v6301 = vpack.c.b16 %v6247, %v6245
      %v6302 = vpack.c.b16 %v6248, %v6246
      %v6303 = vpack.c.b16 %v6251, %v6249
      %v6304 = vpack.c.b16 %v6252, %v6250
      %v6305 = vpack.c.b16 %v6255, %v6253
      %v6306 = vpack.c.b16 %v6256, %v6254
      %v6307 = vpack.c.b16 %v6259, %v6257
      %v6308 = vpack.c.b16 %v6260, %v6258
      %v6309 = vpack.c.b16 %v6263, %v6261
      %v6310 = vpack.c.b16 %v6264, %v6262
      %v6311 = vpack.c.b16 %v6265, %v6265
      %v6312 = vpack.c.b16 %v6266, %v6266
      %v6358 = vsel %vm2272, %v6129, 0
      %v6361 = vsel %vm552, %v6311, 0
      %v6364 = vsel %vm552, %v6312, 0
      %6366 = vmatprep.subr.bf16.mxu0 %v6282
      %6367 = vmatpush1.bf16.msra.mxu0 %v6281
      %6368 = vmatprep.subr.bf16.mxu0 %v6280
      %6369 = vmatpush1.bf16.msra.mxu0 %v6279
      %6370 = vmatprep.subr.bf16.mxu0 %v6278
      %6371 = vmatpush1.bf16.msra.mxu0 %v6277
      %6372 = vmatprep.subr.bf16.mxu0 %v6276
      %6373 = vmatpush1.bf16.msra.mxu0 %v6275
      %6374 = vmatprep.subr.bf16.mxu0 %v6274
      %6375 = vmatpush1.bf16.msra.mxu0 %v6273
      %6376 = vmatprep.subr.bf16.mxu0 %v6272
      %6377 = vmatpush1.bf16.msra.mxu0 %v6271
      %6378 = vmatprep.subr.bf16.mxu0 %v6270
      %6379 = vmatpush1.bf16.msra.mxu0 %v6269
      %6380 = vmatprep.subr.bf16.mxu0 %v6268
      %6381 = vmatpush1.bf16.msra.mxu0 %v6267
      %6382 = vmatprep.subr.bf16.mxu0 %v6298
      %6383 = vmatpush2.bf16.msra.mxu0 %v6297
      %6384 = vmatprep.subr.bf16.mxu0 %v6296
      %6385 = vmatpush2.bf16.msra.mxu0 %v6295
      %6386 = vmatprep.subr.bf16.mxu0 %v6294
      %6387 = vmatpush2.bf16.msra.mxu0 %v6293
      %6388 = vmatprep.subr.bf16.mxu0 %v6292
      %6389 = vmatpush2.bf16.msra.mxu0 %v6291
      %6390 = vmatprep.subr.bf16.mxu0 %v6290
      %6391 = vmatpush2.bf16.msra.mxu0 %v6289
      %6392 = vmatprep.subr.bf16.mxu0 %v6288
      %6393 = vmatpush2.bf16.msra.mxu0 %v6287
      %6394 = vmatprep.subr.bf16.mxu0 %v6286
      %6395 = vmatpush2.bf16.msra.mxu0 %v6285
      %6396 = vmatprep.subr.bf16.mxu0 %v6284
      %6397 = vmatpush2.bf16.msra.mxu0 %v6283
      %6398 = vmatprep.mubr.bf16.mxu0 %v6128
      %6399 = vmatmul.mubr.bf16.gmra.mxu0 %v6127
      %v6400 = vpop.f32.mrf.mxu0
      %v6401 = vadd.f32 %v6120, %v6400
      %v6402 = vpop.f32.mrf.mxu0
      %v6403 = vadd.f32 %v6120, %v6402
      %v6404 = vpop.f32.mrf.mxu0
      %v6405 = vpop.f32.mrf.mxu0
      %6406 = vdwg.mxu0
      %6407 = vmatprep.subr.bf16.mxu0 0
      %6408 = vmatpush1.bf16.msra.mxu0 0
      %6409 = vmatprep.subr.bf16.mxu0 %v6364
      %6410 = vmatpush1.bf16.msra.mxu0 %v6361
      %6411 = vmatprep.subr.bf16.mxu0 %v6310
      %6412 = vmatpush1.bf16.msra.mxu0 %v6309
      %6413 = vmatprep.subr.bf16.mxu0 %v6308
      %6414 = vmatpush1.bf16.msra.mxu0 %v6307
      %6415 = vmatprep.subr.bf16.mxu0 %v6306
      %6416 = vmatpush1.bf16.msra.mxu0 %v6305
      %6417 = vmatprep.subr.bf16.mxu0 %v6304
      %6418 = vmatpush1.bf16.msra.mxu0 %v6303
      %6419 = vmatprep.subr.bf16.mxu0 %v6302
      %6420 = vmatpush1.bf16.msra.mxu0 %v6301
      %6421 = vmatprep.subr.bf16.mxu0 %v6300
      %6422 = vmatpush1.bf16.msra.mxu0 %v6299
      %6423 = vmatprep.subr.bf16.mxu0 0
      %6424 = vmatpush2.bf16.msra.mxu0 0
      %6425 = vmatprep.subr.bf16.mxu0 0
      %6426 = vmatpush2.bf16.msra.mxu0 0
      %6427 = vmatprep.subr.bf16.mxu0 0
      %6428 = vmatpush2.bf16.msra.mxu0 0
      %6429 = vmatprep.subr.bf16.mxu0 0
      %6430 = vmatpush2.bf16.msra.mxu0 0
      %6431 = vmatprep.subr.bf16.mxu0 0
      %6432 = vmatpush2.bf16.msra.mxu0 0
      %6433 = vmatprep.subr.bf16.mxu0 0
      %6434 = vmatpush2.bf16.msra.mxu0 0
      %6435 = vmatprep.subr.bf16.mxu0 0
      %6436 = vmatpush2.bf16.msra.mxu0 0
      %6437 = vmatprep.subr.bf16.mxu0 0
      %6438 = vmatpush2.bf16.msra.mxu0 0
      %6439 = vmatprep.mubr.bf16.mxu0 0
      %6440 = vmatmul.mubr.bf16.gmra.mxu0 %v6358
      %v6441 = vpop.f32.mrf.mxu0
      %v6442 = vadd.f32 %v6401, %v6441
      %v6443 = vpop.f32.mrf.mxu0
      %v6444 = vadd.f32 %v6403, %v6443
      %v6445 = vpop.f32.mrf.mxu0
      %v6446 = vpop.f32.mrf.mxu0
      %6447 = vdwg.mxu0
      %v6448 = vmul.f32 %v6442, 0.2
      %v6449 = vmul.f32 %v6444, 0.2
      %v6450 = vadd.f32 %v6448, %v4408
      %v6451 = vadd.f32 %v6449, %v4409
      %v6452 = vmul.f32 %v6450, 0.2
      %v6453 = vmul.f32 %v6451, 0.2
      %v6454 = vadd.f32 %v6452, %v307
      %v6455 = vadd.f32 %v6453, %v308
      %v6458 = vcombine.low %v6454, %v6455
      %6460 = vst [vmem:[%s305] sm:$0xff] %v6458
      %p6461 = scmp.lt.s32.totalorder %s19, 1
      %s6462 = scalar_select %p6461, %s19, 1
      %s6463 = smul.addr %s6462, 2
      %s6464 = smul.addr %s6463, 4
      %s6465 = scalar_lea.vmem %s8, %s6464
      // Predicated region
      $region53: #{forward.1} parent=51 // pred_check
        %p6466 = pneg %p210
      $region54: #{forward.1} parent=51 // pred_check_branch
        %6468 = sbr.rel (%p6466) target = $region56
      $region55: #{forward.1} parent=51 // pred_region
        _
      $region56: #{forward.1} parent=51 // pred_fallthru
        _
    $region52: #{forward.1} parent=5 // pred_fallthru
      _
    %p6469 = scmp.le.s32.totalorder 2, %s14
    // Predicated region
    $region57: #{forward.1} parent=5 // pred_check
      %p6470 = pneg %p6469
    $region58: #{forward.1} parent=5 // pred_check_branch
      %6472 = sbr.rel (%p6470) target = $region60
    $region59: #{forward.1} parent=5 // pred_region
      %s6473 = ssub.s32 %s14, 2
      // Predicated region
      $region61: #{forward.1} parent=59 // pred_check
        %p6474 = pneg %p216
      $region62: #{forward.1} parent=59 // pred_check_branch
        %6476 = sbr.rel (%p6474) target = $region64
      $region63: #{forward.1} parent=59 // pred_region
        %p6477 = scmp.lt.s32.totalorder %s20, 1
        %s6478 = scalar_select %p6477, %s20, 1
        %s6479 = smul.addr %s6478, 2
        %s6480 = smul.addr %s6479, 4
        %s6481 = scalar_lea.vmem %s8, %s6480
      $region64: #{forward.1} parent=59 // pred_fallthru
        _
    $region60: #{forward.1} parent=5 // pred_fallthru
      _
  $region6: #{forward.1} parent=0 // loop_footer
    %s18 = sadd.s32 1, %s14
  $region7: #{forward.1} parent=0 // loop_footer_branch
    %13 = sbr.rel target = $region3
  $region8: #{forward.1} parent=0 // loop_exit
    _

</llo_original>
